<compile_context>
chip_gen: v7x
topology: tpu7x:2x2x1
jax: 0.10.0
libtpu: 0.0.40
codegen_flags: <defaults>
</compile_context>

<pallas_src>
import jax
import jax.numpy as jnp
from jax import lax
from jax.experimental import pallas as pl
from jax.experimental.pallas import tpu as pltpu


# ----------------------------- kernel #1: input projection ------------------

def _proj_kernel(x_ref, w_ref, b_ref, out_ref):
    # (R, Din) bf16 @ (Din, 8H) bf16 -> f32 accum, + bias, stored as bf16.
    out_ref[...] = (
        jnp.dot(x_ref[...], w_ref[...], preferred_element_type=jnp.float32)
        + b_ref[...]
    ).astype(out_ref.dtype)


def _input_projection(x_flat_bf16, w_both_bf16, b_both_f32,
                      vmem_budget_bytes=24 * 1024 * 1024):
    n_rows, d_in = x_flat_bf16.shape
    n_out = w_both_bf16.shape[1]
    # Resident (single-copy) weights + bias; double-buffered bf16 x and bf16 out streams.
    resident = d_in * n_out * 2 + n_out * 4
    per_row = 2 * (d_in * 2 + n_out * 2)
    r_cap = max(8, (vmem_budget_bytes - resident) // max(per_row, 1))
    r_tile = next(r for r in (1024, 512, 256, 128, 64, 32, 16, 8)
                  if r <= r_cap and n_rows % r == 0)
    return pl.pallas_call(
        _proj_kernel,
        out_shape=jax.ShapeDtypeStruct((n_rows, n_out), jnp.bfloat16),
        grid=(n_rows // r_tile,),
        in_specs=[
            pl.BlockSpec((r_tile, d_in), lambda i: (i, 0)),
            pl.BlockSpec(memory_space=pltpu.MemorySpace.VMEM),  # weights resident once
            pl.BlockSpec(memory_space=pltpu.MemorySpace.VMEM),  # bias resident once
        ],
        out_specs=pl.BlockSpec((r_tile, n_out), lambda i: (i, 0)),
        compiler_params=pltpu.CompilerParams(
            dimension_semantics=("parallel",),
            vmem_limit_bytes=32 * 1024 * 1024),
    )(x_flat_bf16, w_both_bf16, b_both_f32)


# ----------------------------- kernel #2: fused bidirectional recurrence ----

def _recurrence_kernel(xproj_ref, whh_f_ref, whh_b_ref, out_ref, h_scr, c_scr):
    """Grid = (direction, time_chunk).
    xproj_ref: (T_blk, Bp, 4H) bf16 precomputed gate pre-activations for this chunk/dir;
    whh_*_ref: (H, 4H) bf16, fully resident in VMEM (no pipelining);
    out_ref:   (Bp, T_blk, H) f32 block of the batch-major output;
    h_scr:     (Bp, H) bf16 carried hidden state; c_scr: (Bp, H) f32 carried cell state."""
    T_blk = xproj_ref.shape[0]
    H = h_scr.shape[-1]
    d = pl.program_id(0)
    tc = pl.program_id(1)

    @pl.when(tc == 0)
    def _():
        h_scr[...] = jnp.zeros_like(h_scr)
        c_scr[...] = jnp.zeros_like(c_scr)

    def sigmoid(v):                       # one EUP tanh instead of exp + reciprocal
        return 0.5 * (1.0 + jnp.tanh(0.5 * v))

    def step(local_t, whh_ref):
        gates = xproj_ref[local_t].astype(jnp.float32) + jnp.dot(
            h_scr[...], whh_ref[...], preferred_element_type=jnp.float32)  # (Bp, 4H) f32
        i_g = sigmoid(gates[:, 0 * H:1 * H])
        f_g = sigmoid(gates[:, 1 * H:2 * H])
        g_g = jnp.tanh(gates[:, 2 * H:3 * H])
        o_g = sigmoid(gates[:, 3 * H:4 * H])
        c_new = f_g * c_scr[...] + i_g * g_g
        h_new = o_g * jnp.tanh(c_new)
        c_scr[...] = c_new
        h_scr[...] = h_new.astype(h_scr.dtype)          # bf16 h state (feeds next matmul)
        out_ref[:, local_t:local_t + 1, :] = h_new[:, None, :].astype(out_ref.dtype)

    # Fully static, unrolled in-chunk loops; only one branch runs per grid step.
    @pl.when(d == 0)
    def _():
        for s in range(T_blk):
            step(s, whh_f_ref)

    @pl.when(d == 1)
    def _():
        for s in range(T_blk):
            step(T_blk - 1 - s, whh_b_ref)


def _pick_time_block(seq_len):
    for cand in (16, 8):
        if seq_len % cand == 0:
            return cand
    # Fallback: whole sequence as a single chunk (block dims equal to full dims, so the
    # (8,128) rule is still satisfied). Fine for short/odd T.
    return seq_len


def _bilstm_recurrence(xproj, whh_f_bf16, whh_b_bf16, t_blk):
    T, Bp, n_out = xproj.shape
    H = n_out // 8
    n_chunks = T // t_blk

    # Direction d=0 walks chunks forward, d=1 walks them backward (and in-chunk reversed).
    def xproj_map(d, tc):
        return (tc + d * (n_chunks - 1 - 2 * tc), 0, d)   # (time-chunk, 0, gate-col half)

    def out_map(d, tc):
        return (0, tc + d * (n_chunks - 1 - 2 * tc), d)   # fwd -> cols [0,H), bwd -> [H,2H)

    return pl.pallas_call(
        _recurrence_kernel,
        out_shape=jax.ShapeDtypeStruct((Bp, T, 2 * H), jnp.float32),
        grid=(2, n_chunks),
        in_specs=[
            pl.BlockSpec((t_blk, Bp, 4 * H), xproj_map),
            pl.BlockSpec(memory_space=pltpu.MemorySpace.VMEM),   # W_hh fwd, resident once
            pl.BlockSpec(memory_space=pltpu.MemorySpace.VMEM),   # W_hh bwd, resident once
        ],
        out_specs=pl.BlockSpec((Bp, t_blk, H), out_map),
        scratch_shapes=[
            pltpu.VMEM((Bp, H), jnp.bfloat16),   # h state (bf16, feeds MXU directly)
            pltpu.VMEM((Bp, H), jnp.float32),    # c state (f32)
        ],
        compiler_params=pltpu.CompilerParams(
            dimension_semantics=("parallel", "arbitrary"),
            vmem_limit_bytes=32 * 1024 * 1024),
    )(xproj, whh_f_bf16, whh_b_bf16)


# ----------------------------- wrapper ---------------------------------------

@jax.jit
def bilstm_forward(x, params):
    """x: (B, T, Din) -> (B, T, 2*H); matches nn.LSTM(bidirectional=True, batch_first=True)."""
    B, T, Din = x.shape
    H = params["whh_f_t"].shape[0]
    assert H % 128 == 0, "hidden_size must be a multiple of 128 (lane-dense gates/output)"
    Bp = ((B + 7) // 8) * 8                                   # pad batch to sublane multiple

    x_tbd = jnp.transpose(x, (1, 0, 2)).astype(jnp.float32)   # (T, B, Din)
    if Bp != B:
        x_tbd = jnp.pad(x_tbd, ((0, 0), (0, Bp - B), (0, 0)))
    x_flat = x_tbd.reshape(T * Bp, Din).astype(jnp.bfloat16)

    # Stacked input weights: forward gates in columns [0, 4H), backward in [4H, 8H).
    w_both = jnp.concatenate(
        [params["wih_f_t"], params["wih_b_t"]], axis=1).astype(jnp.bfloat16)   # (Din, 8H)
    b_both = jnp.concatenate(
        [params["b_f"], params["b_b"]], axis=1).astype(jnp.float32)            # (1, 8H)

    xproj = _input_projection(x_flat, w_both, b_both)         # (T*Bp, 8H) bf16
    xproj = xproj.reshape(T, Bp, 8 * H)                       # free (contiguous) reshape

    t_blk = _pick_time_block(T)
    out = _bilstm_recurrence(xproj,
                             params["whh_f_t"].astype(jnp.bfloat16),
                             params["whh_b_t"].astype(jnp.bfloat16),
                             t_blk)                           # (Bp, T, 2H) f32, batch-major
    return out[:B]                                            # (B, T, 2H) -- no transpose


def init_params(key, input_size, hidden_size):
    """Deterministic init mimicking PyTorch LSTM uniform(-1/sqrt(H), 1/sqrt(H))."""
    H, Din = hidden_size, input_size
    scale = 1.0 / jnp.sqrt(jnp.float32(H))
    ks = jax.random.split(key, 8)

    def u(k, shape):
        return jax.random.uniform(k, shape, jnp.float32, -scale, scale)

    # PyTorch stores W_ih: (4H, Din), W_hh: (4H, H), b_ih/b_hh: (4H,). Store transposed.
    return {
        "wih_f_t": u(ks[0], (Din, 4 * H)),
        "whh_f_t": u(ks[1], (H, 4 * H)),
        "b_f": (u(ks[2], (1, 4 * H)) + u(ks[3], (1, 4 * H))),  # b_ih + b_hh
        "wih_b_t": u(ks[4], (Din, 4 * H)),
        "whh_b_t": u(ks[5], (H, 4 * H)),
        "b_b": (u(ks[6], (1, 4 * H)) + u(ks[7], (1, 4 * H))),
    }


def _reference_bilstm(x, params):
    """Pure-JAX reference (lax.scan) mirroring the kernel's bf16/f32 precision."""
    B, T, Din = x.shape
    H = params["whh_f_t"].shape[0]
    x_bf = jnp.transpose(x, (1, 0, 2)).astype(jnp.bfloat16)   # (T, B, Din)

    def sigmoid(v):
        return 0.5 * (1.0 + jnp.tanh(0.5 * v))

    def one_dir(xs, wih_t, whh_t, b):
        xp = (jnp.dot(xs.reshape(T * B, Din), wih_t.astype(jnp.bfloat16),
                      preferred_element_type=jnp.float32)
              + b.astype(jnp.float32)).astype(jnp.bfloat16).reshape(T, B, 4 * H)
        whh_bf = whh_t.astype(jnp.bfloat16)

        def step(carry, g_in):
            h, c = carry
            gates = g_in.astype(jnp.float32) + jnp.dot(
                h.astype(jnp.bfloat16), whh_bf, preferred_element_type=jnp.float32)
            i = sigmoid(gates[:, 0 * H:1 * H])
            f = sigmoid(gates[:, 1 * H:2 * H])
            g = jnp.tanh(gates[:, 2 * H:3 * H])
            o = sigmoid(gates[:, 3 * H:4 * H])
            c = f * c + i * g
            h = o * jnp.tanh(c)
            return (h, c), h

        init = (jnp.zeros((B, H), jnp.float32), jnp.zeros((B, H), jnp.float32))
        _, hs = lax.scan(step, init, xp)
        return hs

    out_f = one_dir(x_bf, params["wih_f_t"], params["whh_f_t"], params["b_f"])
    out_b = one_dir(x_bf[::-1], params["wih_b_t"], params["whh_b_t"], params["b_b"])[::-1]
    return jnp.transpose(jnp.concatenate([out_f, out_b], axis=-1), (1, 0, 2))


if __name__ == "__main__":
    # Small shapes: batch=2, seq=8; hidden=128 (multiple of 128 for lane-dense
    # gates/output; PyTorch default hidden_size=512 also satisfies this).
    B, T, INPUT_SIZE, HIDDEN = 2, 8, 64, 128

    key = jax.random.PRNGKey(0)
    k_x, k_p = jax.random.split(key)
    x = jax.random.normal(k_x, (B, T, INPUT_SIZE), jnp.float32)
    params = init_params(k_p, INPUT_SIZE, HIDDEN)

    out = jax.block_until_ready(bilstm_forward(x, params))
    assert out.shape == (B, T, 2 * HIDDEN), out.shape

    ref = jax.block_until_ready(_reference_bilstm(x, params))
    err = float(jnp.max(jnp.abs(out - ref)))
    assert err < 2e-3, f"max abs err {err}"

    print("KERNEL_OK")
</pallas_src>

<mosaic_0001>
module attributes {stable_mosaic.version = 11 : i64} {
  func.func @_proj_kernel(%arg0: i32, %arg1: memref<64x64xbf16, #tpu.memory_space<vmem>>, %arg2: memref<64x1024xbf16, #tpu.memory_space<vmem>>, %arg3: memref<1x1024xf32, #tpu.memory_space<vmem>>, %arg4: memref<64x1024xbf16, #tpu.memory_space<vmem>>) attributes {dimension_semantics = [#tpu.dimension_semantics<parallel>], iteration_bounds = array<i64: 1>, scalar_prefetch = 0 : i64, scratch_operands = 0 : i64, tpu.core_type = #tpu.core_type<tc>, window_params = [{transform_indices = @transform_0, window_bounds = array<i64: 64, 64>}, {pipeline_mode = #tpu.pipeline_mode<synchronous>, transform_indices = @transform_1, window_bounds = array<i64: 64, 1024>}, {pipeline_mode = #tpu.pipeline_mode<synchronous>, transform_indices = @transform_2, window_bounds = array<i64: 1, 1024>}, {transform_indices = @transform_3, window_bounds = array<i64: 64, 1024>}]} {
    %c0 = arith.constant 0 : index
    %c0_0 = arith.constant 0 : index
    %0 = vector.load %arg1[%c0, %c0_0] : memref<64x64xbf16, #tpu.memory_space<vmem>>, vector<64x64xbf16>
    %c0_1 = arith.constant 0 : index
    %c0_2 = arith.constant 0 : index
    %1 = vector.load %arg2[%c0_1, %c0_2] : memref<64x1024xbf16, #tpu.memory_space<vmem>>, vector<64x1024xbf16>
    %cst = arith.constant dense<0.000000e+00> : vector<64x1024xf32>
    %2 = tpu.matmul %0, %1, %cst {dimension_numbers = #tpu.dot_dimension_numbers<[1], [0], [0], [1], [0, 0, 1, 1], [], []>} : vector<64x64xbf16>, vector<64x1024xbf16>, vector<64x1024xf32> -> vector<64x1024xf32>
    %c0_3 = arith.constant 0 : index
    %c0_4 = arith.constant 0 : index
    %3 = vector.load %arg3[%c0_3, %c0_4] : memref<1x1024xf32, #tpu.memory_space<vmem>>, vector<1x1024xf32>
    %4 = vector.broadcast %3 : vector<1x1024xf32> to vector<64x1024xf32>
    %5 = arith.addf %2, %4 : vector<64x1024xf32>
    %6 = arith.truncf %5 : vector<64x1024xf32> to vector<64x1024xbf16>
    %c0_5 = arith.constant 0 : index
    %c0_6 = arith.constant 0 : index
    %7 = vector.load %arg4[%c0_5, %c0_6] : memref<64x1024xbf16, #tpu.memory_space<vmem>>, vector<64x1024xbf16>
    tpu.vector_store %arg4[%c0_5, %c0_6], %6 {strides = array<i32>} : memref<64x1024xbf16, #tpu.memory_space<vmem>>, vector<64x1024xbf16>,
    return
  }
  func.func @transform_0(%arg0: i32) -> (i32, i32) {
    %c0_i32 = arith.constant 0 : i32
    %c0_i32_0 = arith.constant 0 : i32
    return %arg0, %c0_i32 : i32, i32
  }
  func.func @transform_1(%arg0: i32) -> (i32, i32) {
    %c0_i32 = arith.constant 0 : i32
    %c0_i32_0 = arith.constant 0 : i32
    %c0_i32_1 = arith.constant 0 : i32
    return %c0_i32, %c0_i32_0 : i32, i32
  }
  func.func @transform_2(%arg0: i32) -> (i32, i32) {
    %c0_i32 = arith.constant 0 : i32
    %c0_i32_0 = arith.constant 0 : i32
    %c0_i32_1 = arith.constant 0 : i32
    return %c0_i32, %c0_i32_0 : i32, i32
  }
  func.func @transform_3(%arg0: i32) -> (i32, i32) {
    %c0_i32 = arith.constant 0 : i32
    %c0_i32_0 = arith.constant 0 : i32
    return %arg0, %c0_i32 : i32, i32
  }
}

module attributes {stable_mosaic.version = 11 : i64} {
  func.func @_recurrence_kernel(%arg0: i32, %arg1: i32, %arg2: memref<8x8x512xbf16, #tpu.memory_space<vmem>>, %arg3: memref<128x512xbf16, #tpu.memory_space<vmem>>, %arg4: memref<128x512xbf16, #tpu.memory_space<vmem>>, %arg5: memref<8x8x128xf32, #tpu.memory_space<vmem>>, %arg6: memref<8x128xbf16, #tpu.memory_space<vmem>>, %arg7: memref<8x128xf32, #tpu.memory_space<vmem>>) attributes {dimension_semantics = [#tpu.dimension_semantics<parallel>, #tpu.dimension_semantics<arbitrary>], iteration_bounds = array<i64: 2, 1>, scalar_prefetch = 0 : i64, scratch_operands = 2 : i64, tpu.core_type = #tpu.core_type<tc>, window_params = [{transform_indices = @transform_0, window_bounds = array<i64: 8, 8, 512>}, {pipeline_mode = #tpu.pipeline_mode<synchronous>, transform_indices = @transform_1, window_bounds = array<i64: 128, 512>}, {pipeline_mode = #tpu.pipeline_mode<synchronous>, transform_indices = @transform_2, window_bounds = array<i64: 128, 512>}, {transform_indices = @transform_3, window_bounds = array<i64: 8, 8, 128>}]} {
    %c0_i32 = arith.constant 0 : i32
    %0 = arith.cmpi eq, %arg1, %c0_i32 : i32
    %1 = arith.extui %0 : i1 to i32
    %c0_i32_0 = arith.constant 0 : i32
    %2 = arith.cmpi ne, %1, %c0_i32_0 : i32
    scf.if %2 {
      %cst = arith.constant 0.000000e+00 : bf16
      %9 = vector.broadcast %cst : bf16 to vector<8x128xbf16>
      %c0 = arith.constant 0 : index
      %c0_4 = arith.constant 0 : index
      %10 = vector.load %arg6[%c0, %c0_4] : memref<8x128xbf16, #tpu.memory_space<vmem>>, vector<8x128xbf16>
      tpu.vector_store %arg6[%c0, %c0_4], %9 {strides = array<i32>} : memref<8x128xbf16, #tpu.memory_space<vmem>>, vector<8x128xbf16>,
      %cst_5 = arith.constant 0.000000e+00 : f32
      %11 = vector.broadcast %cst_5 : f32 to vector<8x128xf32>
      %c0_6 = arith.constant 0 : index
      %c0_7 = arith.constant 0 : index
      %12 = vector.load %arg7[%c0_6, %c0_7] : memref<8x128xf32, #tpu.memory_space<vmem>>, vector<8x128xf32>
      tpu.vector_store %arg7[%c0_6, %c0_7], %11 {strides = array<i32>} : memref<8x128xf32, #tpu.memory_space<vmem>>, vector<8x128xf32>,
    } else {
    }
    %c0_i32_1 = arith.constant 0 : i32
    %3 = arith.cmpi eq, %arg0, %c0_i32_1 : i32
    %4 = arith.extui %3 : i1 to i32
    %c0_i32_2 = arith.constant 0 : i32
    %5 = arith.cmpi ne, %4, %c0_i32_2 : i32
    scf.if %5 {
      %c0 = arith.constant 0 : index
      %c0_4 = arith.constant 0 : index
      %c0_5 = arith.constant 0 : index
      %9 = vector.load %arg2[%c0, %c0_4, %c0_5] : memref<8x8x512xbf16, #tpu.memory_space<vmem>>, vector<1x8x512xbf16>
      %10 = vector.shape_cast %9 : vector<1x8x512xbf16> to vector<8x512xbf16>
      %11 = arith.extf %10 : vector<8x512xbf16> to vector<8x512xf32>
      %c0_6 = arith.constant 0 : index
      %c0_7 = arith.constant 0 : index
      %12 = vector.load %arg6[%c0_6, %c0_7] : memref<8x128xbf16, #tpu.memory_space<vmem>>, vector<8x128xbf16>
      %c0_8 = arith.constant 0 : index
      %c0_9 = arith.constant 0 : index
      %13 = vector.load %arg3[%c0_8, %c0_9] : memref<128x512xbf16, #tpu.memory_space<vmem>>, vector<128x512xbf16>
      %cst = arith.constant dense<0.000000e+00> : vector<8x512xf32>
      %14 = tpu.matmul %12, %13, %cst {dimension_numbers = #tpu.dot_dimension_numbers<[1], [0], [0], [1], [0, 0, 1, 1], [], []>} : vector<8x128xbf16>, vector<128x512xbf16>, vector<8x512xf32> -> vector<8x512xf32>
      %15 = arith.addf %11, %14 : vector<8x512xf32>
      %16 = vector.extract_strided_slice %15 {offsets = [0, 0], sizes = [8, 128], strides = [1, 1]} : vector<8x512xf32> to vector<8x128xf32>
      %cst_10 = arith.constant 5.000000e-01 : f32
      %17 = vector.broadcast %cst_10 : f32 to vector<8x128xf32>
      %18 = arith.mulf %17, %16 : vector<8x128xf32>
      %19 = math.tanh %18 : vector<8x128xf32>
      %cst_11 = arith.constant 1.000000e+00 : f32
      %20 = vector.broadcast %cst_11 : f32 to vector<8x128xf32>
      %21 = arith.addf %20, %19 : vector<8x128xf32>
      %cst_12 = arith.constant 5.000000e-01 : f32
      %22 = vector.broadcast %cst_12 : f32 to vector<8x128xf32>
      %23 = arith.mulf %22, %21 : vector<8x128xf32>
      %24 = vector.extract_strided_slice %15 {offsets = [0, 128], sizes = [8, 128], strides = [1, 1]} : vector<8x512xf32> to vector<8x128xf32>
      %cst_13 = arith.constant 5.000000e-01 : f32
      %25 = vector.broadcast %cst_13 : f32 to vector<8x128xf32>
      %26 = arith.mulf %25, %24 : vector<8x128xf32>
      %27 = math.tanh %26 : vector<8x128xf32>
      %cst_14 = arith.constant 1.000000e+00 : f32
      %28 = vector.broadcast %cst_14 : f32 to vector<8x128xf32>
      %29 = arith.addf %28, %27 : vector<8x128xf32>
      %cst_15 = arith.constant 5.000000e-01 : f32
      %30 = vector.broadcast %cst_15 : f32 to vector<8x128xf32>
      %31 = arith.mulf %30, %29 : vector<8x128xf32>
      %32 = vector.extract_strided_slice %15 {offsets = [0, 256], sizes = [8, 128], strides = [1, 1]} : vector<8x512xf32> to vector<8x128xf32>
      %33 = math.tanh %32 : vector<8x128xf32>
      %34 = vector.extract_strided_slice %15 {offsets = [0, 384], sizes = [8, 128], strides = [1, 1]} : vector<8x512xf32> to vector<8x128xf32>
      %cst_16 = arith.constant 5.000000e-01 : f32
      %35 = vector.broadcast %cst_16 : f32 to vector<8x128xf32>
      %36 = arith.mulf %35, %34 : vector<8x128xf32>
      %37 = math.tanh %36 : vector<8x128xf32>
      %cst_17 = arith.constant 1.000000e+00 : f32
      %38 = vector.broadcast %cst_17 : f32 to vector<8x128xf32>
      %39 = arith.addf %38, %37 : vector<8x128xf32>
      %cst_18 = arith.constant 5.000000e-01 : f32
      %40 = vector.broadcast %cst_18 : f32 to vector<8x128xf32>
      %41 = arith.mulf %40, %39 : vector<8x128xf32>
      %c0_19 = arith.constant 0 : index
      %c0_20 = arith.constant 0 : index
      %42 = vector.load %arg7[%c0_19, %c0_20] : memref<8x128xf32, #tpu.memory_space<vmem>>, vector<8x128xf32>
      %43 = arith.mulf %31, %42 : vector<8x128xf32>
      %44 = arith.mulf %23, %33 : vector<8x128xf32>
      %45 = arith.addf %43, %44 : vector<8x128xf32>
      %46 = math.tanh %45 : vector<8x128xf32>
      %47 = arith.mulf %41, %46 : vector<8x128xf32>
      %c0_21 = arith.constant 0 : index
      %c0_22 = arith.constant 0 : index
      %48 = vector.load %arg7[%c0_21, %c0_22] : memref<8x128xf32, #tpu.memory_space<vmem>>, vector<8x128xf32>
      tpu.vector_store %arg7[%c0_21, %c0_22], %45 {strides = array<i32>} : memref<8x128xf32, #tpu.memory_space<vmem>>, vector<8x128xf32>,
      %49 = arith.truncf %47 : vector<8x128xf32> to vector<8x128xbf16>
      %c0_23 = arith.constant 0 : index
      %c0_24 = arith.constant 0 : index
      %50 = vector.load %arg6[%c0_23, %c0_24] : memref<8x128xbf16, #tpu.memory_space<vmem>>, vector<8x128xbf16>
      tpu.vector_store %arg6[%c0_23, %c0_24], %49 {strides = array<i32>} : memref<8x128xbf16, #tpu.memory_space<vmem>>, vector<8x128xbf16>,
      %51 = vector.shape_cast %47 : vector<8x128xf32> to vector<8x1x128xf32>
      %c0_25 = arith.constant 0 : index
      %c0_26 = arith.constant 0 : index
      %c0_27 = arith.constant 0 : index
      %52 = vector.load %arg5[%c0_25, %c0_26, %c0_27] : memref<8x8x128xf32, #tpu.memory_space<vmem>>, vector<8x1x128xf32>
      tpu.vector_store %arg5[%c0_25, %c0_26, %c0_27], %51 {strides = array<i32>} : memref<8x8x128xf32, #tpu.memory_space<vmem>>, vector<8x1x128xf32>,
      %c1 = arith.constant 1 : index
      %c0_28 = arith.constant 0 : index
      %c0_29 = arith.constant 0 : index
      %53 = vector.load %arg2[%c1, %c0_28, %c0_29] : memref<8x8x512xbf16, #tpu.memory_space<vmem>>, vector<1x8x512xbf16>
      %54 = vector.shape_cast %53 : vector<1x8x512xbf16> to vector<8x512xbf16>
      %55 = arith.extf %54 : vector<8x512xbf16> to vector<8x512xf32>
      %c0_30 = arith.constant 0 : index
      %c0_31 = arith.constant 0 : index
      %56 = vector.load %arg6[%c0_30, %c0_31] : memref<8x128xbf16, #tpu.memory_space<vmem>>, vector<8x128xbf16>
      %c0_32 = arith.constant 0 : index
      %c0_33 = arith.constant 0 : index
      %57 = vector.load %arg3[%c0_32, %c0_33] : memref<128x512xbf16, #tpu.memory_space<vmem>>, vector<128x512xbf16>
      %cst_34 = arith.constant dense<0.000000e+00> : vector<8x512xf32>
      %58 = tpu.matmul %56, %57, %cst_34 {dimension_numbers = #tpu.dot_dimension_numbers<[1], [0], [0], [1], [0, 0, 1, 1], [], []>} : vector<8x128xbf16>, vector<128x512xbf16>, vector<8x512xf32> -> vector<8x512xf32>
      %59 = arith.addf %55, %58 : vector<8x512xf32>
      %60 = vector.extract_strided_slice %59 {offsets = [0, 0], sizes = [8, 128], strides = [1, 1]} : vector<8x512xf32> to vector<8x128xf32>
      %cst_35 = arith.constant 5.000000e-01 : f32
      %61 = vector.broadcast %cst_35 : f32 to vector<8x128xf32>
      %62 = arith.mulf %61, %60 : vector<8x128xf32>
      %63 = math.tanh %62 : vector<8x128xf32>
      %cst_36 = arith.constant 1.000000e+00 : f32
      %64 = vector.broadcast %cst_36 : f32 to vector<8x128xf32>
      %65 = arith.addf %64, %63 : vector<8x128xf32>
      %cst_37 = arith.constant 5.000000e-01 : f32
      %66 = vector.broadcast %cst_37 : f32 to vector<8x128xf32>
      %67 = arith.mulf %66, %65 : vector<8x128xf32>
      %68 = vector.extract_strided_slice %59 {offsets = [0, 128], sizes = [8, 128], strides = [1, 1]} : vector<8x512xf32> to vector<8x128xf32>
      %cst_38 = arith.constant 5.000000e-01 : f32
      %69 = vector.broadcast %cst_38 : f32 to vector<8x128xf32>
      %70 = arith.mulf %69, %68 : vector<8x128xf32>
      %71 = math.tanh %70 : vector<8x128xf32>
      %cst_39 = arith.constant 1.000000e+00 : f32
      %72 = vector.broadcast %cst_39 : f32 to vector<8x128xf32>
      %73 = arith.addf %72, %71 : vector<8x128xf32>
      %cst_40 = arith.constant 5.000000e-01 : f32
      %74 = vector.broadcast %cst_40 : f32 to vector<8x128xf32>
      %75 = arith.mulf %74, %73 : vector<8x128xf32>
      %76 = vector.extract_strided_slice %59 {offsets = [0, 256], sizes = [8, 128], strides = [1, 1]} : vector<8x512xf32> to vector<8x128xf32>
      %77 = math.tanh %76 : vector<8x128xf32>
      %78 = vector.extract_strided_slice %59 {offsets = [0, 384], sizes = [8, 128], strides = [1, 1]} : vector<8x512xf32> to vector<8x128xf32>
      %cst_41 = arith.constant 5.000000e-01 : f32
      %79 = vector.broadcast %cst_41 : f32 to vector<8x128xf32>
      %80 = arith.mulf %79, %78 : vector<8x128xf32>
      %81 = math.tanh %80 : vector<8x128xf32>
      %cst_42 = arith.constant 1.000000e+00 : f32
      %82 = vector.broadcast %cst_42 : f32 to vector<8x128xf32>
      %83 = arith.addf %82, %81 : vector<8x128xf32>
      %cst_43 = arith.constant 5.000000e-01 : f32
      %84 = vector.broadcast %cst_43 : f32 to vector<8x128xf32>
      %85 = arith.mulf %84, %83 : vector<8x128xf32>
      %c0_44 = arith.constant 0 : index
      %c0_45 = arith.constant 0 : index
      %86 = vector.load %arg7[%c0_44, %c0_45] : memref<8x128xf32, #tpu.memory_space<vmem>>, vector<8x128xf32>
      %87 = arith.mulf %75, %86 : vector<8x128xf32>
      %88 = arith.mulf %67, %77 : vector<8x128xf32>
      %89 = arith.addf %87, %88 : vector<8x128xf32>
      %90 = math.tanh %89 : vector<8x128xf32>
      %91 = arith.mulf %85, %90 : vector<8x128xf32>
      %c0_46 = arith.constant 0 : index
      %c0_47 = arith.constant 0 : index
      %92 = vector.load %arg7[%c0_46, %c0_47] : memref<8x128xf32, #tpu.memory_space<vmem>>, vector<8x128xf32>
      tpu.vector_store %arg7[%c0_46, %c0_47], %89 {strides = array<i32>} : memref<8x128xf32, #tpu.memory_space<vmem>>, vector<8x128xf32>,
      %93 = arith.truncf %91 : vector<8x128xf32> to vector<8x128xbf16>
      %c0_48 = arith.constant 0 : index
      %c0_49 = arith.constant 0 : index
      %94 = vector.load %arg6[%c0_48, %c0_49] : memref<8x128xbf16, #tpu.memory_space<vmem>>, vector<8x128xbf16>
      tpu.vector_store %arg6[%c0_48, %c0_49], %93 {strides = array<i32>} : memref<8x128xbf16, #tpu.memory_space<vmem>>, vector<8x128xbf16>,
      %95 = vector.shape_cast %91 : vector<8x128xf32> to vector<8x1x128xf32>
      %c0_50 = arith.constant 0 : index
      %c1_51 = arith.constant 1 : index
      %c0_52 = arith.constant 0 : index
      %96 = vector.load %arg5[%c0_50, %c1_51, %c0_52] : memref<8x8x128xf32, #tpu.memory_space<vmem>>, vector<8x1x128xf32>
      tpu.vector_store %arg5[%c0_50, %c1_51, %c0_52], %95 {strides = array<i32>} : memref<8x8x128xf32, #tpu.memory_space<vmem>>, vector<8x1x128xf32>,
      %c2 = arith.constant 2 : index
      %c0_53 = arith.constant 0 : index
      %c0_54 = arith.constant 0 : index
      %97 = vector.load %arg2[%c2, %c0_53, %c0_54] : memref<8x8x512xbf16, #tpu.memory_space<vmem>>, vector<1x8x512xbf16>
      %98 = vector.shape_cast %97 : vector<1x8x512xbf16> to vector<8x512xbf16>
      %99 = arith.extf %98 : vector<8x512xbf16> to vector<8x512xf32>
      %c0_55 = arith.constant 0 : index
      %c0_56 = arith.constant 0 : index
      %100 = vector.load %arg6[%c0_55, %c0_56] : memref<8x128xbf16, #tpu.memory_space<vmem>>, vector<8x128xbf16>
      %c0_57 = arith.constant 0 : index
      %c0_58 = arith.constant 0 : index
      %101 = vector.load %arg3[%c0_57, %c0_58] : memref<128x512xbf16, #tpu.memory_space<vmem>>, vector<128x512xbf16>
      %cst_59 = arith.constant dense<0.000000e+00> : vector<8x512xf32>
      %102 = tpu.matmul %100, %101, %cst_59 {dimension_numbers = #tpu.dot_dimension_numbers<[1], [0], [0], [1], [0, 0, 1, 1], [], []>} : vector<8x128xbf16>, vector<128x512xbf16>, vector<8x512xf32> -> vector<8x512xf32>
      %103 = arith.addf %99, %102 : vector<8x512xf32>
      %104 = vector.extract_strided_slice %103 {offsets = [0, 0], sizes = [8, 128], strides = [1, 1]} : vector<8x512xf32> to vector<8x128xf32>
      %cst_60 = arith.constant 5.000000e-01 : f32
      %105 = vector.broadcast %cst_60 : f32 to vector<8x128xf32>
      %106 = arith.mulf %105, %104 : vector<8x128xf32>
      %107 = math.tanh %106 : vector<8x128xf32>
      %cst_61 = arith.constant 1.000000e+00 : f32
      %108 = vector.broadcast %cst_61 : f32 to vector<8x128xf32>
      %109 = arith.addf %108, %107 : vector<8x128xf32>
      %cst_62 = arith.constant 5.000000e-01 : f32
      %110 = vector.broadcast %cst_62 : f32 to vector<8x128xf32>
      %111 = arith.mulf %110, %109 : vector<8x128xf32>
      %112 = vector.extract_strided_slice %103 {offsets = [0, 128], sizes = [8, 128], strides = [1, 1]} : vector<8x512xf32> to vector<8x128xf32>
      %cst_63 = arith.constant 5.000000e-01 : f32
      %113 = vector.broadcast %cst_63 : f32 to vector<8x128xf32>
      %114 = arith.mulf %113, %112 : vector<8x128xf32>
      %115 = math.tanh %114 : vector<8x128xf32>
      %cst_64 = arith.constant 1.000000e+00 : f32
      %116 = vector.broadcast %cst_64 : f32 to vector<8x128xf32>
      %117 = arith.addf %116, %115 : vector<8x128xf32>
      %cst_65 = arith.constant 5.000000e-01 : f32
      %118 = vector.broadcast %cst_65 : f32 to vector<8x128xf32>
      %119 = arith.mulf %118, %117 : vector<8x128xf32>
      %120 = vector.extract_strided_slice %103 {offsets = [0, 256], sizes = [8, 128], strides = [1, 1]} : vector<8x512xf32> to vector<8x128xf32>
      %121 = math.tanh %120 : vector<8x128xf32>
      %122 = vector.extract_strided_slice %103 {offsets = [0, 384], sizes = [8, 128], strides = [1, 1]} : vector<8x512xf32> to vector<8x128xf32>
      %cst_66 = arith.constant 5.000000e-01 : f32
      %123 = vector.broadcast %cst_66 : f32 to vector<8x128xf32>
      %124 = arith.mulf %123, %122 : vector<8x128xf32>
      %125 = math.tanh %124 : vector<8x128xf32>
      %cst_67 = arith.constant 1.000000e+00 : f32
      %126 = vector.broadcast %cst_67 : f32 to vector<8x128xf32>
      %127 = arith.addf %126, %125 : vector<8x128xf32>
      %cst_68 = arith.constant 5.000000e-01 : f32
      %128 = vector.broadcast %cst_68 : f32 to vector<8x128xf32>
      %129 = arith.mulf %128, %127 : vector<8x128xf32>
      %c0_69 = arith.constant 0 : index
      %c0_70 = arith.constant 0 : index
      %130 = vector.load %arg7[%c0_69, %c0_70] : memref<8x128xf32, #tpu.memory_space<vmem>>, vector<8x128xf32>
      %131 = arith.mulf %119, %130 : vector<8x128xf32>
      %132 = arith.mulf %111, %121 : vector<8x128xf32>
      %133 = arith.addf %131, %132 : vector<8x128xf32>
      %134 = math.tanh %133 : vector<8x128xf32>
      %135 = arith.mulf %129, %134 : vector<8x128xf32>
      %c0_71 = arith.constant 0 : index
      %c0_72 = arith.constant 0 : index
      %136 = vector.load %arg7[%c0_71, %c0_72] : memref<8x128xf32, #tpu.memory_space<vmem>>, vector<8x128xf32>
      tpu.vector_store %arg7[%c0_71, %c0_72], %133 {strides = array<i32>} : memref<8x128xf32, #tpu.memory_space<vmem>>, vector<8x128xf32>,
      %137 = arith.truncf %135 : vector<8x128xf32> to vector<8x128xbf16>
      %c0_73 = arith.constant 0 : index
      %c0_74 = arith.constant 0 : index
      %138 = vector.load %arg6[%c0_73, %c0_74] : memref<8x128xbf16, #tpu.memory_space<vmem>>, vector<8x128xbf16>
      tpu.vector_store %arg6[%c0_73, %c0_74], %137 {strides = array<i32>} : memref<8x128xbf16, #tpu.memory_space<vmem>>, vector<8x128xbf16>,
      %139 = vector.shape_cast %135 : vector<8x128xf32> to vector<8x1x128xf32>
      %c0_75 = arith.constant 0 : index
      %c2_76 = arith.constant 2 : index
      %c0_77 = arith.constant 0 : index
      %140 = vector.load %arg5[%c0_75, %c2_76, %c0_77] : memref<8x8x128xf32, #tpu.memory_space<vmem>>, vector<8x1x128xf32>
      tpu.vector_store %arg5[%c0_75, %c2_76, %c0_77], %139 {strides = array<i32>} : memref<8x8x128xf32, #tpu.memory_space<vmem>>, vector<8x1x128xf32>,
      %c3 = arith.constant 3 : index
      %c0_78 = arith.constant 0 : index
      %c0_79 = arith.constant 0 : index
      %141 = vector.load %arg2[%c3, %c0_78, %c0_79] : memref<8x8x512xbf16, #tpu.memory_space<vmem>>, vector<1x8x512xbf16>
      %142 = vector.shape_cast %141 : vector<1x8x512xbf16> to vector<8x512xbf16>
      %143 = arith.extf %142 : vector<8x512xbf16> to vector<8x512xf32>
      %c0_80 = arith.constant 0 : index
      %c0_81 = arith.constant 0 : index
      %144 = vector.load %arg6[%c0_80, %c0_81] : memref<8x128xbf16, #tpu.memory_space<vmem>>, vector<8x128xbf16>
      %c0_82 = arith.constant 0 : index
      %c0_83 = arith.constant 0 : index
      %145 = vector.load %arg3[%c0_82, %c0_83] : memref<128x512xbf16, #tpu.memory_space<vmem>>, vector<128x512xbf16>
      %cst_84 = arith.constant dense<0.000000e+00> : vector<8x512xf32>
      %146 = tpu.matmul %144, %145, %cst_84 {dimension_numbers = #tpu.dot_dimension_numbers<[1], [0], [0], [1], [0, 0, 1, 1], [], []>} : vector<8x128xbf16>, vector<128x512xbf16>, vector<8x512xf32> -> vector<8x512xf32>
      %147 = arith.addf %143, %146 : vector<8x512xf32>
      %148 = vector.extract_strided_slice %147 {offsets = [0, 0], sizes = [8, 128], strides = [1, 1]} : vector<8x512xf32> to vector<8x128xf32>
      %cst_85 = arith.constant 5.000000e-01 : f32
      %149 = vector.broadcast %cst_85 : f32 to vector<8x128xf32>
      %150 = arith.mulf %149, %148 : vector<8x128xf32>
      %151 = math.tanh %150 : vector<8x128xf32>
      %cst_86 = arith.constant 1.000000e+00 : f32
      %152 = vector.broadcast %cst_86 : f32 to vector<8x128xf32>
      %153 = arith.addf %152, %151 : vector<8x128xf32>
      %cst_87 = arith.constant 5.000000e-01 : f32
      %154 = vector.broadcast %cst_87 : f32 to vector<8x128xf32>
      %155 = arith.mulf %154, %153 : vector<8x128xf32>
      %156 = vector.extract_strided_slice %147 {offsets = [0, 128], sizes = [8, 128], strides = [1, 1]} : vector<8x512xf32> to vector<8x128xf32>
      %cst_88 = arith.constant 5.000000e-01 : f32
      %157 = vector.broadcast %cst_88 : f32 to vector<8x128xf32>
      %158 = arith.mulf %157, %156 : vector<8x128xf32>
      %159 = math.tanh %158 : vector<8x128xf32>
      %cst_89 = arith.constant 1.000000e+00 : f32
      %160 = vector.broadcast %cst_89 : f32 to vector<8x128xf32>
      %161 = arith.addf %160, %159 : vector<8x128xf32>
      %cst_90 = arith.constant 5.000000e-01 : f32
      %162 = vector.broadcast %cst_90 : f32 to vector<8x128xf32>
      %163 = arith.mulf %162, %161 : vector<8x128xf32>
      %164 = vector.extract_strided_slice %147 {offsets = [0, 256], sizes = [8, 128], strides = [1, 1]} : vector<8x512xf32> to vector<8x128xf32>
      %165 = math.tanh %164 : vector<8x128xf32>
      %166 = vector.extract_strided_slice %147 {offsets = [0, 384], sizes = [8, 128], strides = [1, 1]} : vector<8x512xf32> to vector<8x128xf32>
      %cst_91 = arith.constant 5.000000e-01 : f32
      %167 = vector.broadcast %cst_91 : f32 to vector<8x128xf32>
      %168 = arith.mulf %167, %166 : vector<8x128xf32>
      %169 = math.tanh %168 : vector<8x128xf32>
      %cst_92 = arith.constant 1.000000e+00 : f32
      %170 = vector.broadcast %cst_92 : f32 to vector<8x128xf32>
      %171 = arith.addf %170, %169 : vector<8x128xf32>
      %cst_93 = arith.constant 5.000000e-01 : f32
      %172 = vector.broadcast %cst_93 : f32 to vector<8x128xf32>
      %173 = arith.mulf %172, %171 : vector<8x128xf32>
      %c0_94 = arith.constant 0 : index
      %c0_95 = arith.constant 0 : index
      %174 = vector.load %arg7[%c0_94, %c0_95] : memref<8x128xf32, #tpu.memory_space<vmem>>, vector<8x128xf32>
      %175 = arith.mulf %163, %174 : vector<8x128xf32>
      %176 = arith.mulf %155, %165 : vector<8x128xf32>
      %177 = arith.addf %175, %176 : vector<8x128xf32>
      %178 = math.tanh %177 : vector<8x128xf32>
      %179 = arith.mulf %173, %178 : vector<8x128xf32>
      %c0_96 = arith.constant 0 : index
      %c0_97 = arith.constant 0 : index
      %180 = vector.load %arg7[%c0_96, %c0_97] : memref<8x128xf32, #tpu.memory_space<vmem>>, vector<8x128xf32>
      tpu.vector_store %arg7[%c0_96, %c0_97], %177 {strides = array<i32>} : memref<8x128xf32, #tpu.memory_space<vmem>>, vector<8x128xf32>,
      %181 = arith.truncf %179 : vector<8x128xf32> to vector<8x128xbf16>
      %c0_98 = arith.constant 0 : index
      %c0_99 = arith.constant 0 : index
      %182 = vector.load %arg6[%c0_98, %c0_99] : memref<8x128xbf16, #tpu.memory_space<vmem>>, vector<8x128xbf16>
      tpu.vector_store %arg6[%c0_98, %c0_99], %181 {strides = array<i32>} : memref<8x128xbf16, #tpu.memory_space<vmem>>, vector<8x128xbf16>,
      %183 = vector.shape_cast %179 : vector<8x128xf32> to vector<8x1x128xf32>
      %c0_100 = arith.constant 0 : index
      %c3_101 = arith.constant 3 : index
      %c0_102 = arith.constant 0 : index
      %184 = vector.load %arg5[%c0_100, %c3_101, %c0_102] : memref<8x8x128xf32, #tpu.memory_space<vmem>>, vector<8x1x128xf32>
      tpu.vector_store %arg5[%c0_100, %c3_101, %c0_102], %183 {strides = array<i32>} : memref<8x8x128xf32, #tpu.memory_space<vmem>>, vector<8x1x128xf32>,
      %c4 = arith.constant 4 : index
      %c0_103 = arith.constant 0 : index
      %c0_104 = arith.constant 0 : index
      %185 = vector.load %arg2[%c4, %c0_103, %c0_104] : memref<8x8x512xbf16, #tpu.memory_space<vmem>>, vector<1x8x512xbf16>
      %186 = vector.shape_cast %185 : vector<1x8x512xbf16> to vector<8x512xbf16>
      %187 = arith.extf %186 : vector<8x512xbf16> to vector<8x512xf32>
      %c0_105 = arith.constant 0 : index
      %c0_106 = arith.constant 0 : index
      %188 = vector.load %arg6[%c0_105, %c0_106] : memref<8x128xbf16, #tpu.memory_space<vmem>>, vector<8x128xbf16>
      %c0_107 = arith.constant 0 : index
      %c0_108 = arith.constant 0 : index
      %189 = vector.load %arg3[%c0_107, %c0_108] : memref<128x512xbf16, #tpu.memory_space<vmem>>, vector<128x512xbf16>
      %cst_109 = arith.constant dense<0.000000e+00> : vector<8x512xf32>
      %190 = tpu.matmul %188, %189, %cst_109 {dimension_numbers = #tpu.dot_dimension_numbers<[1], [0], [0], [1], [0, 0, 1, 1], [], []>} : vector<8x128xbf16>, vector<128x512xbf16>, vector<8x512xf32> -> vector<8x512xf32>
      %191 = arith.addf %187, %190 : vector<8x512xf32>
      %192 = vector.extract_strided_slice %191 {offsets = [0, 0], sizes = [8, 128], strides = [1, 1]} : vector<8x512xf32> to vector<8x128xf32>
      %cst_110 = arith.constant 5.000000e-01 : f32
      %193 = vector.broadcast %cst_110 : f32 to vector<8x128xf32>
      %194 = arith.mulf %193, %192 : vector<8x128xf32>
      %195 = math.tanh %194 : vector<8x128xf32>
      %cst_111 = arith.constant 1.000000e+00 : f32
      %196 = vector.broadcast %cst_111 : f32 to vector<8x128xf32>
      %197 = arith.addf %196, %195 : vector<8x128xf32>
      %cst_112 = arith.constant 5.000000e-01 : f32
      %198 = vector.broadcast %cst_112 : f32 to vector<8x128xf32>
      %199 = arith.mulf %198, %197 : vector<8x128xf32>
      %200 = vector.extract_strided_slice %191 {offsets = [0, 128], sizes = [8, 128], strides = [1, 1]} : vector<8x512xf32> to vector<8x128xf32>
      %cst_113 = arith.constant 5.000000e-01 : f32
      %201 = vector.broadcast %cst_113 : f32 to vector<8x128xf32>
      %202 = arith.mulf %201, %200 : vector<8x128xf32>
      %203 = math.tanh %202 : vector<8x128xf32>
      %cst_114 = arith.constant 1.000000e+00 : f32
      %204 = vector.broadcast %cst_114 : f32 to vector<8x128xf32>
      %205 = arith.addf %204, %203 : vector<8x128xf32>
      %cst_115 = arith.constant 5.000000e-01 : f32
      %206 = vector.broadcast %cst_115 : f32 to vector<8x128xf32>
      %207 = arith.mulf %206, %205 : vector<8x128xf32>
      %208 = vector.extract_strided_slice %191 {offsets = [0, 256], sizes = [8, 128], strides = [1, 1]} : vector<8x512xf32> to vector<8x128xf32>
      %209 = math.tanh %208 : vector<8x128xf32>
      %210 = vector.extract_strided_slice %191 {offsets = [0, 384], sizes = [8, 128], strides = [1, 1]} : vector<8x512xf32> to vector<8x128xf32>
      %cst_116 = arith.constant 5.000000e-01 : f32
      %211 = vector.broadcast %cst_116 : f32 to vector<8x128xf32>
      %212 = arith.mulf %211, %210 : vector<8x128xf32>
      %213 = math.tanh %212 : vector<8x128xf32>
      %cst_117 = arith.constant 1.000000e+00 : f32
      %214 = vector.broadcast %cst_117 : f32 to vector<8x128xf32>
      %215 = arith.addf %214, %213 : vector<8x128xf32>
      %cst_118 = arith.constant 5.000000e-01 : f32
      %216 = vector.broadcast %cst_118 : f32 to vector<8x128xf32>
      %217 = arith.mulf %216, %215 : vector<8x128xf32>
      %c0_119 = arith.constant 0 : index
      %c0_120 = arith.constant 0 : index
      %218 = vector.load %arg7[%c0_119, %c0_120] : memref<8x128xf32, #tpu.memory_space<vmem>>, vector<8x128xf32>
      %219 = arith.mulf %207, %218 : vector<8x128xf32>
      %220 = arith.mulf %199, %209 : vector<8x128xf32>
      %221 = arith.addf %219, %220 : vector<8x128xf32>
      %222 = math.tanh %221 : vector<8x128xf32>
      %223 = arith.mulf %217, %222 : vector<8x128xf32>
      %c0_121 = arith.constant 0 : index
      %c0_122 = arith.constant 0 : index
      %224 = vector.load %arg7[%c0_121, %c0_122] : memref<8x128xf32, #tpu.memory_space<vmem>>, vector<8x128xf32>
      tpu.vector_store %arg7[%c0_121, %c0_122], %221 {strides = array<i32>} : memref<8x128xf32, #tpu.memory_space<vmem>>, vector<8x128xf32>,
      %225 = arith.truncf %223 : vector<8x128xf32> to vector<8x128xbf16>
      %c0_123 = arith.constant 0 : index
      %c0_124 = arith.constant 0 : index
      %226 = vector.load %arg6[%c0_123, %c0_124] : memref<8x128xbf16, #tpu.memory_space<vmem>>, vector<8x128xbf16>
      tpu.vector_store %arg6[%c0_123, %c0_124], %225 {strides = array<i32>} : memref<8x128xbf16, #tpu.memory_space<vmem>>, vector<8x128xbf16>,
      %227 = vector.shape_cast %223 : vector<8x128xf32> to vector<8x1x128xf32>
      %c0_125 = arith.constant 0 : index
      %c4_126 = arith.constant 4 : index
      %c0_127 = arith.constant 0 : index
      %228 = vector.load %arg5[%c0_125, %c4_126, %c0_127] : memref<8x8x128xf32, #tpu.memory_space<vmem>>, vector<8x1x128xf32>
      tpu.vector_store %arg5[%c0_125, %c4_126, %c0_127], %227 {strides = array<i32>} : memref<8x8x128xf32, #tpu.memory_space<vmem>>, vector<8x1x128xf32>,
      %c5 = arith.constant 5 : index
      %c0_128 = arith.constant 0 : index
      %c0_129 = arith.constant 0 : index
      %229 = vector.load %arg2[%c5, %c0_128, %c0_129] : memref<8x8x512xbf16, #tpu.memory_space<vmem>>, vector<1x8x512xbf16>
      %230 = vector.shape_cast %229 : vector<1x8x512xbf16> to vector<8x512xbf16>
      %231 = arith.extf %230 : vector<8x512xbf16> to vector<8x512xf32>
      %c0_130 = arith.constant 0 : index
      %c0_131 = arith.constant 0 : index
      %232 = vector.load %arg6[%c0_130, %c0_131] : memref<8x128xbf16, #tpu.memory_space<vmem>>, vector<8x128xbf16>
      %c0_132 = arith.constant 0 : index
      %c0_133 = arith.constant 0 : index
      %233 = vector.load %arg3[%c0_132, %c0_133] : memref<128x512xbf16, #tpu.memory_space<vmem>>, vector<128x512xbf16>
      %cst_134 = arith.constant dense<0.000000e+00> : vector<8x512xf32>
      %234 = tpu.matmul %232, %233, %cst_134 {dimension_numbers = #tpu.dot_dimension_numbers<[1], [0], [0], [1], [0, 0, 1, 1], [], []>} : vector<8x128xbf16>, vector<128x512xbf16>, vector<8x512xf32> -> vector<8x512xf32>
      %235 = arith.addf %231, %234 : vector<8x512xf32>
      %236 = vector.extract_strided_slice %235 {offsets = [0, 0], sizes = [8, 128], strides = [1, 1]} : vector<8x512xf32> to vector<8x128xf32>
      %cst_135 = arith.constant 5.000000e-01 : f32
      %237 = vector.broadcast %cst_135 : f32 to vector<8x128xf32>
      %238 = arith.mulf %237, %236 : vector<8x128xf32>
      %239 = math.tanh %238 : vector<8x128xf32>
      %cst_136 = arith.constant 1.000000e+00 : f32
      %240 = vector.broadcast %cst_136 : f32 to vector<8x128xf32>
      %241 = arith.addf %240, %239 : vector<8x128xf32>
      %cst_137 = arith.constant 5.000000e-01 : f32
      %242 = vector.broadcast %cst_137 : f32 to vector<8x128xf32>
      %243 = arith.mulf %242, %241 : vector<8x128xf32>
      %244 = vector.extract_strided_slice %235 {offsets = [0, 128], sizes = [8, 128], strides = [1, 1]} : vector<8x512xf32> to vector<8x128xf32>
      %cst_138 = arith.constant 5.000000e-01 : f32
      %245 = vector.broadcast %cst_138 : f32 to vector<8x128xf32>
      %246 = arith.mulf %245, %244 : vector<8x128xf32>
      %247 = math.tanh %246 : vector<8x128xf32>
      %cst_139 = arith.constant 1.000000e+00 : f32
      %248 = vector.broadcast %cst_139 : f32 to vector<8x128xf32>
      %249 = arith.addf %248, %247 : vector<8x128xf32>
      %cst_140 = arith.constant 5.000000e-01 : f32
      %250 = vector.broadcast %cst_140 : f32 to vector<8x128xf32>
      %251 = arith.mulf %250, %249 : vector<8x128xf32>
      %252 = vector.extract_strided_slice %235 {offsets = [0, 256], sizes = [8, 128], strides = [1, 1]} : vector<8x512xf32> to vector<8x128xf32>
      %253 = math.tanh %252 : vector<8x128xf32>
      %254 = vector.extract_strided_slice %235 {offsets = [0, 384], sizes = [8, 128], strides = [1, 1]} : vector<8x512xf32> to vector<8x128xf32>
      %cst_141 = arith.constant 5.000000e-01 : f32
      %255 = vector.broadcast %cst_141 : f32 to vector<8x128xf32>
      %256 = arith.mulf %255, %254 : vector<8x128xf32>
      %257 = math.tanh %256 : vector<8x128xf32>
      %cst_142 = arith.constant 1.000000e+00 : f32
      %258 = vector.broadcast %cst_142 : f32 to vector<8x128xf32>
      %259 = arith.addf %258, %257 : vector<8x128xf32>
      %cst_143 = arith.constant 5.000000e-01 : f32
      %260 = vector.broadcast %cst_143 : f32 to vector<8x128xf32>
      %261 = arith.mulf %260, %259 : vector<8x128xf32>
      %c0_144 = arith.constant 0 : index
      %c0_145 = arith.constant 0 : index
      %262 = vector.load %arg7[%c0_144, %c0_145] : memref<8x128xf32, #tpu.memory_space<vmem>>, vector<8x128xf32>
      %263 = arith.mulf %251, %262 : vector<8x128xf32>
      %264 = arith.mulf %243, %253 : vector<8x128xf32>
      %265 = arith.addf %263, %264 : vector<8x128xf32>
      %266 = math.tanh %265 : vector<8x128xf32>
      %267 = arith.mulf %261, %266 : vector<8x128xf32>
      %c0_146 = arith.constant 0 : index
      %c0_147 = arith.constant 0 : index
      %268 = vector.load %arg7[%c0_146, %c0_147] : memref<8x128xf32, #tpu.memory_space<vmem>>, vector<8x128xf32>
      tpu.vector_store %arg7[%c0_146, %c0_147], %265 {strides = array<i32>} : memref<8x128xf32, #tpu.memory_space<vmem>>, vector<8x128xf32>,
      %269 = arith.truncf %267 : vector<8x128xf32> to vector<8x128xbf16>
      %c0_148 = arith.constant 0 : index
      %c0_149 = arith.constant 0 : index
      %270 = vector.load %arg6[%c0_148, %c0_149] : memref<8x128xbf16, #tpu.memory_space<vmem>>, vector<8x128xbf16>
      tpu.vector_store %arg6[%c0_148, %c0_149], %269 {strides = array<i32>} : memref<8x128xbf16, #tpu.memory_space<vmem>>, vector<8x128xbf16>,
      %271 = vector.shape_cast %267 : vector<8x128xf32> to vector<8x1x128xf32>
      %c0_150 = arith.constant 0 : index
      %c5_151 = arith.constant 5 : index
      %c0_152 = arith.constant 0 : index
      %272 = vector.load %arg5[%c0_150, %c5_151, %c0_152] : memref<8x8x128xf32, #tpu.memory_space<vmem>>, vector<8x1x128xf32>
      tpu.vector_store %arg5[%c0_150, %c5_151, %c0_152], %271 {strides = array<i32>} : memref<8x8x128xf32, #tpu.memory_space<vmem>>, vector<8x1x128xf32>,
      %c6 = arith.constant 6 : index
      %c0_153 = arith.constant 0 : index
      %c0_154 = arith.constant 0 : index
      %273 = vector.load %arg2[%c6, %c0_153, %c0_154] : memref<8x8x512xbf16, #tpu.memory_space<vmem>>, vector<1x8x512xbf16>
      %274 = vector.shape_cast %273 : vector<1x8x512xbf16> to vector<8x512xbf16>
      %275 = arith.extf %274 : vector<8x512xbf16> to vector<8x512xf32>
      %c0_155 = arith.constant 0 : index
      %c0_156 = arith.constant 0 : index
      %276 = vector.load %arg6[%c0_155, %c0_156] : memref<8x128xbf16, #tpu.memory_space<vmem>>, vector<8x128xbf16>
      %c0_157 = arith.constant 0 : index
      %c0_158 = arith.constant 0 : index
      %277 = vector.load %arg3[%c0_157, %c0_158] : memref<128x512xbf16, #tpu.memory_space<vmem>>, vector<128x512xbf16>
      %cst_159 = arith.constant dense<0.000000e+00> : vector<8x512xf32>
      %278 = tpu.matmul %276, %277, %cst_159 {dimension_numbers = #tpu.dot_dimension_numbers<[1], [0], [0], [1], [0, 0, 1, 1], [], []>} : vector<8x128xbf16>, vector<128x512xbf16>, vector<8x512xf32> -> vector<8x512xf32>
      %279 = arith.addf %275, %278 : vector<8x512xf32>
      %280 = vector.extract_strided_slice %279 {offsets = [0, 0], sizes = [8, 128], strides = [1, 1]} : vector<8x512xf32> to vector<8x128xf32>
      %cst_160 = arith.constant 5.000000e-01 : f32
      %281 = vector.broadcast %cst_160 : f32 to vector<8x128xf32>
      %282 = arith.mulf %281, %280 : vector<8x128xf32>
      %283 = math.tanh %282 : vector<8x128xf32>
      %cst_161 = arith.constant 1.000000e+00 : f32
      %284 = vector.broadcast %cst_161 : f32 to vector<8x128xf32>
      %285 = arith.addf %284, %283 : vector<8x128xf32>
      %cst_162 = arith.constant 5.000000e-01 : f32
      %286 = vector.broadcast %cst_162 : f32 to vector<8x128xf32>
      %287 = arith.mulf %286, %285 : vector<8x128xf32>
      %288 = vector.extract_strided_slice %279 {offsets = [0, 128], sizes = [8, 128], strides = [1, 1]} : vector<8x512xf32> to vector<8x128xf32>
      %cst_163 = arith.constant 5.000000e-01 : f32
      %289 = vector.broadcast %cst_163 : f32 to vector<8x128xf32>
      %290 = arith.mulf %289, %288 : vector<8x128xf32>
      %291 = math.tanh %290 : vector<8x128xf32>
      %cst_164 = arith.constant 1.000000e+00 : f32
      %292 = vector.broadcast %cst_164 : f32 to vector<8x128xf32>
      %293 = arith.addf %292, %291 : vector<8x128xf32>
      %cst_165 = arith.constant 5.000000e-01 : f32
      %294 = vector.broadcast %cst_165 : f32 to vector<8x128xf32>
      %295 = arith.mulf %294, %293 : vector<8x128xf32>
      %296 = vector.extract_strided_slice %279 {offsets = [0, 256], sizes = [8, 128], strides = [1, 1]} : vector<8x512xf32> to vector<8x128xf32>
      %297 = math.tanh %296 : vector<8x128xf32>
      %298 = vector.extract_strided_slice %279 {offsets = [0, 384], sizes = [8, 128], strides = [1, 1]} : vector<8x512xf32> to vector<8x128xf32>
      %cst_166 = arith.constant 5.000000e-01 : f32
      %299 = vector.broadcast %cst_166 : f32 to vector<8x128xf32>
      %300 = arith.mulf %299, %298 : vector<8x128xf32>
      %301 = math.tanh %300 : vector<8x128xf32>
      %cst_167 = arith.constant 1.000000e+00 : f32
      %302 = vector.broadcast %cst_167 : f32 to vector<8x128xf32>
      %303 = arith.addf %302, %301 : vector<8x128xf32>
      %cst_168 = arith.constant 5.000000e-01 : f32
      %304 = vector.broadcast %cst_168 : f32 to vector<8x128xf32>
      %305 = arith.mulf %304, %303 : vector<8x128xf32>
      %c0_169 = arith.constant 0 : index
      %c0_170 = arith.constant 0 : index
      %306 = vector.load %arg7[%c0_169, %c0_170] : memref<8x128xf32, #tpu.memory_space<vmem>>, vector<8x128xf32>
      %307 = arith.mulf %295, %306 : vector<8x128xf32>
      %308 = arith.mulf %287, %297 : vector<8x128xf32>
      %309 = arith.addf %307, %308 : vector<8x128xf32>
      %310 = math.tanh %309 : vector<8x128xf32>
      %311 = arith.mulf %305, %310 : vector<8x128xf32>
      %c0_171 = arith.constant 0 : index
      %c0_172 = arith.constant 0 : index
      %312 = vector.load %arg7[%c0_171, %c0_172] : memref<8x128xf32, #tpu.memory_space<vmem>>, vector<8x128xf32>
      tpu.vector_store %arg7[%c0_171, %c0_172], %309 {strides = array<i32>} : memref<8x128xf32, #tpu.memory_space<vmem>>, vector<8x128xf32>,
      %313 = arith.truncf %311 : vector<8x128xf32> to vector<8x128xbf16>
      %c0_173 = arith.constant 0 : index
      %c0_174 = arith.constant 0 : index
      %314 = vector.load %arg6[%c0_173, %c0_174] : memref<8x128xbf16, #tpu.memory_space<vmem>>, vector<8x128xbf16>
      tpu.vector_store %arg6[%c0_173, %c0_174], %313 {strides = array<i32>} : memref<8x128xbf16, #tpu.memory_space<vmem>>, vector<8x128xbf16>,
      %315 = vector.shape_cast %311 : vector<8x128xf32> to vector<8x1x128xf32>
      %c0_175 = arith.constant 0 : index
      %c6_176 = arith.constant 6 : index
      %c0_177 = arith.constant 0 : index
      %316 = vector.load %arg5[%c0_175, %c6_176, %c0_177] : memref<8x8x128xf32, #tpu.memory_space<vmem>>, vector<8x1x128xf32>
      tpu.vector_store %arg5[%c0_175, %c6_176, %c0_177], %315 {strides = array<i32>} : memref<8x8x128xf32, #tpu.memory_space<vmem>>, vector<8x1x128xf32>,
      %c7 = arith.constant 7 : index
      %c0_178 = arith.constant 0 : index
      %c0_179 = arith.constant 0 : index
      %317 = vector.load %arg2[%c7, %c0_178, %c0_179] : memref<8x8x512xbf16, #tpu.memory_space<vmem>>, vector<1x8x512xbf16>
      %318 = vector.shape_cast %317 : vector<1x8x512xbf16> to vector<8x512xbf16>
      %319 = arith.extf %318 : vector<8x512xbf16> to vector<8x512xf32>
      %c0_180 = arith.constant 0 : index
      %c0_181 = arith.constant 0 : index
      %320 = vector.load %arg6[%c0_180, %c0_181] : memref<8x128xbf16, #tpu.memory_space<vmem>>, vector<8x128xbf16>
      %c0_182 = arith.constant 0 : index
      %c0_183 = arith.constant 0 : index
      %321 = vector.load %arg3[%c0_182, %c0_183] : memref<128x512xbf16, #tpu.memory_space<vmem>>, vector<128x512xbf16>
      %cst_184 = arith.constant dense<0.000000e+00> : vector<8x512xf32>
      %322 = tpu.matmul %320, %321, %cst_184 {dimension_numbers = #tpu.dot_dimension_numbers<[1], [0], [0], [1], [0, 0, 1, 1], [], []>} : vector<8x128xbf16>, vector<128x512xbf16>, vector<8x512xf32> -> vector<8x512xf32>
      %323 = arith.addf %319, %322 : vector<8x512xf32>
      %324 = vector.extract_strided_slice %323 {offsets = [0, 0], sizes = [8, 128], strides = [1, 1]} : vector<8x512xf32> to vector<8x128xf32>
      %cst_185 = arith.constant 5.000000e-01 : f32
      %325 = vector.broadcast %cst_185 : f32 to vector<8x128xf32>
      %326 = arith.mulf %325, %324 : vector<8x128xf32>
      %327 = math.tanh %326 : vector<8x128xf32>
      %cst_186 = arith.constant 1.000000e+00 : f32
      %328 = vector.broadcast %cst_186 : f32 to vector<8x128xf32>
      %329 = arith.addf %328, %327 : vector<8x128xf32>
      %cst_187 = arith.constant 5.000000e-01 : f32
      %330 = vector.broadcast %cst_187 : f32 to vector<8x128xf32>
      %331 = arith.mulf %330, %329 : vector<8x128xf32>
      %332 = vector.extract_strided_slice %323 {offsets = [0, 128], sizes = [8, 128], strides = [1, 1]} : vector<8x512xf32> to vector<8x128xf32>
      %cst_188 = arith.constant 5.000000e-01 : f32
      %333 = vector.broadcast %cst_188 : f32 to vector<8x128xf32>
      %334 = arith.mulf %333, %332 : vector<8x128xf32>
      %335 = math.tanh %334 : vector<8x128xf32>
      %cst_189 = arith.constant 1.000000e+00 : f32
      %336 = vector.broadcast %cst_189 : f32 to vector<8x128xf32>
      %337 = arith.addf %336, %335 : vector<8x128xf32>
      %cst_190 = arith.constant 5.000000e-01 : f32
      %338 = vector.broadcast %cst_190 : f32 to vector<8x128xf32>
      %339 = arith.mulf %338, %337 : vector<8x128xf32>
      %340 = vector.extract_strided_slice %323 {offsets = [0, 256], sizes = [8, 128], strides = [1, 1]} : vector<8x512xf32> to vector<8x128xf32>
      %341 = math.tanh %340 : vector<8x128xf32>
      %342 = vector.extract_strided_slice %323 {offsets = [0, 384], sizes = [8, 128], strides = [1, 1]} : vector<8x512xf32> to vector<8x128xf32>
      %cst_191 = arith.constant 5.000000e-01 : f32
      %343 = vector.broadcast %cst_191 : f32 to vector<8x128xf32>
      %344 = arith.mulf %343, %342 : vector<8x128xf32>
      %345 = math.tanh %344 : vector<8x128xf32>
      %cst_192 = arith.constant 1.000000e+00 : f32
      %346 = vector.broadcast %cst_192 : f32 to vector<8x128xf32>
      %347 = arith.addf %346, %345 : vector<8x128xf32>
      %cst_193 = arith.constant 5.000000e-01 : f32
      %348 = vector.broadcast %cst_193 : f32 to vector<8x128xf32>
      %349 = arith.mulf %348, %347 : vector<8x128xf32>
      %c0_194 = arith.constant 0 : index
      %c0_195 = arith.constant 0 : index
      %350 = vector.load %arg7[%c0_194, %c0_195] : memref<8x128xf32, #tpu.memory_space<vmem>>, vector<8x128xf32>
      %351 = arith.mulf %339, %350 : vector<8x128xf32>
      %352 = arith.mulf %331, %341 : vector<8x128xf32>
      %353 = arith.addf %351, %352 : vector<8x128xf32>
      %354 = math.tanh %353 : vector<8x128xf32>
      %355 = arith.mulf %349, %354 : vector<8x128xf32>
      %c0_196 = arith.constant 0 : index
      %c0_197 = arith.constant 0 : index
      %356 = vector.load %arg7[%c0_196, %c0_197] : memref<8x128xf32, #tpu.memory_space<vmem>>, vector<8x128xf32>
      tpu.vector_store %arg7[%c0_196, %c0_197], %353 {strides = array<i32>} : memref<8x128xf32, #tpu.memory_space<vmem>>, vector<8x128xf32>,
      %357 = arith.truncf %355 : vector<8x128xf32> to vector<8x128xbf16>
      %c0_198 = arith.constant 0 : index
      %c0_199 = arith.constant 0 : index
      %358 = vector.load %arg6[%c0_198, %c0_199] : memref<8x128xbf16, #tpu.memory_space<vmem>>, vector<8x128xbf16>
      tpu.vector_store %arg6[%c0_198, %c0_199], %357 {strides = array<i32>} : memref<8x128xbf16, #tpu.memory_space<vmem>>, vector<8x128xbf16>,
      %359 = vector.shape_cast %355 : vector<8x128xf32> to vector<8x1x128xf32>
      %c0_200 = arith.constant 0 : index
      %c7_201 = arith.constant 7 : index
      %c0_202 = arith.constant 0 : index
      %360 = vector.load %arg5[%c0_200, %c7_201, %c0_202] : memref<8x8x128xf32, #tpu.memory_space<vmem>>, vector<8x1x128xf32>
      tpu.vector_store %arg5[%c0_200, %c7_201, %c0_202], %359 {strides = array<i32>} : memref<8x8x128xf32, #tpu.memory_space<vmem>>, vector<8x1x128xf32>,
    } else {
    }
    %c1_i32 = arith.constant 1 : i32
    %6 = arith.cmpi eq, %arg0, %c1_i32 : i32
    %7 = arith.extui %6 : i1 to i32
    %c0_i32_3 = arith.constant 0 : i32
    %8 = arith.cmpi ne, %7, %c0_i32_3 : i32
    scf.if %8 {
      %c7 = arith.constant 7 : index
      %c0 = arith.constant 0 : index
      %c0_4 = arith.constant 0 : index
      %9 = vector.load %arg2[%c7, %c0, %c0_4] : memref<8x8x512xbf16, #tpu.memory_space<vmem>>, vector<1x8x512xbf16>
      %10 = vector.shape_cast %9 : vector<1x8x512xbf16> to vector<8x512xbf16>
      %11 = arith.extf %10 : vector<8x512xbf16> to vector<8x512xf32>
      %c0_5 = arith.constant 0 : index
      %c0_6 = arith.constant 0 : index
      %12 = vector.load %arg6[%c0_5, %c0_6] : memref<8x128xbf16, #tpu.memory_space<vmem>>, vector<8x128xbf16>
      %c0_7 = arith.constant 0 : index
      %c0_8 = arith.constant 0 : index
      %13 = vector.load %arg4[%c0_7, %c0_8] : memref<128x512xbf16, #tpu.memory_space<vmem>>, vector<128x512xbf16>
      %cst = arith.constant dense<0.000000e+00> : vector<8x512xf32>
      %14 = tpu.matmul %12, %13, %cst {dimension_numbers = #tpu.dot_dimension_numbers<[1], [0], [0], [1], [0, 0, 1, 1], [], []>} : vector<8x128xbf16>, vector<128x512xbf16>, vector<8x512xf32> -> vector<8x512xf32>
      %15 = arith.addf %11, %14 : vector<8x512xf32>
      %16 = vector.extract_strided_slice %15 {offsets = [0, 0], sizes = [8, 128], strides = [1, 1]} : vector<8x512xf32> to vector<8x128xf32>
      %cst_9 = arith.constant 5.000000e-01 : f32
      %17 = vector.broadcast %cst_9 : f32 to vector<8x128xf32>
      %18 = arith.mulf %17, %16 : vector<8x128xf32>
      %19 = math.tanh %18 : vector<8x128xf32>
      %cst_10 = arith.constant 1.000000e+00 : f32
      %20 = vector.broadcast %cst_10 : f32 to vector<8x128xf32>
      %21 = arith.addf %20, %19 : vector<8x128xf32>
      %cst_11 = arith.constant 5.000000e-01 : f32
      %22 = vector.broadcast %cst_11 : f32 to vector<8x128xf32>
      %23 = arith.mulf %22, %21 : vector<8x128xf32>
      %24 = vector.extract_strided_slice %15 {offsets = [0, 128], sizes = [8, 128], strides = [1, 1]} : vector<8x512xf32> to vector<8x128xf32>
      %cst_12 = arith.constant 5.000000e-01 : f32
      %25 = vector.broadcast %cst_12 : f32 to vector<8x128xf32>
      %26 = arith.mulf %25, %24 : vector<8x128xf32>
      %27 = math.tanh %26 : vector<8x128xf32>
      %cst_13 = arith.constant 1.000000e+00 : f32
      %28 = vector.broadcast %cst_13 : f32 to vector<8x128xf32>
      %29 = arith.addf %28, %27 : vector<8x128xf32>
      %cst_14 = arith.constant 5.000000e-01 : f32
      %30 = vector.broadcast %cst_14 : f32 to vector<8x128xf32>
      %31 = arith.mulf %30, %29 : vector<8x128xf32>
      %32 = vector.extract_strided_slice %15 {offsets = [0, 256], sizes = [8, 128], strides = [1, 1]} : vector<8x512xf32> to vector<8x128xf32>
      %33 = math.tanh %32 : vector<8x128xf32>
      %34 = vector.extract_strided_slice %15 {offsets = [0, 384], sizes = [8, 128], strides = [1, 1]} : vector<8x512xf32> to vector<8x128xf32>
      %cst_15 = arith.constant 5.000000e-01 : f32
      %35 = vector.broadcast %cst_15 : f32 to vector<8x128xf32>
      %36 = arith.mulf %35, %34 : vector<8x128xf32>
      %37 = math.tanh %36 : vector<8x128xf32>
      %cst_16 = arith.constant 1.000000e+00 : f32
      %38 = vector.broadcast %cst_16 : f32 to vector<8x128xf32>
      %39 = arith.addf %38, %37 : vector<8x128xf32>
      %cst_17 = arith.constant 5.000000e-01 : f32
      %40 = vector.broadcast %cst_17 : f32 to vector<8x128xf32>
      %41 = arith.mulf %40, %39 : vector<8x128xf32>
      %c0_18 = arith.constant 0 : index
      %c0_19 = arith.constant 0 : index
      %42 = vector.load %arg7[%c0_18, %c0_19] : memref<8x128xf32, #tpu.memory_space<vmem>>, vector<8x128xf32>
      %43 = arith.mulf %31, %42 : vector<8x128xf32>
      %44 = arith.mulf %23, %33 : vector<8x128xf32>
      %45 = arith.addf %43, %44 : vector<8x128xf32>
      %46 = math.tanh %45 : vector<8x128xf32>
      %47 = arith.mulf %41, %46 : vector<8x128xf32>
      %c0_20 = arith.constant 0 : index
      %c0_21 = arith.constant 0 : index
      %48 = vector.load %arg7[%c0_20, %c0_21] : memref<8x128xf32, #tpu.memory_space<vmem>>, vector<8x128xf32>
      tpu.vector_store %arg7[%c0_20, %c0_21], %45 {strides = array<i32>} : memref<8x128xf32, #tpu.memory_space<vmem>>, vector<8x128xf32>,
      %49 = arith.truncf %47 : vector<8x128xf32> to vector<8x128xbf16>
      %c0_22 = arith.constant 0 : index
      %c0_23 = arith.constant 0 : index
      %50 = vector.load %arg6[%c0_22, %c0_23] : memref<8x128xbf16, #tpu.memory_space<vmem>>, vector<8x128xbf16>
      tpu.vector_store %arg6[%c0_22, %c0_23], %49 {strides = array<i32>} : memref<8x128xbf16, #tpu.memory_space<vmem>>, vector<8x128xbf16>,
      %51 = vector.shape_cast %47 : vector<8x128xf32> to vector<8x1x128xf32>
      %c0_24 = arith.constant 0 : index
      %c7_25 = arith.constant 7 : index
      %c0_26 = arith.constant 0 : index
      %52 = vector.load %arg5[%c0_24, %c7_25, %c0_26] : memref<8x8x128xf32, #tpu.memory_space<vmem>>, vector<8x1x128xf32>
      tpu.vector_store %arg5[%c0_24, %c7_25, %c0_26], %51 {strides = array<i32>} : memref<8x8x128xf32, #tpu.memory_space<vmem>>, vector<8x1x128xf32>,
      %c6 = arith.constant 6 : index
      %c0_27 = arith.constant 0 : index
      %c0_28 = arith.constant 0 : index
      %53 = vector.load %arg2[%c6, %c0_27, %c0_28] : memref<8x8x512xbf16, #tpu.memory_space<vmem>>, vector<1x8x512xbf16>
      %54 = vector.shape_cast %53 : vector<1x8x512xbf16> to vector<8x512xbf16>
      %55 = arith.extf %54 : vector<8x512xbf16> to vector<8x512xf32>
      %c0_29 = arith.constant 0 : index
      %c0_30 = arith.constant 0 : index
      %56 = vector.load %arg6[%c0_29, %c0_30] : memref<8x128xbf16, #tpu.memory_space<vmem>>, vector<8x128xbf16>
      %c0_31 = arith.constant 0 : index
      %c0_32 = arith.constant 0 : index
      %57 = vector.load %arg4[%c0_31, %c0_32] : memref<128x512xbf16, #tpu.memory_space<vmem>>, vector<128x512xbf16>
      %cst_33 = arith.constant dense<0.000000e+00> : vector<8x512xf32>
      %58 = tpu.matmul %56, %57, %cst_33 {dimension_numbers = #tpu.dot_dimension_numbers<[1], [0], [0], [1], [0, 0, 1, 1], [], []>} : vector<8x128xbf16>, vector<128x512xbf16>, vector<8x512xf32> -> vector<8x512xf32>
      %59 = arith.addf %55, %58 : vector<8x512xf32>
      %60 = vector.extract_strided_slice %59 {offsets = [0, 0], sizes = [8, 128], strides = [1, 1]} : vector<8x512xf32> to vector<8x128xf32>
      %cst_34 = arith.constant 5.000000e-01 : f32
      %61 = vector.broadcast %cst_34 : f32 to vector<8x128xf32>
      %62 = arith.mulf %61, %60 : vector<8x128xf32>
      %63 = math.tanh %62 : vector<8x128xf32>
      %cst_35 = arith.constant 1.000000e+00 : f32
      %64 = vector.broadcast %cst_35 : f32 to vector<8x128xf32>
      %65 = arith.addf %64, %63 : vector<8x128xf32>
      %cst_36 = arith.constant 5.000000e-01 : f32
      %66 = vector.broadcast %cst_36 : f32 to vector<8x128xf32>
      %67 = arith.mulf %66, %65 : vector<8x128xf32>
      %68 = vector.extract_strided_slice %59 {offsets = [0, 128], sizes = [8, 128], strides = [1, 1]} : vector<8x512xf32> to vector<8x128xf32>
      %cst_37 = arith.constant 5.000000e-01 : f32
      %69 = vector.broadcast %cst_37 : f32 to vector<8x128xf32>
      %70 = arith.mulf %69, %68 : vector<8x128xf32>
      %71 = math.tanh %70 : vector<8x128xf32>
      %cst_38 = arith.constant 1.000000e+00 : f32
      %72 = vector.broadcast %cst_38 : f32 to vector<8x128xf32>
      %73 = arith.addf %72, %71 : vector<8x128xf32>
      %cst_39 = arith.constant 5.000000e-01 : f32
      %74 = vector.broadcast %cst_39 : f32 to vector<8x128xf32>
      %75 = arith.mulf %74, %73 : vector<8x128xf32>
      %76 = vector.extract_strided_slice %59 {offsets = [0, 256], sizes = [8, 128], strides = [1, 1]} : vector<8x512xf32> to vector<8x128xf32>
      %77 = math.tanh %76 : vector<8x128xf32>
      %78 = vector.extract_strided_slice %59 {offsets = [0, 384], sizes = [8, 128], strides = [1, 1]} : vector<8x512xf32> to vector<8x128xf32>
      %cst_40 = arith.constant 5.000000e-01 : f32
      %79 = vector.broadcast %cst_40 : f32 to vector<8x128xf32>
      %80 = arith.mulf %79, %78 : vector<8x128xf32>
      %81 = math.tanh %80 : vector<8x128xf32>
      %cst_41 = arith.constant 1.000000e+00 : f32
      %82 = vector.broadcast %cst_41 : f32 to vector<8x128xf32>
      %83 = arith.addf %82, %81 : vector<8x128xf32>
      %cst_42 = arith.constant 5.000000e-01 : f32
      %84 = vector.broadcast %cst_42 : f32 to vector<8x128xf32>
      %85 = arith.mulf %84, %83 : vector<8x128xf32>
      %c0_43 = arith.constant 0 : index
      %c0_44 = arith.constant 0 : index
      %86 = vector.load %arg7[%c0_43, %c0_44] : memref<8x128xf32, #tpu.memory_space<vmem>>, vector<8x128xf32>
      %87 = arith.mulf %75, %86 : vector<8x128xf32>
      %88 = arith.mulf %67, %77 : vector<8x128xf32>
      %89 = arith.addf %87, %88 : vector<8x128xf32>
      %90 = math.tanh %89 : vector<8x128xf32>
      %91 = arith.mulf %85, %90 : vector<8x128xf32>
      %c0_45 = arith.constant 0 : index
      %c0_46 = arith.constant 0 : index
      %92 = vector.load %arg7[%c0_45, %c0_46] : memref<8x128xf32, #tpu.memory_space<vmem>>, vector<8x128xf32>
      tpu.vector_store %arg7[%c0_45, %c0_46], %89 {strides = array<i32>} : memref<8x128xf32, #tpu.memory_space<vmem>>, vector<8x128xf32>,
      %93 = arith.truncf %91 : vector<8x128xf32> to vector<8x128xbf16>
      %c0_47 = arith.constant 0 : index
      %c0_48 = arith.constant 0 : index
      %94 = vector.load %arg6[%c0_47, %c0_48] : memref<8x128xbf16, #tpu.memory_space<vmem>>, vector<8x128xbf16>
      tpu.vector_store %arg6[%c0_47, %c0_48], %93 {strides = array<i32>} : memref<8x128xbf16, #tpu.memory_space<vmem>>, vector<8x128xbf16>,
      %95 = vector.shape_cast %91 : vector<8x128xf32> to vector<8x1x128xf32>
      %c0_49 = arith.constant 0 : index
      %c6_50 = arith.constant 6 : index
      %c0_51 = arith.constant 0 : index
      %96 = vector.load %arg5[%c0_49, %c6_50, %c0_51] : memref<8x8x128xf32, #tpu.memory_space<vmem>>, vector<8x1x128xf32>
      tpu.vector_store %arg5[%c0_49, %c6_50, %c0_51], %95 {strides = array<i32>} : memref<8x8x128xf32, #tpu.memory_space<vmem>>, vector<8x1x128xf32>,
      %c5 = arith.constant 5 : index
      %c0_52 = arith.constant 0 : index
      %c0_53 = arith.constant 0 : index
      %97 = vector.load %arg2[%c5, %c0_52, %c0_53] : memref<8x8x512xbf16, #tpu.memory_space<vmem>>, vector<1x8x512xbf16>
      %98 = vector.shape_cast %97 : vector<1x8x512xbf16> to vector<8x512xbf16>
      %99 = arith.extf %98 : vector<8x512xbf16> to vector<8x512xf32>
      %c0_54 = arith.constant 0 : index
      %c0_55 = arith.constant 0 : index
      %100 = vector.load %arg6[%c0_54, %c0_55] : memref<8x128xbf16, #tpu.memory_space<vmem>>, vector<8x128xbf16>
      %c0_56 = arith.constant 0 : index
      %c0_57 = arith.constant 0 : index
      %101 = vector.load %arg4[%c0_56, %c0_57] : memref<128x512xbf16, #tpu.memory_space<vmem>>, vector<128x512xbf16>
      %cst_58 = arith.constant dense<0.000000e+00> : vector<8x512xf32>
      %102 = tpu.matmul %100, %101, %cst_58 {dimension_numbers = #tpu.dot_dimension_numbers<[1], [0], [0], [1], [0, 0, 1, 1], [], []>} : vector<8x128xbf16>, vector<128x512xbf16>, vector<8x512xf32> -> vector<8x512xf32>
      %103 = arith.addf %99, %102 : vector<8x512xf32>
      %104 = vector.extract_strided_slice %103 {offsets = [0, 0], sizes = [8, 128], strides = [1, 1]} : vector<8x512xf32> to vector<8x128xf32>
      %cst_59 = arith.constant 5.000000e-01 : f32
      %105 = vector.broadcast %cst_59 : f32 to vector<8x128xf32>
      %106 = arith.mulf %105, %104 : vector<8x128xf32>
      %107 = math.tanh %106 : vector<8x128xf32>
      %cst_60 = arith.constant 1.000000e+00 : f32
      %108 = vector.broadcast %cst_60 : f32 to vector<8x128xf32>
      %109 = arith.addf %108, %107 : vector<8x128xf32>
      %cst_61 = arith.constant 5.000000e-01 : f32
      %110 = vector.broadcast %cst_61 : f32 to vector<8x128xf32>
      %111 = arith.mulf %110, %109 : vector<8x128xf32>
      %112 = vector.extract_strided_slice %103 {offsets = [0, 128], sizes = [8, 128], strides = [1, 1]} : vector<8x512xf32> to vector<8x128xf32>
      %cst_62 = arith.constant 5.000000e-01 : f32
      %113 = vector.broadcast %cst_62 : f32 to vector<8x128xf32>
      %114 = arith.mulf %113, %112 : vector<8x128xf32>
      %115 = math.tanh %114 : vector<8x128xf32>
      %cst_63 = arith.constant 1.000000e+00 : f32
      %116 = vector.broadcast %cst_63 : f32 to vector<8x128xf32>
      %117 = arith.addf %116, %115 : vector<8x128xf32>
      %cst_64 = arith.constant 5.000000e-01 : f32
      %118 = vector.broadcast %cst_64 : f32 to vector<8x128xf32>
      %119 = arith.mulf %118, %117 : vector<8x128xf32>
      %120 = vector.extract_strided_slice %103 {offsets = [0, 256], sizes = [8, 128], strides = [1, 1]} : vector<8x512xf32> to vector<8x128xf32>
      %121 = math.tanh %120 : vector<8x128xf32>
      %122 = vector.extract_strided_slice %103 {offsets = [0, 384], sizes = [8, 128], strides = [1, 1]} : vector<8x512xf32> to vector<8x128xf32>
      %cst_65 = arith.constant 5.000000e-01 : f32
      %123 = vector.broadcast %cst_65 : f32 to vector<8x128xf32>
      %124 = arith.mulf %123, %122 : vector<8x128xf32>
      %125 = math.tanh %124 : vector<8x128xf32>
      %cst_66 = arith.constant 1.000000e+00 : f32
      %126 = vector.broadcast %cst_66 : f32 to vector<8x128xf32>
      %127 = arith.addf %126, %125 : vector<8x128xf32>
      %cst_67 = arith.constant 5.000000e-01 : f32
      %128 = vector.broadcast %cst_67 : f32 to vector<8x128xf32>
      %129 = arith.mulf %128, %127 : vector<8x128xf32>
      %c0_68 = arith.constant 0 : index
      %c0_69 = arith.constant 0 : index
      %130 = vector.load %arg7[%c0_68, %c0_69] : memref<8x128xf32, #tpu.memory_space<vmem>>, vector<8x128xf32>
      %131 = arith.mulf %119, %130 : vector<8x128xf32>
      %132 = arith.mulf %111, %121 : vector<8x128xf32>
      %133 = arith.addf %131, %132 : vector<8x128xf32>
      %134 = math.tanh %133 : vector<8x128xf32>
      %135 = arith.mulf %129, %134 : vector<8x128xf32>
      %c0_70 = arith.constant 0 : index
      %c0_71 = arith.constant 0 : index
      %136 = vector.load %arg7[%c0_70, %c0_71] : memref<8x128xf32, #tpu.memory_space<vmem>>, vector<8x128xf32>
      tpu.vector_store %arg7[%c0_70, %c0_71], %133 {strides = array<i32>} : memref<8x128xf32, #tpu.memory_space<vmem>>, vector<8x128xf32>,
      %137 = arith.truncf %135 : vector<8x128xf32> to vector<8x128xbf16>
      %c0_72 = arith.constant 0 : index
      %c0_73 = arith.constant 0 : index
      %138 = vector.load %arg6[%c0_72, %c0_73] : memref<8x128xbf16, #tpu.memory_space<vmem>>, vector<8x128xbf16>
      tpu.vector_store %arg6[%c0_72, %c0_73], %137 {strides = array<i32>} : memref<8x128xbf16, #tpu.memory_space<vmem>>, vector<8x128xbf16>,
      %139 = vector.shape_cast %135 : vector<8x128xf32> to vector<8x1x128xf32>
      %c0_74 = arith.constant 0 : index
      %c5_75 = arith.constant 5 : index
      %c0_76 = arith.constant 0 : index
      %140 = vector.load %arg5[%c0_74, %c5_75, %c0_76] : memref<8x8x128xf32, #tpu.memory_space<vmem>>, vector<8x1x128xf32>
      tpu.vector_store %arg5[%c0_74, %c5_75, %c0_76], %139 {strides = array<i32>} : memref<8x8x128xf32, #tpu.memory_space<vmem>>, vector<8x1x128xf32>,
      %c4 = arith.constant 4 : index
      %c0_77 = arith.constant 0 : index
      %c0_78 = arith.constant 0 : index
      %141 = vector.load %arg2[%c4, %c0_77, %c0_78] : memref<8x8x512xbf16, #tpu.memory_space<vmem>>, vector<1x8x512xbf16>
      %142 = vector.shape_cast %141 : vector<1x8x512xbf16> to vector<8x512xbf16>
      %143 = arith.extf %142 : vector<8x512xbf16> to vector<8x512xf32>
      %c0_79 = arith.constant 0 : index
      %c0_80 = arith.constant 0 : index
      %144 = vector.load %arg6[%c0_79, %c0_80] : memref<8x128xbf16, #tpu.memory_space<vmem>>, vector<8x128xbf16>
      %c0_81 = arith.constant 0 : index
      %c0_82 = arith.constant 0 : index
      %145 = vector.load %arg4[%c0_81, %c0_82] : memref<128x512xbf16, #tpu.memory_space<vmem>>, vector<128x512xbf16>
      %cst_83 = arith.constant dense<0.000000e+00> : vector<8x512xf32>
      %146 = tpu.matmul %144, %145, %cst_83 {dimension_numbers = #tpu.dot_dimension_numbers<[1], [0], [0], [1], [0, 0, 1, 1], [], []>} : vector<8x128xbf16>, vector<128x512xbf16>, vector<8x512xf32> -> vector<8x512xf32>
      %147 = arith.addf %143, %146 : vector<8x512xf32>
      %148 = vector.extract_strided_slice %147 {offsets = [0, 0], sizes = [8, 128], strides = [1, 1]} : vector<8x512xf32> to vector<8x128xf32>
      %cst_84 = arith.constant 5.000000e-01 : f32
      %149 = vector.broadcast %cst_84 : f32 to vector<8x128xf32>
      %150 = arith.mulf %149, %148 : vector<8x128xf32>
      %151 = math.tanh %150 : vector<8x128xf32>
      %cst_85 = arith.constant 1.000000e+00 : f32
      %152 = vector.broadcast %cst_85 : f32 to vector<8x128xf32>
      %153 = arith.addf %152, %151 : vector<8x128xf32>
      %cst_86 = arith.constant 5.000000e-01 : f32
      %154 = vector.broadcast %cst_86 : f32 to vector<8x128xf32>
      %155 = arith.mulf %154, %153 : vector<8x128xf32>
      %156 = vector.extract_strided_slice %147 {offsets = [0, 128], sizes = [8, 128], strides = [1, 1]} : vector<8x512xf32> to vector<8x128xf32>
      %cst_87 = arith.constant 5.000000e-01 : f32
      %157 = vector.broadcast %cst_87 : f32 to vector<8x128xf32>
      %158 = arith.mulf %157, %156 : vector<8x128xf32>
      %159 = math.tanh %158 : vector<8x128xf32>
      %cst_88 = arith.constant 1.000000e+00 : f32
      %160 = vector.broadcast %cst_88 : f32 to vector<8x128xf32>
      %161 = arith.addf %160, %159 : vector<8x128xf32>
      %cst_89 = arith.constant 5.000000e-01 : f32
      %162 = vector.broadcast %cst_89 : f32 to vector<8x128xf32>
      %163 = arith.mulf %162, %161 : vector<8x128xf32>
      %164 = vector.extract_strided_slice %147 {offsets = [0, 256], sizes = [8, 128], strides = [1, 1]} : vector<8x512xf32> to vector<8x128xf32>
      %165 = math.tanh %164 : vector<8x128xf32>
      %166 = vector.extract_strided_slice %147 {offsets = [0, 384], sizes = [8, 128], strides = [1, 1]} : vector<8x512xf32> to vector<8x128xf32>
      %cst_90 = arith.constant 5.000000e-01 : f32
      %167 = vector.broadcast %cst_90 : f32 to vector<8x128xf32>
      %168 = arith.mulf %167, %166 : vector<8x128xf32>
      %169 = math.tanh %168 : vector<8x128xf32>
      %cst_91 = arith.constant 1.000000e+00 : f32
      %170 = vector.broadcast %cst_91 : f32 to vector<8x128xf32>
      %171 = arith.addf %170, %169 : vector<8x128xf32>
      %cst_92 = arith.constant 5.000000e-01 : f32
      %172 = vector.broadcast %cst_92 : f32 to vector<8x128xf32>
      %173 = arith.mulf %172, %171 : vector<8x128xf32>
      %c0_93 = arith.constant 0 : index
      %c0_94 = arith.constant 0 : index
      %174 = vector.load %arg7[%c0_93, %c0_94] : memref<8x128xf32, #tpu.memory_space<vmem>>, vector<8x128xf32>
      %175 = arith.mulf %163, %174 : vector<8x128xf32>
      %176 = arith.mulf %155, %165 : vector<8x128xf32>
      %177 = arith.addf %175, %176 : vector<8x128xf32>
      %178 = math.tanh %177 : vector<8x128xf32>
      %179 = arith.mulf %173, %178 : vector<8x128xf32>
      %c0_95 = arith.constant 0 : index
      %c0_96 = arith.constant 0 : index
      %180 = vector.load %arg7[%c0_95, %c0_96] : memref<8x128xf32, #tpu.memory_space<vmem>>, vector<8x128xf32>
      tpu.vector_store %arg7[%c0_95, %c0_96], %177 {strides = array<i32>} : memref<8x128xf32, #tpu.memory_space<vmem>>, vector<8x128xf32>,
      %181 = arith.truncf %179 : vector<8x128xf32> to vector<8x128xbf16>
      %c0_97 = arith.constant 0 : index
      %c0_98 = arith.constant 0 : index
      %182 = vector.load %arg6[%c0_97, %c0_98] : memref<8x128xbf16, #tpu.memory_space<vmem>>, vector<8x128xbf16>
      tpu.vector_store %arg6[%c0_97, %c0_98], %181 {strides = array<i32>} : memref<8x128xbf16, #tpu.memory_space<vmem>>, vector<8x128xbf16>,
      %183 = vector.shape_cast %179 : vector<8x128xf32> to vector<8x1x128xf32>
      %c0_99 = arith.constant 0 : index
      %c4_100 = arith.constant 4 : index
      %c0_101 = arith.constant 0 : index
      %184 = vector.load %arg5[%c0_99, %c4_100, %c0_101] : memref<8x8x128xf32, #tpu.memory_space<vmem>>, vector<8x1x128xf32>
      tpu.vector_store %arg5[%c0_99, %c4_100, %c0_101], %183 {strides = array<i32>} : memref<8x8x128xf32, #tpu.memory_space<vmem>>, vector<8x1x128xf32>,
      %c3 = arith.constant 3 : index
      %c0_102 = arith.constant 0 : index
      %c0_103 = arith.constant 0 : index
      %185 = vector.load %arg2[%c3, %c0_102, %c0_103] : memref<8x8x512xbf16, #tpu.memory_space<vmem>>, vector<1x8x512xbf16>
      %186 = vector.shape_cast %185 : vector<1x8x512xbf16> to vector<8x512xbf16>
      %187 = arith.extf %186 : vector<8x512xbf16> to vector<8x512xf32>
      %c0_104 = arith.constant 0 : index
      %c0_105 = arith.constant 0 : index
      %188 = vector.load %arg6[%c0_104, %c0_105] : memref<8x128xbf16, #tpu.memory_space<vmem>>, vector<8x128xbf16>
      %c0_106 = arith.constant 0 : index
      %c0_107 = arith.constant 0 : index
      %189 = vector.load %arg4[%c0_106, %c0_107] : memref<128x512xbf16, #tpu.memory_space<vmem>>, vector<128x512xbf16>
      %cst_108 = arith.constant dense<0.000000e+00> : vector<8x512xf32>
      %190 = tpu.matmul %188, %189, %cst_108 {dimension_numbers = #tpu.dot_dimension_numbers<[1], [0], [0], [1], [0, 0, 1, 1], [], []>} : vector<8x128xbf16>, vector<128x512xbf16>, vector<8x512xf32> -> vector<8x512xf32>
      %191 = arith.addf %187, %190 : vector<8x512xf32>
      %192 = vector.extract_strided_slice %191 {offsets = [0, 0], sizes = [8, 128], strides = [1, 1]} : vector<8x512xf32> to vector<8x128xf32>
      %cst_109 = arith.constant 5.000000e-01 : f32
      %193 = vector.broadcast %cst_109 : f32 to vector<8x128xf32>
      %194 = arith.mulf %193, %192 : vector<8x128xf32>
      %195 = math.tanh %194 : vector<8x128xf32>
      %cst_110 = arith.constant 1.000000e+00 : f32
      %196 = vector.broadcast %cst_110 : f32 to vector<8x128xf32>
      %197 = arith.addf %196, %195 : vector<8x128xf32>
      %cst_111 = arith.constant 5.000000e-01 : f32
      %198 = vector.broadcast %cst_111 : f32 to vector<8x128xf32>
      %199 = arith.mulf %198, %197 : vector<8x128xf32>
      %200 = vector.extract_strided_slice %191 {offsets = [0, 128], sizes = [8, 128], strides = [1, 1]} : vector<8x512xf32> to vector<8x128xf32>
      %cst_112 = arith.constant 5.000000e-01 : f32
      %201 = vector.broadcast %cst_112 : f32 to vector<8x128xf32>
      %202 = arith.mulf %201, %200 : vector<8x128xf32>
      %203 = math.tanh %202 : vector<8x128xf32>
      %cst_113 = arith.constant 1.000000e+00 : f32
      %204 = vector.broadcast %cst_113 : f32 to vector<8x128xf32>
      %205 = arith.addf %204, %203 : vector<8x128xf32>
      %cst_114 = arith.constant 5.000000e-01 : f32
      %206 = vector.broadcast %cst_114 : f32 to vector<8x128xf32>
      %207 = arith.mulf %206, %205 : vector<8x128xf32>
      %208 = vector.extract_strided_slice %191 {offsets = [0, 256], sizes = [8, 128], strides = [1, 1]} : vector<8x512xf32> to vector<8x128xf32>
      %209 = math.tanh %208 : vector<8x128xf32>
      %210 = vector.extract_strided_slice %191 {offsets = [0, 384], sizes = [8, 128], strides = [1, 1]} : vector<8x512xf32> to vector<8x128xf32>
      %cst_115 = arith.constant 5.000000e-01 : f32
      %211 = vector.broadcast %cst_115 : f32 to vector<8x128xf32>
      %212 = arith.mulf %211, %210 : vector<8x128xf32>
      %213 = math.tanh %212 : vector<8x128xf32>
      %cst_116 = arith.constant 1.000000e+00 : f32
      %214 = vector.broadcast %cst_116 : f32 to vector<8x128xf32>
      %215 = arith.addf %214, %213 : vector<8x128xf32>
      %cst_117 = arith.constant 5.000000e-01 : f32
      %216 = vector.broadcast %cst_117 : f32 to vector<8x128xf32>
      %217 = arith.mulf %216, %215 : vector<8x128xf32>
      %c0_118 = arith.constant 0 : index
      %c0_119 = arith.constant 0 : index
      %218 = vector.load %arg7[%c0_118, %c0_119] : memref<8x128xf32, #tpu.memory_space<vmem>>, vector<8x128xf32>
      %219 = arith.mulf %207, %218 : vector<8x128xf32>
      %220 = arith.mulf %199, %209 : vector<8x128xf32>
      %221 = arith.addf %219, %220 : vector<8x128xf32>
      %222 = math.tanh %221 : vector<8x128xf32>
      %223 = arith.mulf %217, %222 : vector<8x128xf32>
      %c0_120 = arith.constant 0 : index
      %c0_121 = arith.constant 0 : index
      %224 = vector.load %arg7[%c0_120, %c0_121] : memref<8x128xf32, #tpu.memory_space<vmem>>, vector<8x128xf32>
      tpu.vector_store %arg7[%c0_120, %c0_121], %221 {strides = array<i32>} : memref<8x128xf32, #tpu.memory_space<vmem>>, vector<8x128xf32>,
      %225 = arith.truncf %223 : vector<8x128xf32> to vector<8x128xbf16>
      %c0_122 = arith.constant 0 : index
      %c0_123 = arith.constant 0 : index
      %226 = vector.load %arg6[%c0_122, %c0_123] : memref<8x128xbf16, #tpu.memory_space<vmem>>, vector<8x128xbf16>
      tpu.vector_store %arg6[%c0_122, %c0_123], %225 {strides = array<i32>} : memref<8x128xbf16, #tpu.memory_space<vmem>>, vector<8x128xbf16>,
      %227 = vector.shape_cast %223 : vector<8x128xf32> to vector<8x1x128xf32>
      %c0_124 = arith.constant 0 : index
      %c3_125 = arith.constant 3 : index
      %c0_126 = arith.constant 0 : index
      %228 = vector.load %arg5[%c0_124, %c3_125, %c0_126] : memref<8x8x128xf32, #tpu.memory_space<vmem>>, vector<8x1x128xf32>
      tpu.vector_store %arg5[%c0_124, %c3_125, %c0_126], %227 {strides = array<i32>} : memref<8x8x128xf32, #tpu.memory_space<vmem>>, vector<8x1x128xf32>,
      %c2 = arith.constant 2 : index
      %c0_127 = arith.constant 0 : index
      %c0_128 = arith.constant 0 : index
      %229 = vector.load %arg2[%c2, %c0_127, %c0_128] : memref<8x8x512xbf16, #tpu.memory_space<vmem>>, vector<1x8x512xbf16>
      %230 = vector.shape_cast %229 : vector<1x8x512xbf16> to vector<8x512xbf16>
      %231 = arith.extf %230 : vector<8x512xbf16> to vector<8x512xf32>
      %c0_129 = arith.constant 0 : index
      %c0_130 = arith.constant 0 : index
      %232 = vector.load %arg6[%c0_129, %c0_130] : memref<8x128xbf16, #tpu.memory_space<vmem>>, vector<8x128xbf16>
      %c0_131 = arith.constant 0 : index
      %c0_132 = arith.constant 0 : index
      %233 = vector.load %arg4[%c0_131, %c0_132] : memref<128x512xbf16, #tpu.memory_space<vmem>>, vector<128x512xbf16>
      %cst_133 = arith.constant dense<0.000000e+00> : vector<8x512xf32>
      %234 = tpu.matmul %232, %233, %cst_133 {dimension_numbers = #tpu.dot_dimension_numbers<[1], [0], [0], [1], [0, 0, 1, 1], [], []>} : vector<8x128xbf16>, vector<128x512xbf16>, vector<8x512xf32> -> vector<8x512xf32>
      %235 = arith.addf %231, %234 : vector<8x512xf32>
      %236 = vector.extract_strided_slice %235 {offsets = [0, 0], sizes = [8, 128], strides = [1, 1]} : vector<8x512xf32> to vector<8x128xf32>
      %cst_134 = arith.constant 5.000000e-01 : f32
      %237 = vector.broadcast %cst_134 : f32 to vector<8x128xf32>
      %238 = arith.mulf %237, %236 : vector<8x128xf32>
      %239 = math.tanh %238 : vector<8x128xf32>
      %cst_135 = arith.constant 1.000000e+00 : f32
      %240 = vector.broadcast %cst_135 : f32 to vector<8x128xf32>
      %241 = arith.addf %240, %239 : vector<8x128xf32>
      %cst_136 = arith.constant 5.000000e-01 : f32
      %242 = vector.broadcast %cst_136 : f32 to vector<8x128xf32>
      %243 = arith.mulf %242, %241 : vector<8x128xf32>
      %244 = vector.extract_strided_slice %235 {offsets = [0, 128], sizes = [8, 128], strides = [1, 1]} : vector<8x512xf32> to vector<8x128xf32>
      %cst_137 = arith.constant 5.000000e-01 : f32
      %245 = vector.broadcast %cst_137 : f32 to vector<8x128xf32>
      %246 = arith.mulf %245, %244 : vector<8x128xf32>
      %247 = math.tanh %246 : vector<8x128xf32>
      %cst_138 = arith.constant 1.000000e+00 : f32
      %248 = vector.broadcast %cst_138 : f32 to vector<8x128xf32>
      %249 = arith.addf %248, %247 : vector<8x128xf32>
      %cst_139 = arith.constant 5.000000e-01 : f32
      %250 = vector.broadcast %cst_139 : f32 to vector<8x128xf32>
      %251 = arith.mulf %250, %249 : vector<8x128xf32>
      %252 = vector.extract_strided_slice %235 {offsets = [0, 256], sizes = [8, 128], strides = [1, 1]} : vector<8x512xf32> to vector<8x128xf32>
      %253 = math.tanh %252 : vector<8x128xf32>
      %254 = vector.extract_strided_slice %235 {offsets = [0, 384], sizes = [8, 128], strides = [1, 1]} : vector<8x512xf32> to vector<8x128xf32>
      %cst_140 = arith.constant 5.000000e-01 : f32
      %255 = vector.broadcast %cst_140 : f32 to vector<8x128xf32>
      %256 = arith.mulf %255, %254 : vector<8x128xf32>
      %257 = math.tanh %256 : vector<8x128xf32>
      %cst_141 = arith.constant 1.000000e+00 : f32
      %258 = vector.broadcast %cst_141 : f32 to vector<8x128xf32>
      %259 = arith.addf %258, %257 : vector<8x128xf32>
      %cst_142 = arith.constant 5.000000e-01 : f32
      %260 = vector.broadcast %cst_142 : f32 to vector<8x128xf32>
      %261 = arith.mulf %260, %259 : vector<8x128xf32>
      %c0_143 = arith.constant 0 : index
      %c0_144 = arith.constant 0 : index
      %262 = vector.load %arg7[%c0_143, %c0_144] : memref<8x128xf32, #tpu.memory_space<vmem>>, vector<8x128xf32>
      %263 = arith.mulf %251, %262 : vector<8x128xf32>
      %264 = arith.mulf %243, %253 : vector<8x128xf32>
      %265 = arith.addf %263, %264 : vector<8x128xf32>
      %266 = math.tanh %265 : vector<8x128xf32>
      %267 = arith.mulf %261, %266 : vector<8x128xf32>
      %c0_145 = arith.constant 0 : index
      %c0_146 = arith.constant 0 : index
      %268 = vector.load %arg7[%c0_145, %c0_146] : memref<8x128xf32, #tpu.memory_space<vmem>>, vector<8x128xf32>
      tpu.vector_store %arg7[%c0_145, %c0_146], %265 {strides = array<i32>} : memref<8x128xf32, #tpu.memory_space<vmem>>, vector<8x128xf32>,
      %269 = arith.truncf %267 : vector<8x128xf32> to vector<8x128xbf16>
      %c0_147 = arith.constant 0 : index
      %c0_148 = arith.constant 0 : index
      %270 = vector.load %arg6[%c0_147, %c0_148] : memref<8x128xbf16, #tpu.memory_space<vmem>>, vector<8x128xbf16>
      tpu.vector_store %arg6[%c0_147, %c0_148], %269 {strides = array<i32>} : memref<8x128xbf16, #tpu.memory_space<vmem>>, vector<8x128xbf16>,
      %271 = vector.shape_cast %267 : vector<8x128xf32> to vector<8x1x128xf32>
      %c0_149 = arith.constant 0 : index
      %c2_150 = arith.constant 2 : index
      %c0_151 = arith.constant 0 : index
      %272 = vector.load %arg5[%c0_149, %c2_150, %c0_151] : memref<8x8x128xf32, #tpu.memory_space<vmem>>, vector<8x1x128xf32>
      tpu.vector_store %arg5[%c0_149, %c2_150, %c0_151], %271 {strides = array<i32>} : memref<8x8x128xf32, #tpu.memory_space<vmem>>, vector<8x1x128xf32>,
      %c1 = arith.constant 1 : index
      %c0_152 = arith.constant 0 : index
      %c0_153 = arith.constant 0 : index
      %273 = vector.load %arg2[%c1, %c0_152, %c0_153] : memref<8x8x512xbf16, #tpu.memory_space<vmem>>, vector<1x8x512xbf16>
      %274 = vector.shape_cast %273 : vector<1x8x512xbf16> to vector<8x512xbf16>
      %275 = arith.extf %274 : vector<8x512xbf16> to vector<8x512xf32>
      %c0_154 = arith.constant 0 : index
      %c0_155 = arith.constant 0 : index
      %276 = vector.load %arg6[%c0_154, %c0_155] : memref<8x128xbf16, #tpu.memory_space<vmem>>, vector<8x128xbf16>
      %c0_156 = arith.constant 0 : index
      %c0_157 = arith.constant 0 : index
      %277 = vector.load %arg4[%c0_156, %c0_157] : memref<128x512xbf16, #tpu.memory_space<vmem>>, vector<128x512xbf16>
      %cst_158 = arith.constant dense<0.000000e+00> : vector<8x512xf32>
      %278 = tpu.matmul %276, %277, %cst_158 {dimension_numbers = #tpu.dot_dimension_numbers<[1], [0], [0], [1], [0, 0, 1, 1], [], []>} : vector<8x128xbf16>, vector<128x512xbf16>, vector<8x512xf32> -> vector<8x512xf32>
      %279 = arith.addf %275, %278 : vector<8x512xf32>
      %280 = vector.extract_strided_slice %279 {offsets = [0, 0], sizes = [8, 128], strides = [1, 1]} : vector<8x512xf32> to vector<8x128xf32>
      %cst_159 = arith.constant 5.000000e-01 : f32
      %281 = vector.broadcast %cst_159 : f32 to vector<8x128xf32>
      %282 = arith.mulf %281, %280 : vector<8x128xf32>
      %283 = math.tanh %282 : vector<8x128xf32>
      %cst_160 = arith.constant 1.000000e+00 : f32
      %284 = vector.broadcast %cst_160 : f32 to vector<8x128xf32>
      %285 = arith.addf %284, %283 : vector<8x128xf32>
      %cst_161 = arith.constant 5.000000e-01 : f32
      %286 = vector.broadcast %cst_161 : f32 to vector<8x128xf32>
      %287 = arith.mulf %286, %285 : vector<8x128xf32>
      %288 = vector.extract_strided_slice %279 {offsets = [0, 128], sizes = [8, 128], strides = [1, 1]} : vector<8x512xf32> to vector<8x128xf32>
      %cst_162 = arith.constant 5.000000e-01 : f32
      %289 = vector.broadcast %cst_162 : f32 to vector<8x128xf32>
      %290 = arith.mulf %289, %288 : vector<8x128xf32>
      %291 = math.tanh %290 : vector<8x128xf32>
      %cst_163 = arith.constant 1.000000e+00 : f32
      %292 = vector.broadcast %cst_163 : f32 to vector<8x128xf32>
      %293 = arith.addf %292, %291 : vector<8x128xf32>
      %cst_164 = arith.constant 5.000000e-01 : f32
      %294 = vector.broadcast %cst_164 : f32 to vector<8x128xf32>
      %295 = arith.mulf %294, %293 : vector<8x128xf32>
      %296 = vector.extract_strided_slice %279 {offsets = [0, 256], sizes = [8, 128], strides = [1, 1]} : vector<8x512xf32> to vector<8x128xf32>
      %297 = math.tanh %296 : vector<8x128xf32>
      %298 = vector.extract_strided_slice %279 {offsets = [0, 384], sizes = [8, 128], strides = [1, 1]} : vector<8x512xf32> to vector<8x128xf32>
      %cst_165 = arith.constant 5.000000e-01 : f32
      %299 = vector.broadcast %cst_165 : f32 to vector<8x128xf32>
      %300 = arith.mulf %299, %298 : vector<8x128xf32>
      %301 = math.tanh %300 : vector<8x128xf32>
      %cst_166 = arith.constant 1.000000e+00 : f32
      %302 = vector.broadcast %cst_166 : f32 to vector<8x128xf32>
      %303 = arith.addf %302, %301 : vector<8x128xf32>
      %cst_167 = arith.constant 5.000000e-01 : f32
      %304 = vector.broadcast %cst_167 : f32 to vector<8x128xf32>
      %305 = arith.mulf %304, %303 : vector<8x128xf32>
      %c0_168 = arith.constant 0 : index
      %c0_169 = arith.constant 0 : index
      %306 = vector.load %arg7[%c0_168, %c0_169] : memref<8x128xf32, #tpu.memory_space<vmem>>, vector<8x128xf32>
      %307 = arith.mulf %295, %306 : vector<8x128xf32>
      %308 = arith.mulf %287, %297 : vector<8x128xf32>
      %309 = arith.addf %307, %308 : vector<8x128xf32>
      %310 = math.tanh %309 : vector<8x128xf32>
      %311 = arith.mulf %305, %310 : vector<8x128xf32>
      %c0_170 = arith.constant 0 : index
      %c0_171 = arith.constant 0 : index
      %312 = vector.load %arg7[%c0_170, %c0_171] : memref<8x128xf32, #tpu.memory_space<vmem>>, vector<8x128xf32>
      tpu.vector_store %arg7[%c0_170, %c0_171], %309 {strides = array<i32>} : memref<8x128xf32, #tpu.memory_space<vmem>>, vector<8x128xf32>,
      %313 = arith.truncf %311 : vector<8x128xf32> to vector<8x128xbf16>
      %c0_172 = arith.constant 0 : index
      %c0_173 = arith.constant 0 : index
      %314 = vector.load %arg6[%c0_172, %c0_173] : memref<8x128xbf16, #tpu.memory_space<vmem>>, vector<8x128xbf16>
      tpu.vector_store %arg6[%c0_172, %c0_173], %313 {strides = array<i32>} : memref<8x128xbf16, #tpu.memory_space<vmem>>, vector<8x128xbf16>,
      %315 = vector.shape_cast %311 : vector<8x128xf32> to vector<8x1x128xf32>
      %c0_174 = arith.constant 0 : index
      %c1_175 = arith.constant 1 : index
      %c0_176 = arith.constant 0 : index
      %316 = vector.load %arg5[%c0_174, %c1_175, %c0_176] : memref<8x8x128xf32, #tpu.memory_space<vmem>>, vector<8x1x128xf32>
      tpu.vector_store %arg5[%c0_174, %c1_175, %c0_176], %315 {strides = array<i32>} : memref<8x8x128xf32, #tpu.memory_space<vmem>>, vector<8x1x128xf32>,
      %c0_177 = arith.constant 0 : index
      %c0_178 = arith.constant 0 : index
      %c0_179 = arith.constant 0 : index
      %317 = vector.load %arg2[%c0_177, %c0_178, %c0_179] : memref<8x8x512xbf16, #tpu.memory_space<vmem>>, vector<1x8x512xbf16>
      %318 = vector.shape_cast %317 : vector<1x8x512xbf16> to vector<8x512xbf16>
      %319 = arith.extf %318 : vector<8x512xbf16> to vector<8x512xf32>
      %c0_180 = arith.constant 0 : index
      %c0_181 = arith.constant 0 : index
      %320 = vector.load %arg6[%c0_180, %c0_181] : memref<8x128xbf16, #tpu.memory_space<vmem>>, vector<8x128xbf16>
      %c0_182 = arith.constant 0 : index
      %c0_183 = arith.constant 0 : index
      %321 = vector.load %arg4[%c0_182, %c0_183] : memref<128x512xbf16, #tpu.memory_space<vmem>>, vector<128x512xbf16>
      %cst_184 = arith.constant dense<0.000000e+00> : vector<8x512xf32>
      %322 = tpu.matmul %320, %321, %cst_184 {dimension_numbers = #tpu.dot_dimension_numbers<[1], [0], [0], [1], [0, 0, 1, 1], [], []>} : vector<8x128xbf16>, vector<128x512xbf16>, vector<8x512xf32> -> vector<8x512xf32>
      %323 = arith.addf %319, %322 : vector<8x512xf32>
      %324 = vector.extract_strided_slice %323 {offsets = [0, 0], sizes = [8, 128], strides = [1, 1]} : vector<8x512xf32> to vector<8x128xf32>
      %cst_185 = arith.constant 5.000000e-01 : f32
      %325 = vector.broadcast %cst_185 : f32 to vector<8x128xf32>
      %326 = arith.mulf %325, %324 : vector<8x128xf32>
      %327 = math.tanh %326 : vector<8x128xf32>
      %cst_186 = arith.constant 1.000000e+00 : f32
      %328 = vector.broadcast %cst_186 : f32 to vector<8x128xf32>
      %329 = arith.addf %328, %327 : vector<8x128xf32>
      %cst_187 = arith.constant 5.000000e-01 : f32
      %330 = vector.broadcast %cst_187 : f32 to vector<8x128xf32>
      %331 = arith.mulf %330, %329 : vector<8x128xf32>
      %332 = vector.extract_strided_slice %323 {offsets = [0, 128], sizes = [8, 128], strides = [1, 1]} : vector<8x512xf32> to vector<8x128xf32>
      %cst_188 = arith.constant 5.000000e-01 : f32
      %333 = vector.broadcast %cst_188 : f32 to vector<8x128xf32>
      %334 = arith.mulf %333, %332 : vector<8x128xf32>
      %335 = math.tanh %334 : vector<8x128xf32>
      %cst_189 = arith.constant 1.000000e+00 : f32
      %336 = vector.broadcast %cst_189 : f32 to vector<8x128xf32>
      %337 = arith.addf %336, %335 : vector<8x128xf32>
      %cst_190 = arith.constant 5.000000e-01 : f32
      %338 = vector.broadcast %cst_190 : f32 to vector<8x128xf32>
      %339 = arith.mulf %338, %337 : vector<8x128xf32>
      %340 = vector.extract_strided_slice %323 {offsets = [0, 256], sizes = [8, 128], strides = [1, 1]} : vector<8x512xf32> to vector<8x128xf32>
      %341 = math.tanh %340 : vector<8x128xf32>
      %342 = vector.extract_strided_slice %323 {offsets = [0, 384], sizes = [8, 128], strides = [1, 1]} : vector<8x512xf32> to vector<8x128xf32>
      %cst_191 = arith.constant 5.000000e-01 : f32
      %343 = vector.broadcast %cst_191 : f32 to vector<8x128xf32>
      %344 = arith.mulf %343, %342 : vector<8x128xf32>
      %345 = math.tanh %344 : vector<8x128xf32>
      %cst_192 = arith.constant 1.000000e+00 : f32
      %346 = vector.broadcast %cst_192 : f32 to vector<8x128xf32>
      %347 = arith.addf %346, %345 : vector<8x128xf32>
      %cst_193 = arith.constant 5.000000e-01 : f32
      %348 = vector.broadcast %cst_193 : f32 to vector<8x128xf32>
      %349 = arith.mulf %348, %347 : vector<8x128xf32>
      %c0_194 = arith.constant 0 : index
      %c0_195 = arith.constant 0 : index
      %350 = vector.load %arg7[%c0_194, %c0_195] : memref<8x128xf32, #tpu.memory_space<vmem>>, vector<8x128xf32>
      %351 = arith.mulf %339, %350 : vector<8x128xf32>
      %352 = arith.mulf %331, %341 : vector<8x128xf32>
      %353 = arith.addf %351, %352 : vector<8x128xf32>
      %354 = math.tanh %353 : vector<8x128xf32>
      %355 = arith.mulf %349, %354 : vector<8x128xf32>
      %c0_196 = arith.constant 0 : index
      %c0_197 = arith.constant 0 : index
      %356 = vector.load %arg7[%c0_196, %c0_197] : memref<8x128xf32, #tpu.memory_space<vmem>>, vector<8x128xf32>
      tpu.vector_store %arg7[%c0_196, %c0_197], %353 {strides = array<i32>} : memref<8x128xf32, #tpu.memory_space<vmem>>, vector<8x128xf32>,
      %357 = arith.truncf %355 : vector<8x128xf32> to vector<8x128xbf16>
      %c0_198 = arith.constant 0 : index
      %c0_199 = arith.constant 0 : index
      %358 = vector.load %arg6[%c0_198, %c0_199] : memref<8x128xbf16, #tpu.memory_space<vmem>>, vector<8x128xbf16>
      tpu.vector_store %arg6[%c0_198, %c0_199], %357 {strides = array<i32>} : memref<8x128xbf16, #tpu.memory_space<vmem>>, vector<8x128xbf16>,
      %359 = vector.shape_cast %355 : vector<8x128xf32> to vector<8x1x128xf32>
      %c0_200 = arith.constant 0 : index
      %c0_201 = arith.constant 0 : index
      %c0_202 = arith.constant 0 : index
      %360 = vector.load %arg5[%c0_200, %c0_201, %c0_202] : memref<8x8x128xf32, #tpu.memory_space<vmem>>, vector<8x1x128xf32>
      tpu.vector_store %arg5[%c0_200, %c0_201, %c0_202], %359 {strides = array<i32>} : memref<8x8x128xf32, #tpu.memory_space<vmem>>, vector<8x1x128xf32>,
    } else {
    }
    return
  }
  func.func @transform_0(%arg0: i32, %arg1: i32) -> (i32, i32, i32) {
    %c2_i32 = arith.constant 2 : i32
    %0 = arith.muli %c2_i32, %arg1 : i32
    %c0_i32 = arith.constant 0 : i32
    %1 = arith.subi %c0_i32, %0 : i32
    %2 = arith.muli %arg0, %1 : i32
    %3 = arith.addi %arg1, %2 : i32
    %c0_i32_0 = arith.constant 0 : i32
    %c0_i32_1 = arith.constant 0 : i32
    return %3, %c0_i32_0, %arg0 : i32, i32, i32
  }
  func.func @transform_1(%arg0: i32, %arg1: i32) -> (i32, i32) {
    %c0_i32 = arith.constant 0 : i32
    %c0_i32_0 = arith.constant 0 : i32
    %c0_i32_1 = arith.constant 0 : i32
    return %c0_i32, %c0_i32_0 : i32, i32
  }
  func.func @transform_2(%arg0: i32, %arg1: i32) -> (i32, i32) {
    %c0_i32 = arith.constant 0 : i32
    %c0_i32_0 = arith.constant 0 : i32
    %c0_i32_1 = arith.constant 0 : i32
    return %c0_i32, %c0_i32_0 : i32, i32
  }
  func.func @transform_3(%arg0: i32, %arg1: i32) -> (i32, i32, i32) {
    %c2_i32 = arith.constant 2 : i32
    %0 = arith.muli %c2_i32, %arg1 : i32
    %c0_i32 = arith.constant 0 : i32
    %1 = arith.subi %c0_i32, %0 : i32
    %2 = arith.muli %arg0, %1 : i32
    %3 = arith.addi %arg1, %2 : i32
    %c0_i32_0 = arith.constant 0 : i32
    %c0_i32_1 = arith.constant 0 : i32
    return %c0_i32_0, %3, %arg0 : i32, i32, i32
  }
}

</mosaic_0001>

<llo_original>
// kernel: bilstm_forward.2
$region0: #{bilstm_forward.2}
  #allocation0 [shape = 'u32[]', space=smem, size = 0x4, offset = 0x4, fixed_abs, tag = 'smem constant byte address 0x4 - core index']
  #allocation1 [shape = 'u32[144,128]{1,0:T(1,128)}', space=vmem, size = 0x12000, scoped, tag = 'internal scratch']
  %s0 = inlined_call_operand.vmem [shape: bf16[64,64], index: 0, kind: input, shape index: {}]
  %s1 = inlined_call_operand.vmem [shape: bf16[64,1024], index: 1, kind: input, shape index: {}]
  %s2 = inlined_call_operand.vmem [shape: f32[1,1024], index: 2, kind: input, shape index: {}]
  %s3 = inlined_call_operand.vmem [shape: bf16[64,1024], index: 3, kind: output, shape index: {}]
  %s4 = sld [smem:[#allocation0]]
  $region22: #{bilstm_forward.2} parent=0
    _
  %s6 = ssub.s32 1, %s4
  %s7 = scalar_select 0, %s6, %s4
  // Predicated region
  $region2: #{bilstm_forward.2} parent=0 // pred_check
    _
  $region3: #{bilstm_forward.2} parent=0 // pred_check_branch
    %9 = sbr.rel (0) target = $region5
  $region4: #{bilstm_forward.2} parent=0 // pred_region
    _
  $region5: #{bilstm_forward.2} parent=0 // pred_fallthru
    _
  // Predicated region
  $region6: #{bilstm_forward.2} parent=0 // pred_check
    _
  $region7: #{bilstm_forward.2} parent=0 // pred_check_branch
    %11 = sbr.rel (0) target = $region9
  $region8: #{bilstm_forward.2} parent=0 // pred_region
    _
  $region9: #{bilstm_forward.2} parent=0 // pred_fallthru
    _
  // Predicated region
  $region10: #{bilstm_forward.2} parent=0 // pred_check
    _
  $region11: #{bilstm_forward.2} parent=0 // pred_check_branch
    %13 = sbr.rel (0) target = $region13
  $region12: #{bilstm_forward.2} parent=0 // pred_region
    _
  $region13: #{bilstm_forward.2} parent=0 // pred_fallthru
    _
  %v15 = vld [vmem:[%s0] sm:$0xf]
  %v16 = vld [vmem:[%s0 + $0x4] sm:$0xf]
  %v17 = vld [vmem:[%s0 + $0x8] sm:$0xf]
  %v18 = vld [vmem:[%s0 + $0xc] sm:$0xf]
  %v19 = vld [vmem:[%s0 + $0x10] sm:$0xf]
  %v20 = vld [vmem:[%s0 + $0x14] sm:$0xf]
  %v21 = vld [vmem:[%s0 + $0x18] sm:$0xf]
  %v22 = vld [vmem:[%s0 + $0x1c] sm:$0xf]
  %v23 = vld [vmem:[%s1] sm:$0xff]
  %v24 = vld [vmem:[%s1 + $0x8] sm:$0xff]
  %v25 = vld [vmem:[%s1 + $0x10] sm:$0xff]
  %v26 = vld [vmem:[%s1 + $0x18] sm:$0xff]
  %v27 = vld [vmem:[%s1 + $0x20] sm:$0xff]
  %v28 = vld [vmem:[%s1 + $0x28] sm:$0xff]
  %v29 = vld [vmem:[%s1 + $0x30] sm:$0xff]
  %v30 = vld [vmem:[%s1 + $0x38] sm:$0xff]
  %v31 = vld [vmem:[%s1 + $0x40] sm:$0xff]
  %v32 = vld [vmem:[%s1 + $0x48] sm:$0xff]
  %v33 = vld [vmem:[%s1 + $0x50] sm:$0xff]
  %v34 = vld [vmem:[%s1 + $0x58] sm:$0xff]
  %v35 = vld [vmem:[%s1 + $0x60] sm:$0xff]
  %v36 = vld [vmem:[%s1 + $0x68] sm:$0xff]
  %v37 = vld [vmem:[%s1 + $0x70] sm:$0xff]
  %v38 = vld [vmem:[%s1 + $0x78] sm:$0xff]
  %v39 = vld [vmem:[%s1 + $0x80] sm:$0xff]
  %v40 = vld [vmem:[%s1 + $0x88] sm:$0xff]
  %v41 = vld [vmem:[%s1 + $0x90] sm:$0xff]
  %v42 = vld [vmem:[%s1 + $0x98] sm:$0xff]
  %v43 = vld [vmem:[%s1 + $0xa0] sm:$0xff]
  %v44 = vld [vmem:[%s1 + $0xa8] sm:$0xff]
  %v45 = vld [vmem:[%s1 + $0xb0] sm:$0xff]
  %v46 = vld [vmem:[%s1 + $0xb8] sm:$0xff]
  %v47 = vld [vmem:[%s1 + $0xc0] sm:$0xff]
  %v48 = vld [vmem:[%s1 + $0xc8] sm:$0xff]
  %v49 = vld [vmem:[%s1 + $0xd0] sm:$0xff]
  %v50 = vld [vmem:[%s1 + $0xd8] sm:$0xff]
  %v51 = vld [vmem:[%s1 + $0xe0] sm:$0xff]
  %v52 = vld [vmem:[%s1 + $0xe8] sm:$0xff]
  %v53 = vld [vmem:[%s1 + $0xf0] sm:$0xff]
  %v54 = vld [vmem:[%s1 + $0xf8] sm:$0xff]
  %v55 = vld [vmem:[%s2] sm:$0xff]
  %v57 = vlaneseq
  %v58 = vshrl.u32 %v57, 7
  %v59 = vsub.s32 0, %v58
  %v60 = vrot.slane %v55, %v59
  %v61 = vlaneseq
  %v62 = vshrl.u32 %v61, 7
  %v63 = vsub.s32 1, %v62
  %v64 = vrot.slane %v55, %v63
  %v65 = vlaneseq
  %v66 = vshrl.u32 %v65, 7
  %v67 = vsub.s32 2, %v66
  %v68 = vrot.slane %v55, %v67
  %v69 = vlaneseq
  %v70 = vshrl.u32 %v69, 7
  %v71 = vsub.s32 3, %v70
  %v72 = vrot.slane %v55, %v71
  %v73 = vlaneseq
  %v74 = vshrl.u32 %v73, 7
  %v75 = vsub.s32 4, %v74
  %v76 = vrot.slane %v55, %v75
  %v77 = vlaneseq
  %v78 = vshrl.u32 %v77, 7
  %v79 = vsub.s32 5, %v78
  %v80 = vrot.slane %v55, %v79
  %v81 = vlaneseq
  %v82 = vshrl.u32 %v81, 7
  %v83 = vsub.s32 6, %v82
  %v84 = vrot.slane %v55, %v83
  %v85 = vlaneseq
  %v86 = vshrl.u32 %v85, 7
  %v87 = vsub.s32 7, %v86
  %v88 = vrot.slane %v55, %v87
  %v105 = vunpack.c.l.b16 %v15
  %v106 = vunpack.c.l.b16 %v16
  %v107 = vunpack.c.l.b16 %v17
  %v108 = vunpack.c.l.b16 %v18
  %v109 = vunpack.c.l.b16 %v19
  %v110 = vunpack.c.l.b16 %v20
  %v111 = vunpack.c.l.b16 %v21
  %v112 = vunpack.c.l.b16 %v22
  %v113 = vpack.c.b16 %v106, %v105
  %v114 = vpack.c.b16 %v108, %v107
  %v115 = vpack.c.b16 %v110, %v109
  %v116 = vpack.c.b16 %v112, %v111
  %v149 = vunpack.c.l.b16 %v23
  %v150 = vunpack.c.h.b16 %v23
  %v151 = vunpack.c.l.b16 %v24
  %v152 = vunpack.c.h.b16 %v24
  %v153 = vunpack.c.l.b16 %v25
  %v154 = vunpack.c.h.b16 %v25
  %v155 = vunpack.c.l.b16 %v26
  %v156 = vunpack.c.h.b16 %v26
  %v157 = vunpack.c.l.b16 %v27
  %v158 = vunpack.c.h.b16 %v27
  %v159 = vunpack.c.l.b16 %v28
  %v160 = vunpack.c.h.b16 %v28
  %v161 = vunpack.c.l.b16 %v29
  %v162 = vunpack.c.h.b16 %v29
  %v163 = vunpack.c.l.b16 %v30
  %v164 = vunpack.c.h.b16 %v30
  %v165 = vunpack.c.l.b16 %v31
  %v166 = vunpack.c.h.b16 %v31
  %v167 = vunpack.c.l.b16 %v32
  %v168 = vunpack.c.h.b16 %v32
  %v169 = vunpack.c.l.b16 %v33
  %v170 = vunpack.c.h.b16 %v33
  %v171 = vunpack.c.l.b16 %v34
  %v172 = vunpack.c.h.b16 %v34
  %v173 = vunpack.c.l.b16 %v35
  %v174 = vunpack.c.h.b16 %v35
  %v175 = vunpack.c.l.b16 %v36
  %v176 = vunpack.c.h.b16 %v36
  %v177 = vunpack.c.l.b16 %v37
  %v178 = vunpack.c.h.b16 %v37
  %v179 = vunpack.c.l.b16 %v38
  %v180 = vunpack.c.h.b16 %v38
  %v181 = vunpack.c.l.b16 %v39
  %v182 = vunpack.c.h.b16 %v39
  %v183 = vunpack.c.l.b16 %v40
  %v184 = vunpack.c.h.b16 %v40
  %v185 = vunpack.c.l.b16 %v41
  %v186 = vunpack.c.h.b16 %v41
  %v187 = vunpack.c.l.b16 %v42
  %v188 = vunpack.c.h.b16 %v42
  %v189 = vunpack.c.l.b16 %v43
  %v190 = vunpack.c.h.b16 %v43
  %v191 = vunpack.c.l.b16 %v44
  %v192 = vunpack.c.h.b16 %v44
  %v193 = vunpack.c.l.b16 %v45
  %v194 = vunpack.c.h.b16 %v45
  %v195 = vunpack.c.l.b16 %v46
  %v196 = vunpack.c.h.b16 %v46
  %v197 = vunpack.c.l.b16 %v47
  %v198 = vunpack.c.h.b16 %v47
  %v199 = vunpack.c.l.b16 %v48
  %v200 = vunpack.c.h.b16 %v48
  %v201 = vunpack.c.l.b16 %v49
  %v202 = vunpack.c.h.b16 %v49
  %v203 = vunpack.c.l.b16 %v50
  %v204 = vunpack.c.h.b16 %v50
  %v205 = vunpack.c.l.b16 %v51
  %v206 = vunpack.c.h.b16 %v51
  %v207 = vunpack.c.l.b16 %v52
  %v208 = vunpack.c.h.b16 %v52
  %v209 = vunpack.c.l.b16 %v53
  %v210 = vunpack.c.h.b16 %v53
  %v211 = vunpack.c.l.b16 %v54
  %v212 = vunpack.c.h.b16 %v54
  %v213 = vpack.c.b16 %v157, %v149
  %v214 = vpack.c.b16 %v158, %v150
  %v215 = vpack.c.b16 %v159, %v151
  %v216 = vpack.c.b16 %v160, %v152
  %v217 = vpack.c.b16 %v161, %v153
  %v218 = vpack.c.b16 %v162, %v154
  %v219 = vpack.c.b16 %v163, %v155
  %v220 = vpack.c.b16 %v164, %v156
  %v221 = vpack.c.b16 %v173, %v165
  %v222 = vpack.c.b16 %v174, %v166
  %v223 = vpack.c.b16 %v175, %v167
  %v224 = vpack.c.b16 %v176, %v168
  %v225 = vpack.c.b16 %v177, %v169
  %v226 = vpack.c.b16 %v178, %v170
  %v227 = vpack.c.b16 %v179, %v171
  %v228 = vpack.c.b16 %v180, %v172
  %v229 = vpack.c.b16 %v189, %v181
  %v230 = vpack.c.b16 %v190, %v182
  %v231 = vpack.c.b16 %v191, %v183
  %v232 = vpack.c.b16 %v192, %v184
  %v233 = vpack.c.b16 %v193, %v185
  %v234 = vpack.c.b16 %v194, %v186
  %v235 = vpack.c.b16 %v195, %v187
  %v236 = vpack.c.b16 %v196, %v188
  %v237 = vpack.c.b16 %v205, %v197
  %v238 = vpack.c.b16 %v206, %v198
  %v239 = vpack.c.b16 %v207, %v199
  %v240 = vpack.c.b16 %v208, %v200
  %v241 = vpack.c.b16 %v209, %v201
  %v242 = vpack.c.b16 %v210, %v202
  %v243 = vpack.c.b16 %v211, %v203
  %v244 = vpack.c.b16 %v212, %v204
  %vm277 = vcmask 523264
  %v279 = vsel %vm277, %v113, 0
  %v282 = vsel %vm277, %v114, 0
  %v285 = vsel %vm277, %v115, 0
  %v288 = vsel %vm277, %v116, 0
  %290 = vmatprep.subr.bf16.mxu0 %v214
  %291 = vmatpush1.bf16.msra.mxu0 %v213
  %292 = vmatprep.subr.bf16.mxu0 %v222
  %293 = vmatpush1.bf16.msra.mxu0 %v221
  %294 = vmatprep.subr.bf16.mxu0 %v230
  %295 = vmatpush1.bf16.msra.mxu0 %v229
  %296 = vmatprep.subr.bf16.mxu0 %v238
  %297 = vmatpush1.bf16.msra.mxu0 %v237
  %298 = vmatprep.subr.bf16.mxu0 0
  %299 = vmatpush1.bf16.msra.mxu0 0
  %300 = vmatprep.subr.bf16.mxu0 0
  %301 = vmatpush1.bf16.msra.mxu0 0
  %302 = vmatprep.subr.bf16.mxu0 0
  %303 = vmatpush1.bf16.msra.mxu0 0
  %304 = vmatprep.subr.bf16.mxu0 0
  %305 = vmatpush1.bf16.msra.mxu0 0
  %306 = vmatprep.subr.bf16.mxu0 0
  %307 = vmatpush1.bf16.msra.mxu0 0
  %308 = vmatprep.subr.bf16.mxu0 0
  %309 = vmatpush1.bf16.msra.mxu0 0
  %310 = vmatprep.subr.bf16.mxu0 0
  %311 = vmatpush1.bf16.msra.mxu0 0
  %312 = vmatprep.subr.bf16.mxu0 0
  %313 = vmatpush1.bf16.msra.mxu0 0
  %314 = vmatprep.subr.bf16.mxu0 0
  %315 = vmatpush1.bf16.msra.mxu0 0
  %316 = vmatprep.subr.bf16.mxu0 0
  %317 = vmatpush1.bf16.msra.mxu0 0
  %318 = vmatprep.subr.bf16.mxu0 0
  %319 = vmatpush1.bf16.msra.mxu0 0
  %320 = vmatprep.subr.bf16.mxu0 0
  %321 = vmatpush1.bf16.msra.mxu0 0
  %322 = vmatprep.mubr.bf16.mxu0 0
  %323 = vmatmul.mubr.bf16.gmra.mrb[0].mxu0 %v279
  %v324 = vpop.f32.mrb[0].mxu0
  %v325 = vadd.f32 %v60, %v324
  %v326 = vpop.f32.mrb[0].mxu0
  %v327 = vadd.f32 %v64, %v326
  %v328 = vpop.f32.mrb[0].mxu0
  %v329 = vadd.f32 %v60, %v328
  %v330 = vpop.f32.mrb[0].mxu0
  %v331 = vadd.f32 %v64, %v330
  %332 = vmatprep.mubr.bf16.mxu0 0
  %333 = vmatmul.mubr.bf16.gmra.mrb[0].mxu0 %v282
  %v334 = vpop.f32.mrb[0].mxu0
  %v335 = vadd.f32 %v60, %v334
  %v336 = vpop.f32.mrb[0].mxu0
  %v337 = vadd.f32 %v64, %v336
  %v338 = vpop.f32.mrb[0].mxu0
  %v339 = vadd.f32 %v60, %v338
  %v340 = vpop.f32.mrb[0].mxu0
  %v341 = vadd.f32 %v64, %v340
  %342 = vmatprep.mubr.bf16.mxu0 0
  %343 = vmatmul.mubr.bf16.gmra.mrb[0].mxu0 %v285
  %v344 = vpop.f32.mrb[0].mxu0
  %v345 = vadd.f32 %v60, %v344
  %v346 = vpop.f32.mrb[0].mxu0
  %v347 = vadd.f32 %v64, %v346
  %v348 = vpop.f32.mrb[0].mxu0
  %v349 = vadd.f32 %v60, %v348
  %v350 = vpop.f32.mrb[0].mxu0
  %v351 = vadd.f32 %v64, %v350
  %352 = vmatprep.mubr.bf16.mxu0 0
  %353 = vmatmul.mubr.bf16.gmra.mrb[0].mxu0 %v288
  %v354 = vpop.f32.mrb[0].mxu0
  %v355 = vadd.f32 %v60, %v354
  %v356 = vpop.f32.mrb[0].mxu0
  %v357 = vadd.f32 %v64, %v356
  %v358 = vpop.f32.mrb[0].mxu0
  %v359 = vadd.f32 %v60, %v358
  %v360 = vpop.f32.mrb[0].mxu0
  %v361 = vadd.f32 %v64, %v360
  %362 = vdwg.mxu0
  %363 = vmatprep.subr.bf16.mxu0 %v216
  %364 = vmatpush1.bf16.msra.mxu0 %v215
  %365 = vmatprep.subr.bf16.mxu0 %v224
  %366 = vmatpush1.bf16.msra.mxu0 %v223
  %367 = vmatprep.subr.bf16.mxu0 %v232
  %368 = vmatpush1.bf16.msra.mxu0 %v231
  %369 = vmatprep.subr.bf16.mxu0 %v240
  %370 = vmatpush1.bf16.msra.mxu0 %v239
  %371 = vmatprep.subr.bf16.mxu0 0
  %372 = vmatpush1.bf16.msra.mxu0 0
  %373 = vmatprep.subr.bf16.mxu0 0
  %374 = vmatpush1.bf16.msra.mxu0 0
  %375 = vmatprep.subr.bf16.mxu0 0
  %376 = vmatpush1.bf16.msra.mxu0 0
  %377 = vmatprep.subr.bf16.mxu0 0
  %378 = vmatpush1.bf16.msra.mxu0 0
  %379 = vmatprep.subr.bf16.mxu0 0
  %380 = vmatpush1.bf16.msra.mxu0 0
  %381 = vmatprep.subr.bf16.mxu0 0
  %382 = vmatpush1.bf16.msra.mxu0 0
  %383 = vmatprep.subr.bf16.mxu0 0
  %384 = vmatpush1.bf16.msra.mxu0 0
  %385 = vmatprep.subr.bf16.mxu0 0
  %386 = vmatpush1.bf16.msra.mxu0 0
  %387 = vmatprep.subr.bf16.mxu0 0
  %388 = vmatpush1.bf16.msra.mxu0 0
  %389 = vmatprep.subr.bf16.mxu0 0
  %390 = vmatpush1.bf16.msra.mxu0 0
  %391 = vmatprep.subr.bf16.mxu0 0
  %392 = vmatpush1.bf16.msra.mxu0 0
  %393 = vmatprep.subr.bf16.mxu0 0
  %394 = vmatpush1.bf16.msra.mxu0 0
  %395 = vmatprep.mubr.bf16.mxu0 0
  %396 = vmatmul.mubr.bf16.gmra.mrb[0].mxu0 %v279
  %v397 = vpop.f32.mrb[0].mxu0
  %v398 = vadd.f32 %v68, %v397
  %v399 = vpop.f32.mrb[0].mxu0
  %v400 = vadd.f32 %v72, %v399
  %v401 = vpop.f32.mrb[0].mxu0
  %v402 = vadd.f32 %v68, %v401
  %v403 = vpop.f32.mrb[0].mxu0
  %v404 = vadd.f32 %v72, %v403
  %405 = vmatprep.mubr.bf16.mxu0 0
  %406 = vmatmul.mubr.bf16.gmra.mrb[0].mxu0 %v282
  %v407 = vpop.f32.mrb[0].mxu0
  %v408 = vadd.f32 %v68, %v407
  %v409 = vpop.f32.mrb[0].mxu0
  %v410 = vadd.f32 %v72, %v409
  %v411 = vpop.f32.mrb[0].mxu0
  %v412 = vadd.f32 %v68, %v411
  %v413 = vpop.f32.mrb[0].mxu0
  %v414 = vadd.f32 %v72, %v413
  %415 = vmatprep.mubr.bf16.mxu0 0
  %416 = vmatmul.mubr.bf16.gmra.mrb[0].mxu0 %v285
  %v417 = vpop.f32.mrb[0].mxu0
  %v418 = vadd.f32 %v68, %v417
  %v419 = vpop.f32.mrb[0].mxu0
  %v420 = vadd.f32 %v72, %v419
  %v421 = vpop.f32.mrb[0].mxu0
  %v422 = vadd.f32 %v68, %v421
  %v423 = vpop.f32.mrb[0].mxu0
  %v424 = vadd.f32 %v72, %v423
  %425 = vmatprep.mubr.bf16.mxu0 0
  %426 = vmatmul.mubr.bf16.gmra.mrb[0].mxu0 %v288
  %v427 = vpop.f32.mrb[0].mxu0
  %v428 = vadd.f32 %v68, %v427
  %v429 = vpop.f32.mrb[0].mxu0
  %v430 = vadd.f32 %v72, %v429
  %v431 = vpop.f32.mrb[0].mxu0
  %v432 = vadd.f32 %v68, %v431
  %v433 = vpop.f32.mrb[0].mxu0
  %v434 = vadd.f32 %v72, %v433
  %435 = vdwg.mxu0
  %436 = vmatprep.subr.bf16.mxu0 %v218
  %437 = vmatpush1.bf16.msra.mxu0 %v217
  %438 = vmatprep.subr.bf16.mxu0 %v226
  %439 = vmatpush1.bf16.msra.mxu0 %v225
  %440 = vmatprep.subr.bf16.mxu0 %v234
  %441 = vmatpush1.bf16.msra.mxu0 %v233
  %442 = vmatprep.subr.bf16.mxu0 %v242
  %443 = vmatpush1.bf16.msra.mxu0 %v241
  %444 = vmatprep.subr.bf16.mxu0 0
  %445 = vmatpush1.bf16.msra.mxu0 0
  %446 = vmatprep.subr.bf16.mxu0 0
  %447 = vmatpush1.bf16.msra.mxu0 0
  %448 = vmatprep.subr.bf16.mxu0 0
  %449 = vmatpush1.bf16.msra.mxu0 0
  %450 = vmatprep.subr.bf16.mxu0 0
  %451 = vmatpush1.bf16.msra.mxu0 0
  %452 = vmatprep.subr.bf16.mxu0 0
  %453 = vmatpush1.bf16.msra.mxu0 0
  %454 = vmatprep.subr.bf16.mxu0 0
  %455 = vmatpush1.bf16.msra.mxu0 0
  %456 = vmatprep.subr.bf16.mxu0 0
  %457 = vmatpush1.bf16.msra.mxu0 0
  %458 = vmatprep.subr.bf16.mxu0 0
  %459 = vmatpush1.bf16.msra.mxu0 0
  %460 = vmatprep.subr.bf16.mxu0 0
  %461 = vmatpush1.bf16.msra.mxu0 0
  %462 = vmatprep.subr.bf16.mxu0 0
  %463 = vmatpush1.bf16.msra.mxu0 0
  %464 = vmatprep.subr.bf16.mxu0 0
  %465 = vmatpush1.bf16.msra.mxu0 0
  %466 = vmatprep.subr.bf16.mxu0 0
  %467 = vmatpush1.bf16.msra.mxu0 0
  %468 = vmatprep.mubr.bf16.mxu0 0
  %469 = vmatmul.mubr.bf16.gmra.mrb[0].mxu0 %v279
  %v470 = vpop.f32.mrb[0].mxu0
  %v471 = vadd.f32 %v76, %v470
  %v472 = vpop.f32.mrb[0].mxu0
  %v473 = vadd.f32 %v80, %v472
  %v474 = vpop.f32.mrb[0].mxu0
  %v475 = vadd.f32 %v76, %v474
  %v476 = vpop.f32.mrb[0].mxu0
  %v477 = vadd.f32 %v80, %v476
  %478 = vmatprep.mubr.bf16.mxu0 0
  %479 = vmatmul.mubr.bf16.gmra.mrb[0].mxu0 %v282
  %v480 = vpop.f32.mrb[0].mxu0
  %v481 = vadd.f32 %v76, %v480
  %v482 = vpop.f32.mrb[0].mxu0
  %v483 = vadd.f32 %v80, %v482
  %v484 = vpop.f32.mrb[0].mxu0
  %v485 = vadd.f32 %v76, %v484
  %v486 = vpop.f32.mrb[0].mxu0
  %v487 = vadd.f32 %v80, %v486
  %488 = vmatprep.mubr.bf16.mxu0 0
  %489 = vmatmul.mubr.bf16.gmra.mrb[0].mxu0 %v285
  %v490 = vpop.f32.mrb[0].mxu0
  %v491 = vadd.f32 %v76, %v490
  %v492 = vpop.f32.mrb[0].mxu0
  %v493 = vadd.f32 %v80, %v492
  %v494 = vpop.f32.mrb[0].mxu0
  %v495 = vadd.f32 %v76, %v494
  %v496 = vpop.f32.mrb[0].mxu0
  %v497 = vadd.f32 %v80, %v496
  %498 = vmatprep.mubr.bf16.mxu0 0
  %499 = vmatmul.mubr.bf16.gmra.mrb[0].mxu0 %v288
  %v500 = vpop.f32.mrb[0].mxu0
  %v501 = vadd.f32 %v76, %v500
  %v502 = vpop.f32.mrb[0].mxu0
  %v503 = vadd.f32 %v80, %v502
  %v504 = vpop.f32.mrb[0].mxu0
  %v505 = vadd.f32 %v76, %v504
  %v506 = vpop.f32.mrb[0].mxu0
  %v507 = vadd.f32 %v80, %v506
  %508 = vdwg.mxu0
  %509 = vmatprep.subr.bf16.mxu0 %v220
  %510 = vmatpush1.bf16.msra.mxu0 %v219
  %511 = vmatprep.subr.bf16.mxu0 %v228
  %512 = vmatpush1.bf16.msra.mxu0 %v227
  %513 = vmatprep.subr.bf16.mxu0 %v236
  %514 = vmatpush1.bf16.msra.mxu0 %v235
  %515 = vmatprep.subr.bf16.mxu0 %v244
  %516 = vmatpush1.bf16.msra.mxu0 %v243
  %517 = vmatprep.subr.bf16.mxu0 0
  %518 = vmatpush1.bf16.msra.mxu0 0
  %519 = vmatprep.subr.bf16.mxu0 0
  %520 = vmatpush1.bf16.msra.mxu0 0
  %521 = vmatprep.subr.bf16.mxu0 0
  %522 = vmatpush1.bf16.msra.mxu0 0
  %523 = vmatprep.subr.bf16.mxu0 0
  %524 = vmatpush1.bf16.msra.mxu0 0
  %525 = vmatprep.subr.bf16.mxu0 0
  %526 = vmatpush1.bf16.msra.mxu0 0
  %527 = vmatprep.subr.bf16.mxu0 0
  %528 = vmatpush1.bf16.msra.mxu0 0
  %529 = vmatprep.subr.bf16.mxu0 0
  %530 = vmatpush1.bf16.msra.mxu0 0
  %531 = vmatprep.subr.bf16.mxu0 0
  %532 = vmatpush1.bf16.msra.mxu0 0
  %533 = vmatprep.subr.bf16.mxu0 0
  %534 = vmatpush1.bf16.msra.mxu0 0
  %535 = vmatprep.subr.bf16.mxu0 0
  %536 = vmatpush1.bf16.msra.mxu0 0
  %537 = vmatprep.subr.bf16.mxu0 0
  %538 = vmatpush1.bf16.msra.mxu0 0
  %539 = vmatprep.subr.bf16.mxu0 0
  %540 = vmatpush1.bf16.msra.mxu0 0
  %541 = vmatprep.mubr.bf16.mxu0 0
  %542 = vmatmul.mubr.bf16.gmra.mrb[0].mxu0 %v279
  %v543 = vpop.f32.mrb[0].mxu0
  %v544 = vadd.f32 %v84, %v543
  %v545 = vpop.f32.mrb[0].mxu0
  %v546 = vadd.f32 %v88, %v545
  %v547 = vpop.f32.mrb[0].mxu0
  %v548 = vadd.f32 %v84, %v547
  %v549 = vpop.f32.mrb[0].mxu0
  %v550 = vadd.f32 %v88, %v549
  %551 = vmatprep.mubr.bf16.mxu0 0
  %552 = vmatmul.mubr.bf16.gmra.mrb[0].mxu0 %v282
  %v553 = vpop.f32.mrb[0].mxu0
  %v554 = vadd.f32 %v84, %v553
  %v555 = vpop.f32.mrb[0].mxu0
  %v556 = vadd.f32 %v88, %v555
  %v557 = vpop.f32.mrb[0].mxu0
  %v558 = vadd.f32 %v84, %v557
  %v559 = vpop.f32.mrb[0].mxu0
  %v560 = vadd.f32 %v88, %v559
  %561 = vmatprep.mubr.bf16.mxu0 0
  %562 = vmatmul.mubr.bf16.gmra.mrb[0].mxu0 %v285
  %v563 = vpop.f32.mrb[0].mxu0
  %v564 = vadd.f32 %v84, %v563
  %v565 = vpop.f32.mrb[0].mxu0
  %v566 = vadd.f32 %v88, %v565
  %v567 = vpop.f32.mrb[0].mxu0
  %v568 = vadd.f32 %v84, %v567
  %v569 = vpop.f32.mrb[0].mxu0
  %v570 = vadd.f32 %v88, %v569
  %571 = vmatprep.mubr.bf16.mxu0 0
  %572 = vmatmul.mubr.bf16.gmra.mrb[0].mxu0 %v288
  %v573 = vpop.f32.mrb[0].mxu0
  %v574 = vadd.f32 %v84, %v573
  %v575 = vpop.f32.mrb[0].mxu0
  %v576 = vadd.f32 %v88, %v575
  %v577 = vpop.f32.mrb[0].mxu0
  %v578 = vadd.f32 %v84, %v577
  %v579 = vpop.f32.mrb[0].mxu0
  %v580 = vadd.f32 %v88, %v579
  %581 = vdwg.mxu0
  %v582 = vpack.c.bf16 %v329, %v325
  %v583 = vpack.c.bf16 %v331, %v327
  %v584 = vpack.c.bf16 %v402, %v398
  %v585 = vpack.c.bf16 %v404, %v400
  %v586 = vpack.c.bf16 %v475, %v471
  %v587 = vpack.c.bf16 %v477, %v473
  %v588 = vpack.c.bf16 %v548, %v544
  %v589 = vpack.c.bf16 %v550, %v546
  %v590 = vpack.c.bf16 %v339, %v335
  %v591 = vpack.c.bf16 %v341, %v337
  %v592 = vpack.c.bf16 %v412, %v408
  %v593 = vpack.c.bf16 %v414, %v410
  %v594 = vpack.c.bf16 %v485, %v481
  %v595 = vpack.c.bf16 %v487, %v483
  %v596 = vpack.c.bf16 %v558, %v554
  %v597 = vpack.c.bf16 %v560, %v556
  %v598 = vpack.c.bf16 %v349, %v345
  %v599 = vpack.c.bf16 %v351, %v347
  %v600 = vpack.c.bf16 %v422, %v418
  %v601 = vpack.c.bf16 %v424, %v420
  %v602 = vpack.c.bf16 %v495, %v491
  %v603 = vpack.c.bf16 %v497, %v493
  %v604 = vpack.c.bf16 %v568, %v564
  %v605 = vpack.c.bf16 %v570, %v566
  %v606 = vpack.c.bf16 %v359, %v355
  %v607 = vpack.c.bf16 %v361, %v357
  %v608 = vpack.c.bf16 %v432, %v428
  %v609 = vpack.c.bf16 %v434, %v430
  %v610 = vpack.c.bf16 %v505, %v501
  %v611 = vpack.c.bf16 %v507, %v503
  %v612 = vpack.c.bf16 %v578, %v574
  %v613 = vpack.c.bf16 %v580, %v576
  %v646 = vunpack.c.l.b16 %v582
  %v647 = vunpack.c.l.b16 %v583
  %v648 = vunpack.c.l.b16 %v584
  %v649 = vunpack.c.l.b16 %v585
  %v650 = vunpack.c.l.b16 %v586
  %v651 = vunpack.c.l.b16 %v587
  %v652 = vunpack.c.l.b16 %v588
  %v653 = vunpack.c.l.b16 %v589
  %v654 = vunpack.c.h.b16 %v582
  %v655 = vunpack.c.h.b16 %v583
  %v656 = vunpack.c.h.b16 %v584
  %v657 = vunpack.c.h.b16 %v585
  %v658 = vunpack.c.h.b16 %v586
  %v659 = vunpack.c.h.b16 %v587
  %v660 = vunpack.c.h.b16 %v588
  %v661 = vunpack.c.h.b16 %v589
  %v662 = vunpack.c.l.b16 %v590
  %v663 = vunpack.c.l.b16 %v591
  %v664 = vunpack.c.l.b16 %v592
  %v665 = vunpack.c.l.b16 %v593
  %v666 = vunpack.c.l.b16 %v594
  %v667 = vunpack.c.l.b16 %v595
  %v668 = vunpack.c.l.b16 %v596
  %v669 = vunpack.c.l.b16 %v597
  %v670 = vunpack.c.h.b16 %v590
  %v671 = vunpack.c.h.b16 %v591
  %v672 = vunpack.c.h.b16 %v592
  %v673 = vunpack.c.h.b16 %v593
  %v674 = vunpack.c.h.b16 %v594
  %v675 = vunpack.c.h.b16 %v595
  %v676 = vunpack.c.h.b16 %v596
  %v677 = vunpack.c.h.b16 %v597
  %v678 = vunpack.c.l.b16 %v598
  %v679 = vunpack.c.l.b16 %v599
  %v680 = vunpack.c.l.b16 %v600
  %v681 = vunpack.c.l.b16 %v601
  %v682 = vunpack.c.l.b16 %v602
  %v683 = vunpack.c.l.b16 %v603
  %v684 = vunpack.c.l.b16 %v604
  %v685 = vunpack.c.l.b16 %v605
  %v686 = vunpack.c.h.b16 %v598
  %v687 = vunpack.c.h.b16 %v599
  %v688 = vunpack.c.h.b16 %v600
  %v689 = vunpack.c.h.b16 %v601
  %v690 = vunpack.c.h.b16 %v602
  %v691 = vunpack.c.h.b16 %v603
  %v692 = vunpack.c.h.b16 %v604
  %v693 = vunpack.c.h.b16 %v605
  %v694 = vunpack.c.l.b16 %v606
  %v695 = vunpack.c.l.b16 %v607
  %v696 = vunpack.c.l.b16 %v608
  %v697 = vunpack.c.l.b16 %v609
  %v698 = vunpack.c.l.b16 %v610
  %v699 = vunpack.c.l.b16 %v611
  %v700 = vunpack.c.l.b16 %v612
  %v701 = vunpack.c.l.b16 %v613
  %v702 = vunpack.c.h.b16 %v606
  %v703 = vunpack.c.h.b16 %v607
  %v704 = vunpack.c.h.b16 %v608
  %v705 = vunpack.c.h.b16 %v609
  %v706 = vunpack.c.h.b16 %v610
  %v707 = vunpack.c.h.b16 %v611
  %v708 = vunpack.c.h.b16 %v612
  %v709 = vunpack.c.h.b16 %v613
  %v710 = vpack.c.b16 %v647, %v646
  %v711 = vpack.c.b16 %v649, %v648
  %v712 = vpack.c.b16 %v651, %v650
  %v713 = vpack.c.b16 %v653, %v652
  %v714 = vpack.c.b16 %v655, %v654
  %v715 = vpack.c.b16 %v657, %v656
  %v716 = vpack.c.b16 %v659, %v658
  %v717 = vpack.c.b16 %v661, %v660
  %v718 = vpack.c.b16 %v663, %v662
  %v719 = vpack.c.b16 %v665, %v664
  %v720 = vpack.c.b16 %v667, %v666
  %v721 = vpack.c.b16 %v669, %v668
  %v722 = vpack.c.b16 %v671, %v670
  %v723 = vpack.c.b16 %v673, %v672
  %v724 = vpack.c.b16 %v675, %v674
  %v725 = vpack.c.b16 %v677, %v676
  %v726 = vpack.c.b16 %v679, %v678
  %v727 = vpack.c.b16 %v681, %v680
  %v728 = vpack.c.b16 %v683, %v682
  %v729 = vpack.c.b16 %v685, %v684
  %v730 = vpack.c.b16 %v687, %v686
  %v731 = vpack.c.b16 %v689, %v688
  %v732 = vpack.c.b16 %v691, %v690
  %v733 = vpack.c.b16 %v693, %v692
  %v734 = vpack.c.b16 %v695, %v694
  %v735 = vpack.c.b16 %v697, %v696
  %v736 = vpack.c.b16 %v699, %v698
  %v737 = vpack.c.b16 %v701, %v700
  %v738 = vpack.c.b16 %v703, %v702
  %v739 = vpack.c.b16 %v705, %v704
  %v740 = vpack.c.b16 %v707, %v706
  %v741 = vpack.c.b16 %v709, %v708
  %774 = vst [vmem:[%s3] sm:$0xff] %v710
  %775 = vst [vmem:[%s3 + $0x8] sm:$0xff] %v711
  %776 = vst [vmem:[%s3 + $0x10] sm:$0xff] %v712
  %777 = vst [vmem:[%s3 + $0x18] sm:$0xff] %v713
  %778 = vst [vmem:[%s3 + $0x20] sm:$0xff] %v714
  %779 = vst [vmem:[%s3 + $0x28] sm:$0xff] %v715
  %780 = vst [vmem:[%s3 + $0x30] sm:$0xff] %v716
  %781 = vst [vmem:[%s3 + $0x38] sm:$0xff] %v717
  %782 = vst [vmem:[%s3 + $0x40] sm:$0xff] %v718
  %783 = vst [vmem:[%s3 + $0x48] sm:$0xff] %v719
  %784 = vst [vmem:[%s3 + $0x50] sm:$0xff] %v720
  %785 = vst [vmem:[%s3 + $0x58] sm:$0xff] %v721
  %786 = vst [vmem:[%s3 + $0x60] sm:$0xff] %v722
  %787 = vst [vmem:[%s3 + $0x68] sm:$0xff] %v723
  %788 = vst [vmem:[%s3 + $0x70] sm:$0xff] %v724
  %789 = vst [vmem:[%s3 + $0x78] sm:$0xff] %v725
  %790 = vst [vmem:[%s3 + $0x80] sm:$0xff] %v726
  %791 = vst [vmem:[%s3 + $0x88] sm:$0xff] %v727
  %792 = vst [vmem:[%s3 + $0x90] sm:$0xff] %v728
  %793 = vst [vmem:[%s3 + $0x98] sm:$0xff] %v729
  %794 = vst [vmem:[%s3 + $0xa0] sm:$0xff] %v730
  %795 = vst [vmem:[%s3 + $0xa8] sm:$0xff] %v731
  %796 = vst [vmem:[%s3 + $0xb0] sm:$0xff] %v732
  %797 = vst [vmem:[%s3 + $0xb8] sm:$0xff] %v733
  %798 = vst [vmem:[%s3 + $0xc0] sm:$0xff] %v734
  %799 = vst [vmem:[%s3 + $0xc8] sm:$0xff] %v735
  %800 = vst [vmem:[%s3 + $0xd0] sm:$0xff] %v736
  %801 = vst [vmem:[%s3 + $0xd8] sm:$0xff] %v737
  %802 = vst [vmem:[%s3 + $0xe0] sm:$0xff] %v738
  %803 = vst [vmem:[%s3 + $0xe8] sm:$0xff] %v739
  %804 = vst [vmem:[%s3 + $0xf0] sm:$0xff] %v740
  %805 = vst [vmem:[%s3 + $0xf8] sm:$0xff] %v741
  // Predicated region
  $region14: #{bilstm_forward.2} parent=0 // pred_check
    _
  $region15: #{bilstm_forward.2} parent=0 // pred_check_branch
    %807 = sbr.rel (0) target = $region17
  $region16: #{bilstm_forward.2} parent=0 // pred_region
    _
  $region17: #{bilstm_forward.2} parent=0 // pred_fallthru
    _
  // Predicated region
  $region18: #{bilstm_forward.2} parent=0 // pred_check
    _
  $region19: #{bilstm_forward.2} parent=0 // pred_check_branch
    %809 = sbr.rel (0) target = $region21
  $region20: #{bilstm_forward.2} parent=0 // pred_region
    _
  $region21: #{bilstm_forward.2} parent=0 // pred_fallthru
    _

// kernel: bilstm_forward.3
$region0: #{bilstm_forward.3}
  #allocation0 [shape = 'u32[]', space=smem, size = 0x4, offset = 0x4, fixed_abs, tag = 'smem constant byte address 0x4 - core index']
  #allocation1 [shape = 'u32[144,128]{1,0:T(1,128)}', space=vmem, size = 0x12000, scoped, tag = 'internal scratch']
  #allocation2 [shape = 'bf16[8,128]{1,0:T(8,128)(2,1)}', space=vmem, size = 0x800, scoped, tag = 'scratch operand']
  #allocation3 [shape = 'f32[8,128]{1,0:T(8,128)}', space=vmem, size = 0x1000, scoped, tag = 'scratch operand']
  %s0 = inlined_call_operand.vmem [shape: bf16[8,8,1024], index: 0, kind: input, shape index: {}]
  %s1 = inlined_call_operand.vmem [shape: bf16[128,512], index: 1, kind: input, shape index: {}]
  %s2 = inlined_call_operand.vmem [shape: bf16[128,512], index: 2, kind: input, shape index: {}]
  %s3 = inlined_call_operand.vmem [shape: f32[8,8,256], index: 3, kind: output, shape index: {}]
  %s4 = sld [smem:[#allocation0]]
  $region114: #{bilstm_forward.3} parent=0
    _
  %s6 = ssub.s32 1, %s4
  %s7 = scalar_select 0, %s6, %s4
  $region1: #{bilstm_forward.3} parent=0
    #allocation4 [shape = 'u8[131072]{0}', space=vmem, size = 0x20000, scoped, tag = 'input window, operand 0']
    #allocation5 [shape = 'u8[65536]{0}', space=vmem, size = 0x10000, scoped, tag = 'output window, operand 0']
    loop: start=0, step=1, limit=4
    $region2: #{bilstm_forward.3} parent=1 // loop_pre_header
      _
    $region3: #{bilstm_forward.3} parent=1 // loop_header
      %s9 = sphi 0, %s13
      %p10 = scmp.ge.s32.totalorder %s9, 4
      %s16 = sphi 0, %s28
      %s17 = sphi 0, %s24
      %s18 = sphi 0, %s16
      %s19 = sphi 0, %s17
      %s20 = sphi 0, %s18
      %s21 = sphi 0, %s19
      %s41 = sphi 0, %s43
      %s44 = sphi 0, %s41
      %s45 = sphi 0, %s44
      %s61 = sphi 0, %s45
      %s65 = sphi 0, %s65
      %s67 = sphi 0, %s65
      %s68 = sphi 0, %s67
      %s82 = sphi 0, %s68
      %s86 = sphi 0, %s86
      %s88 = sphi 0, %s86
      %s89 = sphi 0, %s88
      %s103 = sphi 0, %s89
      %s119 = sphi 0, %s121
      %s122 = sphi 0, %s119
      %s123 = sphi 0, %s122
      %s139 = sphi 0, %s123
    $region4: #{bilstm_forward.3} parent=1 // loop_header_branch
      %12 = sbr.rel (%p10) target = $region8
    $region5: #{bilstm_forward.3} parent=1 // loop_body
      %s14 = ssub.s32 %s9, 1
      %s15 = ssub.s32 %s9, 2
      %s22 = sadd.s32 1, %s17
      %p23 = scmp.ge.s32.totalorder %s22, 1
      %s24 = scalar_select %p23, 0, %s22
      %s25 = sadd.s32 1, %s16
      %s26 = scalar_select %p23, %s25, %s16
      %p27 = scmp.ge.s32.totalorder %s26, 2
      %s28 = scalar_select %p27, 0, %s26
      %s29 = smul.u32 %s17, 2
      %s30 = ssub.s32 0, %s29
      %s31 = smul.u32 %s16, %s30
      %s32 = sadd.s32 %s17, %s31
      %s33 = smul.u32 %s24, 2
      %s34 = ssub.s32 0, %s33
      %s35 = smul.u32 %s28, %s34
      %s36 = sadd.s32 %s24, %s35
      %s37 = ssub.s32 %s32, %s36
      %s38 = ssub.s32 %s16, %s28
      %s39 = sor.u32 %s37, %s38
      %p40 = scmp.eq.s32.totalorder %s39, 0
      %s42 = sadd.s32 %s41, 1
      %s43 = scalar_select %p40, %s41, %s42
      %p46 = pneg %p40
      %p47 = scmp.eq.s32.totalorder %s9, 1
      %p48 = por %p46, %p47
      %p49 = scmp.ne.s32.totalorder %s41, %s44
      %p50 = scmp.eq.s32.totalorder %s9, 0
      %p51 = por %p49, %p50
      %p52 = scmp.ne.s32.totalorder %s41, %s44
      %p53 = scmp.eq.s32.totalorder %s14, 1
      %p54 = por %p52, %p53
      %p55 = scmp.ne.s32.totalorder %s44, %s45
      %p56 = scmp.eq.s32.totalorder %s14, 0
      %p57 = por %p55, %p56
      %p58 = scmp.ne.s32.totalorder %s44, %s45
      %p59 = scmp.eq.s32.totalorder %s15, 1
      %p60 = por %p58, %p59
      %p62 = scmp.ne.s32.totalorder %s45, %s61
      %p63 = scmp.eq.s32.totalorder %s15, 0
      %p64 = por %p62, %p63
      %s66 = sadd.s32 %s65, 1
      %p69 = scmp.eq.s32.totalorder %s9, 1
      %p70 = scmp.ne.s32.totalorder %s65, %s67
      %p71 = scmp.eq.s32.totalorder %s9, 0
      %p72 = por %p70, %p71
      %p73 = scmp.ne.s32.totalorder %s65, %s67
      %p74 = scmp.eq.s32.totalorder %s14, 1
      %p75 = por %p73, %p74
      %p76 = scmp.ne.s32.totalorder %s67, %s68
      %p77 = scmp.eq.s32.totalorder %s14, 0
      %p78 = por %p76, %p77
      %p79 = scmp.ne.s32.totalorder %s67, %s68
      %p80 = scmp.eq.s32.totalorder %s15, 1
      %p81 = por %p79, %p80
      %p83 = scmp.ne.s32.totalorder %s68, %s82
      %p84 = scmp.eq.s32.totalorder %s15, 0
      %p85 = por %p83, %p84
      %s87 = sadd.s32 %s86, 1
      %p90 = scmp.eq.s32.totalorder %s9, 1
      %p91 = scmp.ne.s32.totalorder %s86, %s88
      %p92 = scmp.eq.s32.totalorder %s9, 0
      %p93 = por %p91, %p92
      %p94 = scmp.ne.s32.totalorder %s86, %s88
      %p95 = scmp.eq.s32.totalorder %s14, 1
      %p96 = por %p94, %p95
      %p97 = scmp.ne.s32.totalorder %s88, %s89
      %p98 = scmp.eq.s32.totalorder %s14, 0
      %p99 = por %p97, %p98
      %p100 = scmp.ne.s32.totalorder %s88, %s89
      %p101 = scmp.eq.s32.totalorder %s15, 1
      %p102 = por %p100, %p101
      %p104 = scmp.ne.s32.totalorder %s89, %s103
      %p105 = scmp.eq.s32.totalorder %s15, 0
      %p106 = por %p104, %p105
      %s107 = smul.u32 %s17, 2
      %s108 = ssub.s32 0, %s107
      %s109 = smul.u32 %s16, %s108
      %s110 = sadd.s32 %s17, %s109
      %s111 = smul.u32 %s24, 2
      %s112 = ssub.s32 0, %s111
      %s113 = smul.u32 %s28, %s112
      %s114 = sadd.s32 %s24, %s113
      %s115 = ssub.s32 %s110, %s114
      %s116 = ssub.s32 %s16, %s28
      %s117 = sor.u32 %s115, %s116
      %p118 = scmp.eq.s32.totalorder %s117, 0
      %s120 = sadd.s32 %s119, 1
      %s121 = scalar_select %p118, %s119, %s120
      %p124 = pneg %p118
      %p125 = scmp.eq.s32.totalorder %s9, 1
      %p126 = por %p124, %p125
      %p127 = scmp.ne.s32.totalorder %s119, %s122
      %p128 = scmp.eq.s32.totalorder %s9, 0
      %p129 = por %p127, %p128
      %p130 = scmp.ne.s32.totalorder %s119, %s122
      %p131 = scmp.eq.s32.totalorder %s14, 1
      %p132 = por %p130, %p131
      %p133 = scmp.ne.s32.totalorder %s122, %s123
      %p134 = scmp.eq.s32.totalorder %s14, 0
      %p135 = por %p133, %p134
      %p136 = scmp.ne.s32.totalorder %s122, %s123
      %p137 = scmp.eq.s32.totalorder %s15, 1
      %p138 = por %p136, %p137
      %p140 = scmp.ne.s32.totalorder %s123, %s139
      %p141 = scmp.eq.s32.totalorder %s15, 0
      %p142 = por %p140, %p141
      %p143 = scmp.le.s32.totalorder 1, %s9
      %p144 = scmp.lt.s32.totalorder %s9, 3
      %p145 = pnand %p143, %p144
      %p146 = pneg %p145
      // Predicated region
      $region9: #{bilstm_forward.3} parent=5 // pred_check
        _
      $region10: #{bilstm_forward.3} parent=5 // pred_check_branch
        %148 = sbr.rel (%p145) target = $region12
      $region11: #{bilstm_forward.3} parent=5 // pred_region
        %s149 = ssub.s32 %s9, 1
        // Predicated region
        $region13: #{bilstm_forward.3} parent=11 // pred_check
          %p150 = pneg %p78
        $region14: #{bilstm_forward.3} parent=11 // pred_check_branch
          %152 = sbr.rel (%p150) target = $region16
        $region15: #{bilstm_forward.3} parent=11 // pred_region
          _
        $region16: #{bilstm_forward.3} parent=11 // pred_fallthru
          _
        // Predicated region
        $region17: #{bilstm_forward.3} parent=11 // pred_check
          %p153 = pneg %p99
        $region18: #{bilstm_forward.3} parent=11 // pred_check_branch
          %155 = sbr.rel (%p153) target = $region20
        $region19: #{bilstm_forward.3} parent=11 // pred_region
          _
        $region20: #{bilstm_forward.3} parent=11 // pred_fallthru
          _
      $region12: #{bilstm_forward.3} parent=5 // pred_fallthru
        _
      %p156 = scmp.lt.s32.totalorder %s9, 2
      // Predicated region
      $region21: #{bilstm_forward.3} parent=5 // pred_check
        %p157 = pneg %p156
      $region22: #{bilstm_forward.3} parent=5 // pred_check_branch
        %159 = sbr.rel (%p157) target = $region24
      $region23: #{bilstm_forward.3} parent=5 // pred_region
        // Predicated region
        $region25: #{bilstm_forward.3} parent=23 // pred_check
          %p160 = pneg %p51
        $region26: #{bilstm_forward.3} parent=23 // pred_check_branch
          %162 = sbr.rel (%p160) target = $region28
        $region27: #{bilstm_forward.3} parent=23 // pred_region
          %s163 = sand.u32 %s41, 1
          %s164 = sand.u32 %s41, 1
          %s165 = smul.addr %s164, 128
          %s166 = scalar_lea.vmem [#allocation4], %s165
          %s167 = smul.u32 %s17, 2
          %s168 = ssub.s32 0, %s167
          %s169 = smul.u32 %s16, %s168
          %s170 = sadd.s32 %s17, %s169
          %s171 = smul.u32 8, %s170
          %s172 = smul.u32 4, %s16
          %s173 = smul.addr %s171, 8
          %s174 = sadd.s32 %s172, %s173
          %s175 = smul.addr %s174, 4
          %s176 = scalar_lea.vmem %s0, %s175
          // Predicated region
          $region29: #{bilstm_forward.3} parent=27 // pred_check
            _
          $region30: #{bilstm_forward.3} parent=27 // pred_check_branch
            %178 = sbr.rel (0) target = $region32
          $region31: #{bilstm_forward.3} parent=27 // pred_region
            // Predicated region
            $region33: #{bilstm_forward.3} parent=31 // pred_check
              _
            $region34: #{bilstm_forward.3} parent=31 // pred_check_branch
              %180 = sbr.rel (0) target = $region36
            $region35: #{bilstm_forward.3} parent=31 // pred_region
              loop: start=0, step=1, limit=1
              $region37: #{bilstm_forward.3} parent=35 // loop_pre_header
                _
              $region38: #{bilstm_forward.3} parent=35 // loop_header
                %s182 = sphi 0, %s186
                %p183 = scmp.ge.s32.totalorder %s182, 1
                %s187 = sphi %s176, %s176
                %s188 = sphi %s166, %s166
              $region39: #{bilstm_forward.3} parent=35 // loop_header_branch
                %185 = sbr.rel (%p183) target = $region43
              $region40: #{bilstm_forward.3} parent=35 // loop_body
                %v189 = vld [vmem:[%s187] sm:$0xff]
                %190 = vst [vmem:[%s188] sm:$0xff] %v189
                %v191 = vld [vmem:[%s187 + $0x8] sm:$0xff]
                %192 = vst [vmem:[%s188 + $0x8] sm:$0xff] %v191
                %v193 = vld [vmem:[%s187 + $0x20] sm:$0xff]
                %194 = vst [vmem:[%s188 + $0x10] sm:$0xff] %v193
                %v195 = vld [vmem:[%s187 + $0x28] sm:$0xff]
                %196 = vst [vmem:[%s188 + $0x18] sm:$0xff] %v195
                %v197 = vld [vmem:[%s187 + $0x40] sm:$0xff]
                %198 = vst [vmem:[%s188 + $0x20] sm:$0xff] %v197
                %v199 = vld [vmem:[%s187 + $0x48] sm:$0xff]
                %200 = vst [vmem:[%s188 + $0x28] sm:$0xff] %v199
                %v201 = vld [vmem:[%s187 + $0x60] sm:$0xff]
                %202 = vst [vmem:[%s188 + $0x30] sm:$0xff] %v201
                %v203 = vld [vmem:[%s187 + $0x68] sm:$0xff]
                %204 = vst [vmem:[%s188 + $0x38] sm:$0xff] %v203
                %v205 = vld [vmem:[%s187 + $0x80] sm:$0xff]
                %206 = vst [vmem:[%s188 + $0x40] sm:$0xff] %v205
                %v207 = vld [vmem:[%s187 + $0x88] sm:$0xff]
                %208 = vst [vmem:[%s188 + $0x48] sm:$0xff] %v207
                %v209 = vld [vmem:[%s187 + $0xa0] sm:$0xff]
                %210 = vst [vmem:[%s188 + $0x50] sm:$0xff] %v209
                %v211 = vld [vmem:[%s187 + $0xa8] sm:$0xff]
                %212 = vst [vmem:[%s188 + $0x58] sm:$0xff] %v211
                %v213 = vld [vmem:[%s187 + $0xc0] sm:$0xff]
                %214 = vst [vmem:[%s188 + $0x60] sm:$0xff] %v213
                %v215 = vld [vmem:[%s187 + $0xc8] sm:$0xff]
                %216 = vst [vmem:[%s188 + $0x68] sm:$0xff] %v215
                %v217 = vld [vmem:[%s187 + $0xe0] sm:$0xff]
                %218 = vst [vmem:[%s188 + $0x70] sm:$0xff] %v217
                %v219 = vld [vmem:[%s187 + $0xe8] sm:$0xff]
                %220 = vst [vmem:[%s188 + $0x78] sm:$0xff] %v219
              $region41: #{bilstm_forward.3} parent=35 // loop_footer
                %s186 = sadd.s32 1, %s182
              $region42: #{bilstm_forward.3} parent=35 // loop_footer_branch
                %181 = sbr.rel target = $region38
              $region43: #{bilstm_forward.3} parent=35 // loop_exit
                _
            $region36: #{bilstm_forward.3} parent=31 // pred_fallthru
              _
            // Predicated region
            $region44: #{bilstm_forward.3} parent=31 // pred_check
              _
            $region45: #{bilstm_forward.3} parent=31 // pred_check_branch
              %222 = sbr.rel target = $region47
            $region46: #{bilstm_forward.3} parent=31 // pred_region
              _
            $region47: #{bilstm_forward.3} parent=31 // pred_fallthru
              _
          $region32: #{bilstm_forward.3} parent=27 // pred_fallthru
            _
          %223 = vnop
        $region28: #{bilstm_forward.3} parent=23 // pred_fallthru
          _
      $region24: #{bilstm_forward.3} parent=5 // pred_fallthru
        _
      %p224 = scmp.le.s32.totalorder 1, %s9
      %p225 = scmp.lt.s32.totalorder %s9, 3
      %p226 = pnand %p224, %p225
      %p227 = pneg %p226
      // Predicated region
      $region48: #{bilstm_forward.3} parent=5 // pred_check
        _
      $region49: #{bilstm_forward.3} parent=5 // pred_check_branch
        %229 = sbr.rel (%p226) target = $region51
      $region50: #{bilstm_forward.3} parent=5 // pred_region
        %s230 = ssub.s32 %s9, 1
        %s231 = sand.u32 %s44, 1
        %s232 = sand.u32 %s44, 1
        %s233 = smul.addr %s232, 128
        %s234 = scalar_lea.vmem [#allocation4], %s233
        // Predicated region
        $region52: #{bilstm_forward.3} parent=50 // pred_check
          %p235 = pneg %p57
        $region53: #{bilstm_forward.3} parent=50 // pred_check_branch
          %237 = sbr.rel (%p235) target = $region55
        $region54: #{bilstm_forward.3} parent=50 // pred_region
          _
        $region55: #{bilstm_forward.3} parent=50 // pred_fallthru
          _
        %s238 = sand.u32 %s44, 1
        %s239 = sand.u32 %s44, 1
        %s240 = smul.addr %s239, 128
        %s241 = scalar_lea.vmem [#allocation4], %s240
        %p242 = pneg %p57
        %p243 = pneg %p54
        %p244 = pneg %p78
        %p245 = pneg %p75
        %p246 = pneg %p99
        %p247 = pneg %p96
        %p248 = pneg %p135
        %p249 = pneg %p132
        %s250 = sand.u32 %s122, 1
        %s251 = sand.u32 %s122, 1
        %s252 = smul.addr %s251, 64
        %s253 = scalar_lea.vmem [#allocation5], %s252
        %s254 = smul.u32 %s19, 2
        %s255 = ssub.s32 0, %s254
        %s256 = smul.u32 %s18, %s255
        %s257 = sadd.s32 %s19, %s256
        %s258 = smul.u32 8, %s257
        %s259 = smul.u32 4, %s18
        %s260 = smul.u32 %s19, 2
        %s261 = ssub.s32 0, %s260
        %s262 = smul.u32 %s18, %s261
        %s263 = sadd.s32 %s19, %s262
        %p265 = scmp.eq.s32.totalorder %s19, 0
        // Predicated region
        $region56: #{bilstm_forward.3} parent=50 // pred_check
          %p266 = pneg %p265
        $region57: #{bilstm_forward.3} parent=50 // pred_check_branch
          %268 = sbr.rel (%p266) target = $region59
        $region58: #{bilstm_forward.3} parent=50 // pred_region
          %269 = vst [vmem:[#allocation2] sm:$0xf] 0
          %270 = vst [vmem:[#allocation3] sm:$0xff] 0.0
        $region59: #{bilstm_forward.3} parent=50 // pred_fallthru
          _
        %p271 = scmp.eq.s32.totalorder %s18, 0
        // Predicated region
        $region60: #{bilstm_forward.3} parent=50 // pred_check
          %p272 = pneg %p271
        $region61: #{bilstm_forward.3} parent=50 // pred_check_branch
          %274 = sbr.rel (%p272) target = $region63
        $region62: #{bilstm_forward.3} parent=50 // pred_region
          %v275 = vld [vmem:[%s234] sm:$0xff]
          %v276 = vld [vmem:[%s234 + $0x8] sm:$0xff]
          %v277 = vunpack.c.l.bf16 %v275
          %v278 = vunpack.c.h.bf16 %v275
          %v279 = vunpack.c.l.bf16 %v276
          %v280 = vunpack.c.h.bf16 %v276
          %v281 = vld [vmem:[#allocation2] sm:$0xf]
          %v282 = vld [vmem:[%s1] sm:$0xff]
          %v283 = vld [vmem:[%s1 + $0x8] sm:$0xff]
          %v284 = vld [vmem:[%s1 + $0x10] sm:$0xff]
          %v285 = vld [vmem:[%s1 + $0x18] sm:$0xff]
          %v286 = vld [vmem:[%s1 + $0x20] sm:$0xff]
          %v287 = vld [vmem:[%s1 + $0x28] sm:$0xff]
          %v288 = vld [vmem:[%s1 + $0x30] sm:$0xff]
          %v289 = vld [vmem:[%s1 + $0x38] sm:$0xff]
          %v290 = vld [vmem:[%s1 + $0x40] sm:$0xff]
          %v291 = vld [vmem:[%s1 + $0x48] sm:$0xff]
          %v292 = vld [vmem:[%s1 + $0x50] sm:$0xff]
          %v293 = vld [vmem:[%s1 + $0x58] sm:$0xff]
          %v294 = vld [vmem:[%s1 + $0x60] sm:$0xff]
          %v295 = vld [vmem:[%s1 + $0x68] sm:$0xff]
          %v296 = vld [vmem:[%s1 + $0x70] sm:$0xff]
          %v297 = vld [vmem:[%s1 + $0x78] sm:$0xff]
          %v298 = vld [vmem:[%s1 + $0x80] sm:$0xff]
          %v299 = vld [vmem:[%s1 + $0x88] sm:$0xff]
          %v300 = vld [vmem:[%s1 + $0x90] sm:$0xff]
          %v301 = vld [vmem:[%s1 + $0x98] sm:$0xff]
          %v302 = vld [vmem:[%s1 + $0xa0] sm:$0xff]
          %v303 = vld [vmem:[%s1 + $0xa8] sm:$0xff]
          %v304 = vld [vmem:[%s1 + $0xb0] sm:$0xff]
          %v305 = vld [vmem:[%s1 + $0xb8] sm:$0xff]
          %v306 = vld [vmem:[%s1 + $0xc0] sm:$0xff]
          %v307 = vld [vmem:[%s1 + $0xc8] sm:$0xff]
          %v308 = vld [vmem:[%s1 + $0xd0] sm:$0xff]
          %v309 = vld [vmem:[%s1 + $0xd8] sm:$0xff]
          %v310 = vld [vmem:[%s1 + $0xe0] sm:$0xff]
          %v311 = vld [vmem:[%s1 + $0xe8] sm:$0xff]
          %v312 = vld [vmem:[%s1 + $0xf0] sm:$0xff]
          %v313 = vld [vmem:[%s1 + $0xf8] sm:$0xff]
          %v346 = vunpack.c.l.b16 %v282
          %v347 = vunpack.c.h.b16 %v282
          %v348 = vunpack.c.l.b16 %v283
          %v349 = vunpack.c.h.b16 %v283
          %v350 = vunpack.c.l.b16 %v284
          %v351 = vunpack.c.h.b16 %v284
          %v352 = vunpack.c.l.b16 %v285
          %v353 = vunpack.c.h.b16 %v285
          %v354 = vunpack.c.l.b16 %v286
          %v355 = vunpack.c.h.b16 %v286
          %v356 = vunpack.c.l.b16 %v287
          %v357 = vunpack.c.h.b16 %v287
          %v358 = vunpack.c.l.b16 %v288
          %v359 = vunpack.c.h.b16 %v288
          %v360 = vunpack.c.l.b16 %v289
          %v361 = vunpack.c.h.b16 %v289
          %v362 = vunpack.c.l.b16 %v290
          %v363 = vunpack.c.h.b16 %v290
          %v364 = vunpack.c.l.b16 %v291
          %v365 = vunpack.c.h.b16 %v291
          %v366 = vunpack.c.l.b16 %v292
          %v367 = vunpack.c.h.b16 %v292
          %v368 = vunpack.c.l.b16 %v293
          %v369 = vunpack.c.h.b16 %v293
          %v370 = vunpack.c.l.b16 %v294
          %v371 = vunpack.c.h.b16 %v294
          %v372 = vunpack.c.l.b16 %v295
          %v373 = vunpack.c.h.b16 %v295
          %v374 = vunpack.c.l.b16 %v296
          %v375 = vunpack.c.h.b16 %v296
          %v376 = vunpack.c.l.b16 %v297
          %v377 = vunpack.c.h.b16 %v297
          %v378 = vunpack.c.l.b16 %v298
          %v379 = vunpack.c.h.b16 %v298
          %v380 = vunpack.c.l.b16 %v299
          %v381 = vunpack.c.h.b16 %v299
          %v382 = vunpack.c.l.b16 %v300
          %v383 = vunpack.c.h.b16 %v300
          %v384 = vunpack.c.l.b16 %v301
          %v385 = vunpack.c.h.b16 %v301
          %v386 = vunpack.c.l.b16 %v302
          %v387 = vunpack.c.h.b16 %v302
          %v388 = vunpack.c.l.b16 %v303
          %v389 = vunpack.c.h.b16 %v303
          %v390 = vunpack.c.l.b16 %v304
          %v391 = vunpack.c.h.b16 %v304
          %v392 = vunpack.c.l.b16 %v305
          %v393 = vunpack.c.h.b16 %v305
          %v394 = vunpack.c.l.b16 %v306
          %v395 = vunpack.c.h.b16 %v306
          %v396 = vunpack.c.l.b16 %v307
          %v397 = vunpack.c.h.b16 %v307
          %v398 = vunpack.c.l.b16 %v308
          %v399 = vunpack.c.h.b16 %v308
          %v400 = vunpack.c.l.b16 %v309
          %v401 = vunpack.c.h.b16 %v309
          %v402 = vunpack.c.l.b16 %v310
          %v403 = vunpack.c.h.b16 %v310
          %v404 = vunpack.c.l.b16 %v311
          %v405 = vunpack.c.h.b16 %v311
          %v406 = vunpack.c.l.b16 %v312
          %v407 = vunpack.c.h.b16 %v312
          %v408 = vunpack.c.l.b16 %v313
          %v409 = vunpack.c.h.b16 %v313
          %v410 = vpack.c.b16 %v350, %v346
          %v411 = vpack.c.b16 %v351, %v347
          %v412 = vpack.c.b16 %v352, %v348
          %v413 = vpack.c.b16 %v353, %v349
          %v414 = vpack.c.b16 %v358, %v354
          %v415 = vpack.c.b16 %v359, %v355
          %v416 = vpack.c.b16 %v360, %v356
          %v417 = vpack.c.b16 %v361, %v357
          %v418 = vpack.c.b16 %v366, %v362
          %v419 = vpack.c.b16 %v367, %v363
          %v420 = vpack.c.b16 %v368, %v364
          %v421 = vpack.c.b16 %v369, %v365
          %v422 = vpack.c.b16 %v374, %v370
          %v423 = vpack.c.b16 %v375, %v371
          %v424 = vpack.c.b16 %v376, %v372
          %v425 = vpack.c.b16 %v377, %v373
          %v426 = vpack.c.b16 %v382, %v378
          %v427 = vpack.c.b16 %v383, %v379
          %v428 = vpack.c.b16 %v384, %v380
          %v429 = vpack.c.b16 %v385, %v381
          %v430 = vpack.c.b16 %v390, %v386
          %v431 = vpack.c.b16 %v391, %v387
          %v432 = vpack.c.b16 %v392, %v388
          %v433 = vpack.c.b16 %v393, %v389
          %v434 = vpack.c.b16 %v398, %v394
          %v435 = vpack.c.b16 %v399, %v395
          %v436 = vpack.c.b16 %v400, %v396
          %v437 = vpack.c.b16 %v401, %v397
          %v438 = vpack.c.b16 %v406, %v402
          %v439 = vpack.c.b16 %v407, %v403
          %v440 = vpack.c.b16 %v408, %v404
          %v441 = vpack.c.b16 %v409, %v405
          %474 = vmatprep.subr.bf16.mxu0 %v411
          %475 = vmatpush1.bf16.msra.mxu0 %v410
          %476 = vmatprep.subr.bf16.mxu0 %v415
          %477 = vmatpush1.bf16.msra.mxu0 %v414
          %478 = vmatprep.subr.bf16.mxu0 %v419
          %479 = vmatpush1.bf16.msra.mxu0 %v418
          %480 = vmatprep.subr.bf16.mxu0 %v423
          %481 = vmatpush1.bf16.msra.mxu0 %v422
          %482 = vmatprep.subr.bf16.mxu0 %v427
          %483 = vmatpush1.bf16.msra.mxu0 %v426
          %484 = vmatprep.subr.bf16.mxu0 %v431
          %485 = vmatpush1.bf16.msra.mxu0 %v430
          %486 = vmatprep.subr.bf16.mxu0 %v435
          %487 = vmatpush1.bf16.msra.mxu0 %v434
          %488 = vmatprep.subr.bf16.mxu0 %v439
          %489 = vmatpush1.bf16.msra.mxu0 %v438
          %490 = vmatprep.subr.bf16.mxu0 0
          %491 = vmatpush1.bf16.msra.mxu0 0
          %492 = vmatprep.subr.bf16.mxu0 0
          %493 = vmatpush1.bf16.msra.mxu0 0
          %494 = vmatprep.subr.bf16.mxu0 0
          %495 = vmatpush1.bf16.msra.mxu0 0
          %496 = vmatprep.subr.bf16.mxu0 0
          %497 = vmatpush1.bf16.msra.mxu0 0
          %498 = vmatprep.subr.bf16.mxu0 0
          %499 = vmatpush1.bf16.msra.mxu0 0
          %500 = vmatprep.subr.bf16.mxu0 0
          %501 = vmatpush1.bf16.msra.mxu0 0
          %502 = vmatprep.subr.bf16.mxu0 0
          %503 = vmatpush1.bf16.msra.mxu0 0
          %504 = vmatprep.subr.bf16.mxu0 0
          %505 = vmatpush1.bf16.msra.mxu0 0
          %506 = vmatprep.mubr.bf16.mxu0 0
          %507 = vmatmul.mubr.bf16.gmra.mrb[0].mxu0 %v281
          %v508 = vpop.f32.mrb[0].mxu0
          %v509 = vadd.f32 0.0, %v508
          %v510 = vpop.f32.mrb[0].mxu0
          %v511 = vadd.f32 0.0, %v510
          %v512 = vpop.f32.mrb[0].mxu0
          %v513 = vpop.f32.mrb[0].mxu0
          %514 = vdwg.mxu0
          %515 = vmatprep.subr.bf16.mxu0 %v413
          %516 = vmatpush1.bf16.msra.mxu0 %v412
          %517 = vmatprep.subr.bf16.mxu0 %v417
          %518 = vmatpush1.bf16.msra.mxu0 %v416
          %519 = vmatprep.subr.bf16.mxu0 %v421
          %520 = vmatpush1.bf16.msra.mxu0 %v420
          %521 = vmatprep.subr.bf16.mxu0 %v425
          %522 = vmatpush1.bf16.msra.mxu0 %v424
          %523 = vmatprep.subr.bf16.mxu0 %v429
          %524 = vmatpush1.bf16.msra.mxu0 %v428
          %525 = vmatprep.subr.bf16.mxu0 %v433
          %526 = vmatpush1.bf16.msra.mxu0 %v432
          %527 = vmatprep.subr.bf16.mxu0 %v437
          %528 = vmatpush1.bf16.msra.mxu0 %v436
          %529 = vmatprep.subr.bf16.mxu0 %v441
          %530 = vmatpush1.bf16.msra.mxu0 %v440
          %531 = vmatprep.subr.bf16.mxu0 0
          %532 = vmatpush1.bf16.msra.mxu0 0
          %533 = vmatprep.subr.bf16.mxu0 0
          %534 = vmatpush1.bf16.msra.mxu0 0
          %535 = vmatprep.subr.bf16.mxu0 0
          %536 = vmatpush1.bf16.msra.mxu0 0
          %537 = vmatprep.subr.bf16.mxu0 0
          %538 = vmatpush1.bf16.msra.mxu0 0
          %539 = vmatprep.subr.bf16.mxu0 0
          %540 = vmatpush1.bf16.msra.mxu0 0
          %541 = vmatprep.subr.bf16.mxu0 0
          %542 = vmatpush1.bf16.msra.mxu0 0
          %543 = vmatprep.subr.bf16.mxu0 0
          %544 = vmatpush1.bf16.msra.mxu0 0
          %545 = vmatprep.subr.bf16.mxu0 0
          %546 = vmatpush1.bf16.msra.mxu0 0
          %547 = vmatprep.mubr.bf16.mxu0 0
          %548 = vmatmul.mubr.bf16.gmra.mrb[0].mxu0 %v281
          %v549 = vpop.f32.mrb[0].mxu0
          %v550 = vadd.f32 0.0, %v549
          %v551 = vpop.f32.mrb[0].mxu0
          %v552 = vadd.f32 0.0, %v551
          %v553 = vpop.f32.mrb[0].mxu0
          %v554 = vpop.f32.mrb[0].mxu0
          %555 = vdwg.mxu0
          %v556 = vadd.f32 %v277, %v509
          %v557 = vadd.f32 %v278, %v511
          %v558 = vadd.f32 %v279, %v550
          %v559 = vadd.f32 %v280, %v552
          %v560 = vmul.f32 %v556, 0.5
          %v561 = vtanh.pop %v560
          %v562 = vadd.f32 %v561, 1.0
          %v563 = vmul.f32 %v562, 0.5
          %v564 = vmul.f32 %v557, 0.5
          %v565 = vtanh.pop %v564
          %v566 = vadd.f32 %v565, 1.0
          %v567 = vmul.f32 %v566, 0.5
          %v568 = vtanh.pop %v558
          %v569 = vmul.f32 %v559, 0.5
          %v570 = vtanh.pop %v569
          %v571 = vadd.f32 %v570, 1.0
          %v572 = vmul.f32 %v571, 0.5
          %v573 = vld [vmem:[#allocation3] sm:$0xff]
          %v574 = vmul.f32 %v567, %v573
          %v575 = vmul.f32 %v563, %v568
          %v576 = vadd.f32 %v574, %v575
          %v577 = vtanh.pop %v576
          %v578 = vmul.f32 %v572, %v577
          %579 = vst [vmem:[#allocation3] sm:$0xff] %v576
          %v580 = vpack.c.bf16 %v578, %v578
          %581 = vst [vmem:[#allocation2] sm:$0xf] %v580
          %v583 = vcombine.high %v578, %v578
          %v585 = vunpack.c.l.s4 1966171168
          %v586 = vunpack.c.0.s8 %v585
          %v587 = vlaneseq
          %v588 = vshrl.u32 %v587, 7
          %v589 = vsub.s32 %v586, %v588
          %v590 = vrot.slane %v578, %v589
          %v592 = vunpack.c.l.s4 1966171168
          %v593 = vunpack.c.0.s8 %v592
          %v594 = vlaneseq
          %v595 = vshrl.u32 %v594, 7
          %v596 = vsub.s32 %v593, %v595
          %v597 = vrot.slane %v583, %v596
          %v598 = vcombine.high %v590, %v590
          %v599 = vcombine.high %v597, %v597
          %v601 = vunpack.c.l.s4 1966171168
          %v602 = vunpack.c.0.s8 %v601
          %v603 = vlaneseq
          %v604 = vshrl.u32 %v603, 7
          %v605 = vsub.s32 %v602, %v604
          %v606 = vrot.slane %v590, %v605
          %v608 = vunpack.c.l.s4 1966171168
          %v609 = vunpack.c.0.s8 %v608
          %v610 = vlaneseq
          %v611 = vshrl.u32 %v610, 7
          %v612 = vsub.s32 %v609, %v611
          %v613 = vrot.slane %v597, %v612
          %v615 = vunpack.c.l.s4 1966171168
          %v616 = vunpack.c.0.s8 %v615
          %v617 = vlaneseq
          %v618 = vshrl.u32 %v617, 7
          %v619 = vsub.s32 %v616, %v618
          %v620 = vrot.slane %v598, %v619
          %v622 = vunpack.c.l.s4 1966171168
          %v623 = vunpack.c.0.s8 %v622
          %v624 = vlaneseq
          %v625 = vshrl.u32 %v624, 7
          %v626 = vsub.s32 %v623, %v625
          %v627 = vrot.slane %v599, %v626
          %v628 = vcombine.high %v606, %v606
          %v629 = vcombine.high %v613, %v613
          %v630 = vcombine.high %v620, %v620
          %v631 = vcombine.high %v627, %v627
          %640 = vst [vmem:[%s253] sm:$0x1] %v606
          %641 = vst [vmem:[%s253 + $0x8] sm:$0x1] %v620
          %642 = vst [vmem:[%s253 + $0x10] sm:$0x1] %v628
          %643 = vst [vmem:[%s253 + $0x18] sm:$0x1] %v630
          %644 = vst [vmem:[%s253 + $0x20] sm:$0x1] %v613
          %645 = vst [vmem:[%s253 + $0x28] sm:$0x1] %v627
          %646 = vst [vmem:[%s253 + $0x30] sm:$0x1] %v629
          %647 = vst [vmem:[%s253 + $0x38] sm:$0x1] %v631
          %s648 = scalar_lea.vmem %s234, 16 [#allocation4]
          %v649 = vld [vmem:[%s648] sm:$0xff]
          %v650 = vld [vmem:[%s648 + $0x8] sm:$0xff]
          %v651 = vunpack.c.l.bf16 %v649
          %v652 = vunpack.c.h.bf16 %v649
          %v653 = vunpack.c.l.bf16 %v650
          %v654 = vunpack.c.h.bf16 %v650
          %v655 = vld [vmem:[#allocation2] sm:$0xf]
          %v656 = vld [vmem:[%s1] sm:$0xff]
          %v657 = vld [vmem:[%s1 + $0x8] sm:$0xff]
          %v658 = vld [vmem:[%s1 + $0x10] sm:$0xff]
          %v659 = vld [vmem:[%s1 + $0x18] sm:$0xff]
          %v660 = vld [vmem:[%s1 + $0x20] sm:$0xff]
          %v661 = vld [vmem:[%s1 + $0x28] sm:$0xff]
          %v662 = vld [vmem:[%s1 + $0x30] sm:$0xff]
          %v663 = vld [vmem:[%s1 + $0x38] sm:$0xff]
          %v664 = vld [vmem:[%s1 + $0x40] sm:$0xff]
          %v665 = vld [vmem:[%s1 + $0x48] sm:$0xff]
          %v666 = vld [vmem:[%s1 + $0x50] sm:$0xff]
          %v667 = vld [vmem:[%s1 + $0x58] sm:$0xff]
          %v668 = vld [vmem:[%s1 + $0x60] sm:$0xff]
          %v669 = vld [vmem:[%s1 + $0x68] sm:$0xff]
          %v670 = vld [vmem:[%s1 + $0x70] sm:$0xff]
          %v671 = vld [vmem:[%s1 + $0x78] sm:$0xff]
          %v672 = vld [vmem:[%s1 + $0x80] sm:$0xff]
          %v673 = vld [vmem:[%s1 + $0x88] sm:$0xff]
          %v674 = vld [vmem:[%s1 + $0x90] sm:$0xff]
          %v675 = vld [vmem:[%s1 + $0x98] sm:$0xff]
          %v676 = vld [vmem:[%s1 + $0xa0] sm:$0xff]
          %v677 = vld [vmem:[%s1 + $0xa8] sm:$0xff]
          %v678 = vld [vmem:[%s1 + $0xb0] sm:$0xff]
          %v679 = vld [vmem:[%s1 + $0xb8] sm:$0xff]
          %v680 = vld [vmem:[%s1 + $0xc0] sm:$0xff]
          %v681 = vld [vmem:[%s1 + $0xc8] sm:$0xff]
          %v682 = vld [vmem:[%s1 + $0xd0] sm:$0xff]
          %v683 = vld [vmem:[%s1 + $0xd8] sm:$0xff]
          %v684 = vld [vmem:[%s1 + $0xe0] sm:$0xff]
          %v685 = vld [vmem:[%s1 + $0xe8] sm:$0xff]
          %v686 = vld [vmem:[%s1 + $0xf0] sm:$0xff]
          %v687 = vld [vmem:[%s1 + $0xf8] sm:$0xff]
          %v720 = vunpack.c.l.b16 %v656
          %v721 = vunpack.c.h.b16 %v656
          %v722 = vunpack.c.l.b16 %v657
          %v723 = vunpack.c.h.b16 %v657
          %v724 = vunpack.c.l.b16 %v658
          %v725 = vunpack.c.h.b16 %v658
          %v726 = vunpack.c.l.b16 %v659
          %v727 = vunpack.c.h.b16 %v659
          %v728 = vunpack.c.l.b16 %v660
          %v729 = vunpack.c.h.b16 %v660
          %v730 = vunpack.c.l.b16 %v661
          %v731 = vunpack.c.h.b16 %v661
          %v732 = vunpack.c.l.b16 %v662
          %v733 = vunpack.c.h.b16 %v662
          %v734 = vunpack.c.l.b16 %v663
          %v735 = vunpack.c.h.b16 %v663
          %v736 = vunpack.c.l.b16 %v664
          %v737 = vunpack.c.h.b16 %v664
          %v738 = vunpack.c.l.b16 %v665
          %v739 = vunpack.c.h.b16 %v665
          %v740 = vunpack.c.l.b16 %v666
          %v741 = vunpack.c.h.b16 %v666
          %v742 = vunpack.c.l.b16 %v667
          %v743 = vunpack.c.h.b16 %v667
          %v744 = vunpack.c.l.b16 %v668
          %v745 = vunpack.c.h.b16 %v668
          %v746 = vunpack.c.l.b16 %v669
          %v747 = vunpack.c.h.b16 %v669
          %v748 = vunpack.c.l.b16 %v670
          %v749 = vunpack.c.h.b16 %v670
          %v750 = vunpack.c.l.b16 %v671
          %v751 = vunpack.c.h.b16 %v671
          %v752 = vunpack.c.l.b16 %v672
          %v753 = vunpack.c.h.b16 %v672
          %v754 = vunpack.c.l.b16 %v673
          %v755 = vunpack.c.h.b16 %v673
          %v756 = vunpack.c.l.b16 %v674
          %v757 = vunpack.c.h.b16 %v674
          %v758 = vunpack.c.l.b16 %v675
          %v759 = vunpack.c.h.b16 %v675
          %v760 = vunpack.c.l.b16 %v676
          %v761 = vunpack.c.h.b16 %v676
          %v762 = vunpack.c.l.b16 %v677
          %v763 = vunpack.c.h.b16 %v677
          %v764 = vunpack.c.l.b16 %v678
          %v765 = vunpack.c.h.b16 %v678
          %v766 = vunpack.c.l.b16 %v679
          %v767 = vunpack.c.h.b16 %v679
          %v768 = vunpack.c.l.b16 %v680
          %v769 = vunpack.c.h.b16 %v680
          %v770 = vunpack.c.l.b16 %v681
          %v771 = vunpack.c.h.b16 %v681
          %v772 = vunpack.c.l.b16 %v682
          %v773 = vunpack.c.h.b16 %v682
          %v774 = vunpack.c.l.b16 %v683
          %v775 = vunpack.c.h.b16 %v683
          %v776 = vunpack.c.l.b16 %v684
          %v777 = vunpack.c.h.b16 %v684
          %v778 = vunpack.c.l.b16 %v685
          %v779 = vunpack.c.h.b16 %v685
          %v780 = vunpack.c.l.b16 %v686
          %v781 = vunpack.c.h.b16 %v686
          %v782 = vunpack.c.l.b16 %v687
          %v783 = vunpack.c.h.b16 %v687
          %v784 = vpack.c.b16 %v724, %v720
          %v785 = vpack.c.b16 %v725, %v721
          %v786 = vpack.c.b16 %v726, %v722
          %v787 = vpack.c.b16 %v727, %v723
          %v788 = vpack.c.b16 %v732, %v728
          %v789 = vpack.c.b16 %v733, %v729
          %v790 = vpack.c.b16 %v734, %v730
          %v791 = vpack.c.b16 %v735, %v731
          %v792 = vpack.c.b16 %v740, %v736
          %v793 = vpack.c.b16 %v741, %v737
          %v794 = vpack.c.b16 %v742, %v738
          %v795 = vpack.c.b16 %v743, %v739
          %v796 = vpack.c.b16 %v748, %v744
          %v797 = vpack.c.b16 %v749, %v745
          %v798 = vpack.c.b16 %v750, %v746
          %v799 = vpack.c.b16 %v751, %v747
          %v800 = vpack.c.b16 %v756, %v752
          %v801 = vpack.c.b16 %v757, %v753
          %v802 = vpack.c.b16 %v758, %v754
          %v803 = vpack.c.b16 %v759, %v755
          %v804 = vpack.c.b16 %v764, %v760
          %v805 = vpack.c.b16 %v765, %v761
          %v806 = vpack.c.b16 %v766, %v762
          %v807 = vpack.c.b16 %v767, %v763
          %v808 = vpack.c.b16 %v772, %v768
          %v809 = vpack.c.b16 %v773, %v769
          %v810 = vpack.c.b16 %v774, %v770
          %v811 = vpack.c.b16 %v775, %v771
          %v812 = vpack.c.b16 %v780, %v776
          %v813 = vpack.c.b16 %v781, %v777
          %v814 = vpack.c.b16 %v782, %v778
          %v815 = vpack.c.b16 %v783, %v779
          %848 = vmatprep.subr.bf16.mxu0 %v785
          %849 = vmatpush1.bf16.msra.mxu0 %v784
          %850 = vmatprep.subr.bf16.mxu0 %v789
          %851 = vmatpush1.bf16.msra.mxu0 %v788
          %852 = vmatprep.subr.bf16.mxu0 %v793
          %853 = vmatpush1.bf16.msra.mxu0 %v792
          %854 = vmatprep.subr.bf16.mxu0 %v797
          %855 = vmatpush1.bf16.msra.mxu0 %v796
          %856 = vmatprep.subr.bf16.mxu0 %v801
          %857 = vmatpush1.bf16.msra.mxu0 %v800
          %858 = vmatprep.subr.bf16.mxu0 %v805
          %859 = vmatpush1.bf16.msra.mxu0 %v804
          %860 = vmatprep.subr.bf16.mxu0 %v809
          %861 = vmatpush1.bf16.msra.mxu0 %v808
          %862 = vmatprep.subr.bf16.mxu0 %v813
          %863 = vmatpush1.bf16.msra.mxu0 %v812
          %864 = vmatprep.subr.bf16.mxu0 0
          %865 = vmatpush1.bf16.msra.mxu0 0
          %866 = vmatprep.subr.bf16.mxu0 0
          %867 = vmatpush1.bf16.msra.mxu0 0
          %868 = vmatprep.subr.bf16.mxu0 0
          %869 = vmatpush1.bf16.msra.mxu0 0
          %870 = vmatprep.subr.bf16.mxu0 0
          %871 = vmatpush1.bf16.msra.mxu0 0
          %872 = vmatprep.subr.bf16.mxu0 0
          %873 = vmatpush1.bf16.msra.mxu0 0
          %874 = vmatprep.subr.bf16.mxu0 0
          %875 = vmatpush1.bf16.msra.mxu0 0
          %876 = vmatprep.subr.bf16.mxu0 0
          %877 = vmatpush1.bf16.msra.mxu0 0
          %878 = vmatprep.subr.bf16.mxu0 0
          %879 = vmatpush1.bf16.msra.mxu0 0
          %880 = vmatprep.mubr.bf16.mxu0 0
          %881 = vmatmul.mubr.bf16.gmra.mrb[0].mxu0 %v655
          %v882 = vpop.f32.mrb[0].mxu0
          %v883 = vadd.f32 0.0, %v882
          %v884 = vpop.f32.mrb[0].mxu0
          %v885 = vadd.f32 0.0, %v884
          %v886 = vpop.f32.mrb[0].mxu0
          %v887 = vpop.f32.mrb[0].mxu0
          %888 = vdwg.mxu0
          %889 = vmatprep.subr.bf16.mxu0 %v787
          %890 = vmatpush1.bf16.msra.mxu0 %v786
          %891 = vmatprep.subr.bf16.mxu0 %v791
          %892 = vmatpush1.bf16.msra.mxu0 %v790
          %893 = vmatprep.subr.bf16.mxu0 %v795
          %894 = vmatpush1.bf16.msra.mxu0 %v794
          %895 = vmatprep.subr.bf16.mxu0 %v799
          %896 = vmatpush1.bf16.msra.mxu0 %v798
          %897 = vmatprep.subr.bf16.mxu0 %v803
          %898 = vmatpush1.bf16.msra.mxu0 %v802
          %899 = vmatprep.subr.bf16.mxu0 %v807
          %900 = vmatpush1.bf16.msra.mxu0 %v806
          %901 = vmatprep.subr.bf16.mxu0 %v811
          %902 = vmatpush1.bf16.msra.mxu0 %v810
          %903 = vmatprep.subr.bf16.mxu0 %v815
          %904 = vmatpush1.bf16.msra.mxu0 %v814
          %905 = vmatprep.subr.bf16.mxu0 0
          %906 = vmatpush1.bf16.msra.mxu0 0
          %907 = vmatprep.subr.bf16.mxu0 0
          %908 = vmatpush1.bf16.msra.mxu0 0
          %909 = vmatprep.subr.bf16.mxu0 0
          %910 = vmatpush1.bf16.msra.mxu0 0
          %911 = vmatprep.subr.bf16.mxu0 0
          %912 = vmatpush1.bf16.msra.mxu0 0
          %913 = vmatprep.subr.bf16.mxu0 0
          %914 = vmatpush1.bf16.msra.mxu0 0
          %915 = vmatprep.subr.bf16.mxu0 0
          %916 = vmatpush1.bf16.msra.mxu0 0
          %917 = vmatprep.subr.bf16.mxu0 0
          %918 = vmatpush1.bf16.msra.mxu0 0
          %919 = vmatprep.subr.bf16.mxu0 0
          %920 = vmatpush1.bf16.msra.mxu0 0
          %921 = vmatprep.mubr.bf16.mxu0 0
          %922 = vmatmul.mubr.bf16.gmra.mrb[0].mxu0 %v655
          %v923 = vpop.f32.mrb[0].mxu0
          %v924 = vadd.f32 0.0, %v923
          %v925 = vpop.f32.mrb[0].mxu0
          %v926 = vadd.f32 0.0, %v925
          %v927 = vpop.f32.mrb[0].mxu0
          %v928 = vpop.f32.mrb[0].mxu0
          %929 = vdwg.mxu0
          %v930 = vadd.f32 %v651, %v883
          %v931 = vadd.f32 %v652, %v885
          %v932 = vadd.f32 %v653, %v924
          %v933 = vadd.f32 %v654, %v926
          %v934 = vmul.f32 %v930, 0.5
          %v935 = vtanh.pop %v934
          %v936 = vadd.f32 %v935, 1.0
          %v937 = vmul.f32 %v936, 0.5
          %v938 = vmul.f32 %v931, 0.5
          %v939 = vtanh.pop %v938
          %v940 = vadd.f32 %v939, 1.0
          %v941 = vmul.f32 %v940, 0.5
          %v942 = vtanh.pop %v932
          %v943 = vmul.f32 %v933, 0.5
          %v944 = vtanh.pop %v943
          %v945 = vadd.f32 %v944, 1.0
          %v946 = vmul.f32 %v945, 0.5
          %v947 = vld [vmem:[#allocation3] sm:$0xff]
          %v948 = vmul.f32 %v941, %v947
          %v949 = vmul.f32 %v937, %v942
          %v950 = vadd.f32 %v948, %v949
          %v951 = vtanh.pop %v950
          %v952 = vmul.f32 %v946, %v951
          %953 = vst [vmem:[#allocation3] sm:$0xff] %v950
          %v954 = vpack.c.bf16 %v952, %v952
          %955 = vst [vmem:[#allocation2] sm:$0xf] %v954
          %v957 = vcombine.high %v952, %v952
          %v959 = vunpack.c.l.s4 1966171168
          %v960 = vunpack.c.0.s8 %v959
          %v961 = vlaneseq
          %v962 = vshrl.u32 %v961, 7
          %v963 = vsub.s32 %v960, %v962
          %v964 = vrot.slane %v952, %v963
          %v966 = vunpack.c.l.s4 1966171168
          %v967 = vunpack.c.0.s8 %v966
          %v968 = vlaneseq
          %v969 = vshrl.u32 %v968, 7
          %v970 = vsub.s32 %v967, %v969
          %v971 = vrot.slane %v957, %v970
          %v972 = vcombine.high %v964, %v964
          %v973 = vcombine.high %v971, %v971
          %v975 = vunpack.c.l.s4 1966171168
          %v976 = vunpack.c.0.s8 %v975
          %v977 = vlaneseq
          %v978 = vshrl.u32 %v977, 7
          %v979 = vsub.s32 %v976, %v978
          %v980 = vrot.slane %v964, %v979
          %v982 = vunpack.c.l.s4 1966171168
          %v983 = vunpack.c.0.s8 %v982
          %v984 = vlaneseq
          %v985 = vshrl.u32 %v984, 7
          %v986 = vsub.s32 %v983, %v985
          %v987 = vrot.slane %v971, %v986
          %v989 = vunpack.c.l.s4 1966171168
          %v990 = vunpack.c.0.s8 %v989
          %v991 = vlaneseq
          %v992 = vshrl.u32 %v991, 7
          %v993 = vsub.s32 %v990, %v992
          %v994 = vrot.slane %v972, %v993
          %v996 = vunpack.c.l.s4 1966171168
          %v997 = vunpack.c.0.s8 %v996
          %v998 = vlaneseq
          %v999 = vshrl.u32 %v998, 7
          %v1000 = vsub.s32 %v997, %v999
          %v1001 = vrot.slane %v973, %v1000
          %v1002 = vcombine.high %v980, %v980
          %v1003 = vcombine.high %v987, %v987
          %v1004 = vcombine.high %v994, %v994
          %v1005 = vcombine.high %v1001, %v1001
          %1014 = vst [vmem:[%s253 + $0x1] sm:$0x1] %v980
          %1015 = vst [vmem:[%s253 + $0x9] sm:$0x1] %v994
          %1016 = vst [vmem:[%s253 + $0x11] sm:$0x1] %v1002
          %1017 = vst [vmem:[%s253 + $0x19] sm:$0x1] %v1004
          %1018 = vst [vmem:[%s253 + $0x21] sm:$0x1] %v987
          %1019 = vst [vmem:[%s253 + $0x29] sm:$0x1] %v1001
          %1020 = vst [vmem:[%s253 + $0x31] sm:$0x1] %v1003
          %1021 = vst [vmem:[%s253 + $0x39] sm:$0x1] %v1005
          %s1022 = scalar_lea.vmem %s234, 32 [#allocation4]
          %v1023 = vld [vmem:[%s1022] sm:$0xff]
          %v1024 = vld [vmem:[%s1022 + $0x8] sm:$0xff]
          %v1025 = vunpack.c.l.bf16 %v1023
          %v1026 = vunpack.c.h.bf16 %v1023
          %v1027 = vunpack.c.l.bf16 %v1024
          %v1028 = vunpack.c.h.bf16 %v1024
          %v1029 = vld [vmem:[#allocation2] sm:$0xf]
          %v1030 = vld [vmem:[%s1] sm:$0xff]
          %v1031 = vld [vmem:[%s1 + $0x8] sm:$0xff]
          %v1032 = vld [vmem:[%s1 + $0x10] sm:$0xff]
          %v1033 = vld [vmem:[%s1 + $0x18] sm:$0xff]
          %v1034 = vld [vmem:[%s1 + $0x20] sm:$0xff]
          %v1035 = vld [vmem:[%s1 + $0x28] sm:$0xff]
          %v1036 = vld [vmem:[%s1 + $0x30] sm:$0xff]
          %v1037 = vld [vmem:[%s1 + $0x38] sm:$0xff]
          %v1038 = vld [vmem:[%s1 + $0x40] sm:$0xff]
          %v1039 = vld [vmem:[%s1 + $0x48] sm:$0xff]
          %v1040 = vld [vmem:[%s1 + $0x50] sm:$0xff]
          %v1041 = vld [vmem:[%s1 + $0x58] sm:$0xff]
          %v1042 = vld [vmem:[%s1 + $0x60] sm:$0xff]
          %v1043 = vld [vmem:[%s1 + $0x68] sm:$0xff]
          %v1044 = vld [vmem:[%s1 + $0x70] sm:$0xff]
          %v1045 = vld [vmem:[%s1 + $0x78] sm:$0xff]
          %v1046 = vld [vmem:[%s1 + $0x80] sm:$0xff]
          %v1047 = vld [vmem:[%s1 + $0x88] sm:$0xff]
          %v1048 = vld [vmem:[%s1 + $0x90] sm:$0xff]
          %v1049 = vld [vmem:[%s1 + $0x98] sm:$0xff]
          %v1050 = vld [vmem:[%s1 + $0xa0] sm:$0xff]
          %v1051 = vld [vmem:[%s1 + $0xa8] sm:$0xff]
          %v1052 = vld [vmem:[%s1 + $0xb0] sm:$0xff]
          %v1053 = vld [vmem:[%s1 + $0xb8] sm:$0xff]
          %v1054 = vld [vmem:[%s1 + $0xc0] sm:$0xff]
          %v1055 = vld [vmem:[%s1 + $0xc8] sm:$0xff]
          %v1056 = vld [vmem:[%s1 + $0xd0] sm:$0xff]
          %v1057 = vld [vmem:[%s1 + $0xd8] sm:$0xff]
          %v1058 = vld [vmem:[%s1 + $0xe0] sm:$0xff]
          %v1059 = vld [vmem:[%s1 + $0xe8] sm:$0xff]
          %v1060 = vld [vmem:[%s1 + $0xf0] sm:$0xff]
          %v1061 = vld [vmem:[%s1 + $0xf8] sm:$0xff]
          %v1094 = vunpack.c.l.b16 %v1030
          %v1095 = vunpack.c.h.b16 %v1030
          %v1096 = vunpack.c.l.b16 %v1031
          %v1097 = vunpack.c.h.b16 %v1031
          %v1098 = vunpack.c.l.b16 %v1032
          %v1099 = vunpack.c.h.b16 %v1032
          %v1100 = vunpack.c.l.b16 %v1033
          %v1101 = vunpack.c.h.b16 %v1033
          %v1102 = vunpack.c.l.b16 %v1034
          %v1103 = vunpack.c.h.b16 %v1034
          %v1104 = vunpack.c.l.b16 %v1035
          %v1105 = vunpack.c.h.b16 %v1035
          %v1106 = vunpack.c.l.b16 %v1036
          %v1107 = vunpack.c.h.b16 %v1036
          %v1108 = vunpack.c.l.b16 %v1037
          %v1109 = vunpack.c.h.b16 %v1037
          %v1110 = vunpack.c.l.b16 %v1038
          %v1111 = vunpack.c.h.b16 %v1038
          %v1112 = vunpack.c.l.b16 %v1039
          %v1113 = vunpack.c.h.b16 %v1039
          %v1114 = vunpack.c.l.b16 %v1040
          %v1115 = vunpack.c.h.b16 %v1040
          %v1116 = vunpack.c.l.b16 %v1041
          %v1117 = vunpack.c.h.b16 %v1041
          %v1118 = vunpack.c.l.b16 %v1042
          %v1119 = vunpack.c.h.b16 %v1042
          %v1120 = vunpack.c.l.b16 %v1043
          %v1121 = vunpack.c.h.b16 %v1043
          %v1122 = vunpack.c.l.b16 %v1044
          %v1123 = vunpack.c.h.b16 %v1044
          %v1124 = vunpack.c.l.b16 %v1045
          %v1125 = vunpack.c.h.b16 %v1045
          %v1126 = vunpack.c.l.b16 %v1046
          %v1127 = vunpack.c.h.b16 %v1046
          %v1128 = vunpack.c.l.b16 %v1047
          %v1129 = vunpack.c.h.b16 %v1047
          %v1130 = vunpack.c.l.b16 %v1048
          %v1131 = vunpack.c.h.b16 %v1048
          %v1132 = vunpack.c.l.b16 %v1049
          %v1133 = vunpack.c.h.b16 %v1049
          %v1134 = vunpack.c.l.b16 %v1050
          %v1135 = vunpack.c.h.b16 %v1050
          %v1136 = vunpack.c.l.b16 %v1051
          %v1137 = vunpack.c.h.b16 %v1051
          %v1138 = vunpack.c.l.b16 %v1052
          %v1139 = vunpack.c.h.b16 %v1052
          %v1140 = vunpack.c.l.b16 %v1053
          %v1141 = vunpack.c.h.b16 %v1053
          %v1142 = vunpack.c.l.b16 %v1054
          %v1143 = vunpack.c.h.b16 %v1054
          %v1144 = vunpack.c.l.b16 %v1055
          %v1145 = vunpack.c.h.b16 %v1055
          %v1146 = vunpack.c.l.b16 %v1056
          %v1147 = vunpack.c.h.b16 %v1056
          %v1148 = vunpack.c.l.b16 %v1057
          %v1149 = vunpack.c.h.b16 %v1057
          %v1150 = vunpack.c.l.b16 %v1058
          %v1151 = vunpack.c.h.b16 %v1058
          %v1152 = vunpack.c.l.b16 %v1059
          %v1153 = vunpack.c.h.b16 %v1059
          %v1154 = vunpack.c.l.b16 %v1060
          %v1155 = vunpack.c.h.b16 %v1060
          %v1156 = vunpack.c.l.b16 %v1061
          %v1157 = vunpack.c.h.b16 %v1061
          %v1158 = vpack.c.b16 %v1098, %v1094
          %v1159 = vpack.c.b16 %v1099, %v1095
          %v1160 = vpack.c.b16 %v1100, %v1096
          %v1161 = vpack.c.b16 %v1101, %v1097
          %v1162 = vpack.c.b16 %v1106, %v1102
          %v1163 = vpack.c.b16 %v1107, %v1103
          %v1164 = vpack.c.b16 %v1108, %v1104
          %v1165 = vpack.c.b16 %v1109, %v1105
          %v1166 = vpack.c.b16 %v1114, %v1110
          %v1167 = vpack.c.b16 %v1115, %v1111
          %v1168 = vpack.c.b16 %v1116, %v1112
          %v1169 = vpack.c.b16 %v1117, %v1113
          %v1170 = vpack.c.b16 %v1122, %v1118
          %v1171 = vpack.c.b16 %v1123, %v1119
          %v1172 = vpack.c.b16 %v1124, %v1120
          %v1173 = vpack.c.b16 %v1125, %v1121
          %v1174 = vpack.c.b16 %v1130, %v1126
          %v1175 = vpack.c.b16 %v1131, %v1127
          %v1176 = vpack.c.b16 %v1132, %v1128
          %v1177 = vpack.c.b16 %v1133, %v1129
          %v1178 = vpack.c.b16 %v1138, %v1134
          %v1179 = vpack.c.b16 %v1139, %v1135
          %v1180 = vpack.c.b16 %v1140, %v1136
          %v1181 = vpack.c.b16 %v1141, %v1137
          %v1182 = vpack.c.b16 %v1146, %v1142
          %v1183 = vpack.c.b16 %v1147, %v1143
          %v1184 = vpack.c.b16 %v1148, %v1144
          %v1185 = vpack.c.b16 %v1149, %v1145
          %v1186 = vpack.c.b16 %v1154, %v1150
          %v1187 = vpack.c.b16 %v1155, %v1151
          %v1188 = vpack.c.b16 %v1156, %v1152
          %v1189 = vpack.c.b16 %v1157, %v1153
          %1222 = vmatprep.subr.bf16.mxu0 %v1159
          %1223 = vmatpush1.bf16.msra.mxu0 %v1158
          %1224 = vmatprep.subr.bf16.mxu0 %v1163
          %1225 = vmatpush1.bf16.msra.mxu0 %v1162
          %1226 = vmatprep.subr.bf16.mxu0 %v1167
          %1227 = vmatpush1.bf16.msra.mxu0 %v1166
          %1228 = vmatprep.subr.bf16.mxu0 %v1171
          %1229 = vmatpush1.bf16.msra.mxu0 %v1170
          %1230 = vmatprep.subr.bf16.mxu0 %v1175
          %1231 = vmatpush1.bf16.msra.mxu0 %v1174
          %1232 = vmatprep.subr.bf16.mxu0 %v1179
          %1233 = vmatpush1.bf16.msra.mxu0 %v1178
          %1234 = vmatprep.subr.bf16.mxu0 %v1183
          %1235 = vmatpush1.bf16.msra.mxu0 %v1182
          %1236 = vmatprep.subr.bf16.mxu0 %v1187
          %1237 = vmatpush1.bf16.msra.mxu0 %v1186
          %1238 = vmatprep.subr.bf16.mxu0 0
          %1239 = vmatpush1.bf16.msra.mxu0 0
          %1240 = vmatprep.subr.bf16.mxu0 0
          %1241 = vmatpush1.bf16.msra.mxu0 0
          %1242 = vmatprep.subr.bf16.mxu0 0
          %1243 = vmatpush1.bf16.msra.mxu0 0
          %1244 = vmatprep.subr.bf16.mxu0 0
          %1245 = vmatpush1.bf16.msra.mxu0 0
          %1246 = vmatprep.subr.bf16.mxu0 0
          %1247 = vmatpush1.bf16.msra.mxu0 0
          %1248 = vmatprep.subr.bf16.mxu0 0
          %1249 = vmatpush1.bf16.msra.mxu0 0
          %1250 = vmatprep.subr.bf16.mxu0 0
          %1251 = vmatpush1.bf16.msra.mxu0 0
          %1252 = vmatprep.subr.bf16.mxu0 0
          %1253 = vmatpush1.bf16.msra.mxu0 0
          %1254 = vmatprep.mubr.bf16.mxu0 0
          %1255 = vmatmul.mubr.bf16.gmra.mrb[0].mxu0 %v1029
          %v1256 = vpop.f32.mrb[0].mxu0
          %v1257 = vadd.f32 0.0, %v1256
          %v1258 = vpop.f32.mrb[0].mxu0
          %v1259 = vadd.f32 0.0, %v1258
          %v1260 = vpop.f32.mrb[0].mxu0
          %v1261 = vpop.f32.mrb[0].mxu0
          %1262 = vdwg.mxu0
          %1263 = vmatprep.subr.bf16.mxu0 %v1161
          %1264 = vmatpush1.bf16.msra.mxu0 %v1160
          %1265 = vmatprep.subr.bf16.mxu0 %v1165
          %1266 = vmatpush1.bf16.msra.mxu0 %v1164
          %1267 = vmatprep.subr.bf16.mxu0 %v1169
          %1268 = vmatpush1.bf16.msra.mxu0 %v1168
          %1269 = vmatprep.subr.bf16.mxu0 %v1173
          %1270 = vmatpush1.bf16.msra.mxu0 %v1172
          %1271 = vmatprep.subr.bf16.mxu0 %v1177
          %1272 = vmatpush1.bf16.msra.mxu0 %v1176
          %1273 = vmatprep.subr.bf16.mxu0 %v1181
          %1274 = vmatpush1.bf16.msra.mxu0 %v1180
          %1275 = vmatprep.subr.bf16.mxu0 %v1185
          %1276 = vmatpush1.bf16.msra.mxu0 %v1184
          %1277 = vmatprep.subr.bf16.mxu0 %v1189
          %1278 = vmatpush1.bf16.msra.mxu0 %v1188
          %1279 = vmatprep.subr.bf16.mxu0 0
          %1280 = vmatpush1.bf16.msra.mxu0 0
          %1281 = vmatprep.subr.bf16.mxu0 0
          %1282 = vmatpush1.bf16.msra.mxu0 0
          %1283 = vmatprep.subr.bf16.mxu0 0
          %1284 = vmatpush1.bf16.msra.mxu0 0
          %1285 = vmatprep.subr.bf16.mxu0 0
          %1286 = vmatpush1.bf16.msra.mxu0 0
          %1287 = vmatprep.subr.bf16.mxu0 0
          %1288 = vmatpush1.bf16.msra.mxu0 0
          %1289 = vmatprep.subr.bf16.mxu0 0
          %1290 = vmatpush1.bf16.msra.mxu0 0
          %1291 = vmatprep.subr.bf16.mxu0 0
          %1292 = vmatpush1.bf16.msra.mxu0 0
          %1293 = vmatprep.subr.bf16.mxu0 0
          %1294 = vmatpush1.bf16.msra.mxu0 0
          %1295 = vmatprep.mubr.bf16.mxu0 0
          %1296 = vmatmul.mubr.bf16.gmra.mrb[0].mxu0 %v1029
          %v1297 = vpop.f32.mrb[0].mxu0
          %v1298 = vadd.f32 0.0, %v1297
          %v1299 = vpop.f32.mrb[0].mxu0
          %v1300 = vadd.f32 0.0, %v1299
          %v1301 = vpop.f32.mrb[0].mxu0
          %v1302 = vpop.f32.mrb[0].mxu0
          %1303 = vdwg.mxu0
          %v1304 = vadd.f32 %v1025, %v1257
          %v1305 = vadd.f32 %v1026, %v1259
          %v1306 = vadd.f32 %v1027, %v1298
          %v1307 = vadd.f32 %v1028, %v1300
          %v1308 = vmul.f32 %v1304, 0.5
          %v1309 = vtanh.pop %v1308
          %v1310 = vadd.f32 %v1309, 1.0
          %v1311 = vmul.f32 %v1310, 0.5
          %v1312 = vmul.f32 %v1305, 0.5
          %v1313 = vtanh.pop %v1312
          %v1314 = vadd.f32 %v1313, 1.0
          %v1315 = vmul.f32 %v1314, 0.5
          %v1316 = vtanh.pop %v1306
          %v1317 = vmul.f32 %v1307, 0.5
          %v1318 = vtanh.pop %v1317
          %v1319 = vadd.f32 %v1318, 1.0
          %v1320 = vmul.f32 %v1319, 0.5
          %v1321 = vld [vmem:[#allocation3] sm:$0xff]
          %v1322 = vmul.f32 %v1315, %v1321
          %v1323 = vmul.f32 %v1311, %v1316
          %v1324 = vadd.f32 %v1322, %v1323
          %v1325 = vtanh.pop %v1324
          %v1326 = vmul.f32 %v1320, %v1325
          %1327 = vst [vmem:[#allocation3] sm:$0xff] %v1324
          %v1328 = vpack.c.bf16 %v1326, %v1326
          %1329 = vst [vmem:[#allocation2] sm:$0xf] %v1328
          %v1331 = vcombine.high %v1326, %v1326
          %v1333 = vunpack.c.l.s4 1966171168
          %v1334 = vunpack.c.0.s8 %v1333
          %v1335 = vlaneseq
          %v1336 = vshrl.u32 %v1335, 7
          %v1337 = vsub.s32 %v1334, %v1336
          %v1338 = vrot.slane %v1326, %v1337
          %v1340 = vunpack.c.l.s4 1966171168
          %v1341 = vunpack.c.0.s8 %v1340
          %v1342 = vlaneseq
          %v1343 = vshrl.u32 %v1342, 7
          %v1344 = vsub.s32 %v1341, %v1343
          %v1345 = vrot.slane %v1331, %v1344
          %v1346 = vcombine.high %v1338, %v1338
          %v1347 = vcombine.high %v1345, %v1345
          %v1349 = vunpack.c.l.s4 1966171168
          %v1350 = vunpack.c.0.s8 %v1349
          %v1351 = vlaneseq
          %v1352 = vshrl.u32 %v1351, 7
          %v1353 = vsub.s32 %v1350, %v1352
          %v1354 = vrot.slane %v1338, %v1353
          %v1356 = vunpack.c.l.s4 1966171168
          %v1357 = vunpack.c.0.s8 %v1356
          %v1358 = vlaneseq
          %v1359 = vshrl.u32 %v1358, 7
          %v1360 = vsub.s32 %v1357, %v1359
          %v1361 = vrot.slane %v1345, %v1360
          %v1363 = vunpack.c.l.s4 1966171168
          %v1364 = vunpack.c.0.s8 %v1363
          %v1365 = vlaneseq
          %v1366 = vshrl.u32 %v1365, 7
          %v1367 = vsub.s32 %v1364, %v1366
          %v1368 = vrot.slane %v1346, %v1367
          %v1370 = vunpack.c.l.s4 1966171168
          %v1371 = vunpack.c.0.s8 %v1370
          %v1372 = vlaneseq
          %v1373 = vshrl.u32 %v1372, 7
          %v1374 = vsub.s32 %v1371, %v1373
          %v1375 = vrot.slane %v1347, %v1374
          %v1376 = vcombine.high %v1354, %v1354
          %v1377 = vcombine.high %v1361, %v1361
          %v1378 = vcombine.high %v1368, %v1368
          %v1379 = vcombine.high %v1375, %v1375
          %1388 = vst [vmem:[%s253 + $0x2] sm:$0x1] %v1354
          %1389 = vst [vmem:[%s253 + $0xa] sm:$0x1] %v1368
          %1390 = vst [vmem:[%s253 + $0x12] sm:$0x1] %v1376
          %1391 = vst [vmem:[%s253 + $0x1a] sm:$0x1] %v1378
          %1392 = vst [vmem:[%s253 + $0x22] sm:$0x1] %v1361
          %1393 = vst [vmem:[%s253 + $0x2a] sm:$0x1] %v1375
          %1394 = vst [vmem:[%s253 + $0x32] sm:$0x1] %v1377
          %1395 = vst [vmem:[%s253 + $0x3a] sm:$0x1] %v1379
          %s1396 = scalar_lea.vmem %s234, 48 [#allocation4]
          %v1397 = vld [vmem:[%s1396] sm:$0xff]
          %v1398 = vld [vmem:[%s1396 + $0x8] sm:$0xff]
          %v1399 = vunpack.c.l.bf16 %v1397
          %v1400 = vunpack.c.h.bf16 %v1397
          %v1401 = vunpack.c.l.bf16 %v1398
          %v1402 = vunpack.c.h.bf16 %v1398
          %v1403 = vld [vmem:[#allocation2] sm:$0xf]
          %v1404 = vld [vmem:[%s1] sm:$0xff]
          %v1405 = vld [vmem:[%s1 + $0x8] sm:$0xff]
          %v1406 = vld [vmem:[%s1 + $0x10] sm:$0xff]
          %v1407 = vld [vmem:[%s1 + $0x18] sm:$0xff]
          %v1408 = vld [vmem:[%s1 + $0x20] sm:$0xff]
          %v1409 = vld [vmem:[%s1 + $0x28] sm:$0xff]
          %v1410 = vld [vmem:[%s1 + $0x30] sm:$0xff]
          %v1411 = vld [vmem:[%s1 + $0x38] sm:$0xff]
          %v1412 = vld [vmem:[%s1 + $0x40] sm:$0xff]
          %v1413 = vld [vmem:[%s1 + $0x48] sm:$0xff]
          %v1414 = vld [vmem:[%s1 + $0x50] sm:$0xff]
          %v1415 = vld [vmem:[%s1 + $0x58] sm:$0xff]
          %v1416 = vld [vmem:[%s1 + $0x60] sm:$0xff]
          %v1417 = vld [vmem:[%s1 + $0x68] sm:$0xff]
          %v1418 = vld [vmem:[%s1 + $0x70] sm:$0xff]
          %v1419 = vld [vmem:[%s1 + $0x78] sm:$0xff]
          %v1420 = vld [vmem:[%s1 + $0x80] sm:$0xff]
          %v1421 = vld [vmem:[%s1 + $0x88] sm:$0xff]
          %v1422 = vld [vmem:[%s1 + $0x90] sm:$0xff]
          %v1423 = vld [vmem:[%s1 + $0x98] sm:$0xff]
          %v1424 = vld [vmem:[%s1 + $0xa0] sm:$0xff]
          %v1425 = vld [vmem:[%s1 + $0xa8] sm:$0xff]
          %v1426 = vld [vmem:[%s1 + $0xb0] sm:$0xff]
          %v1427 = vld [vmem:[%s1 + $0xb8] sm:$0xff]
          %v1428 = vld [vmem:[%s1 + $0xc0] sm:$0xff]
          %v1429 = vld [vmem:[%s1 + $0xc8] sm:$0xff]
          %v1430 = vld [vmem:[%s1 + $0xd0] sm:$0xff]
          %v1431 = vld [vmem:[%s1 + $0xd8] sm:$0xff]
          %v1432 = vld [vmem:[%s1 + $0xe0] sm:$0xff]
          %v1433 = vld [vmem:[%s1 + $0xe8] sm:$0xff]
          %v1434 = vld [vmem:[%s1 + $0xf0] sm:$0xff]
          %v1435 = vld [vmem:[%s1 + $0xf8] sm:$0xff]
          %v1468 = vunpack.c.l.b16 %v1404
          %v1469 = vunpack.c.h.b16 %v1404
          %v1470 = vunpack.c.l.b16 %v1405
          %v1471 = vunpack.c.h.b16 %v1405
          %v1472 = vunpack.c.l.b16 %v1406
          %v1473 = vunpack.c.h.b16 %v1406
          %v1474 = vunpack.c.l.b16 %v1407
          %v1475 = vunpack.c.h.b16 %v1407
          %v1476 = vunpack.c.l.b16 %v1408
          %v1477 = vunpack.c.h.b16 %v1408
          %v1478 = vunpack.c.l.b16 %v1409
          %v1479 = vunpack.c.h.b16 %v1409
          %v1480 = vunpack.c.l.b16 %v1410
          %v1481 = vunpack.c.h.b16 %v1410
          %v1482 = vunpack.c.l.b16 %v1411
          %v1483 = vunpack.c.h.b16 %v1411
          %v1484 = vunpack.c.l.b16 %v1412
          %v1485 = vunpack.c.h.b16 %v1412
          %v1486 = vunpack.c.l.b16 %v1413
          %v1487 = vunpack.c.h.b16 %v1413
          %v1488 = vunpack.c.l.b16 %v1414
          %v1489 = vunpack.c.h.b16 %v1414
          %v1490 = vunpack.c.l.b16 %v1415
          %v1491 = vunpack.c.h.b16 %v1415
          %v1492 = vunpack.c.l.b16 %v1416
          %v1493 = vunpack.c.h.b16 %v1416
          %v1494 = vunpack.c.l.b16 %v1417
          %v1495 = vunpack.c.h.b16 %v1417
          %v1496 = vunpack.c.l.b16 %v1418
          %v1497 = vunpack.c.h.b16 %v1418
          %v1498 = vunpack.c.l.b16 %v1419
          %v1499 = vunpack.c.h.b16 %v1419
          %v1500 = vunpack.c.l.b16 %v1420
          %v1501 = vunpack.c.h.b16 %v1420
          %v1502 = vunpack.c.l.b16 %v1421
          %v1503 = vunpack.c.h.b16 %v1421
          %v1504 = vunpack.c.l.b16 %v1422
          %v1505 = vunpack.c.h.b16 %v1422
          %v1506 = vunpack.c.l.b16 %v1423
          %v1507 = vunpack.c.h.b16 %v1423
          %v1508 = vunpack.c.l.b16 %v1424
          %v1509 = vunpack.c.h.b16 %v1424
          %v1510 = vunpack.c.l.b16 %v1425
          %v1511 = vunpack.c.h.b16 %v1425
          %v1512 = vunpack.c.l.b16 %v1426
          %v1513 = vunpack.c.h.b16 %v1426
          %v1514 = vunpack.c.l.b16 %v1427
          %v1515 = vunpack.c.h.b16 %v1427
          %v1516 = vunpack.c.l.b16 %v1428
          %v1517 = vunpack.c.h.b16 %v1428
          %v1518 = vunpack.c.l.b16 %v1429
          %v1519 = vunpack.c.h.b16 %v1429
          %v1520 = vunpack.c.l.b16 %v1430
          %v1521 = vunpack.c.h.b16 %v1430
          %v1522 = vunpack.c.l.b16 %v1431
          %v1523 = vunpack.c.h.b16 %v1431
          %v1524 = vunpack.c.l.b16 %v1432
          %v1525 = vunpack.c.h.b16 %v1432
          %v1526 = vunpack.c.l.b16 %v1433
          %v1527 = vunpack.c.h.b16 %v1433
          %v1528 = vunpack.c.l.b16 %v1434
          %v1529 = vunpack.c.h.b16 %v1434
          %v1530 = vunpack.c.l.b16 %v1435
          %v1531 = vunpack.c.h.b16 %v1435
          %v1532 = vpack.c.b16 %v1472, %v1468
          %v1533 = vpack.c.b16 %v1473, %v1469
          %v1534 = vpack.c.b16 %v1474, %v1470
          %v1535 = vpack.c.b16 %v1475, %v1471
          %v1536 = vpack.c.b16 %v1480, %v1476
          %v1537 = vpack.c.b16 %v1481, %v1477
          %v1538 = vpack.c.b16 %v1482, %v1478
          %v1539 = vpack.c.b16 %v1483, %v1479
          %v1540 = vpack.c.b16 %v1488, %v1484
          %v1541 = vpack.c.b16 %v1489, %v1485
          %v1542 = vpack.c.b16 %v1490, %v1486
          %v1543 = vpack.c.b16 %v1491, %v1487
          %v1544 = vpack.c.b16 %v1496, %v1492
          %v1545 = vpack.c.b16 %v1497, %v1493
          %v1546 = vpack.c.b16 %v1498, %v1494
          %v1547 = vpack.c.b16 %v1499, %v1495
          %v1548 = vpack.c.b16 %v1504, %v1500
          %v1549 = vpack.c.b16 %v1505, %v1501
          %v1550 = vpack.c.b16 %v1506, %v1502
          %v1551 = vpack.c.b16 %v1507, %v1503
          %v1552 = vpack.c.b16 %v1512, %v1508
          %v1553 = vpack.c.b16 %v1513, %v1509
          %v1554 = vpack.c.b16 %v1514, %v1510
          %v1555 = vpack.c.b16 %v1515, %v1511
          %v1556 = vpack.c.b16 %v1520, %v1516
          %v1557 = vpack.c.b16 %v1521, %v1517
          %v1558 = vpack.c.b16 %v1522, %v1518
          %v1559 = vpack.c.b16 %v1523, %v1519
          %v1560 = vpack.c.b16 %v1528, %v1524
          %v1561 = vpack.c.b16 %v1529, %v1525
          %v1562 = vpack.c.b16 %v1530, %v1526
          %v1563 = vpack.c.b16 %v1531, %v1527
          %1596 = vmatprep.subr.bf16.mxu0 %v1533
          %1597 = vmatpush1.bf16.msra.mxu0 %v1532
          %1598 = vmatprep.subr.bf16.mxu0 %v1537
          %1599 = vmatpush1.bf16.msra.mxu0 %v1536
          %1600 = vmatprep.subr.bf16.mxu0 %v1541
          %1601 = vmatpush1.bf16.msra.mxu0 %v1540
          %1602 = vmatprep.subr.bf16.mxu0 %v1545
          %1603 = vmatpush1.bf16.msra.mxu0 %v1544
          %1604 = vmatprep.subr.bf16.mxu0 %v1549
          %1605 = vmatpush1.bf16.msra.mxu0 %v1548
          %1606 = vmatprep.subr.bf16.mxu0 %v1553
          %1607 = vmatpush1.bf16.msra.mxu0 %v1552
          %1608 = vmatprep.subr.bf16.mxu0 %v1557
          %1609 = vmatpush1.bf16.msra.mxu0 %v1556
          %1610 = vmatprep.subr.bf16.mxu0 %v1561
          %1611 = vmatpush1.bf16.msra.mxu0 %v1560
          %1612 = vmatprep.subr.bf16.mxu0 0
          %1613 = vmatpush1.bf16.msra.mxu0 0
          %1614 = vmatprep.subr.bf16.mxu0 0
          %1615 = vmatpush1.bf16.msra.mxu0 0
          %1616 = vmatprep.subr.bf16.mxu0 0
          %1617 = vmatpush1.bf16.msra.mxu0 0
          %1618 = vmatprep.subr.bf16.mxu0 0
          %1619 = vmatpush1.bf16.msra.mxu0 0
          %1620 = vmatprep.subr.bf16.mxu0 0
          %1621 = vmatpush1.bf16.msra.mxu0 0
          %1622 = vmatprep.subr.bf16.mxu0 0
          %1623 = vmatpush1.bf16.msra.mxu0 0
          %1624 = vmatprep.subr.bf16.mxu0 0
          %1625 = vmatpush1.bf16.msra.mxu0 0
          %1626 = vmatprep.subr.bf16.mxu0 0
          %1627 = vmatpush1.bf16.msra.mxu0 0
          %1628 = vmatprep.mubr.bf16.mxu0 0
          %1629 = vmatmul.mubr.bf16.gmra.mrb[0].mxu0 %v1403
          %v1630 = vpop.f32.mrb[0].mxu0
          %v1631 = vadd.f32 0.0, %v1630
          %v1632 = vpop.f32.mrb[0].mxu0
          %v1633 = vadd.f32 0.0, %v1632
          %v1634 = vpop.f32.mrb[0].mxu0
          %v1635 = vpop.f32.mrb[0].mxu0
          %1636 = vdwg.mxu0
          %1637 = vmatprep.subr.bf16.mxu0 %v1535
          %1638 = vmatpush1.bf16.msra.mxu0 %v1534
          %1639 = vmatprep.subr.bf16.mxu0 %v1539
          %1640 = vmatpush1.bf16.msra.mxu0 %v1538
          %1641 = vmatprep.subr.bf16.mxu0 %v1543
          %1642 = vmatpush1.bf16.msra.mxu0 %v1542
          %1643 = vmatprep.subr.bf16.mxu0 %v1547
          %1644 = vmatpush1.bf16.msra.mxu0 %v1546
          %1645 = vmatprep.subr.bf16.mxu0 %v1551
          %1646 = vmatpush1.bf16.msra.mxu0 %v1550
          %1647 = vmatprep.subr.bf16.mxu0 %v1555
          %1648 = vmatpush1.bf16.msra.mxu0 %v1554
          %1649 = vmatprep.subr.bf16.mxu0 %v1559
          %1650 = vmatpush1.bf16.msra.mxu0 %v1558
          %1651 = vmatprep.subr.bf16.mxu0 %v1563
          %1652 = vmatpush1.bf16.msra.mxu0 %v1562
          %1653 = vmatprep.subr.bf16.mxu0 0
          %1654 = vmatpush1.bf16.msra.mxu0 0
          %1655 = vmatprep.subr.bf16.mxu0 0
          %1656 = vmatpush1.bf16.msra.mxu0 0
          %1657 = vmatprep.subr.bf16.mxu0 0
          %1658 = vmatpush1.bf16.msra.mxu0 0
          %1659 = vmatprep.subr.bf16.mxu0 0
          %1660 = vmatpush1.bf16.msra.mxu0 0
          %1661 = vmatprep.subr.bf16.mxu0 0
          %1662 = vmatpush1.bf16.msra.mxu0 0
          %1663 = vmatprep.subr.bf16.mxu0 0
          %1664 = vmatpush1.bf16.msra.mxu0 0
          %1665 = vmatprep.subr.bf16.mxu0 0
          %1666 = vmatpush1.bf16.msra.mxu0 0
          %1667 = vmatprep.subr.bf16.mxu0 0
          %1668 = vmatpush1.bf16.msra.mxu0 0
          %1669 = vmatprep.mubr.bf16.mxu0 0
          %1670 = vmatmul.mubr.bf16.gmra.mrb[0].mxu0 %v1403
          %v1671 = vpop.f32.mrb[0].mxu0
          %v1672 = vadd.f32 0.0, %v1671
          %v1673 = vpop.f32.mrb[0].mxu0
          %v1674 = vadd.f32 0.0, %v1673
          %v1675 = vpop.f32.mrb[0].mxu0
          %v1676 = vpop.f32.mrb[0].mxu0
          %1677 = vdwg.mxu0
          %v1678 = vadd.f32 %v1399, %v1631
          %v1679 = vadd.f32 %v1400, %v1633
          %v1680 = vadd.f32 %v1401, %v1672
          %v1681 = vadd.f32 %v1402, %v1674
          %v1682 = vmul.f32 %v1678, 0.5
          %v1683 = vtanh.pop %v1682
          %v1684 = vadd.f32 %v1683, 1.0
          %v1685 = vmul.f32 %v1684, 0.5
          %v1686 = vmul.f32 %v1679, 0.5
          %v1687 = vtanh.pop %v1686
          %v1688 = vadd.f32 %v1687, 1.0
          %v1689 = vmul.f32 %v1688, 0.5
          %v1690 = vtanh.pop %v1680
          %v1691 = vmul.f32 %v1681, 0.5
          %v1692 = vtanh.pop %v1691
          %v1693 = vadd.f32 %v1692, 1.0
          %v1694 = vmul.f32 %v1693, 0.5
          %v1695 = vld [vmem:[#allocation3] sm:$0xff]
          %v1696 = vmul.f32 %v1689, %v1695
          %v1697 = vmul.f32 %v1685, %v1690
          %v1698 = vadd.f32 %v1696, %v1697
          %v1699 = vtanh.pop %v1698
          %v1700 = vmul.f32 %v1694, %v1699
          %1701 = vst [vmem:[#allocation3] sm:$0xff] %v1698
          %v1702 = vpack.c.bf16 %v1700, %v1700
          %1703 = vst [vmem:[#allocation2] sm:$0xf] %v1702
          %v1705 = vcombine.high %v1700, %v1700
          %v1707 = vunpack.c.l.s4 1966171168
          %v1708 = vunpack.c.0.s8 %v1707
          %v1709 = vlaneseq
          %v1710 = vshrl.u32 %v1709, 7
          %v1711 = vsub.s32 %v1708, %v1710
          %v1712 = vrot.slane %v1700, %v1711
          %v1714 = vunpack.c.l.s4 1966171168
          %v1715 = vunpack.c.0.s8 %v1714
          %v1716 = vlaneseq
          %v1717 = vshrl.u32 %v1716, 7
          %v1718 = vsub.s32 %v1715, %v1717
          %v1719 = vrot.slane %v1705, %v1718
          %v1720 = vcombine.high %v1712, %v1712
          %v1721 = vcombine.high %v1719, %v1719
          %v1723 = vunpack.c.l.s4 1966171168
          %v1724 = vunpack.c.0.s8 %v1723
          %v1725 = vlaneseq
          %v1726 = vshrl.u32 %v1725, 7
          %v1727 = vsub.s32 %v1724, %v1726
          %v1728 = vrot.slane %v1712, %v1727
          %v1730 = vunpack.c.l.s4 1966171168
          %v1731 = vunpack.c.0.s8 %v1730
          %v1732 = vlaneseq
          %v1733 = vshrl.u32 %v1732, 7
          %v1734 = vsub.s32 %v1731, %v1733
          %v1735 = vrot.slane %v1719, %v1734
          %v1737 = vunpack.c.l.s4 1966171168
          %v1738 = vunpack.c.0.s8 %v1737
          %v1739 = vlaneseq
          %v1740 = vshrl.u32 %v1739, 7
          %v1741 = vsub.s32 %v1738, %v1740
          %v1742 = vrot.slane %v1720, %v1741
          %v1744 = vunpack.c.l.s4 1966171168
          %v1745 = vunpack.c.0.s8 %v1744
          %v1746 = vlaneseq
          %v1747 = vshrl.u32 %v1746, 7
          %v1748 = vsub.s32 %v1745, %v1747
          %v1749 = vrot.slane %v1721, %v1748
          %v1750 = vcombine.high %v1728, %v1728
          %v1751 = vcombine.high %v1735, %v1735
          %v1752 = vcombine.high %v1742, %v1742
          %v1753 = vcombine.high %v1749, %v1749
          %1762 = vst [vmem:[%s253 + $0x3] sm:$0x1] %v1728
          %1763 = vst [vmem:[%s253 + $0xb] sm:$0x1] %v1742
          %1764 = vst [vmem:[%s253 + $0x13] sm:$0x1] %v1750
          %1765 = vst [vmem:[%s253 + $0x1b] sm:$0x1] %v1752
          %1766 = vst [vmem:[%s253 + $0x23] sm:$0x1] %v1735
          %1767 = vst [vmem:[%s253 + $0x2b] sm:$0x1] %v1749
          %1768 = vst [vmem:[%s253 + $0x33] sm:$0x1] %v1751
          %1769 = vst [vmem:[%s253 + $0x3b] sm:$0x1] %v1753
          %s1770 = scalar_lea.vmem %s234, 64 [#allocation4]
          %v1771 = vld [vmem:[%s1770] sm:$0xff]
          %v1772 = vld [vmem:[%s1770 + $0x8] sm:$0xff]
          %v1773 = vunpack.c.l.bf16 %v1771
          %v1774 = vunpack.c.h.bf16 %v1771
          %v1775 = vunpack.c.l.bf16 %v1772
          %v1776 = vunpack.c.h.bf16 %v1772
          %v1777 = vld [vmem:[#allocation2] sm:$0xf]
          %v1778 = vld [vmem:[%s1] sm:$0xff]
          %v1779 = vld [vmem:[%s1 + $0x8] sm:$0xff]
          %v1780 = vld [vmem:[%s1 + $0x10] sm:$0xff]
          %v1781 = vld [vmem:[%s1 + $0x18] sm:$0xff]
          %v1782 = vld [vmem:[%s1 + $0x20] sm:$0xff]
          %v1783 = vld [vmem:[%s1 + $0x28] sm:$0xff]
          %v1784 = vld [vmem:[%s1 + $0x30] sm:$0xff]
          %v1785 = vld [vmem:[%s1 + $0x38] sm:$0xff]
          %v1786 = vld [vmem:[%s1 + $0x40] sm:$0xff]
          %v1787 = vld [vmem:[%s1 + $0x48] sm:$0xff]
          %v1788 = vld [vmem:[%s1 + $0x50] sm:$0xff]
          %v1789 = vld [vmem:[%s1 + $0x58] sm:$0xff]
          %v1790 = vld [vmem:[%s1 + $0x60] sm:$0xff]
          %v1791 = vld [vmem:[%s1 + $0x68] sm:$0xff]
          %v1792 = vld [vmem:[%s1 + $0x70] sm:$0xff]
          %v1793 = vld [vmem:[%s1 + $0x78] sm:$0xff]
          %v1794 = vld [vmem:[%s1 + $0x80] sm:$0xff]
          %v1795 = vld [vmem:[%s1 + $0x88] sm:$0xff]
          %v1796 = vld [vmem:[%s1 + $0x90] sm:$0xff]
          %v1797 = vld [vmem:[%s1 + $0x98] sm:$0xff]
          %v1798 = vld [vmem:[%s1 + $0xa0] sm:$0xff]
          %v1799 = vld [vmem:[%s1 + $0xa8] sm:$0xff]
          %v1800 = vld [vmem:[%s1 + $0xb0] sm:$0xff]
          %v1801 = vld [vmem:[%s1 + $0xb8] sm:$0xff]
          %v1802 = vld [vmem:[%s1 + $0xc0] sm:$0xff]
          %v1803 = vld [vmem:[%s1 + $0xc8] sm:$0xff]
          %v1804 = vld [vmem:[%s1 + $0xd0] sm:$0xff]
          %v1805 = vld [vmem:[%s1 + $0xd8] sm:$0xff]
          %v1806 = vld [vmem:[%s1 + $0xe0] sm:$0xff]
          %v1807 = vld [vmem:[%s1 + $0xe8] sm:$0xff]
          %v1808 = vld [vmem:[%s1 + $0xf0] sm:$0xff]
          %v1809 = vld [vmem:[%s1 + $0xf8] sm:$0xff]
          %v1842 = vunpack.c.l.b16 %v1778
          %v1843 = vunpack.c.h.b16 %v1778
          %v1844 = vunpack.c.l.b16 %v1779
          %v1845 = vunpack.c.h.b16 %v1779
          %v1846 = vunpack.c.l.b16 %v1780
          %v1847 = vunpack.c.h.b16 %v1780
          %v1848 = vunpack.c.l.b16 %v1781
          %v1849 = vunpack.c.h.b16 %v1781
          %v1850 = vunpack.c.l.b16 %v1782
          %v1851 = vunpack.c.h.b16 %v1782
          %v1852 = vunpack.c.l.b16 %v1783
          %v1853 = vunpack.c.h.b16 %v1783
          %v1854 = vunpack.c.l.b16 %v1784
          %v1855 = vunpack.c.h.b16 %v1784
          %v1856 = vunpack.c.l.b16 %v1785
          %v1857 = vunpack.c.h.b16 %v1785
          %v1858 = vunpack.c.l.b16 %v1786
          %v1859 = vunpack.c.h.b16 %v1786
          %v1860 = vunpack.c.l.b16 %v1787
          %v1861 = vunpack.c.h.b16 %v1787
          %v1862 = vunpack.c.l.b16 %v1788
          %v1863 = vunpack.c.h.b16 %v1788
          %v1864 = vunpack.c.l.b16 %v1789
          %v1865 = vunpack.c.h.b16 %v1789
          %v1866 = vunpack.c.l.b16 %v1790
          %v1867 = vunpack.c.h.b16 %v1790
          %v1868 = vunpack.c.l.b16 %v1791
          %v1869 = vunpack.c.h.b16 %v1791
          %v1870 = vunpack.c.l.b16 %v1792
          %v1871 = vunpack.c.h.b16 %v1792
          %v1872 = vunpack.c.l.b16 %v1793
          %v1873 = vunpack.c.h.b16 %v1793
          %v1874 = vunpack.c.l.b16 %v1794
          %v1875 = vunpack.c.h.b16 %v1794
          %v1876 = vunpack.c.l.b16 %v1795
          %v1877 = vunpack.c.h.b16 %v1795
          %v1878 = vunpack.c.l.b16 %v1796
          %v1879 = vunpack.c.h.b16 %v1796
          %v1880 = vunpack.c.l.b16 %v1797
          %v1881 = vunpack.c.h.b16 %v1797
          %v1882 = vunpack.c.l.b16 %v1798
          %v1883 = vunpack.c.h.b16 %v1798
          %v1884 = vunpack.c.l.b16 %v1799
          %v1885 = vunpack.c.h.b16 %v1799
          %v1886 = vunpack.c.l.b16 %v1800
          %v1887 = vunpack.c.h.b16 %v1800
          %v1888 = vunpack.c.l.b16 %v1801
          %v1889 = vunpack.c.h.b16 %v1801
          %v1890 = vunpack.c.l.b16 %v1802
          %v1891 = vunpack.c.h.b16 %v1802
          %v1892 = vunpack.c.l.b16 %v1803
          %v1893 = vunpack.c.h.b16 %v1803
          %v1894 = vunpack.c.l.b16 %v1804
          %v1895 = vunpack.c.h.b16 %v1804
          %v1896 = vunpack.c.l.b16 %v1805
          %v1897 = vunpack.c.h.b16 %v1805
          %v1898 = vunpack.c.l.b16 %v1806
          %v1899 = vunpack.c.h.b16 %v1806
          %v1900 = vunpack.c.l.b16 %v1807
          %v1901 = vunpack.c.h.b16 %v1807
          %v1902 = vunpack.c.l.b16 %v1808
          %v1903 = vunpack.c.h.b16 %v1808
          %v1904 = vunpack.c.l.b16 %v1809
          %v1905 = vunpack.c.h.b16 %v1809
          %v1906 = vpack.c.b16 %v1846, %v1842
          %v1907 = vpack.c.b16 %v1847, %v1843
          %v1908 = vpack.c.b16 %v1848, %v1844
          %v1909 = vpack.c.b16 %v1849, %v1845
          %v1910 = vpack.c.b16 %v1854, %v1850
          %v1911 = vpack.c.b16 %v1855, %v1851
          %v1912 = vpack.c.b16 %v1856, %v1852
          %v1913 = vpack.c.b16 %v1857, %v1853
          %v1914 = vpack.c.b16 %v1862, %v1858
          %v1915 = vpack.c.b16 %v1863, %v1859
          %v1916 = vpack.c.b16 %v1864, %v1860
          %v1917 = vpack.c.b16 %v1865, %v1861
          %v1918 = vpack.c.b16 %v1870, %v1866
          %v1919 = vpack.c.b16 %v1871, %v1867
          %v1920 = vpack.c.b16 %v1872, %v1868
          %v1921 = vpack.c.b16 %v1873, %v1869
          %v1922 = vpack.c.b16 %v1878, %v1874
          %v1923 = vpack.c.b16 %v1879, %v1875
          %v1924 = vpack.c.b16 %v1880, %v1876
          %v1925 = vpack.c.b16 %v1881, %v1877
          %v1926 = vpack.c.b16 %v1886, %v1882
          %v1927 = vpack.c.b16 %v1887, %v1883
          %v1928 = vpack.c.b16 %v1888, %v1884
          %v1929 = vpack.c.b16 %v1889, %v1885
          %v1930 = vpack.c.b16 %v1894, %v1890
          %v1931 = vpack.c.b16 %v1895, %v1891
          %v1932 = vpack.c.b16 %v1896, %v1892
          %v1933 = vpack.c.b16 %v1897, %v1893
          %v1934 = vpack.c.b16 %v1902, %v1898
          %v1935 = vpack.c.b16 %v1903, %v1899
          %v1936 = vpack.c.b16 %v1904, %v1900
          %v1937 = vpack.c.b16 %v1905, %v1901
          %1970 = vmatprep.subr.bf16.mxu0 %v1907
          %1971 = vmatpush1.bf16.msra.mxu0 %v1906
          %1972 = vmatprep.subr.bf16.mxu0 %v1911
          %1973 = vmatpush1.bf16.msra.mxu0 %v1910
          %1974 = vmatprep.subr.bf16.mxu0 %v1915
          %1975 = vmatpush1.bf16.msra.mxu0 %v1914
          %1976 = vmatprep.subr.bf16.mxu0 %v1919
          %1977 = vmatpush1.bf16.msra.mxu0 %v1918
          %1978 = vmatprep.subr.bf16.mxu0 %v1923
          %1979 = vmatpush1.bf16.msra.mxu0 %v1922
          %1980 = vmatprep.subr.bf16.mxu0 %v1927
          %1981 = vmatpush1.bf16.msra.mxu0 %v1926
          %1982 = vmatprep.subr.bf16.mxu0 %v1931
          %1983 = vmatpush1.bf16.msra.mxu0 %v1930
          %1984 = vmatprep.subr.bf16.mxu0 %v1935
          %1985 = vmatpush1.bf16.msra.mxu0 %v1934
          %1986 = vmatprep.subr.bf16.mxu0 0
          %1987 = vmatpush1.bf16.msra.mxu0 0
          %1988 = vmatprep.subr.bf16.mxu0 0
          %1989 = vmatpush1.bf16.msra.mxu0 0
          %1990 = vmatprep.subr.bf16.mxu0 0
          %1991 = vmatpush1.bf16.msra.mxu0 0
          %1992 = vmatprep.subr.bf16.mxu0 0
          %1993 = vmatpush1.bf16.msra.mxu0 0
          %1994 = vmatprep.subr.bf16.mxu0 0
          %1995 = vmatpush1.bf16.msra.mxu0 0
          %1996 = vmatprep.subr.bf16.mxu0 0
          %1997 = vmatpush1.bf16.msra.mxu0 0
          %1998 = vmatprep.subr.bf16.mxu0 0
          %1999 = vmatpush1.bf16.msra.mxu0 0
          %2000 = vmatprep.subr.bf16.mxu0 0
          %2001 = vmatpush1.bf16.msra.mxu0 0
          %2002 = vmatprep.mubr.bf16.mxu0 0
          %2003 = vmatmul.mubr.bf16.gmra.mrb[0].mxu0 %v1777
          %v2004 = vpop.f32.mrb[0].mxu0
          %v2005 = vadd.f32 0.0, %v2004
          %v2006 = vpop.f32.mrb[0].mxu0
          %v2007 = vadd.f32 0.0, %v2006
          %v2008 = vpop.f32.mrb[0].mxu0
          %v2009 = vpop.f32.mrb[0].mxu0
          %2010 = vdwg.mxu0
          %2011 = vmatprep.subr.bf16.mxu0 %v1909
          %2012 = vmatpush1.bf16.msra.mxu0 %v1908
          %2013 = vmatprep.subr.bf16.mxu0 %v1913
          %2014 = vmatpush1.bf16.msra.mxu0 %v1912
          %2015 = vmatprep.subr.bf16.mxu0 %v1917
          %2016 = vmatpush1.bf16.msra.mxu0 %v1916
          %2017 = vmatprep.subr.bf16.mxu0 %v1921
          %2018 = vmatpush1.bf16.msra.mxu0 %v1920
          %2019 = vmatprep.subr.bf16.mxu0 %v1925
          %2020 = vmatpush1.bf16.msra.mxu0 %v1924
          %2021 = vmatprep.subr.bf16.mxu0 %v1929
          %2022 = vmatpush1.bf16.msra.mxu0 %v1928
          %2023 = vmatprep.subr.bf16.mxu0 %v1933
          %2024 = vmatpush1.bf16.msra.mxu0 %v1932
          %2025 = vmatprep.subr.bf16.mxu0 %v1937
          %2026 = vmatpush1.bf16.msra.mxu0 %v1936
          %2027 = vmatprep.subr.bf16.mxu0 0
          %2028 = vmatpush1.bf16.msra.mxu0 0
          %2029 = vmatprep.subr.bf16.mxu0 0
          %2030 = vmatpush1.bf16.msra.mxu0 0
          %2031 = vmatprep.subr.bf16.mxu0 0
          %2032 = vmatpush1.bf16.msra.mxu0 0
          %2033 = vmatprep.subr.bf16.mxu0 0
          %2034 = vmatpush1.bf16.msra.mxu0 0
          %2035 = vmatprep.subr.bf16.mxu0 0
          %2036 = vmatpush1.bf16.msra.mxu0 0
          %2037 = vmatprep.subr.bf16.mxu0 0
          %2038 = vmatpush1.bf16.msra.mxu0 0
          %2039 = vmatprep.subr.bf16.mxu0 0
          %2040 = vmatpush1.bf16.msra.mxu0 0
          %2041 = vmatprep.subr.bf16.mxu0 0
          %2042 = vmatpush1.bf16.msra.mxu0 0
          %2043 = vmatprep.mubr.bf16.mxu0 0
          %2044 = vmatmul.mubr.bf16.gmra.mrb[0].mxu0 %v1777
          %v2045 = vpop.f32.mrb[0].mxu0
          %v2046 = vadd.f32 0.0, %v2045
          %v2047 = vpop.f32.mrb[0].mxu0
          %v2048 = vadd.f32 0.0, %v2047
          %v2049 = vpop.f32.mrb[0].mxu0
          %v2050 = vpop.f32.mrb[0].mxu0
          %2051 = vdwg.mxu0
          %v2052 = vadd.f32 %v1773, %v2005
          %v2053 = vadd.f32 %v1774, %v2007
          %v2054 = vadd.f32 %v1775, %v2046
          %v2055 = vadd.f32 %v1776, %v2048
          %v2056 = vmul.f32 %v2052, 0.5
          %v2057 = vtanh.pop %v2056
          %v2058 = vadd.f32 %v2057, 1.0
          %v2059 = vmul.f32 %v2058, 0.5
          %v2060 = vmul.f32 %v2053, 0.5
          %v2061 = vtanh.pop %v2060
          %v2062 = vadd.f32 %v2061, 1.0
          %v2063 = vmul.f32 %v2062, 0.5
          %v2064 = vtanh.pop %v2054
          %v2065 = vmul.f32 %v2055, 0.5
          %v2066 = vtanh.pop %v2065
          %v2067 = vadd.f32 %v2066, 1.0
          %v2068 = vmul.f32 %v2067, 0.5
          %v2069 = vld [vmem:[#allocation3] sm:$0xff]
          %v2070 = vmul.f32 %v2063, %v2069
          %v2071 = vmul.f32 %v2059, %v2064
          %v2072 = vadd.f32 %v2070, %v2071
          %v2073 = vtanh.pop %v2072
          %v2074 = vmul.f32 %v2068, %v2073
          %2075 = vst [vmem:[#allocation3] sm:$0xff] %v2072
          %v2076 = vpack.c.bf16 %v2074, %v2074
          %2077 = vst [vmem:[#allocation2] sm:$0xf] %v2076
          %v2079 = vcombine.high %v2074, %v2074
          %v2081 = vunpack.c.l.s4 1966171168
          %v2082 = vunpack.c.0.s8 %v2081
          %v2083 = vlaneseq
          %v2084 = vshrl.u32 %v2083, 7
          %v2085 = vsub.s32 %v2082, %v2084
          %v2086 = vrot.slane %v2074, %v2085
          %v2088 = vunpack.c.l.s4 1966171168
          %v2089 = vunpack.c.0.s8 %v2088
          %v2090 = vlaneseq
          %v2091 = vshrl.u32 %v2090, 7
          %v2092 = vsub.s32 %v2089, %v2091
          %v2093 = vrot.slane %v2079, %v2092
          %v2094 = vcombine.high %v2086, %v2086
          %v2095 = vcombine.high %v2093, %v2093
          %v2097 = vunpack.c.l.s4 1966171168
          %v2098 = vunpack.c.0.s8 %v2097
          %v2099 = vlaneseq
          %v2100 = vshrl.u32 %v2099, 7
          %v2101 = vsub.s32 %v2098, %v2100
          %v2102 = vrot.slane %v2086, %v2101
          %v2104 = vunpack.c.l.s4 1966171168
          %v2105 = vunpack.c.0.s8 %v2104
          %v2106 = vlaneseq
          %v2107 = vshrl.u32 %v2106, 7
          %v2108 = vsub.s32 %v2105, %v2107
          %v2109 = vrot.slane %v2093, %v2108
          %v2111 = vunpack.c.l.s4 1966171168
          %v2112 = vunpack.c.0.s8 %v2111
          %v2113 = vlaneseq
          %v2114 = vshrl.u32 %v2113, 7
          %v2115 = vsub.s32 %v2112, %v2114
          %v2116 = vrot.slane %v2094, %v2115
          %v2118 = vunpack.c.l.s4 1966171168
          %v2119 = vunpack.c.0.s8 %v2118
          %v2120 = vlaneseq
          %v2121 = vshrl.u32 %v2120, 7
          %v2122 = vsub.s32 %v2119, %v2121
          %v2123 = vrot.slane %v2095, %v2122
          %v2124 = vcombine.high %v2102, %v2102
          %v2125 = vcombine.high %v2109, %v2109
          %v2126 = vcombine.high %v2116, %v2116
          %v2127 = vcombine.high %v2123, %v2123
          %2136 = vst [vmem:[%s253 + $0x4] sm:$0x1] %v2102
          %2137 = vst [vmem:[%s253 + $0xc] sm:$0x1] %v2116
          %2138 = vst [vmem:[%s253 + $0x14] sm:$0x1] %v2124
          %2139 = vst [vmem:[%s253 + $0x1c] sm:$0x1] %v2126
          %2140 = vst [vmem:[%s253 + $0x24] sm:$0x1] %v2109
          %2141 = vst [vmem:[%s253 + $0x2c] sm:$0x1] %v2123
          %2142 = vst [vmem:[%s253 + $0x34] sm:$0x1] %v2125
          %2143 = vst [vmem:[%s253 + $0x3c] sm:$0x1] %v2127
          %s2144 = scalar_lea.vmem %s234, 80 [#allocation4]
          %v2145 = vld [vmem:[%s2144] sm:$0xff]
          %v2146 = vld [vmem:[%s2144 + $0x8] sm:$0xff]
          %v2147 = vunpack.c.l.bf16 %v2145
          %v2148 = vunpack.c.h.bf16 %v2145
          %v2149 = vunpack.c.l.bf16 %v2146
          %v2150 = vunpack.c.h.bf16 %v2146
          %v2151 = vld [vmem:[#allocation2] sm:$0xf]
          %v2152 = vld [vmem:[%s1] sm:$0xff]
          %v2153 = vld [vmem:[%s1 + $0x8] sm:$0xff]
          %v2154 = vld [vmem:[%s1 + $0x10] sm:$0xff]
          %v2155 = vld [vmem:[%s1 + $0x18] sm:$0xff]
          %v2156 = vld [vmem:[%s1 + $0x20] sm:$0xff]
          %v2157 = vld [vmem:[%s1 + $0x28] sm:$0xff]
          %v2158 = vld [vmem:[%s1 + $0x30] sm:$0xff]
          %v2159 = vld [vmem:[%s1 + $0x38] sm:$0xff]
          %v2160 = vld [vmem:[%s1 + $0x40] sm:$0xff]
          %v2161 = vld [vmem:[%s1 + $0x48] sm:$0xff]
          %v2162 = vld [vmem:[%s1 + $0x50] sm:$0xff]
          %v2163 = vld [vmem:[%s1 + $0x58] sm:$0xff]
          %v2164 = vld [vmem:[%s1 + $0x60] sm:$0xff]
          %v2165 = vld [vmem:[%s1 + $0x68] sm:$0xff]
          %v2166 = vld [vmem:[%s1 + $0x70] sm:$0xff]
          %v2167 = vld [vmem:[%s1 + $0x78] sm:$0xff]
          %v2168 = vld [vmem:[%s1 + $0x80] sm:$0xff]
          %v2169 = vld [vmem:[%s1 + $0x88] sm:$0xff]
          %v2170 = vld [vmem:[%s1 + $0x90] sm:$0xff]
          %v2171 = vld [vmem:[%s1 + $0x98] sm:$0xff]
          %v2172 = vld [vmem:[%s1 + $0xa0] sm:$0xff]
          %v2173 = vld [vmem:[%s1 + $0xa8] sm:$0xff]
          %v2174 = vld [vmem:[%s1 + $0xb0] sm:$0xff]
          %v2175 = vld [vmem:[%s1 + $0xb8] sm:$0xff]
          %v2176 = vld [vmem:[%s1 + $0xc0] sm:$0xff]
          %v2177 = vld [vmem:[%s1 + $0xc8] sm:$0xff]
          %v2178 = vld [vmem:[%s1 + $0xd0] sm:$0xff]
          %v2179 = vld [vmem:[%s1 + $0xd8] sm:$0xff]
          %v2180 = vld [vmem:[%s1 + $0xe0] sm:$0xff]
          %v2181 = vld [vmem:[%s1 + $0xe8] sm:$0xff]
          %v2182 = vld [vmem:[%s1 + $0xf0] sm:$0xff]
          %v2183 = vld [vmem:[%s1 + $0xf8] sm:$0xff]
          %v2216 = vunpack.c.l.b16 %v2152
          %v2217 = vunpack.c.h.b16 %v2152
          %v2218 = vunpack.c.l.b16 %v2153
          %v2219 = vunpack.c.h.b16 %v2153
          %v2220 = vunpack.c.l.b16 %v2154
          %v2221 = vunpack.c.h.b16 %v2154
          %v2222 = vunpack.c.l.b16 %v2155
          %v2223 = vunpack.c.h.b16 %v2155
          %v2224 = vunpack.c.l.b16 %v2156
          %v2225 = vunpack.c.h.b16 %v2156
          %v2226 = vunpack.c.l.b16 %v2157
          %v2227 = vunpack.c.h.b16 %v2157
          %v2228 = vunpack.c.l.b16 %v2158
          %v2229 = vunpack.c.h.b16 %v2158
          %v2230 = vunpack.c.l.b16 %v2159
          %v2231 = vunpack.c.h.b16 %v2159
          %v2232 = vunpack.c.l.b16 %v2160
          %v2233 = vunpack.c.h.b16 %v2160
          %v2234 = vunpack.c.l.b16 %v2161
          %v2235 = vunpack.c.h.b16 %v2161
          %v2236 = vunpack.c.l.b16 %v2162
          %v2237 = vunpack.c.h.b16 %v2162
          %v2238 = vunpack.c.l.b16 %v2163
          %v2239 = vunpack.c.h.b16 %v2163
          %v2240 = vunpack.c.l.b16 %v2164
          %v2241 = vunpack.c.h.b16 %v2164
          %v2242 = vunpack.c.l.b16 %v2165
          %v2243 = vunpack.c.h.b16 %v2165
          %v2244 = vunpack.c.l.b16 %v2166
          %v2245 = vunpack.c.h.b16 %v2166
          %v2246 = vunpack.c.l.b16 %v2167
          %v2247 = vunpack.c.h.b16 %v2167
          %v2248 = vunpack.c.l.b16 %v2168
          %v2249 = vunpack.c.h.b16 %v2168
          %v2250 = vunpack.c.l.b16 %v2169
          %v2251 = vunpack.c.h.b16 %v2169
          %v2252 = vunpack.c.l.b16 %v2170
          %v2253 = vunpack.c.h.b16 %v2170
          %v2254 = vunpack.c.l.b16 %v2171
          %v2255 = vunpack.c.h.b16 %v2171
          %v2256 = vunpack.c.l.b16 %v2172
          %v2257 = vunpack.c.h.b16 %v2172
          %v2258 = vunpack.c.l.b16 %v2173
          %v2259 = vunpack.c.h.b16 %v2173
          %v2260 = vunpack.c.l.b16 %v2174
          %v2261 = vunpack.c.h.b16 %v2174
          %v2262 = vunpack.c.l.b16 %v2175
          %v2263 = vunpack.c.h.b16 %v2175
          %v2264 = vunpack.c.l.b16 %v2176
          %v2265 = vunpack.c.h.b16 %v2176
          %v2266 = vunpack.c.l.b16 %v2177
          %v2267 = vunpack.c.h.b16 %v2177
          %v2268 = vunpack.c.l.b16 %v2178
          %v2269 = vunpack.c.h.b16 %v2178
          %v2270 = vunpack.c.l.b16 %v2179
          %v2271 = vunpack.c.h.b16 %v2179
          %v2272 = vunpack.c.l.b16 %v2180
          %v2273 = vunpack.c.h.b16 %v2180
          %v2274 = vunpack.c.l.b16 %v2181
          %v2275 = vunpack.c.h.b16 %v2181
          %v2276 = vunpack.c.l.b16 %v2182
          %v2277 = vunpack.c.h.b16 %v2182
          %v2278 = vunpack.c.l.b16 %v2183
          %v2279 = vunpack.c.h.b16 %v2183
          %v2280 = vpack.c.b16 %v2220, %v2216
          %v2281 = vpack.c.b16 %v2221, %v2217
          %v2282 = vpack.c.b16 %v2222, %v2218
          %v2283 = vpack.c.b16 %v2223, %v2219
          %v2284 = vpack.c.b16 %v2228, %v2224
          %v2285 = vpack.c.b16 %v2229, %v2225
          %v2286 = vpack.c.b16 %v2230, %v2226
          %v2287 = vpack.c.b16 %v2231, %v2227
          %v2288 = vpack.c.b16 %v2236, %v2232
          %v2289 = vpack.c.b16 %v2237, %v2233
          %v2290 = vpack.c.b16 %v2238, %v2234
          %v2291 = vpack.c.b16 %v2239, %v2235
          %v2292 = vpack.c.b16 %v2244, %v2240
          %v2293 = vpack.c.b16 %v2245, %v2241
          %v2294 = vpack.c.b16 %v2246, %v2242
          %v2295 = vpack.c.b16 %v2247, %v2243
          %v2296 = vpack.c.b16 %v2252, %v2248
          %v2297 = vpack.c.b16 %v2253, %v2249
          %v2298 = vpack.c.b16 %v2254, %v2250
          %v2299 = vpack.c.b16 %v2255, %v2251
          %v2300 = vpack.c.b16 %v2260, %v2256
          %v2301 = vpack.c.b16 %v2261, %v2257
          %v2302 = vpack.c.b16 %v2262, %v2258
          %v2303 = vpack.c.b16 %v2263, %v2259
          %v2304 = vpack.c.b16 %v2268, %v2264
          %v2305 = vpack.c.b16 %v2269, %v2265
          %v2306 = vpack.c.b16 %v2270, %v2266
          %v2307 = vpack.c.b16 %v2271, %v2267
          %v2308 = vpack.c.b16 %v2276, %v2272
          %v2309 = vpack.c.b16 %v2277, %v2273
          %v2310 = vpack.c.b16 %v2278, %v2274
          %v2311 = vpack.c.b16 %v2279, %v2275
          %2344 = vmatprep.subr.bf16.mxu0 %v2281
          %2345 = vmatpush1.bf16.msra.mxu0 %v2280
          %2346 = vmatprep.subr.bf16.mxu0 %v2285
          %2347 = vmatpush1.bf16.msra.mxu0 %v2284
          %2348 = vmatprep.subr.bf16.mxu0 %v2289
          %2349 = vmatpush1.bf16.msra.mxu0 %v2288
          %2350 = vmatprep.subr.bf16.mxu0 %v2293
          %2351 = vmatpush1.bf16.msra.mxu0 %v2292
          %2352 = vmatprep.subr.bf16.mxu0 %v2297
          %2353 = vmatpush1.bf16.msra.mxu0 %v2296
          %2354 = vmatprep.subr.bf16.mxu0 %v2301
          %2355 = vmatpush1.bf16.msra.mxu0 %v2300
          %2356 = vmatprep.subr.bf16.mxu0 %v2305
          %2357 = vmatpush1.bf16.msra.mxu0 %v2304
          %2358 = vmatprep.subr.bf16.mxu0 %v2309
          %2359 = vmatpush1.bf16.msra.mxu0 %v2308
          %2360 = vmatprep.subr.bf16.mxu0 0
          %2361 = vmatpush1.bf16.msra.mxu0 0
          %2362 = vmatprep.subr.bf16.mxu0 0
          %2363 = vmatpush1.bf16.msra.mxu0 0
          %2364 = vmatprep.subr.bf16.mxu0 0
          %2365 = vmatpush1.bf16.msra.mxu0 0
          %2366 = vmatprep.subr.bf16.mxu0 0
          %2367 = vmatpush1.bf16.msra.mxu0 0
          %2368 = vmatprep.subr.bf16.mxu0 0
          %2369 = vmatpush1.bf16.msra.mxu0 0
          %2370 = vmatprep.subr.bf16.mxu0 0
          %2371 = vmatpush1.bf16.msra.mxu0 0
          %2372 = vmatprep.subr.bf16.mxu0 0
          %2373 = vmatpush1.bf16.msra.mxu0 0
          %2374 = vmatprep.subr.bf16.mxu0 0
          %2375 = vmatpush1.bf16.msra.mxu0 0
          %2376 = vmatprep.mubr.bf16.mxu0 0
          %2377 = vmatmul.mubr.bf16.gmra.mrb[0].mxu0 %v2151
          %v2378 = vpop.f32.mrb[0].mxu0
          %v2379 = vadd.f32 0.0, %v2378
          %v2380 = vpop.f32.mrb[0].mxu0
          %v2381 = vadd.f32 0.0, %v2380
          %v2382 = vpop.f32.mrb[0].mxu0
          %v2383 = vpop.f32.mrb[0].mxu0
          %2384 = vdwg.mxu0
          %2385 = vmatprep.subr.bf16.mxu0 %v2283
          %2386 = vmatpush1.bf16.msra.mxu0 %v2282
          %2387 = vmatprep.subr.bf16.mxu0 %v2287
          %2388 = vmatpush1.bf16.msra.mxu0 %v2286
          %2389 = vmatprep.subr.bf16.mxu0 %v2291
          %2390 = vmatpush1.bf16.msra.mxu0 %v2290
          %2391 = vmatprep.subr.bf16.mxu0 %v2295
          %2392 = vmatpush1.bf16.msra.mxu0 %v2294
          %2393 = vmatprep.subr.bf16.mxu0 %v2299
          %2394 = vmatpush1.bf16.msra.mxu0 %v2298
          %2395 = vmatprep.subr.bf16.mxu0 %v2303
          %2396 = vmatpush1.bf16.msra.mxu0 %v2302
          %2397 = vmatprep.subr.bf16.mxu0 %v2307
          %2398 = vmatpush1.bf16.msra.mxu0 %v2306
          %2399 = vmatprep.subr.bf16.mxu0 %v2311
          %2400 = vmatpush1.bf16.msra.mxu0 %v2310
          %2401 = vmatprep.subr.bf16.mxu0 0
          %2402 = vmatpush1.bf16.msra.mxu0 0
          %2403 = vmatprep.subr.bf16.mxu0 0
          %2404 = vmatpush1.bf16.msra.mxu0 0
          %2405 = vmatprep.subr.bf16.mxu0 0
          %2406 = vmatpush1.bf16.msra.mxu0 0
          %2407 = vmatprep.subr.bf16.mxu0 0
          %2408 = vmatpush1.bf16.msra.mxu0 0
          %2409 = vmatprep.subr.bf16.mxu0 0
          %2410 = vmatpush1.bf16.msra.mxu0 0
          %2411 = vmatprep.subr.bf16.mxu0 0
          %2412 = vmatpush1.bf16.msra.mxu0 0
          %2413 = vmatprep.subr.bf16.mxu0 0
          %2414 = vmatpush1.bf16.msra.mxu0 0
          %2415 = vmatprep.subr.bf16.mxu0 0
          %2416 = vmatpush1.bf16.msra.mxu0 0
          %2417 = vmatprep.mubr.bf16.mxu0 0
          %2418 = vmatmul.mubr.bf16.gmra.mrb[0].mxu0 %v2151
          %v2419 = vpop.f32.mrb[0].mxu0
          %v2420 = vadd.f32 0.0, %v2419
          %v2421 = vpop.f32.mrb[0].mxu0
          %v2422 = vadd.f32 0.0, %v2421
          %v2423 = vpop.f32.mrb[0].mxu0
          %v2424 = vpop.f32.mrb[0].mxu0
          %2425 = vdwg.mxu0
          %v2426 = vadd.f32 %v2147, %v2379
          %v2427 = vadd.f32 %v2148, %v2381
          %v2428 = vadd.f32 %v2149, %v2420
          %v2429 = vadd.f32 %v2150, %v2422
          %v2430 = vmul.f32 %v2426, 0.5
          %v2431 = vtanh.pop %v2430
          %v2432 = vadd.f32 %v2431, 1.0
          %v2433 = vmul.f32 %v2432, 0.5
          %v2434 = vmul.f32 %v2427, 0.5
          %v2435 = vtanh.pop %v2434
          %v2436 = vadd.f32 %v2435, 1.0
          %v2437 = vmul.f32 %v2436, 0.5
          %v2438 = vtanh.pop %v2428
          %v2439 = vmul.f32 %v2429, 0.5
          %v2440 = vtanh.pop %v2439
          %v2441 = vadd.f32 %v2440, 1.0
          %v2442 = vmul.f32 %v2441, 0.5
          %v2443 = vld [vmem:[#allocation3] sm:$0xff]
          %v2444 = vmul.f32 %v2437, %v2443
          %v2445 = vmul.f32 %v2433, %v2438
          %v2446 = vadd.f32 %v2444, %v2445
          %v2447 = vtanh.pop %v2446
          %v2448 = vmul.f32 %v2442, %v2447
          %2449 = vst [vmem:[#allocation3] sm:$0xff] %v2446
          %v2450 = vpack.c.bf16 %v2448, %v2448
          %2451 = vst [vmem:[#allocation2] sm:$0xf] %v2450
          %v2453 = vcombine.high %v2448, %v2448
          %v2455 = vunpack.c.l.s4 1966171168
          %v2456 = vunpack.c.0.s8 %v2455
          %v2457 = vlaneseq
          %v2458 = vshrl.u32 %v2457, 7
          %v2459 = vsub.s32 %v2456, %v2458
          %v2460 = vrot.slane %v2448, %v2459
          %v2462 = vunpack.c.l.s4 1966171168
          %v2463 = vunpack.c.0.s8 %v2462
          %v2464 = vlaneseq
          %v2465 = vshrl.u32 %v2464, 7
          %v2466 = vsub.s32 %v2463, %v2465
          %v2467 = vrot.slane %v2453, %v2466
          %v2468 = vcombine.high %v2460, %v2460
          %v2469 = vcombine.high %v2467, %v2467
          %v2471 = vunpack.c.l.s4 1966171168
          %v2472 = vunpack.c.0.s8 %v2471
          %v2473 = vlaneseq
          %v2474 = vshrl.u32 %v2473, 7
          %v2475 = vsub.s32 %v2472, %v2474
          %v2476 = vrot.slane %v2460, %v2475
          %v2478 = vunpack.c.l.s4 1966171168
          %v2479 = vunpack.c.0.s8 %v2478
          %v2480 = vlaneseq
          %v2481 = vshrl.u32 %v2480, 7
          %v2482 = vsub.s32 %v2479, %v2481
          %v2483 = vrot.slane %v2467, %v2482
          %v2485 = vunpack.c.l.s4 1966171168
          %v2486 = vunpack.c.0.s8 %v2485
          %v2487 = vlaneseq
          %v2488 = vshrl.u32 %v2487, 7
          %v2489 = vsub.s32 %v2486, %v2488
          %v2490 = vrot.slane %v2468, %v2489
          %v2492 = vunpack.c.l.s4 1966171168
          %v2493 = vunpack.c.0.s8 %v2492
          %v2494 = vlaneseq
          %v2495 = vshrl.u32 %v2494, 7
          %v2496 = vsub.s32 %v2493, %v2495
          %v2497 = vrot.slane %v2469, %v2496
          %v2498 = vcombine.high %v2476, %v2476
          %v2499 = vcombine.high %v2483, %v2483
          %v2500 = vcombine.high %v2490, %v2490
          %v2501 = vcombine.high %v2497, %v2497
          %2510 = vst [vmem:[%s253 + $0x5] sm:$0x1] %v2476
          %2511 = vst [vmem:[%s253 + $0xd] sm:$0x1] %v2490
          %2512 = vst [vmem:[%s253 + $0x15] sm:$0x1] %v2498
          %2513 = vst [vmem:[%s253 + $0x1d] sm:$0x1] %v2500
          %2514 = vst [vmem:[%s253 + $0x25] sm:$0x1] %v2483
          %2515 = vst [vmem:[%s253 + $0x2d] sm:$0x1] %v2497
          %2516 = vst [vmem:[%s253 + $0x35] sm:$0x1] %v2499
          %2517 = vst [vmem:[%s253 + $0x3d] sm:$0x1] %v2501
          %s2518 = scalar_lea.vmem %s234, 96 [#allocation4]
          %v2519 = vld [vmem:[%s2518] sm:$0xff]
          %v2520 = vld [vmem:[%s2518 + $0x8] sm:$0xff]
          %v2521 = vunpack.c.l.bf16 %v2519
          %v2522 = vunpack.c.h.bf16 %v2519
          %v2523 = vunpack.c.l.bf16 %v2520
          %v2524 = vunpack.c.h.bf16 %v2520
          %v2525 = vld [vmem:[#allocation2] sm:$0xf]
          %v2526 = vld [vmem:[%s1] sm:$0xff]
          %v2527 = vld [vmem:[%s1 + $0x8] sm:$0xff]
          %v2528 = vld [vmem:[%s1 + $0x10] sm:$0xff]
          %v2529 = vld [vmem:[%s1 + $0x18] sm:$0xff]
          %v2530 = vld [vmem:[%s1 + $0x20] sm:$0xff]
          %v2531 = vld [vmem:[%s1 + $0x28] sm:$0xff]
          %v2532 = vld [vmem:[%s1 + $0x30] sm:$0xff]
          %v2533 = vld [vmem:[%s1 + $0x38] sm:$0xff]
          %v2534 = vld [vmem:[%s1 + $0x40] sm:$0xff]
          %v2535 = vld [vmem:[%s1 + $0x48] sm:$0xff]
          %v2536 = vld [vmem:[%s1 + $0x50] sm:$0xff]
          %v2537 = vld [vmem:[%s1 + $0x58] sm:$0xff]
          %v2538 = vld [vmem:[%s1 + $0x60] sm:$0xff]
          %v2539 = vld [vmem:[%s1 + $0x68] sm:$0xff]
          %v2540 = vld [vmem:[%s1 + $0x70] sm:$0xff]
          %v2541 = vld [vmem:[%s1 + $0x78] sm:$0xff]
          %v2542 = vld [vmem:[%s1 + $0x80] sm:$0xff]
          %v2543 = vld [vmem:[%s1 + $0x88] sm:$0xff]
          %v2544 = vld [vmem:[%s1 + $0x90] sm:$0xff]
          %v2545 = vld [vmem:[%s1 + $0x98] sm:$0xff]
          %v2546 = vld [vmem:[%s1 + $0xa0] sm:$0xff]
          %v2547 = vld [vmem:[%s1 + $0xa8] sm:$0xff]
          %v2548 = vld [vmem:[%s1 + $0xb0] sm:$0xff]
          %v2549 = vld [vmem:[%s1 + $0xb8] sm:$0xff]
          %v2550 = vld [vmem:[%s1 + $0xc0] sm:$0xff]
          %v2551 = vld [vmem:[%s1 + $0xc8] sm:$0xff]
          %v2552 = vld [vmem:[%s1 + $0xd0] sm:$0xff]
          %v2553 = vld [vmem:[%s1 + $0xd8] sm:$0xff]
          %v2554 = vld [vmem:[%s1 + $0xe0] sm:$0xff]
          %v2555 = vld [vmem:[%s1 + $0xe8] sm:$0xff]
          %v2556 = vld [vmem:[%s1 + $0xf0] sm:$0xff]
          %v2557 = vld [vmem:[%s1 + $0xf8] sm:$0xff]
          %v2590 = vunpack.c.l.b16 %v2526
          %v2591 = vunpack.c.h.b16 %v2526
          %v2592 = vunpack.c.l.b16 %v2527
          %v2593 = vunpack.c.h.b16 %v2527
          %v2594 = vunpack.c.l.b16 %v2528
          %v2595 = vunpack.c.h.b16 %v2528
          %v2596 = vunpack.c.l.b16 %v2529
          %v2597 = vunpack.c.h.b16 %v2529
          %v2598 = vunpack.c.l.b16 %v2530
          %v2599 = vunpack.c.h.b16 %v2530
          %v2600 = vunpack.c.l.b16 %v2531
          %v2601 = vunpack.c.h.b16 %v2531
          %v2602 = vunpack.c.l.b16 %v2532
          %v2603 = vunpack.c.h.b16 %v2532
          %v2604 = vunpack.c.l.b16 %v2533
          %v2605 = vunpack.c.h.b16 %v2533
          %v2606 = vunpack.c.l.b16 %v2534
          %v2607 = vunpack.c.h.b16 %v2534
          %v2608 = vunpack.c.l.b16 %v2535
          %v2609 = vunpack.c.h.b16 %v2535
          %v2610 = vunpack.c.l.b16 %v2536
          %v2611 = vunpack.c.h.b16 %v2536
          %v2612 = vunpack.c.l.b16 %v2537
          %v2613 = vunpack.c.h.b16 %v2537
          %v2614 = vunpack.c.l.b16 %v2538
          %v2615 = vunpack.c.h.b16 %v2538
          %v2616 = vunpack.c.l.b16 %v2539
          %v2617 = vunpack.c.h.b16 %v2539
          %v2618 = vunpack.c.l.b16 %v2540
          %v2619 = vunpack.c.h.b16 %v2540
          %v2620 = vunpack.c.l.b16 %v2541
          %v2621 = vunpack.c.h.b16 %v2541
          %v2622 = vunpack.c.l.b16 %v2542
          %v2623 = vunpack.c.h.b16 %v2542
          %v2624 = vunpack.c.l.b16 %v2543
          %v2625 = vunpack.c.h.b16 %v2543
          %v2626 = vunpack.c.l.b16 %v2544
          %v2627 = vunpack.c.h.b16 %v2544
          %v2628 = vunpack.c.l.b16 %v2545
          %v2629 = vunpack.c.h.b16 %v2545
          %v2630 = vunpack.c.l.b16 %v2546
          %v2631 = vunpack.c.h.b16 %v2546
          %v2632 = vunpack.c.l.b16 %v2547
          %v2633 = vunpack.c.h.b16 %v2547
          %v2634 = vunpack.c.l.b16 %v2548
          %v2635 = vunpack.c.h.b16 %v2548
          %v2636 = vunpack.c.l.b16 %v2549
          %v2637 = vunpack.c.h.b16 %v2549
          %v2638 = vunpack.c.l.b16 %v2550
          %v2639 = vunpack.c.h.b16 %v2550
          %v2640 = vunpack.c.l.b16 %v2551
          %v2641 = vunpack.c.h.b16 %v2551
          %v2642 = vunpack.c.l.b16 %v2552
          %v2643 = vunpack.c.h.b16 %v2552
          %v2644 = vunpack.c.l.b16 %v2553
          %v2645 = vunpack.c.h.b16 %v2553
          %v2646 = vunpack.c.l.b16 %v2554
          %v2647 = vunpack.c.h.b16 %v2554
          %v2648 = vunpack.c.l.b16 %v2555
          %v2649 = vunpack.c.h.b16 %v2555
          %v2650 = vunpack.c.l.b16 %v2556
          %v2651 = vunpack.c.h.b16 %v2556
          %v2652 = vunpack.c.l.b16 %v2557
          %v2653 = vunpack.c.h.b16 %v2557
          %v2654 = vpack.c.b16 %v2594, %v2590
          %v2655 = vpack.c.b16 %v2595, %v2591
          %v2656 = vpack.c.b16 %v2596, %v2592
          %v2657 = vpack.c.b16 %v2597, %v2593
          %v2658 = vpack.c.b16 %v2602, %v2598
          %v2659 = vpack.c.b16 %v2603, %v2599
          %v2660 = vpack.c.b16 %v2604, %v2600
          %v2661 = vpack.c.b16 %v2605, %v2601
          %v2662 = vpack.c.b16 %v2610, %v2606
          %v2663 = vpack.c.b16 %v2611, %v2607
          %v2664 = vpack.c.b16 %v2612, %v2608
          %v2665 = vpack.c.b16 %v2613, %v2609
          %v2666 = vpack.c.b16 %v2618, %v2614
          %v2667 = vpack.c.b16 %v2619, %v2615
          %v2668 = vpack.c.b16 %v2620, %v2616
          %v2669 = vpack.c.b16 %v2621, %v2617
          %v2670 = vpack.c.b16 %v2626, %v2622
          %v2671 = vpack.c.b16 %v2627, %v2623
          %v2672 = vpack.c.b16 %v2628, %v2624
          %v2673 = vpack.c.b16 %v2629, %v2625
          %v2674 = vpack.c.b16 %v2634, %v2630
          %v2675 = vpack.c.b16 %v2635, %v2631
          %v2676 = vpack.c.b16 %v2636, %v2632
          %v2677 = vpack.c.b16 %v2637, %v2633
          %v2678 = vpack.c.b16 %v2642, %v2638
          %v2679 = vpack.c.b16 %v2643, %v2639
          %v2680 = vpack.c.b16 %v2644, %v2640
          %v2681 = vpack.c.b16 %v2645, %v2641
          %v2682 = vpack.c.b16 %v2650, %v2646
          %v2683 = vpack.c.b16 %v2651, %v2647
          %v2684 = vpack.c.b16 %v2652, %v2648
          %v2685 = vpack.c.b16 %v2653, %v2649
          %2718 = vmatprep.subr.bf16.mxu0 %v2655
          %2719 = vmatpush1.bf16.msra.mxu0 %v2654
          %2720 = vmatprep.subr.bf16.mxu0 %v2659
          %2721 = vmatpush1.bf16.msra.mxu0 %v2658
          %2722 = vmatprep.subr.bf16.mxu0 %v2663
          %2723 = vmatpush1.bf16.msra.mxu0 %v2662
          %2724 = vmatprep.subr.bf16.mxu0 %v2667
          %2725 = vmatpush1.bf16.msra.mxu0 %v2666
          %2726 = vmatprep.subr.bf16.mxu0 %v2671
          %2727 = vmatpush1.bf16.msra.mxu0 %v2670
          %2728 = vmatprep.subr.bf16.mxu0 %v2675
          %2729 = vmatpush1.bf16.msra.mxu0 %v2674
          %2730 = vmatprep.subr.bf16.mxu0 %v2679
          %2731 = vmatpush1.bf16.msra.mxu0 %v2678
          %2732 = vmatprep.subr.bf16.mxu0 %v2683
          %2733 = vmatpush1.bf16.msra.mxu0 %v2682
          %2734 = vmatprep.subr.bf16.mxu0 0
          %2735 = vmatpush1.bf16.msra.mxu0 0
          %2736 = vmatprep.subr.bf16.mxu0 0
          %2737 = vmatpush1.bf16.msra.mxu0 0
          %2738 = vmatprep.subr.bf16.mxu0 0
          %2739 = vmatpush1.bf16.msra.mxu0 0
          %2740 = vmatprep.subr.bf16.mxu0 0
          %2741 = vmatpush1.bf16.msra.mxu0 0
          %2742 = vmatprep.subr.bf16.mxu0 0
          %2743 = vmatpush1.bf16.msra.mxu0 0
          %2744 = vmatprep.subr.bf16.mxu0 0
          %2745 = vmatpush1.bf16.msra.mxu0 0
          %2746 = vmatprep.subr.bf16.mxu0 0
          %2747 = vmatpush1.bf16.msra.mxu0 0
          %2748 = vmatprep.subr.bf16.mxu0 0
          %2749 = vmatpush1.bf16.msra.mxu0 0
          %2750 = vmatprep.mubr.bf16.mxu0 0
          %2751 = vmatmul.mubr.bf16.gmra.mrb[0].mxu0 %v2525
          %v2752 = vpop.f32.mrb[0].mxu0
          %v2753 = vadd.f32 0.0, %v2752
          %v2754 = vpop.f32.mrb[0].mxu0
          %v2755 = vadd.f32 0.0, %v2754
          %v2756 = vpop.f32.mrb[0].mxu0
          %v2757 = vpop.f32.mrb[0].mxu0
          %2758 = vdwg.mxu0
          %2759 = vmatprep.subr.bf16.mxu0 %v2657
          %2760 = vmatpush1.bf16.msra.mxu0 %v2656
          %2761 = vmatprep.subr.bf16.mxu0 %v2661
          %2762 = vmatpush1.bf16.msra.mxu0 %v2660
          %2763 = vmatprep.subr.bf16.mxu0 %v2665
          %2764 = vmatpush1.bf16.msra.mxu0 %v2664
          %2765 = vmatprep.subr.bf16.mxu0 %v2669
          %2766 = vmatpush1.bf16.msra.mxu0 %v2668
          %2767 = vmatprep.subr.bf16.mxu0 %v2673
          %2768 = vmatpush1.bf16.msra.mxu0 %v2672
          %2769 = vmatprep.subr.bf16.mxu0 %v2677
          %2770 = vmatpush1.bf16.msra.mxu0 %v2676
          %2771 = vmatprep.subr.bf16.mxu0 %v2681
          %2772 = vmatpush1.bf16.msra.mxu0 %v2680
          %2773 = vmatprep.subr.bf16.mxu0 %v2685
          %2774 = vmatpush1.bf16.msra.mxu0 %v2684
          %2775 = vmatprep.subr.bf16.mxu0 0
          %2776 = vmatpush1.bf16.msra.mxu0 0
          %2777 = vmatprep.subr.bf16.mxu0 0
          %2778 = vmatpush1.bf16.msra.mxu0 0
          %2779 = vmatprep.subr.bf16.mxu0 0
          %2780 = vmatpush1.bf16.msra.mxu0 0
          %2781 = vmatprep.subr.bf16.mxu0 0
          %2782 = vmatpush1.bf16.msra.mxu0 0
          %2783 = vmatprep.subr.bf16.mxu0 0
          %2784 = vmatpush1.bf16.msra.mxu0 0
          %2785 = vmatprep.subr.bf16.mxu0 0
          %2786 = vmatpush1.bf16.msra.mxu0 0
          %2787 = vmatprep.subr.bf16.mxu0 0
          %2788 = vmatpush1.bf16.msra.mxu0 0
          %2789 = vmatprep.subr.bf16.mxu0 0
          %2790 = vmatpush1.bf16.msra.mxu0 0
          %2791 = vmatprep.mubr.bf16.mxu0 0
          %2792 = vmatmul.mubr.bf16.gmra.mrb[0].mxu0 %v2525
          %v2793 = vpop.f32.mrb[0].mxu0
          %v2794 = vadd.f32 0.0, %v2793
          %v2795 = vpop.f32.mrb[0].mxu0
          %v2796 = vadd.f32 0.0, %v2795
          %v2797 = vpop.f32.mrb[0].mxu0
          %v2798 = vpop.f32.mrb[0].mxu0
          %2799 = vdwg.mxu0
          %v2800 = vadd.f32 %v2521, %v2753
          %v2801 = vadd.f32 %v2522, %v2755
          %v2802 = vadd.f32 %v2523, %v2794
          %v2803 = vadd.f32 %v2524, %v2796
          %v2804 = vmul.f32 %v2800, 0.5
          %v2805 = vtanh.pop %v2804
          %v2806 = vadd.f32 %v2805, 1.0
          %v2807 = vmul.f32 %v2806, 0.5
          %v2808 = vmul.f32 %v2801, 0.5
          %v2809 = vtanh.pop %v2808
          %v2810 = vadd.f32 %v2809, 1.0
          %v2811 = vmul.f32 %v2810, 0.5
          %v2812 = vtanh.pop %v2802
          %v2813 = vmul.f32 %v2803, 0.5
          %v2814 = vtanh.pop %v2813
          %v2815 = vadd.f32 %v2814, 1.0
          %v2816 = vmul.f32 %v2815, 0.5
          %v2817 = vld [vmem:[#allocation3] sm:$0xff]
          %v2818 = vmul.f32 %v2811, %v2817
          %v2819 = vmul.f32 %v2807, %v2812
          %v2820 = vadd.f32 %v2818, %v2819
          %v2821 = vtanh.pop %v2820
          %v2822 = vmul.f32 %v2816, %v2821
          %2823 = vst [vmem:[#allocation3] sm:$0xff] %v2820
          %v2824 = vpack.c.bf16 %v2822, %v2822
          %2825 = vst [vmem:[#allocation2] sm:$0xf] %v2824
          %v2827 = vcombine.high %v2822, %v2822
          %v2829 = vunpack.c.l.s4 1966171168
          %v2830 = vunpack.c.0.s8 %v2829
          %v2831 = vlaneseq
          %v2832 = vshrl.u32 %v2831, 7
          %v2833 = vsub.s32 %v2830, %v2832
          %v2834 = vrot.slane %v2822, %v2833
          %v2836 = vunpack.c.l.s4 1966171168
          %v2837 = vunpack.c.0.s8 %v2836
          %v2838 = vlaneseq
          %v2839 = vshrl.u32 %v2838, 7
          %v2840 = vsub.s32 %v2837, %v2839
          %v2841 = vrot.slane %v2827, %v2840
          %v2842 = vcombine.high %v2834, %v2834
          %v2843 = vcombine.high %v2841, %v2841
          %v2845 = vunpack.c.l.s4 1966171168
          %v2846 = vunpack.c.0.s8 %v2845
          %v2847 = vlaneseq
          %v2848 = vshrl.u32 %v2847, 7
          %v2849 = vsub.s32 %v2846, %v2848
          %v2850 = vrot.slane %v2834, %v2849
          %v2852 = vunpack.c.l.s4 1966171168
          %v2853 = vunpack.c.0.s8 %v2852
          %v2854 = vlaneseq
          %v2855 = vshrl.u32 %v2854, 7
          %v2856 = vsub.s32 %v2853, %v2855
          %v2857 = vrot.slane %v2841, %v2856
          %v2859 = vunpack.c.l.s4 1966171168
          %v2860 = vunpack.c.0.s8 %v2859
          %v2861 = vlaneseq
          %v2862 = vshrl.u32 %v2861, 7
          %v2863 = vsub.s32 %v2860, %v2862
          %v2864 = vrot.slane %v2842, %v2863
          %v2866 = vunpack.c.l.s4 1966171168
          %v2867 = vunpack.c.0.s8 %v2866
          %v2868 = vlaneseq
          %v2869 = vshrl.u32 %v2868, 7
          %v2870 = vsub.s32 %v2867, %v2869
          %v2871 = vrot.slane %v2843, %v2870
          %v2872 = vcombine.high %v2850, %v2850
          %v2873 = vcombine.high %v2857, %v2857
          %v2874 = vcombine.high %v2864, %v2864
          %v2875 = vcombine.high %v2871, %v2871
          %2884 = vst [vmem:[%s253 + $0x6] sm:$0x1] %v2850
          %2885 = vst [vmem:[%s253 + $0xe] sm:$0x1] %v2864
          %2886 = vst [vmem:[%s253 + $0x16] sm:$0x1] %v2872
          %2887 = vst [vmem:[%s253 + $0x1e] sm:$0x1] %v2874
          %2888 = vst [vmem:[%s253 + $0x26] sm:$0x1] %v2857
          %2889 = vst [vmem:[%s253 + $0x2e] sm:$0x1] %v2871
          %2890 = vst [vmem:[%s253 + $0x36] sm:$0x1] %v2873
          %2891 = vst [vmem:[%s253 + $0x3e] sm:$0x1] %v2875
          %s2892 = scalar_lea.vmem %s234, 112 [#allocation4]
          %v2893 = vld [vmem:[%s2892] sm:$0xff]
          %v2894 = vld [vmem:[%s2892 + $0x8] sm:$0xff]
          %v2895 = vunpack.c.l.bf16 %v2893
          %v2896 = vunpack.c.h.bf16 %v2893
          %v2897 = vunpack.c.l.bf16 %v2894
          %v2898 = vunpack.c.h.bf16 %v2894
          %v2899 = vld [vmem:[#allocation2] sm:$0xf]
          %v2900 = vld [vmem:[%s1] sm:$0xff]
          %v2901 = vld [vmem:[%s1 + $0x8] sm:$0xff]
          %v2902 = vld [vmem:[%s1 + $0x10] sm:$0xff]
          %v2903 = vld [vmem:[%s1 + $0x18] sm:$0xff]
          %v2904 = vld [vmem:[%s1 + $0x20] sm:$0xff]
          %v2905 = vld [vmem:[%s1 + $0x28] sm:$0xff]
          %v2906 = vld [vmem:[%s1 + $0x30] sm:$0xff]
          %v2907 = vld [vmem:[%s1 + $0x38] sm:$0xff]
          %v2908 = vld [vmem:[%s1 + $0x40] sm:$0xff]
          %v2909 = vld [vmem:[%s1 + $0x48] sm:$0xff]
          %v2910 = vld [vmem:[%s1 + $0x50] sm:$0xff]
          %v2911 = vld [vmem:[%s1 + $0x58] sm:$0xff]
          %v2912 = vld [vmem:[%s1 + $0x60] sm:$0xff]
          %v2913 = vld [vmem:[%s1 + $0x68] sm:$0xff]
          %v2914 = vld [vmem:[%s1 + $0x70] sm:$0xff]
          %v2915 = vld [vmem:[%s1 + $0x78] sm:$0xff]
          %v2916 = vld [vmem:[%s1 + $0x80] sm:$0xff]
          %v2917 = vld [vmem:[%s1 + $0x88] sm:$0xff]
          %v2918 = vld [vmem:[%s1 + $0x90] sm:$0xff]
          %v2919 = vld [vmem:[%s1 + $0x98] sm:$0xff]
          %v2920 = vld [vmem:[%s1 + $0xa0] sm:$0xff]
          %v2921 = vld [vmem:[%s1 + $0xa8] sm:$0xff]
          %v2922 = vld [vmem:[%s1 + $0xb0] sm:$0xff]
          %v2923 = vld [vmem:[%s1 + $0xb8] sm:$0xff]
          %v2924 = vld [vmem:[%s1 + $0xc0] sm:$0xff]
          %v2925 = vld [vmem:[%s1 + $0xc8] sm:$0xff]
          %v2926 = vld [vmem:[%s1 + $0xd0] sm:$0xff]
          %v2927 = vld [vmem:[%s1 + $0xd8] sm:$0xff]
          %v2928 = vld [vmem:[%s1 + $0xe0] sm:$0xff]
          %v2929 = vld [vmem:[%s1 + $0xe8] sm:$0xff]
          %v2930 = vld [vmem:[%s1 + $0xf0] sm:$0xff]
          %v2931 = vld [vmem:[%s1 + $0xf8] sm:$0xff]
          %v2964 = vunpack.c.l.b16 %v2900
          %v2965 = vunpack.c.h.b16 %v2900
          %v2966 = vunpack.c.l.b16 %v2901
          %v2967 = vunpack.c.h.b16 %v2901
          %v2968 = vunpack.c.l.b16 %v2902
          %v2969 = vunpack.c.h.b16 %v2902
          %v2970 = vunpack.c.l.b16 %v2903
          %v2971 = vunpack.c.h.b16 %v2903
          %v2972 = vunpack.c.l.b16 %v2904
          %v2973 = vunpack.c.h.b16 %v2904
          %v2974 = vunpack.c.l.b16 %v2905
          %v2975 = vunpack.c.h.b16 %v2905
          %v2976 = vunpack.c.l.b16 %v2906
          %v2977 = vunpack.c.h.b16 %v2906
          %v2978 = vunpack.c.l.b16 %v2907
          %v2979 = vunpack.c.h.b16 %v2907
          %v2980 = vunpack.c.l.b16 %v2908
          %v2981 = vunpack.c.h.b16 %v2908
          %v2982 = vunpack.c.l.b16 %v2909
          %v2983 = vunpack.c.h.b16 %v2909
          %v2984 = vunpack.c.l.b16 %v2910
          %v2985 = vunpack.c.h.b16 %v2910
          %v2986 = vunpack.c.l.b16 %v2911
          %v2987 = vunpack.c.h.b16 %v2911
          %v2988 = vunpack.c.l.b16 %v2912
          %v2989 = vunpack.c.h.b16 %v2912
          %v2990 = vunpack.c.l.b16 %v2913
          %v2991 = vunpack.c.h.b16 %v2913
          %v2992 = vunpack.c.l.b16 %v2914
          %v2993 = vunpack.c.h.b16 %v2914
          %v2994 = vunpack.c.l.b16 %v2915
          %v2995 = vunpack.c.h.b16 %v2915
          %v2996 = vunpack.c.l.b16 %v2916
          %v2997 = vunpack.c.h.b16 %v2916
          %v2998 = vunpack.c.l.b16 %v2917
          %v2999 = vunpack.c.h.b16 %v2917
          %v3000 = vunpack.c.l.b16 %v2918
          %v3001 = vunpack.c.h.b16 %v2918
          %v3002 = vunpack.c.l.b16 %v2919
          %v3003 = vunpack.c.h.b16 %v2919
          %v3004 = vunpack.c.l.b16 %v2920
          %v3005 = vunpack.c.h.b16 %v2920
          %v3006 = vunpack.c.l.b16 %v2921
          %v3007 = vunpack.c.h.b16 %v2921
          %v3008 = vunpack.c.l.b16 %v2922
          %v3009 = vunpack.c.h.b16 %v2922
          %v3010 = vunpack.c.l.b16 %v2923
          %v3011 = vunpack.c.h.b16 %v2923
          %v3012 = vunpack.c.l.b16 %v2924
          %v3013 = vunpack.c.h.b16 %v2924
          %v3014 = vunpack.c.l.b16 %v2925
          %v3015 = vunpack.c.h.b16 %v2925
          %v3016 = vunpack.c.l.b16 %v2926
          %v3017 = vunpack.c.h.b16 %v2926
          %v3018 = vunpack.c.l.b16 %v2927
          %v3019 = vunpack.c.h.b16 %v2927
          %v3020 = vunpack.c.l.b16 %v2928
          %v3021 = vunpack.c.h.b16 %v2928
          %v3022 = vunpack.c.l.b16 %v2929
          %v3023 = vunpack.c.h.b16 %v2929
          %v3024 = vunpack.c.l.b16 %v2930
          %v3025 = vunpack.c.h.b16 %v2930
          %v3026 = vunpack.c.l.b16 %v2931
          %v3027 = vunpack.c.h.b16 %v2931
          %v3028 = vpack.c.b16 %v2968, %v2964
          %v3029 = vpack.c.b16 %v2969, %v2965
          %v3030 = vpack.c.b16 %v2970, %v2966
          %v3031 = vpack.c.b16 %v2971, %v2967
          %v3032 = vpack.c.b16 %v2976, %v2972
          %v3033 = vpack.c.b16 %v2977, %v2973
          %v3034 = vpack.c.b16 %v2978, %v2974
          %v3035 = vpack.c.b16 %v2979, %v2975
          %v3036 = vpack.c.b16 %v2984, %v2980
          %v3037 = vpack.c.b16 %v2985, %v2981
          %v3038 = vpack.c.b16 %v2986, %v2982
          %v3039 = vpack.c.b16 %v2987, %v2983
          %v3040 = vpack.c.b16 %v2992, %v2988
          %v3041 = vpack.c.b16 %v2993, %v2989
          %v3042 = vpack.c.b16 %v2994, %v2990
          %v3043 = vpack.c.b16 %v2995, %v2991
          %v3044 = vpack.c.b16 %v3000, %v2996
          %v3045 = vpack.c.b16 %v3001, %v2997
          %v3046 = vpack.c.b16 %v3002, %v2998
          %v3047 = vpack.c.b16 %v3003, %v2999
          %v3048 = vpack.c.b16 %v3008, %v3004
          %v3049 = vpack.c.b16 %v3009, %v3005
          %v3050 = vpack.c.b16 %v3010, %v3006
          %v3051 = vpack.c.b16 %v3011, %v3007
          %v3052 = vpack.c.b16 %v3016, %v3012
          %v3053 = vpack.c.b16 %v3017, %v3013
          %v3054 = vpack.c.b16 %v3018, %v3014
          %v3055 = vpack.c.b16 %v3019, %v3015
          %v3056 = vpack.c.b16 %v3024, %v3020
          %v3057 = vpack.c.b16 %v3025, %v3021
          %v3058 = vpack.c.b16 %v3026, %v3022
          %v3059 = vpack.c.b16 %v3027, %v3023
          %3092 = vmatprep.subr.bf16.mxu0 %v3029
          %3093 = vmatpush1.bf16.msra.mxu0 %v3028
          %3094 = vmatprep.subr.bf16.mxu0 %v3033
          %3095 = vmatpush1.bf16.msra.mxu0 %v3032
          %3096 = vmatprep.subr.bf16.mxu0 %v3037
          %3097 = vmatpush1.bf16.msra.mxu0 %v3036
          %3098 = vmatprep.subr.bf16.mxu0 %v3041
          %3099 = vmatpush1.bf16.msra.mxu0 %v3040
          %3100 = vmatprep.subr.bf16.mxu0 %v3045
          %3101 = vmatpush1.bf16.msra.mxu0 %v3044
          %3102 = vmatprep.subr.bf16.mxu0 %v3049
          %3103 = vmatpush1.bf16.msra.mxu0 %v3048
          %3104 = vmatprep.subr.bf16.mxu0 %v3053
          %3105 = vmatpush1.bf16.msra.mxu0 %v3052
          %3106 = vmatprep.subr.bf16.mxu0 %v3057
          %3107 = vmatpush1.bf16.msra.mxu0 %v3056
          %3108 = vmatprep.subr.bf16.mxu0 0
          %3109 = vmatpush1.bf16.msra.mxu0 0
          %3110 = vmatprep.subr.bf16.mxu0 0
          %3111 = vmatpush1.bf16.msra.mxu0 0
          %3112 = vmatprep.subr.bf16.mxu0 0
          %3113 = vmatpush1.bf16.msra.mxu0 0
          %3114 = vmatprep.subr.bf16.mxu0 0
          %3115 = vmatpush1.bf16.msra.mxu0 0
          %3116 = vmatprep.subr.bf16.mxu0 0
          %3117 = vmatpush1.bf16.msra.mxu0 0
          %3118 = vmatprep.subr.bf16.mxu0 0
          %3119 = vmatpush1.bf16.msra.mxu0 0
          %3120 = vmatprep.subr.bf16.mxu0 0
          %3121 = vmatpush1.bf16.msra.mxu0 0
          %3122 = vmatprep.subr.bf16.mxu0 0
          %3123 = vmatpush1.bf16.msra.mxu0 0
          %3124 = vmatprep.mubr.bf16.mxu0 0
          %3125 = vmatmul.mubr.bf16.gmra.mrb[0].mxu0 %v2899
          %v3126 = vpop.f32.mrb[0].mxu0
          %v3127 = vadd.f32 0.0, %v3126
          %v3128 = vpop.f32.mrb[0].mxu0
          %v3129 = vadd.f32 0.0, %v3128
          %v3130 = vpop.f32.mrb[0].mxu0
          %v3131 = vpop.f32.mrb[0].mxu0
          %3132 = vdwg.mxu0
          %3133 = vmatprep.subr.bf16.mxu0 %v3031
          %3134 = vmatpush1.bf16.msra.mxu0 %v3030
          %3135 = vmatprep.subr.bf16.mxu0 %v3035
          %3136 = vmatpush1.bf16.msra.mxu0 %v3034
          %3137 = vmatprep.subr.bf16.mxu0 %v3039
          %3138 = vmatpush1.bf16.msra.mxu0 %v3038
          %3139 = vmatprep.subr.bf16.mxu0 %v3043
          %3140 = vmatpush1.bf16.msra.mxu0 %v3042
          %3141 = vmatprep.subr.bf16.mxu0 %v3047
          %3142 = vmatpush1.bf16.msra.mxu0 %v3046
          %3143 = vmatprep.subr.bf16.mxu0 %v3051
          %3144 = vmatpush1.bf16.msra.mxu0 %v3050
          %3145 = vmatprep.subr.bf16.mxu0 %v3055
          %3146 = vmatpush1.bf16.msra.mxu0 %v3054
          %3147 = vmatprep.subr.bf16.mxu0 %v3059
          %3148 = vmatpush1.bf16.msra.mxu0 %v3058
          %3149 = vmatprep.subr.bf16.mxu0 0
          %3150 = vmatpush1.bf16.msra.mxu0 0
          %3151 = vmatprep.subr.bf16.mxu0 0
          %3152 = vmatpush1.bf16.msra.mxu0 0
          %3153 = vmatprep.subr.bf16.mxu0 0
          %3154 = vmatpush1.bf16.msra.mxu0 0
          %3155 = vmatprep.subr.bf16.mxu0 0
          %3156 = vmatpush1.bf16.msra.mxu0 0
          %3157 = vmatprep.subr.bf16.mxu0 0
          %3158 = vmatpush1.bf16.msra.mxu0 0
          %3159 = vmatprep.subr.bf16.mxu0 0
          %3160 = vmatpush1.bf16.msra.mxu0 0
          %3161 = vmatprep.subr.bf16.mxu0 0
          %3162 = vmatpush1.bf16.msra.mxu0 0
          %3163 = vmatprep.subr.bf16.mxu0 0
          %3164 = vmatpush1.bf16.msra.mxu0 0
          %3165 = vmatprep.mubr.bf16.mxu0 0
          %3166 = vmatmul.mubr.bf16.gmra.mrb[0].mxu0 %v2899
          %v3167 = vpop.f32.mrb[0].mxu0
          %v3168 = vadd.f32 0.0, %v3167
          %v3169 = vpop.f32.mrb[0].mxu0
          %v3170 = vadd.f32 0.0, %v3169
          %v3171 = vpop.f32.mrb[0].mxu0
          %v3172 = vpop.f32.mrb[0].mxu0
          %3173 = vdwg.mxu0
          %v3174 = vadd.f32 %v2895, %v3127
          %v3175 = vadd.f32 %v2896, %v3129
          %v3176 = vadd.f32 %v2897, %v3168
          %v3177 = vadd.f32 %v2898, %v3170
          %v3178 = vmul.f32 %v3174, 0.5
          %v3179 = vtanh.pop %v3178
          %v3180 = vadd.f32 %v3179, 1.0
          %v3181 = vmul.f32 %v3180, 0.5
          %v3182 = vmul.f32 %v3175, 0.5
          %v3183 = vtanh.pop %v3182
          %v3184 = vadd.f32 %v3183, 1.0
          %v3185 = vmul.f32 %v3184, 0.5
          %v3186 = vtanh.pop %v3176
          %v3187 = vmul.f32 %v3177, 0.5
          %v3188 = vtanh.pop %v3187
          %v3189 = vadd.f32 %v3188, 1.0
          %v3190 = vmul.f32 %v3189, 0.5
          %v3191 = vld [vmem:[#allocation3] sm:$0xff]
          %v3192 = vmul.f32 %v3185, %v3191
          %v3193 = vmul.f32 %v3181, %v3186
          %v3194 = vadd.f32 %v3192, %v3193
          %v3195 = vtanh.pop %v3194
          %v3196 = vmul.f32 %v3190, %v3195
          %3197 = vst [vmem:[#allocation3] sm:$0xff] %v3194
          %v3198 = vpack.c.bf16 %v3196, %v3196
          %3199 = vst [vmem:[#allocation2] sm:$0xf] %v3198
          %v3201 = vcombine.high %v3196, %v3196
          %v3203 = vunpack.c.l.s4 1966171168
          %v3204 = vunpack.c.0.s8 %v3203
          %v3205 = vlaneseq
          %v3206 = vshrl.u32 %v3205, 7
          %v3207 = vsub.s32 %v3204, %v3206
          %v3208 = vrot.slane %v3196, %v3207
          %v3210 = vunpack.c.l.s4 1966171168
          %v3211 = vunpack.c.0.s8 %v3210
          %v3212 = vlaneseq
          %v3213 = vshrl.u32 %v3212, 7
          %v3214 = vsub.s32 %v3211, %v3213
          %v3215 = vrot.slane %v3201, %v3214
          %v3216 = vcombine.high %v3208, %v3208
          %v3217 = vcombine.high %v3215, %v3215
          %v3219 = vunpack.c.l.s4 1966171168
          %v3220 = vunpack.c.0.s8 %v3219
          %v3221 = vlaneseq
          %v3222 = vshrl.u32 %v3221, 7
          %v3223 = vsub.s32 %v3220, %v3222
          %v3224 = vrot.slane %v3208, %v3223
          %v3226 = vunpack.c.l.s4 1966171168
          %v3227 = vunpack.c.0.s8 %v3226
          %v3228 = vlaneseq
          %v3229 = vshrl.u32 %v3228, 7
          %v3230 = vsub.s32 %v3227, %v3229
          %v3231 = vrot.slane %v3215, %v3230
          %v3233 = vunpack.c.l.s4 1966171168
          %v3234 = vunpack.c.0.s8 %v3233
          %v3235 = vlaneseq
          %v3236 = vshrl.u32 %v3235, 7
          %v3237 = vsub.s32 %v3234, %v3236
          %v3238 = vrot.slane %v3216, %v3237
          %v3240 = vunpack.c.l.s4 1966171168
          %v3241 = vunpack.c.0.s8 %v3240
          %v3242 = vlaneseq
          %v3243 = vshrl.u32 %v3242, 7
          %v3244 = vsub.s32 %v3241, %v3243
          %v3245 = vrot.slane %v3217, %v3244
          %v3246 = vcombine.high %v3224, %v3224
          %v3247 = vcombine.high %v3231, %v3231
          %v3248 = vcombine.high %v3238, %v3238
          %v3249 = vcombine.high %v3245, %v3245
          %3258 = vst [vmem:[%s253 + $0x7] sm:$0x1] %v3224
          %3259 = vst [vmem:[%s253 + $0xf] sm:$0x1] %v3238
          %3260 = vst [vmem:[%s253 + $0x17] sm:$0x1] %v3246
          %3261 = vst [vmem:[%s253 + $0x1f] sm:$0x1] %v3248
          %3262 = vst [vmem:[%s253 + $0x27] sm:$0x1] %v3231
          %3263 = vst [vmem:[%s253 + $0x2f] sm:$0x1] %v3245
          %3264 = vst [vmem:[%s253 + $0x37] sm:$0x1] %v3247
          %3265 = vst [vmem:[%s253 + $0x3f] sm:$0x1] %v3249
        $region63: #{bilstm_forward.3} parent=50 // pred_fallthru
          _
        %p3266 = scmp.eq.s32.totalorder %s18, 1
        // Predicated region
        $region64: #{bilstm_forward.3} parent=50 // pred_check
          %p3267 = pneg %p3266
        $region65: #{bilstm_forward.3} parent=50 // pred_check_branch
          %3269 = sbr.rel (%p3267) target = $region67
        $region66: #{bilstm_forward.3} parent=50 // pred_region
          %s3270 = scalar_lea.vmem %s234, 112 [#allocation4]
          %v3271 = vld [vmem:[%s3270] sm:$0xff]
          %v3272 = vld [vmem:[%s3270 + $0x8] sm:$0xff]
          %v3273 = vunpack.c.l.bf16 %v3271
          %v3274 = vunpack.c.h.bf16 %v3271
          %v3275 = vunpack.c.l.bf16 %v3272
          %v3276 = vunpack.c.h.bf16 %v3272
          %v3277 = vld [vmem:[#allocation2] sm:$0xf]
          %v3278 = vld [vmem:[%s2] sm:$0xff]
          %v3279 = vld [vmem:[%s2 + $0x8] sm:$0xff]
          %v3280 = vld [vmem:[%s2 + $0x10] sm:$0xff]
          %v3281 = vld [vmem:[%s2 + $0x18] sm:$0xff]
          %v3282 = vld [vmem:[%s2 + $0x20] sm:$0xff]
          %v3283 = vld [vmem:[%s2 + $0x28] sm:$0xff]
          %v3284 = vld [vmem:[%s2 + $0x30] sm:$0xff]
          %v3285 = vld [vmem:[%s2 + $0x38] sm:$0xff]
          %v3286 = vld [vmem:[%s2 + $0x40] sm:$0xff]
          %v3287 = vld [vmem:[%s2 + $0x48] sm:$0xff]
          %v3288 = vld [vmem:[%s2 + $0x50] sm:$0xff]
          %v3289 = vld [vmem:[%s2 + $0x58] sm:$0xff]
          %v3290 = vld [vmem:[%s2 + $0x60] sm:$0xff]
          %v3291 = vld [vmem:[%s2 + $0x68] sm:$0xff]
          %v3292 = vld [vmem:[%s2 + $0x70] sm:$0xff]
          %v3293 = vld [vmem:[%s2 + $0x78] sm:$0xff]
          %v3294 = vld [vmem:[%s2 + $0x80] sm:$0xff]
          %v3295 = vld [vmem:[%s2 + $0x88] sm:$0xff]
          %v3296 = vld [vmem:[%s2 + $0x90] sm:$0xff]
          %v3297 = vld [vmem:[%s2 + $0x98] sm:$0xff]
          %v3298 = vld [vmem:[%s2 + $0xa0] sm:$0xff]
          %v3299 = vld [vmem:[%s2 + $0xa8] sm:$0xff]
          %v3300 = vld [vmem:[%s2 + $0xb0] sm:$0xff]
          %v3301 = vld [vmem:[%s2 + $0xb8] sm:$0xff]
          %v3302 = vld [vmem:[%s2 + $0xc0] sm:$0xff]
          %v3303 = vld [vmem:[%s2 + $0xc8] sm:$0xff]
          %v3304 = vld [vmem:[%s2 + $0xd0] sm:$0xff]
          %v3305 = vld [vmem:[%s2 + $0xd8] sm:$0xff]
          %v3306 = vld [vmem:[%s2 + $0xe0] sm:$0xff]
          %v3307 = vld [vmem:[%s2 + $0xe8] sm:$0xff]
          %v3308 = vld [vmem:[%s2 + $0xf0] sm:$0xff]
          %v3309 = vld [vmem:[%s2 + $0xf8] sm:$0xff]
          %v3342 = vunpack.c.l.b16 %v3278
          %v3343 = vunpack.c.h.b16 %v3278
          %v3344 = vunpack.c.l.b16 %v3279
          %v3345 = vunpack.c.h.b16 %v3279
          %v3346 = vunpack.c.l.b16 %v3280
          %v3347 = vunpack.c.h.b16 %v3280
          %v3348 = vunpack.c.l.b16 %v3281
          %v3349 = vunpack.c.h.b16 %v3281
          %v3350 = vunpack.c.l.b16 %v3282
          %v3351 = vunpack.c.h.b16 %v3282
          %v3352 = vunpack.c.l.b16 %v3283
          %v3353 = vunpack.c.h.b16 %v3283
          %v3354 = vunpack.c.l.b16 %v3284
          %v3355 = vunpack.c.h.b16 %v3284
          %v3356 = vunpack.c.l.b16 %v3285
          %v3357 = vunpack.c.h.b16 %v3285
          %v3358 = vunpack.c.l.b16 %v3286
          %v3359 = vunpack.c.h.b16 %v3286
          %v3360 = vunpack.c.l.b16 %v3287
          %v3361 = vunpack.c.h.b16 %v3287
          %v3362 = vunpack.c.l.b16 %v3288
          %v3363 = vunpack.c.h.b16 %v3288
          %v3364 = vunpack.c.l.b16 %v3289
          %v3365 = vunpack.c.h.b16 %v3289
          %v3366 = vunpack.c.l.b16 %v3290
          %v3367 = vunpack.c.h.b16 %v3290
          %v3368 = vunpack.c.l.b16 %v3291
          %v3369 = vunpack.c.h.b16 %v3291
          %v3370 = vunpack.c.l.b16 %v3292
          %v3371 = vunpack.c.h.b16 %v3292
          %v3372 = vunpack.c.l.b16 %v3293
          %v3373 = vunpack.c.h.b16 %v3293
          %v3374 = vunpack.c.l.b16 %v3294
          %v3375 = vunpack.c.h.b16 %v3294
          %v3376 = vunpack.c.l.b16 %v3295
          %v3377 = vunpack.c.h.b16 %v3295
          %v3378 = vunpack.c.l.b16 %v3296
          %v3379 = vunpack.c.h.b16 %v3296
          %v3380 = vunpack.c.l.b16 %v3297
          %v3381 = vunpack.c.h.b16 %v3297
          %v3382 = vunpack.c.l.b16 %v3298
          %v3383 = vunpack.c.h.b16 %v3298
          %v3384 = vunpack.c.l.b16 %v3299
          %v3385 = vunpack.c.h.b16 %v3299
          %v3386 = vunpack.c.l.b16 %v3300
          %v3387 = vunpack.c.h.b16 %v3300
          %v3388 = vunpack.c.l.b16 %v3301
          %v3389 = vunpack.c.h.b16 %v3301
          %v3390 = vunpack.c.l.b16 %v3302
          %v3391 = vunpack.c.h.b16 %v3302
          %v3392 = vunpack.c.l.b16 %v3303
          %v3393 = vunpack.c.h.b16 %v3303
          %v3394 = vunpack.c.l.b16 %v3304
          %v3395 = vunpack.c.h.b16 %v3304
          %v3396 = vunpack.c.l.b16 %v3305
          %v3397 = vunpack.c.h.b16 %v3305
          %v3398 = vunpack.c.l.b16 %v3306
          %v3399 = vunpack.c.h.b16 %v3306
          %v3400 = vunpack.c.l.b16 %v3307
          %v3401 = vunpack.c.h.b16 %v3307
          %v3402 = vunpack.c.l.b16 %v3308
          %v3403 = vunpack.c.h.b16 %v3308
          %v3404 = vunpack.c.l.b16 %v3309
          %v3405 = vunpack.c.h.b16 %v3309
          %v3406 = vpack.c.b16 %v3346, %v3342
          %v3407 = vpack.c.b16 %v3347, %v3343
          %v3408 = vpack.c.b16 %v3348, %v3344
          %v3409 = vpack.c.b16 %v3349, %v3345
          %v3410 = vpack.c.b16 %v3354, %v3350
          %v3411 = vpack.c.b16 %v3355, %v3351
          %v3412 = vpack.c.b16 %v3356, %v3352
          %v3413 = vpack.c.b16 %v3357, %v3353
          %v3414 = vpack.c.b16 %v3362, %v3358
          %v3415 = vpack.c.b16 %v3363, %v3359
          %v3416 = vpack.c.b16 %v3364, %v3360
          %v3417 = vpack.c.b16 %v3365, %v3361
          %v3418 = vpack.c.b16 %v3370, %v3366
          %v3419 = vpack.c.b16 %v3371, %v3367
          %v3420 = vpack.c.b16 %v3372, %v3368
          %v3421 = vpack.c.b16 %v3373, %v3369
          %v3422 = vpack.c.b16 %v3378, %v3374
          %v3423 = vpack.c.b16 %v3379, %v3375
          %v3424 = vpack.c.b16 %v3380, %v3376
          %v3425 = vpack.c.b16 %v3381, %v3377
          %v3426 = vpack.c.b16 %v3386, %v3382
          %v3427 = vpack.c.b16 %v3387, %v3383
          %v3428 = vpack.c.b16 %v3388, %v3384
          %v3429 = vpack.c.b16 %v3389, %v3385
          %v3430 = vpack.c.b16 %v3394, %v3390
          %v3431 = vpack.c.b16 %v3395, %v3391
          %v3432 = vpack.c.b16 %v3396, %v3392
          %v3433 = vpack.c.b16 %v3397, %v3393
          %v3434 = vpack.c.b16 %v3402, %v3398
          %v3435 = vpack.c.b16 %v3403, %v3399
          %v3436 = vpack.c.b16 %v3404, %v3400
          %v3437 = vpack.c.b16 %v3405, %v3401
          %3470 = vmatprep.subr.bf16.mxu0 %v3407
          %3471 = vmatpush1.bf16.msra.mxu0 %v3406
          %3472 = vmatprep.subr.bf16.mxu0 %v3411
          %3473 = vmatpush1.bf16.msra.mxu0 %v3410
          %3474 = vmatprep.subr.bf16.mxu0 %v3415
          %3475 = vmatpush1.bf16.msra.mxu0 %v3414
          %3476 = vmatprep.subr.bf16.mxu0 %v3419
          %3477 = vmatpush1.bf16.msra.mxu0 %v3418
          %3478 = vmatprep.subr.bf16.mxu0 %v3423
          %3479 = vmatpush1.bf16.msra.mxu0 %v3422
          %3480 = vmatprep.subr.bf16.mxu0 %v3427
          %3481 = vmatpush1.bf16.msra.mxu0 %v3426
          %3482 = vmatprep.subr.bf16.mxu0 %v3431
          %3483 = vmatpush1.bf16.msra.mxu0 %v3430
          %3484 = vmatprep.subr.bf16.mxu0 %v3435
          %3485 = vmatpush1.bf16.msra.mxu0 %v3434
          %3486 = vmatprep.subr.bf16.mxu0 0
          %3487 = vmatpush1.bf16.msra.mxu0 0
          %3488 = vmatprep.subr.bf16.mxu0 0
          %3489 = vmatpush1.bf16.msra.mxu0 0
          %3490 = vmatprep.subr.bf16.mxu0 0
          %3491 = vmatpush1.bf16.msra.mxu0 0
          %3492 = vmatprep.subr.bf16.mxu0 0
          %3493 = vmatpush1.bf16.msra.mxu0 0
          %3494 = vmatprep.subr.bf16.mxu0 0
          %3495 = vmatpush1.bf16.msra.mxu0 0
          %3496 = vmatprep.subr.bf16.mxu0 0
          %3497 = vmatpush1.bf16.msra.mxu0 0
          %3498 = vmatprep.subr.bf16.mxu0 0
          %3499 = vmatpush1.bf16.msra.mxu0 0
          %3500 = vmatprep.subr.bf16.mxu0 0
          %3501 = vmatpush1.bf16.msra.mxu0 0
          %3502 = vmatprep.mubr.bf16.mxu0 0
          %3503 = vmatmul.mubr.bf16.gmra.mrb[0].mxu0 %v3277
          %v3504 = vpop.f32.mrb[0].mxu0
          %v3505 = vadd.f32 0.0, %v3504
          %v3506 = vpop.f32.mrb[0].mxu0
          %v3507 = vadd.f32 0.0, %v3506
          %v3508 = vpop.f32.mrb[0].mxu0
          %v3509 = vpop.f32.mrb[0].mxu0
          %3510 = vdwg.mxu0
          %3511 = vmatprep.subr.bf16.mxu0 %v3409
          %3512 = vmatpush1.bf16.msra.mxu0 %v3408
          %3513 = vmatprep.subr.bf16.mxu0 %v3413
          %3514 = vmatpush1.bf16.msra.mxu0 %v3412
          %3515 = vmatprep.subr.bf16.mxu0 %v3417
          %3516 = vmatpush1.bf16.msra.mxu0 %v3416
          %3517 = vmatprep.subr.bf16.mxu0 %v3421
          %3518 = vmatpush1.bf16.msra.mxu0 %v3420
          %3519 = vmatprep.subr.bf16.mxu0 %v3425
          %3520 = vmatpush1.bf16.msra.mxu0 %v3424
          %3521 = vmatprep.subr.bf16.mxu0 %v3429
          %3522 = vmatpush1.bf16.msra.mxu0 %v3428
          %3523 = vmatprep.subr.bf16.mxu0 %v3433
          %3524 = vmatpush1.bf16.msra.mxu0 %v3432
          %3525 = vmatprep.subr.bf16.mxu0 %v3437
          %3526 = vmatpush1.bf16.msra.mxu0 %v3436
          %3527 = vmatprep.subr.bf16.mxu0 0
          %3528 = vmatpush1.bf16.msra.mxu0 0
          %3529 = vmatprep.subr.bf16.mxu0 0
          %3530 = vmatpush1.bf16.msra.mxu0 0
          %3531 = vmatprep.subr.bf16.mxu0 0
          %3532 = vmatpush1.bf16.msra.mxu0 0
          %3533 = vmatprep.subr.bf16.mxu0 0
          %3534 = vmatpush1.bf16.msra.mxu0 0
          %3535 = vmatprep.subr.bf16.mxu0 0
          %3536 = vmatpush1.bf16.msra.mxu0 0
          %3537 = vmatprep.subr.bf16.mxu0 0
          %3538 = vmatpush1.bf16.msra.mxu0 0
          %3539 = vmatprep.subr.bf16.mxu0 0
          %3540 = vmatpush1.bf16.msra.mxu0 0
          %3541 = vmatprep.subr.bf16.mxu0 0
          %3542 = vmatpush1.bf16.msra.mxu0 0
          %3543 = vmatprep.mubr.bf16.mxu0 0
          %3544 = vmatmul.mubr.bf16.gmra.mrb[0].mxu0 %v3277
          %v3545 = vpop.f32.mrb[0].mxu0
          %v3546 = vadd.f32 0.0, %v3545
          %v3547 = vpop.f32.mrb[0].mxu0
          %v3548 = vadd.f32 0.0, %v3547
          %v3549 = vpop.f32.mrb[0].mxu0
          %v3550 = vpop.f32.mrb[0].mxu0
          %3551 = vdwg.mxu0
          %v3552 = vadd.f32 %v3273, %v3505
          %v3553 = vadd.f32 %v3274, %v3507
          %v3554 = vadd.f32 %v3275, %v3546
          %v3555 = vadd.f32 %v3276, %v3548
          %v3556 = vmul.f32 %v3552, 0.5
          %v3557 = vtanh.pop %v3556
          %v3558 = vadd.f32 %v3557, 1.0
          %v3559 = vmul.f32 %v3558, 0.5
          %v3560 = vmul.f32 %v3553, 0.5
          %v3561 = vtanh.pop %v3560
          %v3562 = vadd.f32 %v3561, 1.0
          %v3563 = vmul.f32 %v3562, 0.5
          %v3564 = vtanh.pop %v3554
          %v3565 = vmul.f32 %v3555, 0.5
          %v3566 = vtanh.pop %v3565
          %v3567 = vadd.f32 %v3566, 1.0
          %v3568 = vmul.f32 %v3567, 0.5
          %v3569 = vld [vmem:[#allocation3] sm:$0xff]
          %v3570 = vmul.f32 %v3563, %v3569
          %v3571 = vmul.f32 %v3559, %v3564
          %v3572 = vadd.f32 %v3570, %v3571
          %v3573 = vtanh.pop %v3572
          %v3574 = vmul.f32 %v3568, %v3573
          %3575 = vst [vmem:[#allocation3] sm:$0xff] %v3572
          %v3576 = vpack.c.bf16 %v3574, %v3574
          %3577 = vst [vmem:[#allocation2] sm:$0xf] %v3576
          %v3579 = vcombine.high %v3574, %v3574
          %v3581 = vunpack.c.l.s4 1966171168
          %v3582 = vunpack.c.0.s8 %v3581
          %v3583 = vlaneseq
          %v3584 = vshrl.u32 %v3583, 7
          %v3585 = vsub.s32 %v3582, %v3584
          %v3586 = vrot.slane %v3574, %v3585
          %v3588 = vunpack.c.l.s4 1966171168
          %v3589 = vunpack.c.0.s8 %v3588
          %v3590 = vlaneseq
          %v3591 = vshrl.u32 %v3590, 7
          %v3592 = vsub.s32 %v3589, %v3591
          %v3593 = vrot.slane %v3579, %v3592
          %v3594 = vcombine.high %v3586, %v3586
          %v3595 = vcombine.high %v3593, %v3593
          %v3597 = vunpack.c.l.s4 1966171168
          %v3598 = vunpack.c.0.s8 %v3597
          %v3599 = vlaneseq
          %v3600 = vshrl.u32 %v3599, 7
          %v3601 = vsub.s32 %v3598, %v3600
          %v3602 = vrot.slane %v3586, %v3601
          %v3604 = vunpack.c.l.s4 1966171168
          %v3605 = vunpack.c.0.s8 %v3604
          %v3606 = vlaneseq
          %v3607 = vshrl.u32 %v3606, 7
          %v3608 = vsub.s32 %v3605, %v3607
          %v3609 = vrot.slane %v3593, %v3608
          %v3611 = vunpack.c.l.s4 1966171168
          %v3612 = vunpack.c.0.s8 %v3611
          %v3613 = vlaneseq
          %v3614 = vshrl.u32 %v3613, 7
          %v3615 = vsub.s32 %v3612, %v3614
          %v3616 = vrot.slane %v3594, %v3615
          %v3618 = vunpack.c.l.s4 1966171168
          %v3619 = vunpack.c.0.s8 %v3618
          %v3620 = vlaneseq
          %v3621 = vshrl.u32 %v3620, 7
          %v3622 = vsub.s32 %v3619, %v3621
          %v3623 = vrot.slane %v3595, %v3622
          %v3624 = vcombine.high %v3602, %v3602
          %v3625 = vcombine.high %v3609, %v3609
          %v3626 = vcombine.high %v3616, %v3616
          %v3627 = vcombine.high %v3623, %v3623
          %3636 = vst [vmem:[%s253 + $0x7] sm:$0x1] %v3602
          %3637 = vst [vmem:[%s253 + $0xf] sm:$0x1] %v3616
          %3638 = vst [vmem:[%s253 + $0x17] sm:$0x1] %v3624
          %3639 = vst [vmem:[%s253 + $0x1f] sm:$0x1] %v3626
          %3640 = vst [vmem:[%s253 + $0x27] sm:$0x1] %v3609
          %3641 = vst [vmem:[%s253 + $0x2f] sm:$0x1] %v3623
          %3642 = vst [vmem:[%s253 + $0x37] sm:$0x1] %v3625
          %3643 = vst [vmem:[%s253 + $0x3f] sm:$0x1] %v3627
          %s3644 = scalar_lea.vmem %s234, 96 [#allocation4]
          %v3645 = vld [vmem:[%s3644] sm:$0xff]
          %v3646 = vld [vmem:[%s3644 + $0x8] sm:$0xff]
          %v3647 = vunpack.c.l.bf16 %v3645
          %v3648 = vunpack.c.h.bf16 %v3645
          %v3649 = vunpack.c.l.bf16 %v3646
          %v3650 = vunpack.c.h.bf16 %v3646
          %v3651 = vld [vmem:[#allocation2] sm:$0xf]
          %v3652 = vld [vmem:[%s2] sm:$0xff]
          %v3653 = vld [vmem:[%s2 + $0x8] sm:$0xff]
          %v3654 = vld [vmem:[%s2 + $0x10] sm:$0xff]
          %v3655 = vld [vmem:[%s2 + $0x18] sm:$0xff]
          %v3656 = vld [vmem:[%s2 + $0x20] sm:$0xff]
          %v3657 = vld [vmem:[%s2 + $0x28] sm:$0xff]
          %v3658 = vld [vmem:[%s2 + $0x30] sm:$0xff]
          %v3659 = vld [vmem:[%s2 + $0x38] sm:$0xff]
          %v3660 = vld [vmem:[%s2 + $0x40] sm:$0xff]
          %v3661 = vld [vmem:[%s2 + $0x48] sm:$0xff]
          %v3662 = vld [vmem:[%s2 + $0x50] sm:$0xff]
          %v3663 = vld [vmem:[%s2 + $0x58] sm:$0xff]
          %v3664 = vld [vmem:[%s2 + $0x60] sm:$0xff]
          %v3665 = vld [vmem:[%s2 + $0x68] sm:$0xff]
          %v3666 = vld [vmem:[%s2 + $0x70] sm:$0xff]
          %v3667 = vld [vmem:[%s2 + $0x78] sm:$0xff]
          %v3668 = vld [vmem:[%s2 + $0x80] sm:$0xff]
          %v3669 = vld [vmem:[%s2 + $0x88] sm:$0xff]
          %v3670 = vld [vmem:[%s2 + $0x90] sm:$0xff]
          %v3671 = vld [vmem:[%s2 + $0x98] sm:$0xff]
          %v3672 = vld [vmem:[%s2 + $0xa0] sm:$0xff]
          %v3673 = vld [vmem:[%s2 + $0xa8] sm:$0xff]
          %v3674 = vld [vmem:[%s2 + $0xb0] sm:$0xff]
          %v3675 = vld [vmem:[%s2 + $0xb8] sm:$0xff]
          %v3676 = vld [vmem:[%s2 + $0xc0] sm:$0xff]
          %v3677 = vld [vmem:[%s2 + $0xc8] sm:$0xff]
          %v3678 = vld [vmem:[%s2 + $0xd0] sm:$0xff]
          %v3679 = vld [vmem:[%s2 + $0xd8] sm:$0xff]
          %v3680 = vld [vmem:[%s2 + $0xe0] sm:$0xff]
          %v3681 = vld [vmem:[%s2 + $0xe8] sm:$0xff]
          %v3682 = vld [vmem:[%s2 + $0xf0] sm:$0xff]
          %v3683 = vld [vmem:[%s2 + $0xf8] sm:$0xff]
          %v3716 = vunpack.c.l.b16 %v3652
          %v3717 = vunpack.c.h.b16 %v3652
          %v3718 = vunpack.c.l.b16 %v3653
          %v3719 = vunpack.c.h.b16 %v3653
          %v3720 = vunpack.c.l.b16 %v3654
          %v3721 = vunpack.c.h.b16 %v3654
          %v3722 = vunpack.c.l.b16 %v3655
          %v3723 = vunpack.c.h.b16 %v3655
          %v3724 = vunpack.c.l.b16 %v3656
          %v3725 = vunpack.c.h.b16 %v3656
          %v3726 = vunpack.c.l.b16 %v3657
          %v3727 = vunpack.c.h.b16 %v3657
          %v3728 = vunpack.c.l.b16 %v3658
          %v3729 = vunpack.c.h.b16 %v3658
          %v3730 = vunpack.c.l.b16 %v3659
          %v3731 = vunpack.c.h.b16 %v3659
          %v3732 = vunpack.c.l.b16 %v3660
          %v3733 = vunpack.c.h.b16 %v3660
          %v3734 = vunpack.c.l.b16 %v3661
          %v3735 = vunpack.c.h.b16 %v3661
          %v3736 = vunpack.c.l.b16 %v3662
          %v3737 = vunpack.c.h.b16 %v3662
          %v3738 = vunpack.c.l.b16 %v3663
          %v3739 = vunpack.c.h.b16 %v3663
          %v3740 = vunpack.c.l.b16 %v3664
          %v3741 = vunpack.c.h.b16 %v3664
          %v3742 = vunpack.c.l.b16 %v3665
          %v3743 = vunpack.c.h.b16 %v3665
          %v3744 = vunpack.c.l.b16 %v3666
          %v3745 = vunpack.c.h.b16 %v3666
          %v3746 = vunpack.c.l.b16 %v3667
          %v3747 = vunpack.c.h.b16 %v3667
          %v3748 = vunpack.c.l.b16 %v3668
          %v3749 = vunpack.c.h.b16 %v3668
          %v3750 = vunpack.c.l.b16 %v3669
          %v3751 = vunpack.c.h.b16 %v3669
          %v3752 = vunpack.c.l.b16 %v3670
          %v3753 = vunpack.c.h.b16 %v3670
          %v3754 = vunpack.c.l.b16 %v3671
          %v3755 = vunpack.c.h.b16 %v3671
          %v3756 = vunpack.c.l.b16 %v3672
          %v3757 = vunpack.c.h.b16 %v3672
          %v3758 = vunpack.c.l.b16 %v3673
          %v3759 = vunpack.c.h.b16 %v3673
          %v3760 = vunpack.c.l.b16 %v3674
          %v3761 = vunpack.c.h.b16 %v3674
          %v3762 = vunpack.c.l.b16 %v3675
          %v3763 = vunpack.c.h.b16 %v3675
          %v3764 = vunpack.c.l.b16 %v3676
          %v3765 = vunpack.c.h.b16 %v3676
          %v3766 = vunpack.c.l.b16 %v3677
          %v3767 = vunpack.c.h.b16 %v3677
          %v3768 = vunpack.c.l.b16 %v3678
          %v3769 = vunpack.c.h.b16 %v3678
          %v3770 = vunpack.c.l.b16 %v3679
          %v3771 = vunpack.c.h.b16 %v3679
          %v3772 = vunpack.c.l.b16 %v3680
          %v3773 = vunpack.c.h.b16 %v3680
          %v3774 = vunpack.c.l.b16 %v3681
          %v3775 = vunpack.c.h.b16 %v3681
          %v3776 = vunpack.c.l.b16 %v3682
          %v3777 = vunpack.c.h.b16 %v3682
          %v3778 = vunpack.c.l.b16 %v3683
          %v3779 = vunpack.c.h.b16 %v3683
          %v3780 = vpack.c.b16 %v3720, %v3716
          %v3781 = vpack.c.b16 %v3721, %v3717
          %v3782 = vpack.c.b16 %v3722, %v3718
          %v3783 = vpack.c.b16 %v3723, %v3719
          %v3784 = vpack.c.b16 %v3728, %v3724
          %v3785 = vpack.c.b16 %v3729, %v3725
          %v3786 = vpack.c.b16 %v3730, %v3726
          %v3787 = vpack.c.b16 %v3731, %v3727
          %v3788 = vpack.c.b16 %v3736, %v3732
          %v3789 = vpack.c.b16 %v3737, %v3733
          %v3790 = vpack.c.b16 %v3738, %v3734
          %v3791 = vpack.c.b16 %v3739, %v3735
          %v3792 = vpack.c.b16 %v3744, %v3740
          %v3793 = vpack.c.b16 %v3745, %v3741
          %v3794 = vpack.c.b16 %v3746, %v3742
          %v3795 = vpack.c.b16 %v3747, %v3743
          %v3796 = vpack.c.b16 %v3752, %v3748
          %v3797 = vpack.c.b16 %v3753, %v3749
          %v3798 = vpack.c.b16 %v3754, %v3750
          %v3799 = vpack.c.b16 %v3755, %v3751
          %v3800 = vpack.c.b16 %v3760, %v3756
          %v3801 = vpack.c.b16 %v3761, %v3757
          %v3802 = vpack.c.b16 %v3762, %v3758
          %v3803 = vpack.c.b16 %v3763, %v3759
          %v3804 = vpack.c.b16 %v3768, %v3764
          %v3805 = vpack.c.b16 %v3769, %v3765
          %v3806 = vpack.c.b16 %v3770, %v3766
          %v3807 = vpack.c.b16 %v3771, %v3767
          %v3808 = vpack.c.b16 %v3776, %v3772
          %v3809 = vpack.c.b16 %v3777, %v3773
          %v3810 = vpack.c.b16 %v3778, %v3774
          %v3811 = vpack.c.b16 %v3779, %v3775
          %3844 = vmatprep.subr.bf16.mxu0 %v3781
          %3845 = vmatpush1.bf16.msra.mxu0 %v3780
          %3846 = vmatprep.subr.bf16.mxu0 %v3785
          %3847 = vmatpush1.bf16.msra.mxu0 %v3784
          %3848 = vmatprep.subr.bf16.mxu0 %v3789
          %3849 = vmatpush1.bf16.msra.mxu0 %v3788
          %3850 = vmatprep.subr.bf16.mxu0 %v3793
          %3851 = vmatpush1.bf16.msra.mxu0 %v3792
          %3852 = vmatprep.subr.bf16.mxu0 %v3797
          %3853 = vmatpush1.bf16.msra.mxu0 %v3796
          %3854 = vmatprep.subr.bf16.mxu0 %v3801
          %3855 = vmatpush1.bf16.msra.mxu0 %v3800
          %3856 = vmatprep.subr.bf16.mxu0 %v3805
          %3857 = vmatpush1.bf16.msra.mxu0 %v3804
          %3858 = vmatprep.subr.bf16.mxu0 %v3809
          %3859 = vmatpush1.bf16.msra.mxu0 %v3808
          %3860 = vmatprep.subr.bf16.mxu0 0
          %3861 = vmatpush1.bf16.msra.mxu0 0
          %3862 = vmatprep.subr.bf16.mxu0 0
          %3863 = vmatpush1.bf16.msra.mxu0 0
          %3864 = vmatprep.subr.bf16.mxu0 0
          %3865 = vmatpush1.bf16.msra.mxu0 0
          %3866 = vmatprep.subr.bf16.mxu0 0
          %3867 = vmatpush1.bf16.msra.mxu0 0
          %3868 = vmatprep.subr.bf16.mxu0 0
          %3869 = vmatpush1.bf16.msra.mxu0 0
          %3870 = vmatprep.subr.bf16.mxu0 0
          %3871 = vmatpush1.bf16.msra.mxu0 0
          %3872 = vmatprep.subr.bf16.mxu0 0
          %3873 = vmatpush1.bf16.msra.mxu0 0
          %3874 = vmatprep.subr.bf16.mxu0 0
          %3875 = vmatpush1.bf16.msra.mxu0 0
          %3876 = vmatprep.mubr.bf16.mxu0 0
          %3877 = vmatmul.mubr.bf16.gmra.mrb[0].mxu0 %v3651
          %v3878 = vpop.f32.mrb[0].mxu0
          %v3879 = vadd.f32 0.0, %v3878
          %v3880 = vpop.f32.mrb[0].mxu0
          %v3881 = vadd.f32 0.0, %v3880
          %v3882 = vpop.f32.mrb[0].mxu0
          %v3883 = vpop.f32.mrb[0].mxu0
          %3884 = vdwg.mxu0
          %3885 = vmatprep.subr.bf16.mxu0 %v3783
          %3886 = vmatpush1.bf16.msra.mxu0 %v3782
          %3887 = vmatprep.subr.bf16.mxu0 %v3787
          %3888 = vmatpush1.bf16.msra.mxu0 %v3786
          %3889 = vmatprep.subr.bf16.mxu0 %v3791
          %3890 = vmatpush1.bf16.msra.mxu0 %v3790
          %3891 = vmatprep.subr.bf16.mxu0 %v3795
          %3892 = vmatpush1.bf16.msra.mxu0 %v3794
          %3893 = vmatprep.subr.bf16.mxu0 %v3799
          %3894 = vmatpush1.bf16.msra.mxu0 %v3798
          %3895 = vmatprep.subr.bf16.mxu0 %v3803
          %3896 = vmatpush1.bf16.msra.mxu0 %v3802
          %3897 = vmatprep.subr.bf16.mxu0 %v3807
          %3898 = vmatpush1.bf16.msra.mxu0 %v3806
          %3899 = vmatprep.subr.bf16.mxu0 %v3811
          %3900 = vmatpush1.bf16.msra.mxu0 %v3810
          %3901 = vmatprep.subr.bf16.mxu0 0
          %3902 = vmatpush1.bf16.msra.mxu0 0
          %3903 = vmatprep.subr.bf16.mxu0 0
          %3904 = vmatpush1.bf16.msra.mxu0 0
          %3905 = vmatprep.subr.bf16.mxu0 0
          %3906 = vmatpush1.bf16.msra.mxu0 0
          %3907 = vmatprep.subr.bf16.mxu0 0
          %3908 = vmatpush1.bf16.msra.mxu0 0
          %3909 = vmatprep.subr.bf16.mxu0 0
          %3910 = vmatpush1.bf16.msra.mxu0 0
          %3911 = vmatprep.subr.bf16.mxu0 0
          %3912 = vmatpush1.bf16.msra.mxu0 0
          %3913 = vmatprep.subr.bf16.mxu0 0
          %3914 = vmatpush1.bf16.msra.mxu0 0
          %3915 = vmatprep.subr.bf16.mxu0 0
          %3916 = vmatpush1.bf16.msra.mxu0 0
          %3917 = vmatprep.mubr.bf16.mxu0 0
          %3918 = vmatmul.mubr.bf16.gmra.mrb[0].mxu0 %v3651
          %v3919 = vpop.f32.mrb[0].mxu0
          %v3920 = vadd.f32 0.0, %v3919
          %v3921 = vpop.f32.mrb[0].mxu0
          %v3922 = vadd.f32 0.0, %v3921
          %v3923 = vpop.f32.mrb[0].mxu0
          %v3924 = vpop.f32.mrb[0].mxu0
          %3925 = vdwg.mxu0
          %v3926 = vadd.f32 %v3647, %v3879
          %v3927 = vadd.f32 %v3648, %v3881
          %v3928 = vadd.f32 %v3649, %v3920
          %v3929 = vadd.f32 %v3650, %v3922
          %v3930 = vmul.f32 %v3926, 0.5
          %v3931 = vtanh.pop %v3930
          %v3932 = vadd.f32 %v3931, 1.0
          %v3933 = vmul.f32 %v3932, 0.5
          %v3934 = vmul.f32 %v3927, 0.5
          %v3935 = vtanh.pop %v3934
          %v3936 = vadd.f32 %v3935, 1.0
          %v3937 = vmul.f32 %v3936, 0.5
          %v3938 = vtanh.pop %v3928
          %v3939 = vmul.f32 %v3929, 0.5
          %v3940 = vtanh.pop %v3939
          %v3941 = vadd.f32 %v3940, 1.0
          %v3942 = vmul.f32 %v3941, 0.5
          %v3943 = vld [vmem:[#allocation3] sm:$0xff]
          %v3944 = vmul.f32 %v3937, %v3943
          %v3945 = vmul.f32 %v3933, %v3938
          %v3946 = vadd.f32 %v3944, %v3945
          %v3947 = vtanh.pop %v3946
          %v3948 = vmul.f32 %v3942, %v3947
          %3949 = vst [vmem:[#allocation3] sm:$0xff] %v3946
          %v3950 = vpack.c.bf16 %v3948, %v3948
          %3951 = vst [vmem:[#allocation2] sm:$0xf] %v3950
          %v3953 = vcombine.high %v3948, %v3948
          %v3955 = vunpack.c.l.s4 1966171168
          %v3956 = vunpack.c.0.s8 %v3955
          %v3957 = vlaneseq
          %v3958 = vshrl.u32 %v3957, 7
          %v3959 = vsub.s32 %v3956, %v3958
          %v3960 = vrot.slane %v3948, %v3959
          %v3962 = vunpack.c.l.s4 1966171168
          %v3963 = vunpack.c.0.s8 %v3962
          %v3964 = vlaneseq
          %v3965 = vshrl.u32 %v3964, 7
          %v3966 = vsub.s32 %v3963, %v3965
          %v3967 = vrot.slane %v3953, %v3966
          %v3968 = vcombine.high %v3960, %v3960
          %v3969 = vcombine.high %v3967, %v3967
          %v3971 = vunpack.c.l.s4 1966171168
          %v3972 = vunpack.c.0.s8 %v3971
          %v3973 = vlaneseq
          %v3974 = vshrl.u32 %v3973, 7
          %v3975 = vsub.s32 %v3972, %v3974
          %v3976 = vrot.slane %v3960, %v3975
          %v3978 = vunpack.c.l.s4 1966171168
          %v3979 = vunpack.c.0.s8 %v3978
          %v3980 = vlaneseq
          %v3981 = vshrl.u32 %v3980, 7
          %v3982 = vsub.s32 %v3979, %v3981
          %v3983 = vrot.slane %v3967, %v3982
          %v3985 = vunpack.c.l.s4 1966171168
          %v3986 = vunpack.c.0.s8 %v3985
          %v3987 = vlaneseq
          %v3988 = vshrl.u32 %v3987, 7
          %v3989 = vsub.s32 %v3986, %v3988
          %v3990 = vrot.slane %v3968, %v3989
          %v3992 = vunpack.c.l.s4 1966171168
          %v3993 = vunpack.c.0.s8 %v3992
          %v3994 = vlaneseq
          %v3995 = vshrl.u32 %v3994, 7
          %v3996 = vsub.s32 %v3993, %v3995
          %v3997 = vrot.slane %v3969, %v3996
          %v3998 = vcombine.high %v3976, %v3976
          %v3999 = vcombine.high %v3983, %v3983
          %v4000 = vcombine.high %v3990, %v3990
          %v4001 = vcombine.high %v3997, %v3997
          %4010 = vst [vmem:[%s253 + $0x6] sm:$0x1] %v3976
          %4011 = vst [vmem:[%s253 + $0xe] sm:$0x1] %v3990
          %4012 = vst [vmem:[%s253 + $0x16] sm:$0x1] %v3998
          %4013 = vst [vmem:[%s253 + $0x1e] sm:$0x1] %v4000
          %4014 = vst [vmem:[%s253 + $0x26] sm:$0x1] %v3983
          %4015 = vst [vmem:[%s253 + $0x2e] sm:$0x1] %v3997
          %4016 = vst [vmem:[%s253 + $0x36] sm:$0x1] %v3999
          %4017 = vst [vmem:[%s253 + $0x3e] sm:$0x1] %v4001
          %s4018 = scalar_lea.vmem %s234, 80 [#allocation4]
          %v4019 = vld [vmem:[%s4018] sm:$0xff]
          %v4020 = vld [vmem:[%s4018 + $0x8] sm:$0xff]
          %v4021 = vunpack.c.l.bf16 %v4019
          %v4022 = vunpack.c.h.bf16 %v4019
          %v4023 = vunpack.c.l.bf16 %v4020
          %v4024 = vunpack.c.h.bf16 %v4020
          %v4025 = vld [vmem:[#allocation2] sm:$0xf]
          %v4026 = vld [vmem:[%s2] sm:$0xff]
          %v4027 = vld [vmem:[%s2 + $0x8] sm:$0xff]
          %v4028 = vld [vmem:[%s2 + $0x10] sm:$0xff]
          %v4029 = vld [vmem:[%s2 + $0x18] sm:$0xff]
          %v4030 = vld [vmem:[%s2 + $0x20] sm:$0xff]
          %v4031 = vld [vmem:[%s2 + $0x28] sm:$0xff]
          %v4032 = vld [vmem:[%s2 + $0x30] sm:$0xff]
          %v4033 = vld [vmem:[%s2 + $0x38] sm:$0xff]
          %v4034 = vld [vmem:[%s2 + $0x40] sm:$0xff]
          %v4035 = vld [vmem:[%s2 + $0x48] sm:$0xff]
          %v4036 = vld [vmem:[%s2 + $0x50] sm:$0xff]
          %v4037 = vld [vmem:[%s2 + $0x58] sm:$0xff]
          %v4038 = vld [vmem:[%s2 + $0x60] sm:$0xff]
          %v4039 = vld [vmem:[%s2 + $0x68] sm:$0xff]
          %v4040 = vld [vmem:[%s2 + $0x70] sm:$0xff]
          %v4041 = vld [vmem:[%s2 + $0x78] sm:$0xff]
          %v4042 = vld [vmem:[%s2 + $0x80] sm:$0xff]
          %v4043 = vld [vmem:[%s2 + $0x88] sm:$0xff]
          %v4044 = vld [vmem:[%s2 + $0x90] sm:$0xff]
          %v4045 = vld [vmem:[%s2 + $0x98] sm:$0xff]
          %v4046 = vld [vmem:[%s2 + $0xa0] sm:$0xff]
          %v4047 = vld [vmem:[%s2 + $0xa8] sm:$0xff]
          %v4048 = vld [vmem:[%s2 + $0xb0] sm:$0xff]
          %v4049 = vld [vmem:[%s2 + $0xb8] sm:$0xff]
          %v4050 = vld [vmem:[%s2 + $0xc0] sm:$0xff]
          %v4051 = vld [vmem:[%s2 + $0xc8] sm:$0xff]
          %v4052 = vld [vmem:[%s2 + $0xd0] sm:$0xff]
          %v4053 = vld [vmem:[%s2 + $0xd8] sm:$0xff]
          %v4054 = vld [vmem:[%s2 + $0xe0] sm:$0xff]
          %v4055 = vld [vmem:[%s2 + $0xe8] sm:$0xff]
          %v4056 = vld [vmem:[%s2 + $0xf0] sm:$0xff]
          %v4057 = vld [vmem:[%s2 + $0xf8] sm:$0xff]
          %v4090 = vunpack.c.l.b16 %v4026
          %v4091 = vunpack.c.h.b16 %v4026
          %v4092 = vunpack.c.l.b16 %v4027
          %v4093 = vunpack.c.h.b16 %v4027
          %v4094 = vunpack.c.l.b16 %v4028
          %v4095 = vunpack.c.h.b16 %v4028
          %v4096 = vunpack.c.l.b16 %v4029
          %v4097 = vunpack.c.h.b16 %v4029
          %v4098 = vunpack.c.l.b16 %v4030
          %v4099 = vunpack.c.h.b16 %v4030
          %v4100 = vunpack.c.l.b16 %v4031
          %v4101 = vunpack.c.h.b16 %v4031
          %v4102 = vunpack.c.l.b16 %v4032
          %v4103 = vunpack.c.h.b16 %v4032
          %v4104 = vunpack.c.l.b16 %v4033
          %v4105 = vunpack.c.h.b16 %v4033
          %v4106 = vunpack.c.l.b16 %v4034
          %v4107 = vunpack.c.h.b16 %v4034
          %v4108 = vunpack.c.l.b16 %v4035
          %v4109 = vunpack.c.h.b16 %v4035
          %v4110 = vunpack.c.l.b16 %v4036
          %v4111 = vunpack.c.h.b16 %v4036
          %v4112 = vunpack.c.l.b16 %v4037
          %v4113 = vunpack.c.h.b16 %v4037
          %v4114 = vunpack.c.l.b16 %v4038
          %v4115 = vunpack.c.h.b16 %v4038
          %v4116 = vunpack.c.l.b16 %v4039
          %v4117 = vunpack.c.h.b16 %v4039
          %v4118 = vunpack.c.l.b16 %v4040
          %v4119 = vunpack.c.h.b16 %v4040
          %v4120 = vunpack.c.l.b16 %v4041
          %v4121 = vunpack.c.h.b16 %v4041
          %v4122 = vunpack.c.l.b16 %v4042
          %v4123 = vunpack.c.h.b16 %v4042
          %v4124 = vunpack.c.l.b16 %v4043
          %v4125 = vunpack.c.h.b16 %v4043
          %v4126 = vunpack.c.l.b16 %v4044
          %v4127 = vunpack.c.h.b16 %v4044
          %v4128 = vunpack.c.l.b16 %v4045
          %v4129 = vunpack.c.h.b16 %v4045
          %v4130 = vunpack.c.l.b16 %v4046
          %v4131 = vunpack.c.h.b16 %v4046
          %v4132 = vunpack.c.l.b16 %v4047
          %v4133 = vunpack.c.h.b16 %v4047
          %v4134 = vunpack.c.l.b16 %v4048
          %v4135 = vunpack.c.h.b16 %v4048
          %v4136 = vunpack.c.l.b16 %v4049
          %v4137 = vunpack.c.h.b16 %v4049
          %v4138 = vunpack.c.l.b16 %v4050
          %v4139 = vunpack.c.h.b16 %v4050
          %v4140 = vunpack.c.l.b16 %v4051
          %v4141 = vunpack.c.h.b16 %v4051
          %v4142 = vunpack.c.l.b16 %v4052
          %v4143 = vunpack.c.h.b16 %v4052
          %v4144 = vunpack.c.l.b16 %v4053
          %v4145 = vunpack.c.h.b16 %v4053
          %v4146 = vunpack.c.l.b16 %v4054
          %v4147 = vunpack.c.h.b16 %v4054
          %v4148 = vunpack.c.l.b16 %v4055
          %v4149 = vunpack.c.h.b16 %v4055
          %v4150 = vunpack.c.l.b16 %v4056
          %v4151 = vunpack.c.h.b16 %v4056
          %v4152 = vunpack.c.l.b16 %v4057
          %v4153 = vunpack.c.h.b16 %v4057
          %v4154 = vpack.c.b16 %v4094, %v4090
          %v4155 = vpack.c.b16 %v4095, %v4091
          %v4156 = vpack.c.b16 %v4096, %v4092
          %v4157 = vpack.c.b16 %v4097, %v4093
          %v4158 = vpack.c.b16 %v4102, %v4098
          %v4159 = vpack.c.b16 %v4103, %v4099
          %v4160 = vpack.c.b16 %v4104, %v4100
          %v4161 = vpack.c.b16 %v4105, %v4101
          %v4162 = vpack.c.b16 %v4110, %v4106
          %v4163 = vpack.c.b16 %v4111, %v4107
          %v4164 = vpack.c.b16 %v4112, %v4108
          %v4165 = vpack.c.b16 %v4113, %v4109
          %v4166 = vpack.c.b16 %v4118, %v4114
          %v4167 = vpack.c.b16 %v4119, %v4115
          %v4168 = vpack.c.b16 %v4120, %v4116
          %v4169 = vpack.c.b16 %v4121, %v4117
          %v4170 = vpack.c.b16 %v4126, %v4122
          %v4171 = vpack.c.b16 %v4127, %v4123
          %v4172 = vpack.c.b16 %v4128, %v4124
          %v4173 = vpack.c.b16 %v4129, %v4125
          %v4174 = vpack.c.b16 %v4134, %v4130
          %v4175 = vpack.c.b16 %v4135, %v4131
          %v4176 = vpack.c.b16 %v4136, %v4132
          %v4177 = vpack.c.b16 %v4137, %v4133
          %v4178 = vpack.c.b16 %v4142, %v4138
          %v4179 = vpack.c.b16 %v4143, %v4139
          %v4180 = vpack.c.b16 %v4144, %v4140
          %v4181 = vpack.c.b16 %v4145, %v4141
          %v4182 = vpack.c.b16 %v4150, %v4146
          %v4183 = vpack.c.b16 %v4151, %v4147
          %v4184 = vpack.c.b16 %v4152, %v4148
          %v4185 = vpack.c.b16 %v4153, %v4149
          %4218 = vmatprep.subr.bf16.mxu0 %v4155
          %4219 = vmatpush1.bf16.msra.mxu0 %v4154
          %4220 = vmatprep.subr.bf16.mxu0 %v4159
          %4221 = vmatpush1.bf16.msra.mxu0 %v4158
          %4222 = vmatprep.subr.bf16.mxu0 %v4163
          %4223 = vmatpush1.bf16.msra.mxu0 %v4162
          %4224 = vmatprep.subr.bf16.mxu0 %v4167
          %4225 = vmatpush1.bf16.msra.mxu0 %v4166
          %4226 = vmatprep.subr.bf16.mxu0 %v4171
          %4227 = vmatpush1.bf16.msra.mxu0 %v4170
          %4228 = vmatprep.subr.bf16.mxu0 %v4175
          %4229 = vmatpush1.bf16.msra.mxu0 %v4174
          %4230 = vmatprep.subr.bf16.mxu0 %v4179
          %4231 = vmatpush1.bf16.msra.mxu0 %v4178
          %4232 = vmatprep.subr.bf16.mxu0 %v4183
          %4233 = vmatpush1.bf16.msra.mxu0 %v4182
          %4234 = vmatprep.subr.bf16.mxu0 0
          %4235 = vmatpush1.bf16.msra.mxu0 0
          %4236 = vmatprep.subr.bf16.mxu0 0
          %4237 = vmatpush1.bf16.msra.mxu0 0
          %4238 = vmatprep.subr.bf16.mxu0 0
          %4239 = vmatpush1.bf16.msra.mxu0 0
          %4240 = vmatprep.subr.bf16.mxu0 0
          %4241 = vmatpush1.bf16.msra.mxu0 0
          %4242 = vmatprep.subr.bf16.mxu0 0
          %4243 = vmatpush1.bf16.msra.mxu0 0
          %4244 = vmatprep.subr.bf16.mxu0 0
          %4245 = vmatpush1.bf16.msra.mxu0 0
          %4246 = vmatprep.subr.bf16.mxu0 0
          %4247 = vmatpush1.bf16.msra.mxu0 0
          %4248 = vmatprep.subr.bf16.mxu0 0
          %4249 = vmatpush1.bf16.msra.mxu0 0
          %4250 = vmatprep.mubr.bf16.mxu0 0
          %4251 = vmatmul.mubr.bf16.gmra.mrb[0].mxu0 %v4025
          %v4252 = vpop.f32.mrb[0].mxu0
          %v4253 = vadd.f32 0.0, %v4252
          %v4254 = vpop.f32.mrb[0].mxu0
          %v4255 = vadd.f32 0.0, %v4254
          %v4256 = vpop.f32.mrb[0].mxu0
          %v4257 = vpop.f32.mrb[0].mxu0
          %4258 = vdwg.mxu0
          %4259 = vmatprep.subr.bf16.mxu0 %v4157
          %4260 = vmatpush1.bf16.msra.mxu0 %v4156
          %4261 = vmatprep.subr.bf16.mxu0 %v4161
          %4262 = vmatpush1.bf16.msra.mxu0 %v4160
          %4263 = vmatprep.subr.bf16.mxu0 %v4165
          %4264 = vmatpush1.bf16.msra.mxu0 %v4164
          %4265 = vmatprep.subr.bf16.mxu0 %v4169
          %4266 = vmatpush1.bf16.msra.mxu0 %v4168
          %4267 = vmatprep.subr.bf16.mxu0 %v4173
          %4268 = vmatpush1.bf16.msra.mxu0 %v4172
          %4269 = vmatprep.subr.bf16.mxu0 %v4177
          %4270 = vmatpush1.bf16.msra.mxu0 %v4176
          %4271 = vmatprep.subr.bf16.mxu0 %v4181
          %4272 = vmatpush1.bf16.msra.mxu0 %v4180
          %4273 = vmatprep.subr.bf16.mxu0 %v4185
          %4274 = vmatpush1.bf16.msra.mxu0 %v4184
          %4275 = vmatprep.subr.bf16.mxu0 0
          %4276 = vmatpush1.bf16.msra.mxu0 0
          %4277 = vmatprep.subr.bf16.mxu0 0
          %4278 = vmatpush1.bf16.msra.mxu0 0
          %4279 = vmatprep.subr.bf16.mxu0 0
          %4280 = vmatpush1.bf16.msra.mxu0 0
          %4281 = vmatprep.subr.bf16.mxu0 0
          %4282 = vmatpush1.bf16.msra.mxu0 0
          %4283 = vmatprep.subr.bf16.mxu0 0
          %4284 = vmatpush1.bf16.msra.mxu0 0
          %4285 = vmatprep.subr.bf16.mxu0 0
          %4286 = vmatpush1.bf16.msra.mxu0 0
          %4287 = vmatprep.subr.bf16.mxu0 0
          %4288 = vmatpush1.bf16.msra.mxu0 0
          %4289 = vmatprep.subr.bf16.mxu0 0
          %4290 = vmatpush1.bf16.msra.mxu0 0
          %4291 = vmatprep.mubr.bf16.mxu0 0
          %4292 = vmatmul.mubr.bf16.gmra.mrb[0].mxu0 %v4025
          %v4293 = vpop.f32.mrb[0].mxu0
          %v4294 = vadd.f32 0.0, %v4293
          %v4295 = vpop.f32.mrb[0].mxu0
          %v4296 = vadd.f32 0.0, %v4295
          %v4297 = vpop.f32.mrb[0].mxu0
          %v4298 = vpop.f32.mrb[0].mxu0
          %4299 = vdwg.mxu0
          %v4300 = vadd.f32 %v4021, %v4253
          %v4301 = vadd.f32 %v4022, %v4255
          %v4302 = vadd.f32 %v4023, %v4294
          %v4303 = vadd.f32 %v4024, %v4296
          %v4304 = vmul.f32 %v4300, 0.5
          %v4305 = vtanh.pop %v4304
          %v4306 = vadd.f32 %v4305, 1.0
          %v4307 = vmul.f32 %v4306, 0.5
          %v4308 = vmul.f32 %v4301, 0.5
          %v4309 = vtanh.pop %v4308
          %v4310 = vadd.f32 %v4309, 1.0
          %v4311 = vmul.f32 %v4310, 0.5
          %v4312 = vtanh.pop %v4302
          %v4313 = vmul.f32 %v4303, 0.5
          %v4314 = vtanh.pop %v4313
          %v4315 = vadd.f32 %v4314, 1.0
          %v4316 = vmul.f32 %v4315, 0.5
          %v4317 = vld [vmem:[#allocation3] sm:$0xff]
          %v4318 = vmul.f32 %v4311, %v4317
          %v4319 = vmul.f32 %v4307, %v4312
          %v4320 = vadd.f32 %v4318, %v4319
          %v4321 = vtanh.pop %v4320
          %v4322 = vmul.f32 %v4316, %v4321
          %4323 = vst [vmem:[#allocation3] sm:$0xff] %v4320
          %v4324 = vpack.c.bf16 %v4322, %v4322
          %4325 = vst [vmem:[#allocation2] sm:$0xf] %v4324
          %v4327 = vcombine.high %v4322, %v4322
          %v4329 = vunpack.c.l.s4 1966171168
          %v4330 = vunpack.c.0.s8 %v4329
          %v4331 = vlaneseq
          %v4332 = vshrl.u32 %v4331, 7
          %v4333 = vsub.s32 %v4330, %v4332
          %v4334 = vrot.slane %v4322, %v4333
          %v4336 = vunpack.c.l.s4 1966171168
          %v4337 = vunpack.c.0.s8 %v4336
          %v4338 = vlaneseq
          %v4339 = vshrl.u32 %v4338, 7
          %v4340 = vsub.s32 %v4337, %v4339
          %v4341 = vrot.slane %v4327, %v4340
          %v4342 = vcombine.high %v4334, %v4334
          %v4343 = vcombine.high %v4341, %v4341
          %v4345 = vunpack.c.l.s4 1966171168
          %v4346 = vunpack.c.0.s8 %v4345
          %v4347 = vlaneseq
          %v4348 = vshrl.u32 %v4347, 7
          %v4349 = vsub.s32 %v4346, %v4348
          %v4350 = vrot.slane %v4334, %v4349
          %v4352 = vunpack.c.l.s4 1966171168
          %v4353 = vunpack.c.0.s8 %v4352
          %v4354 = vlaneseq
          %v4355 = vshrl.u32 %v4354, 7
          %v4356 = vsub.s32 %v4353, %v4355
          %v4357 = vrot.slane %v4341, %v4356
          %v4359 = vunpack.c.l.s4 1966171168
          %v4360 = vunpack.c.0.s8 %v4359
          %v4361 = vlaneseq
          %v4362 = vshrl.u32 %v4361, 7
          %v4363 = vsub.s32 %v4360, %v4362
          %v4364 = vrot.slane %v4342, %v4363
          %v4366 = vunpack.c.l.s4 1966171168
          %v4367 = vunpack.c.0.s8 %v4366
          %v4368 = vlaneseq
          %v4369 = vshrl.u32 %v4368, 7
          %v4370 = vsub.s32 %v4367, %v4369
          %v4371 = vrot.slane %v4343, %v4370
          %v4372 = vcombine.high %v4350, %v4350
          %v4373 = vcombine.high %v4357, %v4357
          %v4374 = vcombine.high %v4364, %v4364
          %v4375 = vcombine.high %v4371, %v4371
          %4384 = vst [vmem:[%s253 + $0x5] sm:$0x1] %v4350
          %4385 = vst [vmem:[%s253 + $0xd] sm:$0x1] %v4364
          %4386 = vst [vmem:[%s253 + $0x15] sm:$0x1] %v4372
          %4387 = vst [vmem:[%s253 + $0x1d] sm:$0x1] %v4374
          %4388 = vst [vmem:[%s253 + $0x25] sm:$0x1] %v4357
          %4389 = vst [vmem:[%s253 + $0x2d] sm:$0x1] %v4371
          %4390 = vst [vmem:[%s253 + $0x35] sm:$0x1] %v4373
          %4391 = vst [vmem:[%s253 + $0x3d] sm:$0x1] %v4375
          %s4392 = scalar_lea.vmem %s234, 64 [#allocation4]
          %v4393 = vld [vmem:[%s4392] sm:$0xff]
          %v4394 = vld [vmem:[%s4392 + $0x8] sm:$0xff]
          %v4395 = vunpack.c.l.bf16 %v4393
          %v4396 = vunpack.c.h.bf16 %v4393
          %v4397 = vunpack.c.l.bf16 %v4394
          %v4398 = vunpack.c.h.bf16 %v4394
          %v4399 = vld [vmem:[#allocation2] sm:$0xf]
          %v4400 = vld [vmem:[%s2] sm:$0xff]
          %v4401 = vld [vmem:[%s2 + $0x8] sm:$0xff]
          %v4402 = vld [vmem:[%s2 + $0x10] sm:$0xff]
          %v4403 = vld [vmem:[%s2 + $0x18] sm:$0xff]
          %v4404 = vld [vmem:[%s2 + $0x20] sm:$0xff]
          %v4405 = vld [vmem:[%s2 + $0x28] sm:$0xff]
          %v4406 = vld [vmem:[%s2 + $0x30] sm:$0xff]
          %v4407 = vld [vmem:[%s2 + $0x38] sm:$0xff]
          %v4408 = vld [vmem:[%s2 + $0x40] sm:$0xff]
          %v4409 = vld [vmem:[%s2 + $0x48] sm:$0xff]
          %v4410 = vld [vmem:[%s2 + $0x50] sm:$0xff]
          %v4411 = vld [vmem:[%s2 + $0x58] sm:$0xff]
          %v4412 = vld [vmem:[%s2 + $0x60] sm:$0xff]
          %v4413 = vld [vmem:[%s2 + $0x68] sm:$0xff]
          %v4414 = vld [vmem:[%s2 + $0x70] sm:$0xff]
          %v4415 = vld [vmem:[%s2 + $0x78] sm:$0xff]
          %v4416 = vld [vmem:[%s2 + $0x80] sm:$0xff]
          %v4417 = vld [vmem:[%s2 + $0x88] sm:$0xff]
          %v4418 = vld [vmem:[%s2 + $0x90] sm:$0xff]
          %v4419 = vld [vmem:[%s2 + $0x98] sm:$0xff]
          %v4420 = vld [vmem:[%s2 + $0xa0] sm:$0xff]
          %v4421 = vld [vmem:[%s2 + $0xa8] sm:$0xff]
          %v4422 = vld [vmem:[%s2 + $0xb0] sm:$0xff]
          %v4423 = vld [vmem:[%s2 + $0xb8] sm:$0xff]
          %v4424 = vld [vmem:[%s2 + $0xc0] sm:$0xff]
          %v4425 = vld [vmem:[%s2 + $0xc8] sm:$0xff]
          %v4426 = vld [vmem:[%s2 + $0xd0] sm:$0xff]
          %v4427 = vld [vmem:[%s2 + $0xd8] sm:$0xff]
          %v4428 = vld [vmem:[%s2 + $0xe0] sm:$0xff]
          %v4429 = vld [vmem:[%s2 + $0xe8] sm:$0xff]
          %v4430 = vld [vmem:[%s2 + $0xf0] sm:$0xff]
          %v4431 = vld [vmem:[%s2 + $0xf8] sm:$0xff]
          %v4464 = vunpack.c.l.b16 %v4400
          %v4465 = vunpack.c.h.b16 %v4400
          %v4466 = vunpack.c.l.b16 %v4401
          %v4467 = vunpack.c.h.b16 %v4401
          %v4468 = vunpack.c.l.b16 %v4402
          %v4469 = vunpack.c.h.b16 %v4402
          %v4470 = vunpack.c.l.b16 %v4403
          %v4471 = vunpack.c.h.b16 %v4403
          %v4472 = vunpack.c.l.b16 %v4404
          %v4473 = vunpack.c.h.b16 %v4404
          %v4474 = vunpack.c.l.b16 %v4405
          %v4475 = vunpack.c.h.b16 %v4405
          %v4476 = vunpack.c.l.b16 %v4406
          %v4477 = vunpack.c.h.b16 %v4406
          %v4478 = vunpack.c.l.b16 %v4407
          %v4479 = vunpack.c.h.b16 %v4407
          %v4480 = vunpack.c.l.b16 %v4408
          %v4481 = vunpack.c.h.b16 %v4408
          %v4482 = vunpack.c.l.b16 %v4409
          %v4483 = vunpack.c.h.b16 %v4409
          %v4484 = vunpack.c.l.b16 %v4410
          %v4485 = vunpack.c.h.b16 %v4410
          %v4486 = vunpack.c.l.b16 %v4411
          %v4487 = vunpack.c.h.b16 %v4411
          %v4488 = vunpack.c.l.b16 %v4412
          %v4489 = vunpack.c.h.b16 %v4412
          %v4490 = vunpack.c.l.b16 %v4413
          %v4491 = vunpack.c.h.b16 %v4413
          %v4492 = vunpack.c.l.b16 %v4414
          %v4493 = vunpack.c.h.b16 %v4414
          %v4494 = vunpack.c.l.b16 %v4415
          %v4495 = vunpack.c.h.b16 %v4415
          %v4496 = vunpack.c.l.b16 %v4416
          %v4497 = vunpack.c.h.b16 %v4416
          %v4498 = vunpack.c.l.b16 %v4417
          %v4499 = vunpack.c.h.b16 %v4417
          %v4500 = vunpack.c.l.b16 %v4418
          %v4501 = vunpack.c.h.b16 %v4418
          %v4502 = vunpack.c.l.b16 %v4419
          %v4503 = vunpack.c.h.b16 %v4419
          %v4504 = vunpack.c.l.b16 %v4420
          %v4505 = vunpack.c.h.b16 %v4420
          %v4506 = vunpack.c.l.b16 %v4421
          %v4507 = vunpack.c.h.b16 %v4421
          %v4508 = vunpack.c.l.b16 %v4422
          %v4509 = vunpack.c.h.b16 %v4422
          %v4510 = vunpack.c.l.b16 %v4423
          %v4511 = vunpack.c.h.b16 %v4423
          %v4512 = vunpack.c.l.b16 %v4424
          %v4513 = vunpack.c.h.b16 %v4424
          %v4514 = vunpack.c.l.b16 %v4425
          %v4515 = vunpack.c.h.b16 %v4425
          %v4516 = vunpack.c.l.b16 %v4426
          %v4517 = vunpack.c.h.b16 %v4426
          %v4518 = vunpack.c.l.b16 %v4427
          %v4519 = vunpack.c.h.b16 %v4427
          %v4520 = vunpack.c.l.b16 %v4428
          %v4521 = vunpack.c.h.b16 %v4428
          %v4522 = vunpack.c.l.b16 %v4429
          %v4523 = vunpack.c.h.b16 %v4429
          %v4524 = vunpack.c.l.b16 %v4430
          %v4525 = vunpack.c.h.b16 %v4430
          %v4526 = vunpack.c.l.b16 %v4431
          %v4527 = vunpack.c.h.b16 %v4431
          %v4528 = vpack.c.b16 %v4468, %v4464
          %v4529 = vpack.c.b16 %v4469, %v4465
          %v4530 = vpack.c.b16 %v4470, %v4466
          %v4531 = vpack.c.b16 %v4471, %v4467
          %v4532 = vpack.c.b16 %v4476, %v4472
          %v4533 = vpack.c.b16 %v4477, %v4473
          %v4534 = vpack.c.b16 %v4478, %v4474
          %v4535 = vpack.c.b16 %v4479, %v4475
          %v4536 = vpack.c.b16 %v4484, %v4480
          %v4537 = vpack.c.b16 %v4485, %v4481
          %v4538 = vpack.c.b16 %v4486, %v4482
          %v4539 = vpack.c.b16 %v4487, %v4483
          %v4540 = vpack.c.b16 %v4492, %v4488
          %v4541 = vpack.c.b16 %v4493, %v4489
          %v4542 = vpack.c.b16 %v4494, %v4490
          %v4543 = vpack.c.b16 %v4495, %v4491
          %v4544 = vpack.c.b16 %v4500, %v4496
          %v4545 = vpack.c.b16 %v4501, %v4497
          %v4546 = vpack.c.b16 %v4502, %v4498
          %v4547 = vpack.c.b16 %v4503, %v4499
          %v4548 = vpack.c.b16 %v4508, %v4504
          %v4549 = vpack.c.b16 %v4509, %v4505
          %v4550 = vpack.c.b16 %v4510, %v4506
          %v4551 = vpack.c.b16 %v4511, %v4507
          %v4552 = vpack.c.b16 %v4516, %v4512
          %v4553 = vpack.c.b16 %v4517, %v4513
          %v4554 = vpack.c.b16 %v4518, %v4514
          %v4555 = vpack.c.b16 %v4519, %v4515
          %v4556 = vpack.c.b16 %v4524, %v4520
          %v4557 = vpack.c.b16 %v4525, %v4521
          %v4558 = vpack.c.b16 %v4526, %v4522
          %v4559 = vpack.c.b16 %v4527, %v4523
          %4592 = vmatprep.subr.bf16.mxu0 %v4529
          %4593 = vmatpush1.bf16.msra.mxu0 %v4528
          %4594 = vmatprep.subr.bf16.mxu0 %v4533
          %4595 = vmatpush1.bf16.msra.mxu0 %v4532
          %4596 = vmatprep.subr.bf16.mxu0 %v4537
          %4597 = vmatpush1.bf16.msra.mxu0 %v4536
          %4598 = vmatprep.subr.bf16.mxu0 %v4541
          %4599 = vmatpush1.bf16.msra.mxu0 %v4540
          %4600 = vmatprep.subr.bf16.mxu0 %v4545
          %4601 = vmatpush1.bf16.msra.mxu0 %v4544
          %4602 = vmatprep.subr.bf16.mxu0 %v4549
          %4603 = vmatpush1.bf16.msra.mxu0 %v4548
          %4604 = vmatprep.subr.bf16.mxu0 %v4553
          %4605 = vmatpush1.bf16.msra.mxu0 %v4552
          %4606 = vmatprep.subr.bf16.mxu0 %v4557
          %4607 = vmatpush1.bf16.msra.mxu0 %v4556
          %4608 = vmatprep.subr.bf16.mxu0 0
          %4609 = vmatpush1.bf16.msra.mxu0 0
          %4610 = vmatprep.subr.bf16.mxu0 0
          %4611 = vmatpush1.bf16.msra.mxu0 0
          %4612 = vmatprep.subr.bf16.mxu0 0
          %4613 = vmatpush1.bf16.msra.mxu0 0
          %4614 = vmatprep.subr.bf16.mxu0 0
          %4615 = vmatpush1.bf16.msra.mxu0 0
          %4616 = vmatprep.subr.bf16.mxu0 0
          %4617 = vmatpush1.bf16.msra.mxu0 0
          %4618 = vmatprep.subr.bf16.mxu0 0
          %4619 = vmatpush1.bf16.msra.mxu0 0
          %4620 = vmatprep.subr.bf16.mxu0 0
          %4621 = vmatpush1.bf16.msra.mxu0 0
          %4622 = vmatprep.subr.bf16.mxu0 0
          %4623 = vmatpush1.bf16.msra.mxu0 0
          %4624 = vmatprep.mubr.bf16.mxu0 0
          %4625 = vmatmul.mubr.bf16.gmra.mrb[0].mxu0 %v4399
          %v4626 = vpop.f32.mrb[0].mxu0
          %v4627 = vadd.f32 0.0, %v4626
          %v4628 = vpop.f32.mrb[0].mxu0
          %v4629 = vadd.f32 0.0, %v4628
          %v4630 = vpop.f32.mrb[0].mxu0
          %v4631 = vpop.f32.mrb[0].mxu0
          %4632 = vdwg.mxu0
          %4633 = vmatprep.subr.bf16.mxu0 %v4531
          %4634 = vmatpush1.bf16.msra.mxu0 %v4530
          %4635 = vmatprep.subr.bf16.mxu0 %v4535
          %4636 = vmatpush1.bf16.msra.mxu0 %v4534
          %4637 = vmatprep.subr.bf16.mxu0 %v4539
          %4638 = vmatpush1.bf16.msra.mxu0 %v4538
          %4639 = vmatprep.subr.bf16.mxu0 %v4543
          %4640 = vmatpush1.bf16.msra.mxu0 %v4542
          %4641 = vmatprep.subr.bf16.mxu0 %v4547
          %4642 = vmatpush1.bf16.msra.mxu0 %v4546
          %4643 = vmatprep.subr.bf16.mxu0 %v4551
          %4644 = vmatpush1.bf16.msra.mxu0 %v4550
          %4645 = vmatprep.subr.bf16.mxu0 %v4555
          %4646 = vmatpush1.bf16.msra.mxu0 %v4554
          %4647 = vmatprep.subr.bf16.mxu0 %v4559
          %4648 = vmatpush1.bf16.msra.mxu0 %v4558
          %4649 = vmatprep.subr.bf16.mxu0 0
          %4650 = vmatpush1.bf16.msra.mxu0 0
          %4651 = vmatprep.subr.bf16.mxu0 0
          %4652 = vmatpush1.bf16.msra.mxu0 0
          %4653 = vmatprep.subr.bf16.mxu0 0
          %4654 = vmatpush1.bf16.msra.mxu0 0
          %4655 = vmatprep.subr.bf16.mxu0 0
          %4656 = vmatpush1.bf16.msra.mxu0 0
          %4657 = vmatprep.subr.bf16.mxu0 0
          %4658 = vmatpush1.bf16.msra.mxu0 0
          %4659 = vmatprep.subr.bf16.mxu0 0
          %4660 = vmatpush1.bf16.msra.mxu0 0
          %4661 = vmatprep.subr.bf16.mxu0 0
          %4662 = vmatpush1.bf16.msra.mxu0 0
          %4663 = vmatprep.subr.bf16.mxu0 0
          %4664 = vmatpush1.bf16.msra.mxu0 0
          %4665 = vmatprep.mubr.bf16.mxu0 0
          %4666 = vmatmul.mubr.bf16.gmra.mrb[0].mxu0 %v4399
          %v4667 = vpop.f32.mrb[0].mxu0
          %v4668 = vadd.f32 0.0, %v4667
          %v4669 = vpop.f32.mrb[0].mxu0
          %v4670 = vadd.f32 0.0, %v4669
          %v4671 = vpop.f32.mrb[0].mxu0
          %v4672 = vpop.f32.mrb[0].mxu0
          %4673 = vdwg.mxu0
          %v4674 = vadd.f32 %v4395, %v4627
          %v4675 = vadd.f32 %v4396, %v4629
          %v4676 = vadd.f32 %v4397, %v4668
          %v4677 = vadd.f32 %v4398, %v4670
          %v4678 = vmul.f32 %v4674, 0.5
          %v4679 = vtanh.pop %v4678
          %v4680 = vadd.f32 %v4679, 1.0
          %v4681 = vmul.f32 %v4680, 0.5
          %v4682 = vmul.f32 %v4675, 0.5
          %v4683 = vtanh.pop %v4682
          %v4684 = vadd.f32 %v4683, 1.0
          %v4685 = vmul.f32 %v4684, 0.5
          %v4686 = vtanh.pop %v4676
          %v4687 = vmul.f32 %v4677, 0.5
          %v4688 = vtanh.pop %v4687
          %v4689 = vadd.f32 %v4688, 1.0
          %v4690 = vmul.f32 %v4689, 0.5
          %v4691 = vld [vmem:[#allocation3] sm:$0xff]
          %v4692 = vmul.f32 %v4685, %v4691
          %v4693 = vmul.f32 %v4681, %v4686
          %v4694 = vadd.f32 %v4692, %v4693
          %v4695 = vtanh.pop %v4694
          %v4696 = vmul.f32 %v4690, %v4695
          %4697 = vst [vmem:[#allocation3] sm:$0xff] %v4694
          %v4698 = vpack.c.bf16 %v4696, %v4696
          %4699 = vst [vmem:[#allocation2] sm:$0xf] %v4698
          %v4701 = vcombine.high %v4696, %v4696
          %v4703 = vunpack.c.l.s4 1966171168
          %v4704 = vunpack.c.0.s8 %v4703
          %v4705 = vlaneseq
          %v4706 = vshrl.u32 %v4705, 7
          %v4707 = vsub.s32 %v4704, %v4706
          %v4708 = vrot.slane %v4696, %v4707
          %v4710 = vunpack.c.l.s4 1966171168
          %v4711 = vunpack.c.0.s8 %v4710
          %v4712 = vlaneseq
          %v4713 = vshrl.u32 %v4712, 7
          %v4714 = vsub.s32 %v4711, %v4713
          %v4715 = vrot.slane %v4701, %v4714
          %v4716 = vcombine.high %v4708, %v4708
          %v4717 = vcombine.high %v4715, %v4715
          %v4719 = vunpack.c.l.s4 1966171168
          %v4720 = vunpack.c.0.s8 %v4719
          %v4721 = vlaneseq
          %v4722 = vshrl.u32 %v4721, 7
          %v4723 = vsub.s32 %v4720, %v4722
          %v4724 = vrot.slane %v4708, %v4723
          %v4726 = vunpack.c.l.s4 1966171168
          %v4727 = vunpack.c.0.s8 %v4726
          %v4728 = vlaneseq
          %v4729 = vshrl.u32 %v4728, 7
          %v4730 = vsub.s32 %v4727, %v4729
          %v4731 = vrot.slane %v4715, %v4730
          %v4733 = vunpack.c.l.s4 1966171168
          %v4734 = vunpack.c.0.s8 %v4733
          %v4735 = vlaneseq
          %v4736 = vshrl.u32 %v4735, 7
          %v4737 = vsub.s32 %v4734, %v4736
          %v4738 = vrot.slane %v4716, %v4737
          %v4740 = vunpack.c.l.s4 1966171168
          %v4741 = vunpack.c.0.s8 %v4740
          %v4742 = vlaneseq
          %v4743 = vshrl.u32 %v4742, 7
          %v4744 = vsub.s32 %v4741, %v4743
          %v4745 = vrot.slane %v4717, %v4744
          %v4746 = vcombine.high %v4724, %v4724
          %v4747 = vcombine.high %v4731, %v4731
          %v4748 = vcombine.high %v4738, %v4738
          %v4749 = vcombine.high %v4745, %v4745
          %4758 = vst [vmem:[%s253 + $0x4] sm:$0x1] %v4724
          %4759 = vst [vmem:[%s253 + $0xc] sm:$0x1] %v4738
          %4760 = vst [vmem:[%s253 + $0x14] sm:$0x1] %v4746
          %4761 = vst [vmem:[%s253 + $0x1c] sm:$0x1] %v4748
          %4762 = vst [vmem:[%s253 + $0x24] sm:$0x1] %v4731
          %4763 = vst [vmem:[%s253 + $0x2c] sm:$0x1] %v4745
          %4764 = vst [vmem:[%s253 + $0x34] sm:$0x1] %v4747
          %4765 = vst [vmem:[%s253 + $0x3c] sm:$0x1] %v4749
          %s4766 = scalar_lea.vmem %s234, 48 [#allocation4]
          %v4767 = vld [vmem:[%s4766] sm:$0xff]
          %v4768 = vld [vmem:[%s4766 + $0x8] sm:$0xff]
          %v4769 = vunpack.c.l.bf16 %v4767
          %v4770 = vunpack.c.h.bf16 %v4767
          %v4771 = vunpack.c.l.bf16 %v4768
          %v4772 = vunpack.c.h.bf16 %v4768
          %v4773 = vld [vmem:[#allocation2] sm:$0xf]
          %v4774 = vld [vmem:[%s2] sm:$0xff]
          %v4775 = vld [vmem:[%s2 + $0x8] sm:$0xff]
          %v4776 = vld [vmem:[%s2 + $0x10] sm:$0xff]
          %v4777 = vld [vmem:[%s2 + $0x18] sm:$0xff]
          %v4778 = vld [vmem:[%s2 + $0x20] sm:$0xff]
          %v4779 = vld [vmem:[%s2 + $0x28] sm:$0xff]
          %v4780 = vld [vmem:[%s2 + $0x30] sm:$0xff]
          %v4781 = vld [vmem:[%s2 + $0x38] sm:$0xff]
          %v4782 = vld [vmem:[%s2 + $0x40] sm:$0xff]
          %v4783 = vld [vmem:[%s2 + $0x48] sm:$0xff]
          %v4784 = vld [vmem:[%s2 + $0x50] sm:$0xff]
          %v4785 = vld [vmem:[%s2 + $0x58] sm:$0xff]
          %v4786 = vld [vmem:[%s2 + $0x60] sm:$0xff]
          %v4787 = vld [vmem:[%s2 + $0x68] sm:$0xff]
          %v4788 = vld [vmem:[%s2 + $0x70] sm:$0xff]
          %v4789 = vld [vmem:[%s2 + $0x78] sm:$0xff]
          %v4790 = vld [vmem:[%s2 + $0x80] sm:$0xff]
          %v4791 = vld [vmem:[%s2 + $0x88] sm:$0xff]
          %v4792 = vld [vmem:[%s2 + $0x90] sm:$0xff]
          %v4793 = vld [vmem:[%s2 + $0x98] sm:$0xff]
          %v4794 = vld [vmem:[%s2 + $0xa0] sm:$0xff]
          %v4795 = vld [vmem:[%s2 + $0xa8] sm:$0xff]
          %v4796 = vld [vmem:[%s2 + $0xb0] sm:$0xff]
          %v4797 = vld [vmem:[%s2 + $0xb8] sm:$0xff]
          %v4798 = vld [vmem:[%s2 + $0xc0] sm:$0xff]
          %v4799 = vld [vmem:[%s2 + $0xc8] sm:$0xff]
          %v4800 = vld [vmem:[%s2 + $0xd0] sm:$0xff]
          %v4801 = vld [vmem:[%s2 + $0xd8] sm:$0xff]
          %v4802 = vld [vmem:[%s2 + $0xe0] sm:$0xff]
          %v4803 = vld [vmem:[%s2 + $0xe8] sm:$0xff]
          %v4804 = vld [vmem:[%s2 + $0xf0] sm:$0xff]
          %v4805 = vld [vmem:[%s2 + $0xf8] sm:$0xff]
          %v4838 = vunpack.c.l.b16 %v4774
          %v4839 = vunpack.c.h.b16 %v4774
          %v4840 = vunpack.c.l.b16 %v4775
          %v4841 = vunpack.c.h.b16 %v4775
          %v4842 = vunpack.c.l.b16 %v4776
          %v4843 = vunpack.c.h.b16 %v4776
          %v4844 = vunpack.c.l.b16 %v4777
          %v4845 = vunpack.c.h.b16 %v4777
          %v4846 = vunpack.c.l.b16 %v4778
          %v4847 = vunpack.c.h.b16 %v4778
          %v4848 = vunpack.c.l.b16 %v4779
          %v4849 = vunpack.c.h.b16 %v4779
          %v4850 = vunpack.c.l.b16 %v4780
          %v4851 = vunpack.c.h.b16 %v4780
          %v4852 = vunpack.c.l.b16 %v4781
          %v4853 = vunpack.c.h.b16 %v4781
          %v4854 = vunpack.c.l.b16 %v4782
          %v4855 = vunpack.c.h.b16 %v4782
          %v4856 = vunpack.c.l.b16 %v4783
          %v4857 = vunpack.c.h.b16 %v4783
          %v4858 = vunpack.c.l.b16 %v4784
          %v4859 = vunpack.c.h.b16 %v4784
          %v4860 = vunpack.c.l.b16 %v4785
          %v4861 = vunpack.c.h.b16 %v4785
          %v4862 = vunpack.c.l.b16 %v4786
          %v4863 = vunpack.c.h.b16 %v4786
          %v4864 = vunpack.c.l.b16 %v4787
          %v4865 = vunpack.c.h.b16 %v4787
          %v4866 = vunpack.c.l.b16 %v4788
          %v4867 = vunpack.c.h.b16 %v4788
          %v4868 = vunpack.c.l.b16 %v4789
          %v4869 = vunpack.c.h.b16 %v4789
          %v4870 = vunpack.c.l.b16 %v4790
          %v4871 = vunpack.c.h.b16 %v4790
          %v4872 = vunpack.c.l.b16 %v4791
          %v4873 = vunpack.c.h.b16 %v4791
          %v4874 = vunpack.c.l.b16 %v4792
          %v4875 = vunpack.c.h.b16 %v4792
          %v4876 = vunpack.c.l.b16 %v4793
          %v4877 = vunpack.c.h.b16 %v4793
          %v4878 = vunpack.c.l.b16 %v4794
          %v4879 = vunpack.c.h.b16 %v4794
          %v4880 = vunpack.c.l.b16 %v4795
          %v4881 = vunpack.c.h.b16 %v4795
          %v4882 = vunpack.c.l.b16 %v4796
          %v4883 = vunpack.c.h.b16 %v4796
          %v4884 = vunpack.c.l.b16 %v4797
          %v4885 = vunpack.c.h.b16 %v4797
          %v4886 = vunpack.c.l.b16 %v4798
          %v4887 = vunpack.c.h.b16 %v4798
          %v4888 = vunpack.c.l.b16 %v4799
          %v4889 = vunpack.c.h.b16 %v4799
          %v4890 = vunpack.c.l.b16 %v4800
          %v4891 = vunpack.c.h.b16 %v4800
          %v4892 = vunpack.c.l.b16 %v4801
          %v4893 = vunpack.c.h.b16 %v4801
          %v4894 = vunpack.c.l.b16 %v4802
          %v4895 = vunpack.c.h.b16 %v4802
          %v4896 = vunpack.c.l.b16 %v4803
          %v4897 = vunpack.c.h.b16 %v4803
          %v4898 = vunpack.c.l.b16 %v4804
          %v4899 = vunpack.c.h.b16 %v4804
          %v4900 = vunpack.c.l.b16 %v4805
          %v4901 = vunpack.c.h.b16 %v4805
          %v4902 = vpack.c.b16 %v4842, %v4838
          %v4903 = vpack.c.b16 %v4843, %v4839
          %v4904 = vpack.c.b16 %v4844, %v4840
          %v4905 = vpack.c.b16 %v4845, %v4841
          %v4906 = vpack.c.b16 %v4850, %v4846
          %v4907 = vpack.c.b16 %v4851, %v4847
          %v4908 = vpack.c.b16 %v4852, %v4848
          %v4909 = vpack.c.b16 %v4853, %v4849
          %v4910 = vpack.c.b16 %v4858, %v4854
          %v4911 = vpack.c.b16 %v4859, %v4855
          %v4912 = vpack.c.b16 %v4860, %v4856
          %v4913 = vpack.c.b16 %v4861, %v4857
          %v4914 = vpack.c.b16 %v4866, %v4862
          %v4915 = vpack.c.b16 %v4867, %v4863
          %v4916 = vpack.c.b16 %v4868, %v4864
          %v4917 = vpack.c.b16 %v4869, %v4865
          %v4918 = vpack.c.b16 %v4874, %v4870
          %v4919 = vpack.c.b16 %v4875, %v4871
          %v4920 = vpack.c.b16 %v4876, %v4872
          %v4921 = vpack.c.b16 %v4877, %v4873
          %v4922 = vpack.c.b16 %v4882, %v4878
          %v4923 = vpack.c.b16 %v4883, %v4879
          %v4924 = vpack.c.b16 %v4884, %v4880
          %v4925 = vpack.c.b16 %v4885, %v4881
          %v4926 = vpack.c.b16 %v4890, %v4886
          %v4927 = vpack.c.b16 %v4891, %v4887
          %v4928 = vpack.c.b16 %v4892, %v4888
          %v4929 = vpack.c.b16 %v4893, %v4889
          %v4930 = vpack.c.b16 %v4898, %v4894
          %v4931 = vpack.c.b16 %v4899, %v4895
          %v4932 = vpack.c.b16 %v4900, %v4896
          %v4933 = vpack.c.b16 %v4901, %v4897
          %4966 = vmatprep.subr.bf16.mxu0 %v4903
          %4967 = vmatpush1.bf16.msra.mxu0 %v4902
          %4968 = vmatprep.subr.bf16.mxu0 %v4907
          %4969 = vmatpush1.bf16.msra.mxu0 %v4906
          %4970 = vmatprep.subr.bf16.mxu0 %v4911
          %4971 = vmatpush1.bf16.msra.mxu0 %v4910
          %4972 = vmatprep.subr.bf16.mxu0 %v4915
          %4973 = vmatpush1.bf16.msra.mxu0 %v4914
          %4974 = vmatprep.subr.bf16.mxu0 %v4919
          %4975 = vmatpush1.bf16.msra.mxu0 %v4918
          %4976 = vmatprep.subr.bf16.mxu0 %v4923
          %4977 = vmatpush1.bf16.msra.mxu0 %v4922
          %4978 = vmatprep.subr.bf16.mxu0 %v4927
          %4979 = vmatpush1.bf16.msra.mxu0 %v4926
          %4980 = vmatprep.subr.bf16.mxu0 %v4931
          %4981 = vmatpush1.bf16.msra.mxu0 %v4930
          %4982 = vmatprep.subr.bf16.mxu0 0
          %4983 = vmatpush1.bf16.msra.mxu0 0
          %4984 = vmatprep.subr.bf16.mxu0 0
          %4985 = vmatpush1.bf16.msra.mxu0 0
          %4986 = vmatprep.subr.bf16.mxu0 0
          %4987 = vmatpush1.bf16.msra.mxu0 0
          %4988 = vmatprep.subr.bf16.mxu0 0
          %4989 = vmatpush1.bf16.msra.mxu0 0
          %4990 = vmatprep.subr.bf16.mxu0 0
          %4991 = vmatpush1.bf16.msra.mxu0 0
          %4992 = vmatprep.subr.bf16.mxu0 0
          %4993 = vmatpush1.bf16.msra.mxu0 0
          %4994 = vmatprep.subr.bf16.mxu0 0
          %4995 = vmatpush1.bf16.msra.mxu0 0
          %4996 = vmatprep.subr.bf16.mxu0 0
          %4997 = vmatpush1.bf16.msra.mxu0 0
          %4998 = vmatprep.mubr.bf16.mxu0 0
          %4999 = vmatmul.mubr.bf16.gmra.mrb[0].mxu0 %v4773
          %v5000 = vpop.f32.mrb[0].mxu0
          %v5001 = vadd.f32 0.0, %v5000
          %v5002 = vpop.f32.mrb[0].mxu0
          %v5003 = vadd.f32 0.0, %v5002
          %v5004 = vpop.f32.mrb[0].mxu0
          %v5005 = vpop.f32.mrb[0].mxu0
          %5006 = vdwg.mxu0
          %5007 = vmatprep.subr.bf16.mxu0 %v4905
          %5008 = vmatpush1.bf16.msra.mxu0 %v4904
          %5009 = vmatprep.subr.bf16.mxu0 %v4909
          %5010 = vmatpush1.bf16.msra.mxu0 %v4908
          %5011 = vmatprep.subr.bf16.mxu0 %v4913
          %5012 = vmatpush1.bf16.msra.mxu0 %v4912
          %5013 = vmatprep.subr.bf16.mxu0 %v4917
          %5014 = vmatpush1.bf16.msra.mxu0 %v4916
          %5015 = vmatprep.subr.bf16.mxu0 %v4921
          %5016 = vmatpush1.bf16.msra.mxu0 %v4920
          %5017 = vmatprep.subr.bf16.mxu0 %v4925
          %5018 = vmatpush1.bf16.msra.mxu0 %v4924
          %5019 = vmatprep.subr.bf16.mxu0 %v4929
          %5020 = vmatpush1.bf16.msra.mxu0 %v4928
          %5021 = vmatprep.subr.bf16.mxu0 %v4933
          %5022 = vmatpush1.bf16.msra.mxu0 %v4932
          %5023 = vmatprep.subr.bf16.mxu0 0
          %5024 = vmatpush1.bf16.msra.mxu0 0
          %5025 = vmatprep.subr.bf16.mxu0 0
          %5026 = vmatpush1.bf16.msra.mxu0 0
          %5027 = vmatprep.subr.bf16.mxu0 0
          %5028 = vmatpush1.bf16.msra.mxu0 0
          %5029 = vmatprep.subr.bf16.mxu0 0
          %5030 = vmatpush1.bf16.msra.mxu0 0
          %5031 = vmatprep.subr.bf16.mxu0 0
          %5032 = vmatpush1.bf16.msra.mxu0 0
          %5033 = vmatprep.subr.bf16.mxu0 0
          %5034 = vmatpush1.bf16.msra.mxu0 0
          %5035 = vmatprep.subr.bf16.mxu0 0
          %5036 = vmatpush1.bf16.msra.mxu0 0
          %5037 = vmatprep.subr.bf16.mxu0 0
          %5038 = vmatpush1.bf16.msra.mxu0 0
          %5039 = vmatprep.mubr.bf16.mxu0 0
          %5040 = vmatmul.mubr.bf16.gmra.mrb[0].mxu0 %v4773
          %v5041 = vpop.f32.mrb[0].mxu0
          %v5042 = vadd.f32 0.0, %v5041
          %v5043 = vpop.f32.mrb[0].mxu0
          %v5044 = vadd.f32 0.0, %v5043
          %v5045 = vpop.f32.mrb[0].mxu0
          %v5046 = vpop.f32.mrb[0].mxu0
          %5047 = vdwg.mxu0
          %v5048 = vadd.f32 %v4769, %v5001
          %v5049 = vadd.f32 %v4770, %v5003
          %v5050 = vadd.f32 %v4771, %v5042
          %v5051 = vadd.f32 %v4772, %v5044
          %v5052 = vmul.f32 %v5048, 0.5
          %v5053 = vtanh.pop %v5052
          %v5054 = vadd.f32 %v5053, 1.0
          %v5055 = vmul.f32 %v5054, 0.5
          %v5056 = vmul.f32 %v5049, 0.5
          %v5057 = vtanh.pop %v5056
          %v5058 = vadd.f32 %v5057, 1.0
          %v5059 = vmul.f32 %v5058, 0.5
          %v5060 = vtanh.pop %v5050
          %v5061 = vmul.f32 %v5051, 0.5
          %v5062 = vtanh.pop %v5061
          %v5063 = vadd.f32 %v5062, 1.0
          %v5064 = vmul.f32 %v5063, 0.5
          %v5065 = vld [vmem:[#allocation3] sm:$0xff]
          %v5066 = vmul.f32 %v5059, %v5065
          %v5067 = vmul.f32 %v5055, %v5060
          %v5068 = vadd.f32 %v5066, %v5067
          %v5069 = vtanh.pop %v5068
          %v5070 = vmul.f32 %v5064, %v5069
          %5071 = vst [vmem:[#allocation3] sm:$0xff] %v5068
          %v5072 = vpack.c.bf16 %v5070, %v5070
          %5073 = vst [vmem:[#allocation2] sm:$0xf] %v5072
          %v5075 = vcombine.high %v5070, %v5070
          %v5077 = vunpack.c.l.s4 1966171168
          %v5078 = vunpack.c.0.s8 %v5077
          %v5079 = vlaneseq
          %v5080 = vshrl.u32 %v5079, 7
          %v5081 = vsub.s32 %v5078, %v5080
          %v5082 = vrot.slane %v5070, %v5081
          %v5084 = vunpack.c.l.s4 1966171168
          %v5085 = vunpack.c.0.s8 %v5084
          %v5086 = vlaneseq
          %v5087 = vshrl.u32 %v5086, 7
          %v5088 = vsub.s32 %v5085, %v5087
          %v5089 = vrot.slane %v5075, %v5088
          %v5090 = vcombine.high %v5082, %v5082
          %v5091 = vcombine.high %v5089, %v5089
          %v5093 = vunpack.c.l.s4 1966171168
          %v5094 = vunpack.c.0.s8 %v5093
          %v5095 = vlaneseq
          %v5096 = vshrl.u32 %v5095, 7
          %v5097 = vsub.s32 %v5094, %v5096
          %v5098 = vrot.slane %v5082, %v5097
          %v5100 = vunpack.c.l.s4 1966171168
          %v5101 = vunpack.c.0.s8 %v5100
          %v5102 = vlaneseq
          %v5103 = vshrl.u32 %v5102, 7
          %v5104 = vsub.s32 %v5101, %v5103
          %v5105 = vrot.slane %v5089, %v5104
          %v5107 = vunpack.c.l.s4 1966171168
          %v5108 = vunpack.c.0.s8 %v5107
          %v5109 = vlaneseq
          %v5110 = vshrl.u32 %v5109, 7
          %v5111 = vsub.s32 %v5108, %v5110
          %v5112 = vrot.slane %v5090, %v5111
          %v5114 = vunpack.c.l.s4 1966171168
          %v5115 = vunpack.c.0.s8 %v5114
          %v5116 = vlaneseq
          %v5117 = vshrl.u32 %v5116, 7
          %v5118 = vsub.s32 %v5115, %v5117
          %v5119 = vrot.slane %v5091, %v5118
          %v5120 = vcombine.high %v5098, %v5098
          %v5121 = vcombine.high %v5105, %v5105
          %v5122 = vcombine.high %v5112, %v5112
          %v5123 = vcombine.high %v5119, %v5119
          %5132 = vst [vmem:[%s253 + $0x3] sm:$0x1] %v5098
          %5133 = vst [vmem:[%s253 + $0xb] sm:$0x1] %v5112
          %5134 = vst [vmem:[%s253 + $0x13] sm:$0x1] %v5120
          %5135 = vst [vmem:[%s253 + $0x1b] sm:$0x1] %v5122
          %5136 = vst [vmem:[%s253 + $0x23] sm:$0x1] %v5105
          %5137 = vst [vmem:[%s253 + $0x2b] sm:$0x1] %v5119
          %5138 = vst [vmem:[%s253 + $0x33] sm:$0x1] %v5121
          %5139 = vst [vmem:[%s253 + $0x3b] sm:$0x1] %v5123
          %s5140 = scalar_lea.vmem %s234, 32 [#allocation4]
          %v5141 = vld [vmem:[%s5140] sm:$0xff]
          %v5142 = vld [vmem:[%s5140 + $0x8] sm:$0xff]
          %v5143 = vunpack.c.l.bf16 %v5141
          %v5144 = vunpack.c.h.bf16 %v5141
          %v5145 = vunpack.c.l.bf16 %v5142
          %v5146 = vunpack.c.h.bf16 %v5142
          %v5147 = vld [vmem:[#allocation2] sm:$0xf]
          %v5148 = vld [vmem:[%s2] sm:$0xff]
          %v5149 = vld [vmem:[%s2 + $0x8] sm:$0xff]
          %v5150 = vld [vmem:[%s2 + $0x10] sm:$0xff]
          %v5151 = vld [vmem:[%s2 + $0x18] sm:$0xff]
          %v5152 = vld [vmem:[%s2 + $0x20] sm:$0xff]
          %v5153 = vld [vmem:[%s2 + $0x28] sm:$0xff]
          %v5154 = vld [vmem:[%s2 + $0x30] sm:$0xff]
          %v5155 = vld [vmem:[%s2 + $0x38] sm:$0xff]
          %v5156 = vld [vmem:[%s2 + $0x40] sm:$0xff]
          %v5157 = vld [vmem:[%s2 + $0x48] sm:$0xff]
          %v5158 = vld [vmem:[%s2 + $0x50] sm:$0xff]
          %v5159 = vld [vmem:[%s2 + $0x58] sm:$0xff]
          %v5160 = vld [vmem:[%s2 + $0x60] sm:$0xff]
          %v5161 = vld [vmem:[%s2 + $0x68] sm:$0xff]
          %v5162 = vld [vmem:[%s2 + $0x70] sm:$0xff]
          %v5163 = vld [vmem:[%s2 + $0x78] sm:$0xff]
          %v5164 = vld [vmem:[%s2 + $0x80] sm:$0xff]
          %v5165 = vld [vmem:[%s2 + $0x88] sm:$0xff]
          %v5166 = vld [vmem:[%s2 + $0x90] sm:$0xff]
          %v5167 = vld [vmem:[%s2 + $0x98] sm:$0xff]
          %v5168 = vld [vmem:[%s2 + $0xa0] sm:$0xff]
          %v5169 = vld [vmem:[%s2 + $0xa8] sm:$0xff]
          %v5170 = vld [vmem:[%s2 + $0xb0] sm:$0xff]
          %v5171 = vld [vmem:[%s2 + $0xb8] sm:$0xff]
          %v5172 = vld [vmem:[%s2 + $0xc0] sm:$0xff]
          %v5173 = vld [vmem:[%s2 + $0xc8] sm:$0xff]
          %v5174 = vld [vmem:[%s2 + $0xd0] sm:$0xff]
          %v5175 = vld [vmem:[%s2 + $0xd8] sm:$0xff]
          %v5176 = vld [vmem:[%s2 + $0xe0] sm:$0xff]
          %v5177 = vld [vmem:[%s2 + $0xe8] sm:$0xff]
          %v5178 = vld [vmem:[%s2 + $0xf0] sm:$0xff]
          %v5179 = vld [vmem:[%s2 + $0xf8] sm:$0xff]
          %v5212 = vunpack.c.l.b16 %v5148
          %v5213 = vunpack.c.h.b16 %v5148
          %v5214 = vunpack.c.l.b16 %v5149
          %v5215 = vunpack.c.h.b16 %v5149
          %v5216 = vunpack.c.l.b16 %v5150
          %v5217 = vunpack.c.h.b16 %v5150
          %v5218 = vunpack.c.l.b16 %v5151
          %v5219 = vunpack.c.h.b16 %v5151
          %v5220 = vunpack.c.l.b16 %v5152
          %v5221 = vunpack.c.h.b16 %v5152
          %v5222 = vunpack.c.l.b16 %v5153
          %v5223 = vunpack.c.h.b16 %v5153
          %v5224 = vunpack.c.l.b16 %v5154
          %v5225 = vunpack.c.h.b16 %v5154
          %v5226 = vunpack.c.l.b16 %v5155
          %v5227 = vunpack.c.h.b16 %v5155
          %v5228 = vunpack.c.l.b16 %v5156
          %v5229 = vunpack.c.h.b16 %v5156
          %v5230 = vunpack.c.l.b16 %v5157
          %v5231 = vunpack.c.h.b16 %v5157
          %v5232 = vunpack.c.l.b16 %v5158
          %v5233 = vunpack.c.h.b16 %v5158
          %v5234 = vunpack.c.l.b16 %v5159
          %v5235 = vunpack.c.h.b16 %v5159
          %v5236 = vunpack.c.l.b16 %v5160
          %v5237 = vunpack.c.h.b16 %v5160
          %v5238 = vunpack.c.l.b16 %v5161
          %v5239 = vunpack.c.h.b16 %v5161
          %v5240 = vunpack.c.l.b16 %v5162
          %v5241 = vunpack.c.h.b16 %v5162
          %v5242 = vunpack.c.l.b16 %v5163
          %v5243 = vunpack.c.h.b16 %v5163
          %v5244 = vunpack.c.l.b16 %v5164
          %v5245 = vunpack.c.h.b16 %v5164
          %v5246 = vunpack.c.l.b16 %v5165
          %v5247 = vunpack.c.h.b16 %v5165
          %v5248 = vunpack.c.l.b16 %v5166
          %v5249 = vunpack.c.h.b16 %v5166
          %v5250 = vunpack.c.l.b16 %v5167
          %v5251 = vunpack.c.h.b16 %v5167
          %v5252 = vunpack.c.l.b16 %v5168
          %v5253 = vunpack.c.h.b16 %v5168
          %v5254 = vunpack.c.l.b16 %v5169
          %v5255 = vunpack.c.h.b16 %v5169
          %v5256 = vunpack.c.l.b16 %v5170
          %v5257 = vunpack.c.h.b16 %v5170
          %v5258 = vunpack.c.l.b16 %v5171
          %v5259 = vunpack.c.h.b16 %v5171
          %v5260 = vunpack.c.l.b16 %v5172
          %v5261 = vunpack.c.h.b16 %v5172
          %v5262 = vunpack.c.l.b16 %v5173
          %v5263 = vunpack.c.h.b16 %v5173
          %v5264 = vunpack.c.l.b16 %v5174
          %v5265 = vunpack.c.h.b16 %v5174
          %v5266 = vunpack.c.l.b16 %v5175
          %v5267 = vunpack.c.h.b16 %v5175
          %v5268 = vunpack.c.l.b16 %v5176
          %v5269 = vunpack.c.h.b16 %v5176
          %v5270 = vunpack.c.l.b16 %v5177
          %v5271 = vunpack.c.h.b16 %v5177
          %v5272 = vunpack.c.l.b16 %v5178
          %v5273 = vunpack.c.h.b16 %v5178
          %v5274 = vunpack.c.l.b16 %v5179
          %v5275 = vunpack.c.h.b16 %v5179
          %v5276 = vpack.c.b16 %v5216, %v5212
          %v5277 = vpack.c.b16 %v5217, %v5213
          %v5278 = vpack.c.b16 %v5218, %v5214
          %v5279 = vpack.c.b16 %v5219, %v5215
          %v5280 = vpack.c.b16 %v5224, %v5220
          %v5281 = vpack.c.b16 %v5225, %v5221
          %v5282 = vpack.c.b16 %v5226, %v5222
          %v5283 = vpack.c.b16 %v5227, %v5223
          %v5284 = vpack.c.b16 %v5232, %v5228
          %v5285 = vpack.c.b16 %v5233, %v5229
          %v5286 = vpack.c.b16 %v5234, %v5230
          %v5287 = vpack.c.b16 %v5235, %v5231
          %v5288 = vpack.c.b16 %v5240, %v5236
          %v5289 = vpack.c.b16 %v5241, %v5237
          %v5290 = vpack.c.b16 %v5242, %v5238
          %v5291 = vpack.c.b16 %v5243, %v5239
          %v5292 = vpack.c.b16 %v5248, %v5244
          %v5293 = vpack.c.b16 %v5249, %v5245
          %v5294 = vpack.c.b16 %v5250, %v5246
          %v5295 = vpack.c.b16 %v5251, %v5247
          %v5296 = vpack.c.b16 %v5256, %v5252
          %v5297 = vpack.c.b16 %v5257, %v5253
          %v5298 = vpack.c.b16 %v5258, %v5254
          %v5299 = vpack.c.b16 %v5259, %v5255
          %v5300 = vpack.c.b16 %v5264, %v5260
          %v5301 = vpack.c.b16 %v5265, %v5261
          %v5302 = vpack.c.b16 %v5266, %v5262
          %v5303 = vpack.c.b16 %v5267, %v5263
          %v5304 = vpack.c.b16 %v5272, %v5268
          %v5305 = vpack.c.b16 %v5273, %v5269
          %v5306 = vpack.c.b16 %v5274, %v5270
          %v5307 = vpack.c.b16 %v5275, %v5271
          %5340 = vmatprep.subr.bf16.mxu0 %v5277
          %5341 = vmatpush1.bf16.msra.mxu0 %v5276
          %5342 = vmatprep.subr.bf16.mxu0 %v5281
          %5343 = vmatpush1.bf16.msra.mxu0 %v5280
          %5344 = vmatprep.subr.bf16.mxu0 %v5285
          %5345 = vmatpush1.bf16.msra.mxu0 %v5284
          %5346 = vmatprep.subr.bf16.mxu0 %v5289
          %5347 = vmatpush1.bf16.msra.mxu0 %v5288
          %5348 = vmatprep.subr.bf16.mxu0 %v5293
          %5349 = vmatpush1.bf16.msra.mxu0 %v5292
          %5350 = vmatprep.subr.bf16.mxu0 %v5297
          %5351 = vmatpush1.bf16.msra.mxu0 %v5296
          %5352 = vmatprep.subr.bf16.mxu0 %v5301
          %5353 = vmatpush1.bf16.msra.mxu0 %v5300
          %5354 = vmatprep.subr.bf16.mxu0 %v5305
          %5355 = vmatpush1.bf16.msra.mxu0 %v5304
          %5356 = vmatprep.subr.bf16.mxu0 0
          %5357 = vmatpush1.bf16.msra.mxu0 0
          %5358 = vmatprep.subr.bf16.mxu0 0
          %5359 = vmatpush1.bf16.msra.mxu0 0
          %5360 = vmatprep.subr.bf16.mxu0 0
          %5361 = vmatpush1.bf16.msra.mxu0 0
          %5362 = vmatprep.subr.bf16.mxu0 0
          %5363 = vmatpush1.bf16.msra.mxu0 0
          %5364 = vmatprep.subr.bf16.mxu0 0
          %5365 = vmatpush1.bf16.msra.mxu0 0
          %5366 = vmatprep.subr.bf16.mxu0 0
          %5367 = vmatpush1.bf16.msra.mxu0 0
          %5368 = vmatprep.subr.bf16.mxu0 0
          %5369 = vmatpush1.bf16.msra.mxu0 0
          %5370 = vmatprep.subr.bf16.mxu0 0
          %5371 = vmatpush1.bf16.msra.mxu0 0
          %5372 = vmatprep.mubr.bf16.mxu0 0
          %5373 = vmatmul.mubr.bf16.gmra.mrb[0].mxu0 %v5147
          %v5374 = vpop.f32.mrb[0].mxu0
          %v5375 = vadd.f32 0.0, %v5374
          %v5376 = vpop.f32.mrb[0].mxu0
          %v5377 = vadd.f32 0.0, %v5376
          %v5378 = vpop.f32.mrb[0].mxu0
          %v5379 = vpop.f32.mrb[0].mxu0
          %5380 = vdwg.mxu0
          %5381 = vmatprep.subr.bf16.mxu0 %v5279
          %5382 = vmatpush1.bf16.msra.mxu0 %v5278
          %5383 = vmatprep.subr.bf16.mxu0 %v5283
          %5384 = vmatpush1.bf16.msra.mxu0 %v5282
          %5385 = vmatprep.subr.bf16.mxu0 %v5287
          %5386 = vmatpush1.bf16.msra.mxu0 %v5286
          %5387 = vmatprep.subr.bf16.mxu0 %v5291
          %5388 = vmatpush1.bf16.msra.mxu0 %v5290
          %5389 = vmatprep.subr.bf16.mxu0 %v5295
          %5390 = vmatpush1.bf16.msra.mxu0 %v5294
          %5391 = vmatprep.subr.bf16.mxu0 %v5299
          %5392 = vmatpush1.bf16.msra.mxu0 %v5298
          %5393 = vmatprep.subr.bf16.mxu0 %v5303
          %5394 = vmatpush1.bf16.msra.mxu0 %v5302
          %5395 = vmatprep.subr.bf16.mxu0 %v5307
          %5396 = vmatpush1.bf16.msra.mxu0 %v5306
          %5397 = vmatprep.subr.bf16.mxu0 0
          %5398 = vmatpush1.bf16.msra.mxu0 0
          %5399 = vmatprep.subr.bf16.mxu0 0
          %5400 = vmatpush1.bf16.msra.mxu0 0
          %5401 = vmatprep.subr.bf16.mxu0 0
          %5402 = vmatpush1.bf16.msra.mxu0 0
          %5403 = vmatprep.subr.bf16.mxu0 0
          %5404 = vmatpush1.bf16.msra.mxu0 0
          %5405 = vmatprep.subr.bf16.mxu0 0
          %5406 = vmatpush1.bf16.msra.mxu0 0
          %5407 = vmatprep.subr.bf16.mxu0 0
          %5408 = vmatpush1.bf16.msra.mxu0 0
          %5409 = vmatprep.subr.bf16.mxu0 0
          %5410 = vmatpush1.bf16.msra.mxu0 0
          %5411 = vmatprep.subr.bf16.mxu0 0
          %5412 = vmatpush1.bf16.msra.mxu0 0
          %5413 = vmatprep.mubr.bf16.mxu0 0
          %5414 = vmatmul.mubr.bf16.gmra.mrb[0].mxu0 %v5147
          %v5415 = vpop.f32.mrb[0].mxu0
          %v5416 = vadd.f32 0.0, %v5415
          %v5417 = vpop.f32.mrb[0].mxu0
          %v5418 = vadd.f32 0.0, %v5417
          %v5419 = vpop.f32.mrb[0].mxu0
          %v5420 = vpop.f32.mrb[0].mxu0
          %5421 = vdwg.mxu0
          %v5422 = vadd.f32 %v5143, %v5375
          %v5423 = vadd.f32 %v5144, %v5377
          %v5424 = vadd.f32 %v5145, %v5416
          %v5425 = vadd.f32 %v5146, %v5418
          %v5426 = vmul.f32 %v5422, 0.5
          %v5427 = vtanh.pop %v5426
          %v5428 = vadd.f32 %v5427, 1.0
          %v5429 = vmul.f32 %v5428, 0.5
          %v5430 = vmul.f32 %v5423, 0.5
          %v5431 = vtanh.pop %v5430
          %v5432 = vadd.f32 %v5431, 1.0
          %v5433 = vmul.f32 %v5432, 0.5
          %v5434 = vtanh.pop %v5424
          %v5435 = vmul.f32 %v5425, 0.5
          %v5436 = vtanh.pop %v5435
          %v5437 = vadd.f32 %v5436, 1.0
          %v5438 = vmul.f32 %v5437, 0.5
          %v5439 = vld [vmem:[#allocation3] sm:$0xff]
          %v5440 = vmul.f32 %v5433, %v5439
          %v5441 = vmul.f32 %v5429, %v5434
          %v5442 = vadd.f32 %v5440, %v5441
          %v5443 = vtanh.pop %v5442
          %v5444 = vmul.f32 %v5438, %v5443
          %5445 = vst [vmem:[#allocation3] sm:$0xff] %v5442
          %v5446 = vpack.c.bf16 %v5444, %v5444
          %5447 = vst [vmem:[#allocation2] sm:$0xf] %v5446
          %v5449 = vcombine.high %v5444, %v5444
          %v5451 = vunpack.c.l.s4 1966171168
          %v5452 = vunpack.c.0.s8 %v5451
          %v5453 = vlaneseq
          %v5454 = vshrl.u32 %v5453, 7
          %v5455 = vsub.s32 %v5452, %v5454
          %v5456 = vrot.slane %v5444, %v5455
          %v5458 = vunpack.c.l.s4 1966171168
          %v5459 = vunpack.c.0.s8 %v5458
          %v5460 = vlaneseq
          %v5461 = vshrl.u32 %v5460, 7
          %v5462 = vsub.s32 %v5459, %v5461
          %v5463 = vrot.slane %v5449, %v5462
          %v5464 = vcombine.high %v5456, %v5456
          %v5465 = vcombine.high %v5463, %v5463
          %v5467 = vunpack.c.l.s4 1966171168
          %v5468 = vunpack.c.0.s8 %v5467
          %v5469 = vlaneseq
          %v5470 = vshrl.u32 %v5469, 7
          %v5471 = vsub.s32 %v5468, %v5470
          %v5472 = vrot.slane %v5456, %v5471
          %v5474 = vunpack.c.l.s4 1966171168
          %v5475 = vunpack.c.0.s8 %v5474
          %v5476 = vlaneseq
          %v5477 = vshrl.u32 %v5476, 7
          %v5478 = vsub.s32 %v5475, %v5477
          %v5479 = vrot.slane %v5463, %v5478
          %v5481 = vunpack.c.l.s4 1966171168
          %v5482 = vunpack.c.0.s8 %v5481
          %v5483 = vlaneseq
          %v5484 = vshrl.u32 %v5483, 7
          %v5485 = vsub.s32 %v5482, %v5484
          %v5486 = vrot.slane %v5464, %v5485
          %v5488 = vunpack.c.l.s4 1966171168
          %v5489 = vunpack.c.0.s8 %v5488
          %v5490 = vlaneseq
          %v5491 = vshrl.u32 %v5490, 7
          %v5492 = vsub.s32 %v5489, %v5491
          %v5493 = vrot.slane %v5465, %v5492
          %v5494 = vcombine.high %v5472, %v5472
          %v5495 = vcombine.high %v5479, %v5479
          %v5496 = vcombine.high %v5486, %v5486
          %v5497 = vcombine.high %v5493, %v5493
          %5506 = vst [vmem:[%s253 + $0x2] sm:$0x1] %v5472
          %5507 = vst [vmem:[%s253 + $0xa] sm:$0x1] %v5486
          %5508 = vst [vmem:[%s253 + $0x12] sm:$0x1] %v5494
          %5509 = vst [vmem:[%s253 + $0x1a] sm:$0x1] %v5496
          %5510 = vst [vmem:[%s253 + $0x22] sm:$0x1] %v5479
          %5511 = vst [vmem:[%s253 + $0x2a] sm:$0x1] %v5493
          %5512 = vst [vmem:[%s253 + $0x32] sm:$0x1] %v5495
          %5513 = vst [vmem:[%s253 + $0x3a] sm:$0x1] %v5497
          %s5514 = scalar_lea.vmem %s234, 16 [#allocation4]
          %v5515 = vld [vmem:[%s5514] sm:$0xff]
          %v5516 = vld [vmem:[%s5514 + $0x8] sm:$0xff]
          %v5517 = vunpack.c.l.bf16 %v5515
          %v5518 = vunpack.c.h.bf16 %v5515
          %v5519 = vunpack.c.l.bf16 %v5516
          %v5520 = vunpack.c.h.bf16 %v5516
          %v5521 = vld [vmem:[#allocation2] sm:$0xf]
          %v5522 = vld [vmem:[%s2] sm:$0xff]
          %v5523 = vld [vmem:[%s2 + $0x8] sm:$0xff]
          %v5524 = vld [vmem:[%s2 + $0x10] sm:$0xff]
          %v5525 = vld [vmem:[%s2 + $0x18] sm:$0xff]
          %v5526 = vld [vmem:[%s2 + $0x20] sm:$0xff]
          %v5527 = vld [vmem:[%s2 + $0x28] sm:$0xff]
          %v5528 = vld [vmem:[%s2 + $0x30] sm:$0xff]
          %v5529 = vld [vmem:[%s2 + $0x38] sm:$0xff]
          %v5530 = vld [vmem:[%s2 + $0x40] sm:$0xff]
          %v5531 = vld [vmem:[%s2 + $0x48] sm:$0xff]
          %v5532 = vld [vmem:[%s2 + $0x50] sm:$0xff]
          %v5533 = vld [vmem:[%s2 + $0x58] sm:$0xff]
          %v5534 = vld [vmem:[%s2 + $0x60] sm:$0xff]
          %v5535 = vld [vmem:[%s2 + $0x68] sm:$0xff]
          %v5536 = vld [vmem:[%s2 + $0x70] sm:$0xff]
          %v5537 = vld [vmem:[%s2 + $0x78] sm:$0xff]
          %v5538 = vld [vmem:[%s2 + $0x80] sm:$0xff]
          %v5539 = vld [vmem:[%s2 + $0x88] sm:$0xff]
          %v5540 = vld [vmem:[%s2 + $0x90] sm:$0xff]
          %v5541 = vld [vmem:[%s2 + $0x98] sm:$0xff]
          %v5542 = vld [vmem:[%s2 + $0xa0] sm:$0xff]
          %v5543 = vld [vmem:[%s2 + $0xa8] sm:$0xff]
          %v5544 = vld [vmem:[%s2 + $0xb0] sm:$0xff]
          %v5545 = vld [vmem:[%s2 + $0xb8] sm:$0xff]
          %v5546 = vld [vmem:[%s2 + $0xc0] sm:$0xff]
          %v5547 = vld [vmem:[%s2 + $0xc8] sm:$0xff]
          %v5548 = vld [vmem:[%s2 + $0xd0] sm:$0xff]
          %v5549 = vld [vmem:[%s2 + $0xd8] sm:$0xff]
          %v5550 = vld [vmem:[%s2 + $0xe0] sm:$0xff]
          %v5551 = vld [vmem:[%s2 + $0xe8] sm:$0xff]
          %v5552 = vld [vmem:[%s2 + $0xf0] sm:$0xff]
          %v5553 = vld [vmem:[%s2 + $0xf8] sm:$0xff]
          %v5586 = vunpack.c.l.b16 %v5522
          %v5587 = vunpack.c.h.b16 %v5522
          %v5588 = vunpack.c.l.b16 %v5523
          %v5589 = vunpack.c.h.b16 %v5523
          %v5590 = vunpack.c.l.b16 %v5524
          %v5591 = vunpack.c.h.b16 %v5524
          %v5592 = vunpack.c.l.b16 %v5525
          %v5593 = vunpack.c.h.b16 %v5525
          %v5594 = vunpack.c.l.b16 %v5526
          %v5595 = vunpack.c.h.b16 %v5526
          %v5596 = vunpack.c.l.b16 %v5527
          %v5597 = vunpack.c.h.b16 %v5527
          %v5598 = vunpack.c.l.b16 %v5528
          %v5599 = vunpack.c.h.b16 %v5528
          %v5600 = vunpack.c.l.b16 %v5529
          %v5601 = vunpack.c.h.b16 %v5529
          %v5602 = vunpack.c.l.b16 %v5530
          %v5603 = vunpack.c.h.b16 %v5530
          %v5604 = vunpack.c.l.b16 %v5531
          %v5605 = vunpack.c.h.b16 %v5531
          %v5606 = vunpack.c.l.b16 %v5532
          %v5607 = vunpack.c.h.b16 %v5532
          %v5608 = vunpack.c.l.b16 %v5533
          %v5609 = vunpack.c.h.b16 %v5533
          %v5610 = vunpack.c.l.b16 %v5534
          %v5611 = vunpack.c.h.b16 %v5534
          %v5612 = vunpack.c.l.b16 %v5535
          %v5613 = vunpack.c.h.b16 %v5535
          %v5614 = vunpack.c.l.b16 %v5536
          %v5615 = vunpack.c.h.b16 %v5536
          %v5616 = vunpack.c.l.b16 %v5537
          %v5617 = vunpack.c.h.b16 %v5537
          %v5618 = vunpack.c.l.b16 %v5538
          %v5619 = vunpack.c.h.b16 %v5538
          %v5620 = vunpack.c.l.b16 %v5539
          %v5621 = vunpack.c.h.b16 %v5539
          %v5622 = vunpack.c.l.b16 %v5540
          %v5623 = vunpack.c.h.b16 %v5540
          %v5624 = vunpack.c.l.b16 %v5541
          %v5625 = vunpack.c.h.b16 %v5541
          %v5626 = vunpack.c.l.b16 %v5542
          %v5627 = vunpack.c.h.b16 %v5542
          %v5628 = vunpack.c.l.b16 %v5543
          %v5629 = vunpack.c.h.b16 %v5543
          %v5630 = vunpack.c.l.b16 %v5544
          %v5631 = vunpack.c.h.b16 %v5544
          %v5632 = vunpack.c.l.b16 %v5545
          %v5633 = vunpack.c.h.b16 %v5545
          %v5634 = vunpack.c.l.b16 %v5546
          %v5635 = vunpack.c.h.b16 %v5546
          %v5636 = vunpack.c.l.b16 %v5547
          %v5637 = vunpack.c.h.b16 %v5547
          %v5638 = vunpack.c.l.b16 %v5548
          %v5639 = vunpack.c.h.b16 %v5548
          %v5640 = vunpack.c.l.b16 %v5549
          %v5641 = vunpack.c.h.b16 %v5549
          %v5642 = vunpack.c.l.b16 %v5550
          %v5643 = vunpack.c.h.b16 %v5550
          %v5644 = vunpack.c.l.b16 %v5551
          %v5645 = vunpack.c.h.b16 %v5551
          %v5646 = vunpack.c.l.b16 %v5552
          %v5647 = vunpack.c.h.b16 %v5552
          %v5648 = vunpack.c.l.b16 %v5553
          %v5649 = vunpack.c.h.b16 %v5553
          %v5650 = vpack.c.b16 %v5590, %v5586
          %v5651 = vpack.c.b16 %v5591, %v5587
          %v5652 = vpack.c.b16 %v5592, %v5588
          %v5653 = vpack.c.b16 %v5593, %v5589
          %v5654 = vpack.c.b16 %v5598, %v5594
          %v5655 = vpack.c.b16 %v5599, %v5595
          %v5656 = vpack.c.b16 %v5600, %v5596
          %v5657 = vpack.c.b16 %v5601, %v5597
          %v5658 = vpack.c.b16 %v5606, %v5602
          %v5659 = vpack.c.b16 %v5607, %v5603
          %v5660 = vpack.c.b16 %v5608, %v5604
          %v5661 = vpack.c.b16 %v5609, %v5605
          %v5662 = vpack.c.b16 %v5614, %v5610
          %v5663 = vpack.c.b16 %v5615, %v5611
          %v5664 = vpack.c.b16 %v5616, %v5612
          %v5665 = vpack.c.b16 %v5617, %v5613
          %v5666 = vpack.c.b16 %v5622, %v5618
          %v5667 = vpack.c.b16 %v5623, %v5619
          %v5668 = vpack.c.b16 %v5624, %v5620
          %v5669 = vpack.c.b16 %v5625, %v5621
          %v5670 = vpack.c.b16 %v5630, %v5626
          %v5671 = vpack.c.b16 %v5631, %v5627
          %v5672 = vpack.c.b16 %v5632, %v5628
          %v5673 = vpack.c.b16 %v5633, %v5629
          %v5674 = vpack.c.b16 %v5638, %v5634
          %v5675 = vpack.c.b16 %v5639, %v5635
          %v5676 = vpack.c.b16 %v5640, %v5636
          %v5677 = vpack.c.b16 %v5641, %v5637
          %v5678 = vpack.c.b16 %v5646, %v5642
          %v5679 = vpack.c.b16 %v5647, %v5643
          %v5680 = vpack.c.b16 %v5648, %v5644
          %v5681 = vpack.c.b16 %v5649, %v5645
          %5714 = vmatprep.subr.bf16.mxu0 %v5651
          %5715 = vmatpush1.bf16.msra.mxu0 %v5650
          %5716 = vmatprep.subr.bf16.mxu0 %v5655
          %5717 = vmatpush1.bf16.msra.mxu0 %v5654
          %5718 = vmatprep.subr.bf16.mxu0 %v5659
          %5719 = vmatpush1.bf16.msra.mxu0 %v5658
          %5720 = vmatprep.subr.bf16.mxu0 %v5663
          %5721 = vmatpush1.bf16.msra.mxu0 %v5662
          %5722 = vmatprep.subr.bf16.mxu0 %v5667
          %5723 = vmatpush1.bf16.msra.mxu0 %v5666
          %5724 = vmatprep.subr.bf16.mxu0 %v5671
          %5725 = vmatpush1.bf16.msra.mxu0 %v5670
          %5726 = vmatprep.subr.bf16.mxu0 %v5675
          %5727 = vmatpush1.bf16.msra.mxu0 %v5674
          %5728 = vmatprep.subr.bf16.mxu0 %v5679
          %5729 = vmatpush1.bf16.msra.mxu0 %v5678
          %5730 = vmatprep.subr.bf16.mxu0 0
          %5731 = vmatpush1.bf16.msra.mxu0 0
          %5732 = vmatprep.subr.bf16.mxu0 0
          %5733 = vmatpush1.bf16.msra.mxu0 0
          %5734 = vmatprep.subr.bf16.mxu0 0
          %5735 = vmatpush1.bf16.msra.mxu0 0
          %5736 = vmatprep.subr.bf16.mxu0 0
          %5737 = vmatpush1.bf16.msra.mxu0 0
          %5738 = vmatprep.subr.bf16.mxu0 0
          %5739 = vmatpush1.bf16.msra.mxu0 0
          %5740 = vmatprep.subr.bf16.mxu0 0
          %5741 = vmatpush1.bf16.msra.mxu0 0
          %5742 = vmatprep.subr.bf16.mxu0 0
          %5743 = vmatpush1.bf16.msra.mxu0 0
          %5744 = vmatprep.subr.bf16.mxu0 0
          %5745 = vmatpush1.bf16.msra.mxu0 0
          %5746 = vmatprep.mubr.bf16.mxu0 0
          %5747 = vmatmul.mubr.bf16.gmra.mrb[0].mxu0 %v5521
          %v5748 = vpop.f32.mrb[0].mxu0
          %v5749 = vadd.f32 0.0, %v5748
          %v5750 = vpop.f32.mrb[0].mxu0
          %v5751 = vadd.f32 0.0, %v5750
          %v5752 = vpop.f32.mrb[0].mxu0
          %v5753 = vpop.f32.mrb[0].mxu0
          %5754 = vdwg.mxu0
          %5755 = vmatprep.subr.bf16.mxu0 %v5653
          %5756 = vmatpush1.bf16.msra.mxu0 %v5652
          %5757 = vmatprep.subr.bf16.mxu0 %v5657
          %5758 = vmatpush1.bf16.msra.mxu0 %v5656
          %5759 = vmatprep.subr.bf16.mxu0 %v5661
          %5760 = vmatpush1.bf16.msra.mxu0 %v5660
          %5761 = vmatprep.subr.bf16.mxu0 %v5665
          %5762 = vmatpush1.bf16.msra.mxu0 %v5664
          %5763 = vmatprep.subr.bf16.mxu0 %v5669
          %5764 = vmatpush1.bf16.msra.mxu0 %v5668
          %5765 = vmatprep.subr.bf16.mxu0 %v5673
          %5766 = vmatpush1.bf16.msra.mxu0 %v5672
          %5767 = vmatprep.subr.bf16.mxu0 %v5677
          %5768 = vmatpush1.bf16.msra.mxu0 %v5676
          %5769 = vmatprep.subr.bf16.mxu0 %v5681
          %5770 = vmatpush1.bf16.msra.mxu0 %v5680
          %5771 = vmatprep.subr.bf16.mxu0 0
          %5772 = vmatpush1.bf16.msra.mxu0 0
          %5773 = vmatprep.subr.bf16.mxu0 0
          %5774 = vmatpush1.bf16.msra.mxu0 0
          %5775 = vmatprep.subr.bf16.mxu0 0
          %5776 = vmatpush1.bf16.msra.mxu0 0
          %5777 = vmatprep.subr.bf16.mxu0 0
          %5778 = vmatpush1.bf16.msra.mxu0 0
          %5779 = vmatprep.subr.bf16.mxu0 0
          %5780 = vmatpush1.bf16.msra.mxu0 0
          %5781 = vmatprep.subr.bf16.mxu0 0
          %5782 = vmatpush1.bf16.msra.mxu0 0
          %5783 = vmatprep.subr.bf16.mxu0 0
          %5784 = vmatpush1.bf16.msra.mxu0 0
          %5785 = vmatprep.subr.bf16.mxu0 0
          %5786 = vmatpush1.bf16.msra.mxu0 0
          %5787 = vmatprep.mubr.bf16.mxu0 0
          %5788 = vmatmul.mubr.bf16.gmra.mrb[0].mxu0 %v5521
          %v5789 = vpop.f32.mrb[0].mxu0
          %v5790 = vadd.f32 0.0, %v5789
          %v5791 = vpop.f32.mrb[0].mxu0
          %v5792 = vadd.f32 0.0, %v5791
          %v5793 = vpop.f32.mrb[0].mxu0
          %v5794 = vpop.f32.mrb[0].mxu0
          %5795 = vdwg.mxu0
          %v5796 = vadd.f32 %v5517, %v5749
          %v5797 = vadd.f32 %v5518, %v5751
          %v5798 = vadd.f32 %v5519, %v5790
          %v5799 = vadd.f32 %v5520, %v5792
          %v5800 = vmul.f32 %v5796, 0.5
          %v5801 = vtanh.pop %v5800
          %v5802 = vadd.f32 %v5801, 1.0
          %v5803 = vmul.f32 %v5802, 0.5
          %v5804 = vmul.f32 %v5797, 0.5
          %v5805 = vtanh.pop %v5804
          %v5806 = vadd.f32 %v5805, 1.0
          %v5807 = vmul.f32 %v5806, 0.5
          %v5808 = vtanh.pop %v5798
          %v5809 = vmul.f32 %v5799, 0.5
          %v5810 = vtanh.pop %v5809
          %v5811 = vadd.f32 %v5810, 1.0
          %v5812 = vmul.f32 %v5811, 0.5
          %v5813 = vld [vmem:[#allocation3] sm:$0xff]
          %v5814 = vmul.f32 %v5807, %v5813
          %v5815 = vmul.f32 %v5803, %v5808
          %v5816 = vadd.f32 %v5814, %v5815
          %v5817 = vtanh.pop %v5816
          %v5818 = vmul.f32 %v5812, %v5817
          %5819 = vst [vmem:[#allocation3] sm:$0xff] %v5816
          %v5820 = vpack.c.bf16 %v5818, %v5818
          %5821 = vst [vmem:[#allocation2] sm:$0xf] %v5820
          %v5823 = vcombine.high %v5818, %v5818
          %v5825 = vunpack.c.l.s4 1966171168
          %v5826 = vunpack.c.0.s8 %v5825
          %v5827 = vlaneseq
          %v5828 = vshrl.u32 %v5827, 7
          %v5829 = vsub.s32 %v5826, %v5828
          %v5830 = vrot.slane %v5818, %v5829
          %v5832 = vunpack.c.l.s4 1966171168
          %v5833 = vunpack.c.0.s8 %v5832
          %v5834 = vlaneseq
          %v5835 = vshrl.u32 %v5834, 7
          %v5836 = vsub.s32 %v5833, %v5835
          %v5837 = vrot.slane %v5823, %v5836
          %v5838 = vcombine.high %v5830, %v5830
          %v5839 = vcombine.high %v5837, %v5837
          %v5841 = vunpack.c.l.s4 1966171168
          %v5842 = vunpack.c.0.s8 %v5841
          %v5843 = vlaneseq
          %v5844 = vshrl.u32 %v5843, 7
          %v5845 = vsub.s32 %v5842, %v5844
          %v5846 = vrot.slane %v5830, %v5845
          %v5848 = vunpack.c.l.s4 1966171168
          %v5849 = vunpack.c.0.s8 %v5848
          %v5850 = vlaneseq
          %v5851 = vshrl.u32 %v5850, 7
          %v5852 = vsub.s32 %v5849, %v5851
          %v5853 = vrot.slane %v5837, %v5852
          %v5855 = vunpack.c.l.s4 1966171168
          %v5856 = vunpack.c.0.s8 %v5855
          %v5857 = vlaneseq
          %v5858 = vshrl.u32 %v5857, 7
          %v5859 = vsub.s32 %v5856, %v5858
          %v5860 = vrot.slane %v5838, %v5859
          %v5862 = vunpack.c.l.s4 1966171168
          %v5863 = vunpack.c.0.s8 %v5862
          %v5864 = vlaneseq
          %v5865 = vshrl.u32 %v5864, 7
          %v5866 = vsub.s32 %v5863, %v5865
          %v5867 = vrot.slane %v5839, %v5866
          %v5868 = vcombine.high %v5846, %v5846
          %v5869 = vcombine.high %v5853, %v5853
          %v5870 = vcombine.high %v5860, %v5860
          %v5871 = vcombine.high %v5867, %v5867
          %5880 = vst [vmem:[%s253 + $0x1] sm:$0x1] %v5846
          %5881 = vst [vmem:[%s253 + $0x9] sm:$0x1] %v5860
          %5882 = vst [vmem:[%s253 + $0x11] sm:$0x1] %v5868
          %5883 = vst [vmem:[%s253 + $0x19] sm:$0x1] %v5870
          %5884 = vst [vmem:[%s253 + $0x21] sm:$0x1] %v5853
          %5885 = vst [vmem:[%s253 + $0x29] sm:$0x1] %v5867
          %5886 = vst [vmem:[%s253 + $0x31] sm:$0x1] %v5869
          %5887 = vst [vmem:[%s253 + $0x39] sm:$0x1] %v5871
          %v5888 = vld [vmem:[%s234] sm:$0xff]
          %v5889 = vld [vmem:[%s234 + $0x8] sm:$0xff]
          %v5890 = vunpack.c.l.bf16 %v5888
          %v5891 = vunpack.c.h.bf16 %v5888
          %v5892 = vunpack.c.l.bf16 %v5889
          %v5893 = vunpack.c.h.bf16 %v5889
          %v5894 = vld [vmem:[#allocation2] sm:$0xf]
          %v5895 = vld [vmem:[%s2] sm:$0xff]
          %v5896 = vld [vmem:[%s2 + $0x8] sm:$0xff]
          %v5897 = vld [vmem:[%s2 + $0x10] sm:$0xff]
          %v5898 = vld [vmem:[%s2 + $0x18] sm:$0xff]
          %v5899 = vld [vmem:[%s2 + $0x20] sm:$0xff]
          %v5900 = vld [vmem:[%s2 + $0x28] sm:$0xff]
          %v5901 = vld [vmem:[%s2 + $0x30] sm:$0xff]
          %v5902 = vld [vmem:[%s2 + $0x38] sm:$0xff]
          %v5903 = vld [vmem:[%s2 + $0x40] sm:$0xff]
          %v5904 = vld [vmem:[%s2 + $0x48] sm:$0xff]
          %v5905 = vld [vmem:[%s2 + $0x50] sm:$0xff]
          %v5906 = vld [vmem:[%s2 + $0x58] sm:$0xff]
          %v5907 = vld [vmem:[%s2 + $0x60] sm:$0xff]
          %v5908 = vld [vmem:[%s2 + $0x68] sm:$0xff]
          %v5909 = vld [vmem:[%s2 + $0x70] sm:$0xff]
          %v5910 = vld [vmem:[%s2 + $0x78] sm:$0xff]
          %v5911 = vld [vmem:[%s2 + $0x80] sm:$0xff]
          %v5912 = vld [vmem:[%s2 + $0x88] sm:$0xff]
          %v5913 = vld [vmem:[%s2 + $0x90] sm:$0xff]
          %v5914 = vld [vmem:[%s2 + $0x98] sm:$0xff]
          %v5915 = vld [vmem:[%s2 + $0xa0] sm:$0xff]
          %v5916 = vld [vmem:[%s2 + $0xa8] sm:$0xff]
          %v5917 = vld [vmem:[%s2 + $0xb0] sm:$0xff]
          %v5918 = vld [vmem:[%s2 + $0xb8] sm:$0xff]
          %v5919 = vld [vmem:[%s2 + $0xc0] sm:$0xff]
          %v5920 = vld [vmem:[%s2 + $0xc8] sm:$0xff]
          %v5921 = vld [vmem:[%s2 + $0xd0] sm:$0xff]
          %v5922 = vld [vmem:[%s2 + $0xd8] sm:$0xff]
          %v5923 = vld [vmem:[%s2 + $0xe0] sm:$0xff]
          %v5924 = vld [vmem:[%s2 + $0xe8] sm:$0xff]
          %v5925 = vld [vmem:[%s2 + $0xf0] sm:$0xff]
          %v5926 = vld [vmem:[%s2 + $0xf8] sm:$0xff]
          %v5959 = vunpack.c.l.b16 %v5895
          %v5960 = vunpack.c.h.b16 %v5895
          %v5961 = vunpack.c.l.b16 %v5896
          %v5962 = vunpack.c.h.b16 %v5896
          %v5963 = vunpack.c.l.b16 %v5897
          %v5964 = vunpack.c.h.b16 %v5897
          %v5965 = vunpack.c.l.b16 %v5898
          %v5966 = vunpack.c.h.b16 %v5898
          %v5967 = vunpack.c.l.b16 %v5899
          %v5968 = vunpack.c.h.b16 %v5899
          %v5969 = vunpack.c.l.b16 %v5900
          %v5970 = vunpack.c.h.b16 %v5900
          %v5971 = vunpack.c.l.b16 %v5901
          %v5972 = vunpack.c.h.b16 %v5901
          %v5973 = vunpack.c.l.b16 %v5902
          %v5974 = vunpack.c.h.b16 %v5902
          %v5975 = vunpack.c.l.b16 %v5903
          %v5976 = vunpack.c.h.b16 %v5903
          %v5977 = vunpack.c.l.b16 %v5904
          %v5978 = vunpack.c.h.b16 %v5904
          %v5979 = vunpack.c.l.b16 %v5905
          %v5980 = vunpack.c.h.b16 %v5905
          %v5981 = vunpack.c.l.b16 %v5906
          %v5982 = vunpack.c.h.b16 %v5906
          %v5983 = vunpack.c.l.b16 %v5907
          %v5984 = vunpack.c.h.b16 %v5907
          %v5985 = vunpack.c.l.b16 %v5908
          %v5986 = vunpack.c.h.b16 %v5908
          %v5987 = vunpack.c.l.b16 %v5909
          %v5988 = vunpack.c.h.b16 %v5909
          %v5989 = vunpack.c.l.b16 %v5910
          %v5990 = vunpack.c.h.b16 %v5910
          %v5991 = vunpack.c.l.b16 %v5911
          %v5992 = vunpack.c.h.b16 %v5911
          %v5993 = vunpack.c.l.b16 %v5912
          %v5994 = vunpack.c.h.b16 %v5912
          %v5995 = vunpack.c.l.b16 %v5913
          %v5996 = vunpack.c.h.b16 %v5913
          %v5997 = vunpack.c.l.b16 %v5914
          %v5998 = vunpack.c.h.b16 %v5914
          %v5999 = vunpack.c.l.b16 %v5915
          %v6000 = vunpack.c.h.b16 %v5915
          %v6001 = vunpack.c.l.b16 %v5916
          %v6002 = vunpack.c.h.b16 %v5916
          %v6003 = vunpack.c.l.b16 %v5917
          %v6004 = vunpack.c.h.b16 %v5917
          %v6005 = vunpack.c.l.b16 %v5918
          %v6006 = vunpack.c.h.b16 %v5918
          %v6007 = vunpack.c.l.b16 %v5919
          %v6008 = vunpack.c.h.b16 %v5919
          %v6009 = vunpack.c.l.b16 %v5920
          %v6010 = vunpack.c.h.b16 %v5920
          %v6011 = vunpack.c.l.b16 %v5921
          %v6012 = vunpack.c.h.b16 %v5921
          %v6013 = vunpack.c.l.b16 %v5922
          %v6014 = vunpack.c.h.b16 %v5922
          %v6015 = vunpack.c.l.b16 %v5923
          %v6016 = vunpack.c.h.b16 %v5923
          %v6017 = vunpack.c.l.b16 %v5924
          %v6018 = vunpack.c.h.b16 %v5924
          %v6019 = vunpack.c.l.b16 %v5925
          %v6020 = vunpack.c.h.b16 %v5925
          %v6021 = vunpack.c.l.b16 %v5926
          %v6022 = vunpack.c.h.b16 %v5926
          %v6023 = vpack.c.b16 %v5963, %v5959
          %v6024 = vpack.c.b16 %v5964, %v5960
          %v6025 = vpack.c.b16 %v5965, %v5961
          %v6026 = vpack.c.b16 %v5966, %v5962
          %v6027 = vpack.c.b16 %v5971, %v5967
          %v6028 = vpack.c.b16 %v5972, %v5968
          %v6029 = vpack.c.b16 %v5973, %v5969
          %v6030 = vpack.c.b16 %v5974, %v5970
          %v6031 = vpack.c.b16 %v5979, %v5975
          %v6032 = vpack.c.b16 %v5980, %v5976
          %v6033 = vpack.c.b16 %v5981, %v5977
          %v6034 = vpack.c.b16 %v5982, %v5978
          %v6035 = vpack.c.b16 %v5987, %v5983
          %v6036 = vpack.c.b16 %v5988, %v5984
          %v6037 = vpack.c.b16 %v5989, %v5985
          %v6038 = vpack.c.b16 %v5990, %v5986
          %v6039 = vpack.c.b16 %v5995, %v5991
          %v6040 = vpack.c.b16 %v5996, %v5992
          %v6041 = vpack.c.b16 %v5997, %v5993
          %v6042 = vpack.c.b16 %v5998, %v5994
          %v6043 = vpack.c.b16 %v6003, %v5999
          %v6044 = vpack.c.b16 %v6004, %v6000
          %v6045 = vpack.c.b16 %v6005, %v6001
          %v6046 = vpack.c.b16 %v6006, %v6002
          %v6047 = vpack.c.b16 %v6011, %v6007
          %v6048 = vpack.c.b16 %v6012, %v6008
          %v6049 = vpack.c.b16 %v6013, %v6009
          %v6050 = vpack.c.b16 %v6014, %v6010
          %v6051 = vpack.c.b16 %v6019, %v6015
          %v6052 = vpack.c.b16 %v6020, %v6016
          %v6053 = vpack.c.b16 %v6021, %v6017
          %v6054 = vpack.c.b16 %v6022, %v6018
          %6087 = vmatprep.subr.bf16.mxu0 %v6024
          %6088 = vmatpush1.bf16.msra.mxu0 %v6023
          %6089 = vmatprep.subr.bf16.mxu0 %v6028
          %6090 = vmatpush1.bf16.msra.mxu0 %v6027
          %6091 = vmatprep.subr.bf16.mxu0 %v6032
          %6092 = vmatpush1.bf16.msra.mxu0 %v6031
          %6093 = vmatprep.subr.bf16.mxu0 %v6036
          %6094 = vmatpush1.bf16.msra.mxu0 %v6035
          %6095 = vmatprep.subr.bf16.mxu0 %v6040
          %6096 = vmatpush1.bf16.msra.mxu0 %v6039
          %6097 = vmatprep.subr.bf16.mxu0 %v6044
          %6098 = vmatpush1.bf16.msra.mxu0 %v6043
          %6099 = vmatprep.subr.bf16.mxu0 %v6048
          %6100 = vmatpush1.bf16.msra.mxu0 %v6047
          %6101 = vmatprep.subr.bf16.mxu0 %v6052
          %6102 = vmatpush1.bf16.msra.mxu0 %v6051
          %6103 = vmatprep.subr.bf16.mxu0 0
          %6104 = vmatpush1.bf16.msra.mxu0 0
          %6105 = vmatprep.subr.bf16.mxu0 0
          %6106 = vmatpush1.bf16.msra.mxu0 0
          %6107 = vmatprep.subr.bf16.mxu0 0
          %6108 = vmatpush1.bf16.msra.mxu0 0
          %6109 = vmatprep.subr.bf16.mxu0 0
          %6110 = vmatpush1.bf16.msra.mxu0 0
          %6111 = vmatprep.subr.bf16.mxu0 0
          %6112 = vmatpush1.bf16.msra.mxu0 0
          %6113 = vmatprep.subr.bf16.mxu0 0
          %6114 = vmatpush1.bf16.msra.mxu0 0
          %6115 = vmatprep.subr.bf16.mxu0 0
          %6116 = vmatpush1.bf16.msra.mxu0 0
          %6117 = vmatprep.subr.bf16.mxu0 0
          %6118 = vmatpush1.bf16.msra.mxu0 0
          %6119 = vmatprep.mubr.bf16.mxu0 0
          %6120 = vmatmul.mubr.bf16.gmra.mrb[0].mxu0 %v5894
          %v6121 = vpop.f32.mrb[0].mxu0
          %v6122 = vadd.f32 0.0, %v6121
          %v6123 = vpop.f32.mrb[0].mxu0
          %v6124 = vadd.f32 0.0, %v6123
          %v6125 = vpop.f32.mrb[0].mxu0
          %v6126 = vpop.f32.mrb[0].mxu0
          %6127 = vdwg.mxu0
          %6128 = vmatprep.subr.bf16.mxu0 %v6026
          %6129 = vmatpush1.bf16.msra.mxu0 %v6025
          %6130 = vmatprep.subr.bf16.mxu0 %v6030
          %6131 = vmatpush1.bf16.msra.mxu0 %v6029
          %6132 = vmatprep.subr.bf16.mxu0 %v6034
          %6133 = vmatpush1.bf16.msra.mxu0 %v6033
          %6134 = vmatprep.subr.bf16.mxu0 %v6038
          %6135 = vmatpush1.bf16.msra.mxu0 %v6037
          %6136 = vmatprep.subr.bf16.mxu0 %v6042
          %6137 = vmatpush1.bf16.msra.mxu0 %v6041
          %6138 = vmatprep.subr.bf16.mxu0 %v6046
          %6139 = vmatpush1.bf16.msra.mxu0 %v6045
          %6140 = vmatprep.subr.bf16.mxu0 %v6050
          %6141 = vmatpush1.bf16.msra.mxu0 %v6049
          %6142 = vmatprep.subr.bf16.mxu0 %v6054
          %6143 = vmatpush1.bf16.msra.mxu0 %v6053
          %6144 = vmatprep.subr.bf16.mxu0 0
          %6145 = vmatpush1.bf16.msra.mxu0 0
          %6146 = vmatprep.subr.bf16.mxu0 0
          %6147 = vmatpush1.bf16.msra.mxu0 0
          %6148 = vmatprep.subr.bf16.mxu0 0
          %6149 = vmatpush1.bf16.msra.mxu0 0
          %6150 = vmatprep.subr.bf16.mxu0 0
          %6151 = vmatpush1.bf16.msra.mxu0 0
          %6152 = vmatprep.subr.bf16.mxu0 0
          %6153 = vmatpush1.bf16.msra.mxu0 0
          %6154 = vmatprep.subr.bf16.mxu0 0
          %6155 = vmatpush1.bf16.msra.mxu0 0
          %6156 = vmatprep.subr.bf16.mxu0 0
          %6157 = vmatpush1.bf16.msra.mxu0 0
          %6158 = vmatprep.subr.bf16.mxu0 0
          %6159 = vmatpush1.bf16.msra.mxu0 0
          %6160 = vmatprep.mubr.bf16.mxu0 0
          %6161 = vmatmul.mubr.bf16.gmra.mrb[0].mxu0 %v5894
          %v6162 = vpop.f32.mrb[0].mxu0
          %v6163 = vadd.f32 0.0, %v6162
          %v6164 = vpop.f32.mrb[0].mxu0
          %v6165 = vadd.f32 0.0, %v6164
          %v6166 = vpop.f32.mrb[0].mxu0
          %v6167 = vpop.f32.mrb[0].mxu0
          %6168 = vdwg.mxu0
          %v6169 = vadd.f32 %v5890, %v6122
          %v6170 = vadd.f32 %v5891, %v6124
          %v6171 = vadd.f32 %v5892, %v6163
          %v6172 = vadd.f32 %v5893, %v6165
          %v6173 = vmul.f32 %v6169, 0.5
          %v6174 = vtanh.pop %v6173
          %v6175 = vadd.f32 %v6174, 1.0
          %v6176 = vmul.f32 %v6175, 0.5
          %v6177 = vmul.f32 %v6170, 0.5
          %v6178 = vtanh.pop %v6177
          %v6179 = vadd.f32 %v6178, 1.0
          %v6180 = vmul.f32 %v6179, 0.5
          %v6181 = vtanh.pop %v6171
          %v6182 = vmul.f32 %v6172, 0.5
          %v6183 = vtanh.pop %v6182
          %v6184 = vadd.f32 %v6183, 1.0
          %v6185 = vmul.f32 %v6184, 0.5
          %v6186 = vld [vmem:[#allocation3] sm:$0xff]
          %v6187 = vmul.f32 %v6180, %v6186
          %v6188 = vmul.f32 %v6176, %v6181
          %v6189 = vadd.f32 %v6187, %v6188
          %v6190 = vtanh.pop %v6189
          %v6191 = vmul.f32 %v6185, %v6190
          %6192 = vst [vmem:[#allocation3] sm:$0xff] %v6189
          %v6193 = vpack.c.bf16 %v6191, %v6191
          %6194 = vst [vmem:[#allocation2] sm:$0xf] %v6193
          %v6196 = vcombine.high %v6191, %v6191
          %v6198 = vunpack.c.l.s4 1966171168
          %v6199 = vunpack.c.0.s8 %v6198
          %v6200 = vlaneseq
          %v6201 = vshrl.u32 %v6200, 7
          %v6202 = vsub.s32 %v6199, %v6201
          %v6203 = vrot.slane %v6191, %v6202
          %v6205 = vunpack.c.l.s4 1966171168
          %v6206 = vunpack.c.0.s8 %v6205
          %v6207 = vlaneseq
          %v6208 = vshrl.u32 %v6207, 7
          %v6209 = vsub.s32 %v6206, %v6208
          %v6210 = vrot.slane %v6196, %v6209
          %v6211 = vcombine.high %v6203, %v6203
          %v6212 = vcombine.high %v6210, %v6210
          %v6214 = vunpack.c.l.s4 1966171168
          %v6215 = vunpack.c.0.s8 %v6214
          %v6216 = vlaneseq
          %v6217 = vshrl.u32 %v6216, 7
          %v6218 = vsub.s32 %v6215, %v6217
          %v6219 = vrot.slane %v6203, %v6218
          %v6221 = vunpack.c.l.s4 1966171168
          %v6222 = vunpack.c.0.s8 %v6221
          %v6223 = vlaneseq
          %v6224 = vshrl.u32 %v6223, 7
          %v6225 = vsub.s32 %v6222, %v6224
          %v6226 = vrot.slane %v6210, %v6225
          %v6228 = vunpack.c.l.s4 1966171168
          %v6229 = vunpack.c.0.s8 %v6228
          %v6230 = vlaneseq
          %v6231 = vshrl.u32 %v6230, 7
          %v6232 = vsub.s32 %v6229, %v6231
          %v6233 = vrot.slane %v6211, %v6232
          %v6235 = vunpack.c.l.s4 1966171168
          %v6236 = vunpack.c.0.s8 %v6235
          %v6237 = vlaneseq
          %v6238 = vshrl.u32 %v6237, 7
          %v6239 = vsub.s32 %v6236, %v6238
          %v6240 = vrot.slane %v6212, %v6239
          %v6241 = vcombine.high %v6219, %v6219
          %v6242 = vcombine.high %v6226, %v6226
          %v6243 = vcombine.high %v6233, %v6233
          %v6244 = vcombine.high %v6240, %v6240
          %6253 = vst [vmem:[%s253] sm:$0x1] %v6219
          %6254 = vst [vmem:[%s253 + $0x8] sm:$0x1] %v6233
          %6255 = vst [vmem:[%s253 + $0x10] sm:$0x1] %v6241
          %6256 = vst [vmem:[%s253 + $0x18] sm:$0x1] %v6243
          %6257 = vst [vmem:[%s253 + $0x20] sm:$0x1] %v6226
          %6258 = vst [vmem:[%s253 + $0x28] sm:$0x1] %v6240
          %6259 = vst [vmem:[%s253 + $0x30] sm:$0x1] %v6242
          %6260 = vst [vmem:[%s253 + $0x38] sm:$0x1] %v6244
        $region67: #{bilstm_forward.3} parent=50 // pred_fallthru
          _
        %s6261 = sand.u32 %s122, 1
        %s6262 = sand.u32 %s122, 1
        %s6263 = smul.addr %s6262, 64
        %s6264 = scalar_lea.vmem [#allocation5], %s6263
        // Predicated region
        $region68: #{bilstm_forward.3} parent=50 // pred_check
          %p6265 = pneg %p132
        $region69: #{bilstm_forward.3} parent=50 // pred_check_branch
          %6267 = sbr.rel (%p6265) target = $region71
        $region70: #{bilstm_forward.3} parent=50 // pred_region
          %s6268 = smul.u32 %s19, 2
          %s6269 = ssub.s32 0, %s6268
          %s6270 = smul.u32 %s18, %s6269
          %s6271 = sadd.s32 %s19, %s6270
          %s6272 = smul.addr %s6271, 2
          %s6273 = sadd.s32 %s18, %s6272
          %s6274 = smul.addr %s6273, 8
          %s6275 = scalar_lea.vmem %s3, %s6274
          // Predicated region
          $region72: #{bilstm_forward.3} parent=70 // pred_check
            _
          $region73: #{bilstm_forward.3} parent=70 // pred_check_branch
            %6277 = sbr.rel (0) target = $region75
          $region74: #{bilstm_forward.3} parent=70 // pred_region
            // Predicated region
            $region76: #{bilstm_forward.3} parent=74 // pred_check
              _
            $region77: #{bilstm_forward.3} parent=74 // pred_check_branch
              %6279 = sbr.rel (0) target = $region79
            $region78: #{bilstm_forward.3} parent=74 // pred_region
              // Predicated region
              $region91: #{bilstm_forward.3} parent=78 // pred_check
                _
              $region92: #{bilstm_forward.3} parent=78 // pred_check_branch
                %6308 = sbr.rel (0) target = $region94
              $region93: #{bilstm_forward.3} parent=78 // pred_region
                loop: start=0, step=1, limit=1
                $region95: #{bilstm_forward.3} parent=93 // loop_pre_header
                  _
                $region96: #{bilstm_forward.3} parent=93 // loop_header
                  %s6310 = sphi 0, %s6314
                  %p6311 = scmp.ge.s32.totalorder %s6310, 1
                  %s6315 = sphi %s6264, %s6264
                  %s6316 = sphi %s6275, %s6275
                $region97: #{bilstm_forward.3} parent=93 // loop_header_branch
                  %6313 = sbr.rel (%p6311) target = $region101
                $region98: #{bilstm_forward.3} parent=93 // loop_body
                  %v6317 = vld [vmem:[%s6315] sm:$0xff]
                  %6318 = vst [vmem:[%s6316] sm:$0xff] %v6317
                  %v6319 = vld [vmem:[%s6315 + $0x8] sm:$0xff]
                  %6320 = vst [vmem:[%s6316 + $0x10] sm:$0xff] %v6319
                  %v6321 = vld [vmem:[%s6315 + $0x10] sm:$0xff]
                  %6322 = vst [vmem:[%s6316 + $0x20] sm:$0xff] %v6321
                  %v6323 = vld [vmem:[%s6315 + $0x18] sm:$0xff]
                  %6324 = vst [vmem:[%s6316 + $0x30] sm:$0xff] %v6323
                  %v6325 = vld [vmem:[%s6315 + $0x20] sm:$0xff]
                  %6326 = vst [vmem:[%s6316 + $0x40] sm:$0xff] %v6325
                  %v6327 = vld [vmem:[%s6315 + $0x28] sm:$0xff]
                  %6328 = vst [vmem:[%s6316 + $0x50] sm:$0xff] %v6327
                  %v6329 = vld [vmem:[%s6315 + $0x30] sm:$0xff]
                  %6330 = vst [vmem:[%s6316 + $0x60] sm:$0xff] %v6329
                  %v6331 = vld [vmem:[%s6315 + $0x38] sm:$0xff]
                  %6332 = vst [vmem:[%s6316 + $0x70] sm:$0xff] %v6331
                $region99: #{bilstm_forward.3} parent=93 // loop_footer
                  %s6314 = sadd.s32 1, %s6310
                $region100: #{bilstm_forward.3} parent=93 // loop_footer_branch
                  %6309 = sbr.rel target = $region96
                $region101: #{bilstm_forward.3} parent=93 // loop_exit
                  _
              $region94: #{bilstm_forward.3} parent=78 // pred_fallthru
                _
              // Predicated region
              $region102: #{bilstm_forward.3} parent=78 // pred_check
                _
              $region103: #{bilstm_forward.3} parent=78 // pred_check_branch
                %6334 = sbr.rel target = $region105
              $region104: #{bilstm_forward.3} parent=78 // pred_region
                _
              $region105: #{bilstm_forward.3} parent=78 // pred_fallthru
                _
            $region79: #{bilstm_forward.3} parent=74 // pred_fallthru
              _
            // Predicated region
            $region80: #{bilstm_forward.3} parent=74 // pred_check
              _
            $region81: #{bilstm_forward.3} parent=74 // pred_check_branch
              %6281 = sbr.rel target = $region83
            $region82: #{bilstm_forward.3} parent=74 // pred_region
              loop: start=0, step=1, limit=1
              $region84: #{bilstm_forward.3} parent=82 // loop_pre_header
                _
              $region85: #{bilstm_forward.3} parent=82 // loop_header
                %s6284 = sphi 0, %s6288
                %p6285 = scmp.ge.s32.totalorder %s6284, 1
                %s6289 = sphi %s6264, %s6264
                %s6290 = sphi %s6275, %s6275
              $region86: #{bilstm_forward.3} parent=82 // loop_header_branch
                %6287 = sbr.rel (%p6285) target = $region90
              $region87: #{bilstm_forward.3} parent=82 // loop_body
                %v6291 = vld [vmem:[%s6289] sm:$0xff]
                %6292 = vst [vmem:[%s6290] sm:$0xff] %v6291
                %v6293 = vld [vmem:[%s6289 + $0x8] sm:$0xff]
                %6294 = vst [vmem:[%s6290 + $0x10] sm:$0xff] %v6293
                %v6295 = vld [vmem:[%s6289 + $0x10] sm:$0xff]
                %6296 = vst [vmem:[%s6290 + $0x20] sm:$0xff] %v6295
                %v6297 = vld [vmem:[%s6289 + $0x18] sm:$0xff]
                %6298 = vst [vmem:[%s6290 + $0x30] sm:$0xff] %v6297
                %v6299 = vld [vmem:[%s6289 + $0x20] sm:$0xff]
                %6300 = vst [vmem:[%s6290 + $0x40] sm:$0xff] %v6299
                %v6301 = vld [vmem:[%s6289 + $0x28] sm:$0xff]
                %6302 = vst [vmem:[%s6290 + $0x50] sm:$0xff] %v6301
                %v6303 = vld [vmem:[%s6289 + $0x30] sm:$0xff]
                %6304 = vst [vmem:[%s6290 + $0x60] sm:$0xff] %v6303
                %v6305 = vld [vmem:[%s6289 + $0x38] sm:$0xff]
                %6306 = vst [vmem:[%s6290 + $0x70] sm:$0xff] %v6305
              $region88: #{bilstm_forward.3} parent=82 // loop_footer
                %s6288 = sadd.s32 1, %s6284
              $region89: #{bilstm_forward.3} parent=82 // loop_footer_branch
                %6283 = sbr.rel target = $region85
              $region90: #{bilstm_forward.3} parent=82 // loop_exit
                _
            $region83: #{bilstm_forward.3} parent=74 // pred_fallthru
              _
          $region75: #{bilstm_forward.3} parent=70 // pred_fallthru
            _
          %6335 = vnop
        $region71: #{bilstm_forward.3} parent=50 // pred_fallthru
          _
      $region51: #{bilstm_forward.3} parent=5 // pred_fallthru
        _
      %p6336 = scmp.le.s32.totalorder 2, %s9
      // Predicated region
      $region106: #{bilstm_forward.3} parent=5 // pred_check
        %p6337 = pneg %p6336
      $region107: #{bilstm_forward.3} parent=5 // pred_check_branch
        %6339 = sbr.rel (%p6337) target = $region109
      $region108: #{bilstm_forward.3} parent=5 // pred_region
        %s6340 = ssub.s32 %s9, 2
        // Predicated region
        $region110: #{bilstm_forward.3} parent=108 // pred_check
          %p6341 = pneg %p138
        $region111: #{bilstm_forward.3} parent=108 // pred_check_branch
          %6343 = sbr.rel (%p6341) target = $region113
        $region112: #{bilstm_forward.3} parent=108 // pred_region
          %s6344 = sand.u32 %s123, 1
          %s6345 = sand.u32 %s123, 1
          %s6346 = smul.addr %s6345, 64
          %s6347 = scalar_lea.vmem [#allocation5], %s6346
        $region113: #{bilstm_forward.3} parent=108 // pred_fallthru
          _
      $region109: #{bilstm_forward.3} parent=5 // pred_fallthru
        _
    $region6: #{bilstm_forward.3} parent=1 // loop_footer
      %s13 = sadd.s32 1, %s9
    $region7: #{bilstm_forward.3} parent=1 // loop_footer_branch
      %8 = sbr.rel target = $region3
    $region8: #{bilstm_forward.3} parent=1 // loop_exit
      _

</llo_original>
